<compile_context>
chip_gen: v5e
topology: v5e:2x2
jax: 0.10.0
libtpu: 0.0.40
codegen_flags: <defaults>
</compile_context>

<pallas_src>
import functools

import jax
import jax.numpy as jnp
from jax.experimental import pallas as pl
from jax.experimental.pallas import tpu as pltpu

LANE = 128
EPS = 1e-5


def _round_up(x, m):
    return (x + m - 1) // m * m


def _geometry(H, W, k):
    """Canonical flattened-row geometry for a KxK, stride-1, pad=k//2 conv."""
    p = k // 2
    Hg, Wg = H + 2 * p, W + 2 * p
    # front/back zero guard rows: front chosen so the written output slab
    # starts on a 16-row (bf16 sublane-tile) boundary, back so R is 16-aligned.
    gf = p + (-(p * Wg + 2 * p)) % 16
    pad_top = gf + p * Wg + p                  # first row of the (H, Wg) output slab
    gb = p + (-(gf + Hg * Wg + p)) % 16
    R = gf + Hg * Wg + gb
    return p, Hg, Wg, gf, gb, pad_top, R


# ----------------------------------------------------------------------------
# Conv kernel: one padded image per grid step; k*k shifted bf16 matmuls with an
# f32 accumulator; fused (optional) bias + ReLU; fused per-image BN statistics.
# ----------------------------------------------------------------------------
def _conv_kernel(*refs, k, Wg, HWg, s0, pad_top, add_bias, apply_relu):
    if add_bias:
        x_ref, w_ref, b_ref, mask_ref, y_ref, s_ref, ss_ref = refs
    else:
        x_ref, w_ref, mask_ref, y_ref, s_ref, ss_ref = refs
        b_ref = None

    R, Cp = y_ref.shape[1], y_ref.shape[2]

    # Single aligned load of the whole padded image block; taps are value
    # slices (cheap VMEM relayouts, no extra HBM traffic), fed to the MXU in
    # bf16, accumulated in f32.
    xall = x_ref[0].astype(jnp.float32)                       # (R, Cin_p)
    acc = jnp.zeros((HWg, Cp), jnp.float32)
    for dy in range(k):
        for dx in range(k):
            s = s0 + dy * Wg + dx
            slab = xall[s:s + HWg, :].astype(jnp.bfloat16)    # (HWg, Cin_p)
            acc = acc + jnp.dot(slab, w_ref[dy * k + dx],
                                preferred_element_type=jnp.float32)

    if add_bias:
        acc = acc + b_ref[...]                                # (1, Cp) broadcast
    if apply_relu:
        acc = jnp.maximum(acc, 0.0)

    m = mask_ref[pad_top:pad_top + HWg, :]                    # (HWg, 1) in {0,1}
    masked = acc * m

    # Fused BN statistics over the valid H*W pixels of this image.
    s_ref[0] = jnp.sum(masked, axis=0, keepdims=True)
    ss_ref[0] = jnp.sum(masked * acc, axis=0, keepdims=True)

    # Canonical output: zero guard / halo rows, masked conv slab in the middle
    # (16-row-aligned, 128-lane-dense store).
    y_ref[0] = jnp.zeros((R, Cp), y_ref.dtype)
    y_ref[0, pad_top:pad_top + HWg, :] = masked.astype(y_ref.dtype)


def conv2d_canonical(x_can, w_taps, bias_row, mask, geom, *, k, add_bias,
                     apply_relu, out_dtype=jnp.bfloat16):
    """x_can: (N, R, Cin_p) bf16 canonical layout.  w_taps: (k*k, Cin_p, Cp) bf16."""
    p, Hg, Wg, gf, gb, pad_top, R = geom
    N, Rx, Cin_p = x_can.shape
    assert Rx == R
    kk, _, Cp = w_taps.shape
    H = Hg - 2 * p
    HWg = H * Wg

    kern = functools.partial(_conv_kernel, k=k, Wg=Wg, HWg=HWg, s0=gf - p,
                             pad_top=pad_top, add_bias=add_bias,
                             apply_relu=apply_relu)

    inputs = [x_can, w_taps] + ([bias_row] if add_bias else []) + [mask]
    in_specs = [pl.BlockSpec((1, R, Cin_p), lambda n: (n, 0, 0)),
                pl.BlockSpec((kk, Cin_p, Cp), lambda n: (0, 0, 0))]
    if add_bias:
        in_specs.append(pl.BlockSpec((1, Cp), lambda n: (0, 0)))
    in_specs.append(pl.BlockSpec((R, 1), lambda n: (0, 0)))

    y, ssum, ssq = pl.pallas_call(
        kern,
        out_shape=(jax.ShapeDtypeStruct((N, R, Cp), out_dtype),
                   jax.ShapeDtypeStruct((N, 1, Cp), jnp.float32),
                   jax.ShapeDtypeStruct((N, 1, Cp), jnp.float32)),
        grid=(N,),
        in_specs=in_specs,
        out_specs=(pl.BlockSpec((1, R, Cp), lambda n: (n, 0, 0)),
                   pl.BlockSpec((1, 1, Cp), lambda n: (n, 0, 0)),
                   pl.BlockSpec((1, 1, Cp), lambda n: (n, 0, 0))),
        compiler_params=pltpu.CompilerParams(
            dimension_semantics=("parallel",)),
    )(*inputs)
    return y, ssum, ssq


# ----------------------------------------------------------------------------
# BN apply kernel: y = x*scale + shift (+ReLU) (+residual), re-masked to keep
# the canonical zero padding.  Pure elementwise, one image block per grid step.
# ----------------------------------------------------------------------------
def _bn_apply_kernel(*refs, apply_relu, has_res):
    if has_res:
        x_ref, r_ref, scale_ref, shift_ref, mask_ref, o_ref = refs
    else:
        x_ref, scale_ref, shift_ref, mask_ref, o_ref = refs
        r_ref = None

    y = x_ref[0].astype(jnp.float32) * scale_ref[...] + shift_ref[...]
    if apply_relu:
        y = jnp.maximum(y, 0.0)
    if has_res:
        y = y + r_ref[0].astype(jnp.float32)
    y = y * mask_ref[...]                     # restore canonical zero padding
    o_ref[0] = y.astype(o_ref.dtype)


def bn_apply(x_can, ssum, ssq, gamma_p, beta_p, mask, count, *, apply_relu,
             residual=None, out_dtype=jnp.bfloat16):
    """Training-mode BatchNorm2d (+opt ReLU, +opt residual) on canonical layout."""
    N, R, Cp = x_can.shape
    # Tiny per-channel reductions of the fused conv statistics (N x Cp values).
    mean = jnp.sum(ssum, axis=0) / count                     # (1, Cp)
    var = jnp.maximum(jnp.sum(ssq, axis=0) / count - mean * mean, 0.0)
    scale = gamma_p.reshape(1, Cp) * jax.lax.rsqrt(var + EPS)
    shift = beta_p.reshape(1, Cp) - mean * scale

    has_res = residual is not None
    kern = functools.partial(_bn_apply_kernel, apply_relu=apply_relu,
                             has_res=has_res)

    big = pl.BlockSpec((1, R, Cp), lambda n: (n, 0, 0))
    inputs = [x_can] + ([residual] if has_res else []) + [scale, shift, mask]
    in_specs = [big] + ([big] if has_res else []) + [
        pl.BlockSpec((1, Cp), lambda n: (0, 0)),
        pl.BlockSpec((1, Cp), lambda n: (0, 0)),
        pl.BlockSpec((R, 1), lambda n: (0, 0)),
    ]
    return pl.pallas_call(
        kern,
        out_shape=jax.ShapeDtypeStruct((N, R, Cp), out_dtype),
        grid=(N,),
        in_specs=in_specs,
        out_specs=pl.BlockSpec((1, R, Cp), lambda n: (n, 0, 0)),
        compiler_params=pltpu.CompilerParams(
            dimension_semantics=("parallel",)),
    )(*inputs)


# ----------------------------------------------------------------------------
# Layout glue (runs once on the input / once on the final output).
# ----------------------------------------------------------------------------
def to_canonical(x_nchw, geom, Cp):
    p, Hg, Wg, gf, gb, _, _ = geom
    N, C, H, W = x_nchw.shape
    x = jnp.transpose(x_nchw, (0, 2, 3, 1))                  # NHWC
    x = jnp.pad(x, ((0, 0), (p, p), (p, p), (0, Cp - C)))
    x = x.reshape(N, Hg * Wg, Cp)
    x = jnp.pad(x, ((0, 0), (gf, gb), (0, 0)))
    return x.astype(jnp.bfloat16)


def from_canonical(x_can, geom, H, W, C):
    p, Hg, Wg, gf, gb, pad_top, R = geom
    N = x_can.shape[0]
    x = x_can[:, pad_top:pad_top + H * Wg, :].reshape(N, H, Wg, -1)
    x = x[:, :, p:p + W, :C]
    return jnp.transpose(x, (0, 3, 1, 2))                    # NHWC -> NCHW


def make_valid_mask(geom, H, W):
    p, Hg, Wg, gf, gb, pad_top, R = geom
    r = jnp.arange(R)
    yy = (r - gf) // Wg
    xx = (r - gf) % Wg
    valid = (yy >= p) & (yy < p + H) & (xx >= p) & (xx < p + W)
    return valid.astype(jnp.float32).reshape(R, 1)


def prep_conv_weight(w_oihw, cin_p, cout_p):
    """PyTorch (Cout,Cin,kh,kw) -> (k*k, Cin_p, Cout_p) bf16, lane-padded."""
    cout, cin, k, _ = w_oihw.shape
    w = jnp.transpose(w_oihw, (2, 3, 1, 0)).reshape(k * k, cin, cout)
    w = jnp.pad(w, ((0, 0), (0, cin_p - cin), (0, cout_p - cout)))
    return w.astype(jnp.bfloat16)


def prep_channel_vec(v, cp):
    return jnp.pad(v, (0, cp - v.shape[0])).astype(jnp.float32)


# ----------------------------------------------------------------------------
# Parameters (deterministic, matching the PyTorch __init__: weights N(0,0.02),
# biases zero, BN gamma=1 / beta=0).  BN runs with batch statistics (training
# mode); running-stat buffers are not tracked.
# ----------------------------------------------------------------------------
def init_params(key, in_channels, out_channels, kernel_size, num_res_block):
    def conv_w(k_, cin, cout):
        return jax.random.normal(
            k_, (cout, cin, kernel_size, kernel_size), jnp.float32) * 0.02

    keys = jax.random.split(key, 2 + 2 * num_res_block)
    kit = iter(keys)
    params = dict(
        head_w=conv_w(next(kit), in_channels, out_channels),
        head_b=jnp.zeros((out_channels,), jnp.float32),
        resblocks=[],
    )
    for _ in range(num_res_block):
        params["resblocks"].append(dict(
            w1=conv_w(next(kit), out_channels, out_channels),
            g1=jnp.ones((out_channels,), jnp.float32),
            be1=jnp.zeros((out_channels,), jnp.float32),
            w2=conv_w(next(kit), out_channels, out_channels),
            g2=jnp.ones((out_channels,), jnp.float32),
            be2=jnp.zeros((out_channels,), jnp.float32),
        ))
    params["tail_w"] = conv_w(next(kit), out_channels, out_channels)
    params["tail_g"] = jnp.ones((out_channels,), jnp.float32)
    params["tail_be"] = jnp.zeros((out_channels,), jnp.float32)
    return params


# ----------------------------------------------------------------------------
# BasicBlock forward
# ----------------------------------------------------------------------------
def basic_block_forward(x_nchw, params):
    N, Cin, H, W = x_nchw.shape
    Cout, _, k, _ = params["head_w"].shape
    cin_p = _round_up(Cin, LANE)
    cp = _round_up(Cout, LANE)
    geom = _geometry(H, W, k)
    count = float(N * H * W)

    mask = make_valid_mask(geom, H, W)
    x_can = to_canonical(x_nchw, geom, cin_p)

    def conv_bn(x_in, w, gamma, beta, *, apply_relu, residual,
                out_dtype=jnp.bfloat16):
        # Conv bias omitted: exactly cancelled by the BN batch-mean subtraction.
        y, s1, s2 = conv2d_canonical(
            x_in, prep_conv_weight(w, cp, cp), None, mask, geom, k=k,
            add_bias=False, apply_relu=False)
        return bn_apply(y, s1, s2, prep_channel_vec(gamma, cp),
                        prep_channel_vec(beta, cp), mask, count,
                        apply_relu=apply_relu, residual=residual,
                        out_dtype=out_dtype)

    # self.conv : conv + bias + ReLU (no BN)
    res, _, _ = conv2d_canonical(
        x_can, prep_conv_weight(params["head_w"], cin_p, cp),
        prep_channel_vec(params["head_b"], cp).reshape(1, cp), mask, geom,
        k=k, add_bias=True, apply_relu=True)

    # self.body : num_res_block * ResBlock, then conv + BN, then += res
    h = res
    for rb in params["resblocks"]:
        t = conv_bn(h, rb["w1"], rb["g1"], rb["be1"],
                    apply_relu=True, residual=None)
        h = conv_bn(t, rb["w2"], rb["g2"], rb["be2"],
                    apply_relu=False, residual=h)           # res += x
    out = conv_bn(h, params["tail_w"], params["tail_g"], params["tail_be"],
                  apply_relu=False, residual=res,            # out += res
                  out_dtype=jnp.float32)

    return from_canonical(out, geom, H, W, Cout)


if __name__ == "__main__":
    batch, in_channels, out_channels = 2, 4, 8
    kernel_size, num_res_block = 3, 2
    height = width = 16

    key = jax.random.PRNGKey(0)
    kx, kp = jax.random.split(key)
    x = jax.random.normal(kx, (batch, in_channels, height, width), jnp.float32)
    params = init_params(kp, in_channels, out_channels, kernel_size,
                         num_res_block)

    out = jax.jit(basic_block_forward)(x, params)
    jax.block_until_ready(out)
    assert out.shape == (batch, out_channels, height, width)
    assert out.dtype == jnp.float32
    print("KERNEL_OK")
</pallas_src>

<mosaic_0001>
module attributes {stable_mosaic.version = 11 : i64} {
  func.func @_conv_kernel(%arg0: i32, %arg1: memref<1x352x128xbf16, #tpu.memory_space<vmem>>, %arg2: memref<9x128x128xbf16, #tpu.memory_space<vmem>>, %arg3: memref<1x128xf32, #tpu.memory_space<vmem>>, %arg4: memref<352x1xf32, #tpu.memory_space<vmem>>, %arg5: memref<1x352x128xbf16, #tpu.memory_space<vmem>>, %arg6: memref<1x1x128xf32, #tpu.memory_space<vmem>>, %arg7: memref<1x1x128xf32, #tpu.memory_space<vmem>>) attributes {dimension_semantics = [#tpu.dimension_semantics<parallel>], iteration_bounds = array<i64: 2>, scalar_prefetch = 0 : i64, scratch_operands = 0 : i64, tpu.core_type = #tpu.core_type<tc>, window_params = [{transform_indices = @transform_0, window_bounds = array<i64: 1, 352, 128>}, {pipeline_mode = #tpu.pipeline_mode<synchronous>, transform_indices = @transform_1, window_bounds = array<i64: 9, 128, 128>}, {pipeline_mode = #tpu.pipeline_mode<synchronous>, transform_indices = @transform_2, window_bounds = array<i64: 1, 128>}, {pipeline_mode = #tpu.pipeline_mode<synchronous>, transform_indices = @transform_3, window_bounds = array<i64: 352, 1>}, {transform_indices = @transform_4, window_bounds = array<i64: 1, 352, 128>}, {transform_indices = @transform_5, window_bounds = array<i64: 1, 1, 128>}, {transform_indices = @transform_6, window_bounds = array<i64: 1, 1, 128>}]} {
    %c0 = arith.constant 0 : index
    %c0_0 = arith.constant 0 : index
    %c0_1 = arith.constant 0 : index
    %0 = vector.load %arg1[%c0, %c0_0, %c0_1] : memref<1x352x128xbf16, #tpu.memory_space<vmem>>, vector<1x352x128xbf16>
    %1 = vector.shape_cast %0 : vector<1x352x128xbf16> to vector<352x128xbf16>
    %2 = arith.extf %1 : vector<352x128xbf16> to vector<352x128xf32>
    %cst = arith.constant 0.000000e+00 : f32
    %3 = vector.broadcast %cst : f32 to vector<288x128xf32>
    %4 = vector.extract_strided_slice %2 {offsets = [12, 0], sizes = [288, 128], strides = [1, 1]} : vector<352x128xf32> to vector<288x128xf32>
    %5 = arith.truncf %4 : vector<288x128xf32> to vector<288x128xbf16>
    %c0_2 = arith.constant 0 : index
    %c0_3 = arith.constant 0 : index
    %c0_4 = arith.constant 0 : index
    %6 = vector.load %arg2[%c0_2, %c0_3, %c0_4] : memref<9x128x128xbf16, #tpu.memory_space<vmem>>, vector<1x128x128xbf16>
    %7 = vector.shape_cast %6 : vector<1x128x128xbf16> to vector<128x128xbf16>
    %cst_5 = arith.constant dense<0.000000e+00> : vector<288x128xf32>
    %8 = tpu.matmul %5, %7, %cst_5 {dimension_numbers = #tpu.dot_dimension_numbers<[1], [0], [0], [1], [0, 0, 1, 1], [], []>} : vector<288x128xbf16>, vector<128x128xbf16>, vector<288x128xf32> -> vector<288x128xf32>
    %9 = arith.addf %3, %8 : vector<288x128xf32>
    %10 = vector.extract_strided_slice %2 {offsets = [13, 0], sizes = [288, 128], strides = [1, 1]} : vector<352x128xf32> to vector<288x128xf32>
    %11 = arith.truncf %10 : vector<288x128xf32> to vector<288x128xbf16>
    %c1 = arith.constant 1 : index
    %c0_6 = arith.constant 0 : index
    %c0_7 = arith.constant 0 : index
    %12 = vector.load %arg2[%c1, %c0_6, %c0_7] : memref<9x128x128xbf16, #tpu.memory_space<vmem>>, vector<1x128x128xbf16>
    %13 = vector.shape_cast %12 : vector<1x128x128xbf16> to vector<128x128xbf16>
    %cst_8 = arith.constant dense<0.000000e+00> : vector<288x128xf32>
    %14 = tpu.matmul %11, %13, %cst_8 {dimension_numbers = #tpu.dot_dimension_numbers<[1], [0], [0], [1], [0, 0, 1, 1], [], []>} : vector<288x128xbf16>, vector<128x128xbf16>, vector<288x128xf32> -> vector<288x128xf32>
    %15 = arith.addf %9, %14 : vector<288x128xf32>
    %16 = vector.extract_strided_slice %2 {offsets = [14, 0], sizes = [288, 128], strides = [1, 1]} : vector<352x128xf32> to vector<288x128xf32>
    %17 = arith.truncf %16 : vector<288x128xf32> to vector<288x128xbf16>
    %c2 = arith.constant 2 : index
    %c0_9 = arith.constant 0 : index
    %c0_10 = arith.constant 0 : index
    %18 = vector.load %arg2[%c2, %c0_9, %c0_10] : memref<9x128x128xbf16, #tpu.memory_space<vmem>>, vector<1x128x128xbf16>
    %19 = vector.shape_cast %18 : vector<1x128x128xbf16> to vector<128x128xbf16>
    %cst_11 = arith.constant dense<0.000000e+00> : vector<288x128xf32>
    %20 = tpu.matmul %17, %19, %cst_11 {dimension_numbers = #tpu.dot_dimension_numbers<[1], [0], [0], [1], [0, 0, 1, 1], [], []>} : vector<288x128xbf16>, vector<128x128xbf16>, vector<288x128xf32> -> vector<288x128xf32>
    %21 = arith.addf %15, %20 : vector<288x128xf32>
    %22 = vector.extract_strided_slice %2 {offsets = [30, 0], sizes = [288, 128], strides = [1, 1]} : vector<352x128xf32> to vector<288x128xf32>
    %23 = arith.truncf %22 : vector<288x128xf32> to vector<288x128xbf16>
    %c3 = arith.constant 3 : index
    %c0_12 = arith.constant 0 : index
    %c0_13 = arith.constant 0 : index
    %24 = vector.load %arg2[%c3, %c0_12, %c0_13] : memref<9x128x128xbf16, #tpu.memory_space<vmem>>, vector<1x128x128xbf16>
    %25 = vector.shape_cast %24 : vector<1x128x128xbf16> to vector<128x128xbf16>
    %cst_14 = arith.constant dense<0.000000e+00> : vector<288x128xf32>
    %26 = tpu.matmul %23, %25, %cst_14 {dimension_numbers = #tpu.dot_dimension_numbers<[1], [0], [0], [1], [0, 0, 1, 1], [], []>} : vector<288x128xbf16>, vector<128x128xbf16>, vector<288x128xf32> -> vector<288x128xf32>
    %27 = arith.addf %21, %26 : vector<288x128xf32>
    %28 = vector.extract_strided_slice %2 {offsets = [31, 0], sizes = [288, 128], strides = [1, 1]} : vector<352x128xf32> to vector<288x128xf32>
    %29 = arith.truncf %28 : vector<288x128xf32> to vector<288x128xbf16>
    %c4 = arith.constant 4 : index
    %c0_15 = arith.constant 0 : index
    %c0_16 = arith.constant 0 : index
    %30 = vector.load %arg2[%c4, %c0_15, %c0_16] : memref<9x128x128xbf16, #tpu.memory_space<vmem>>, vector<1x128x128xbf16>
    %31 = vector.shape_cast %30 : vector<1x128x128xbf16> to vector<128x128xbf16>
    %cst_17 = arith.constant dense<0.000000e+00> : vector<288x128xf32>
    %32 = tpu.matmul %29, %31, %cst_17 {dimension_numbers = #tpu.dot_dimension_numbers<[1], [0], [0], [1], [0, 0, 1, 1], [], []>} : vector<288x128xbf16>, vector<128x128xbf16>, vector<288x128xf32> -> vector<288x128xf32>
    %33 = arith.addf %27, %32 : vector<288x128xf32>
    %34 = vector.extract_strided_slice %2 {offsets = [32, 0], sizes = [288, 128], strides = [1, 1]} : vector<352x128xf32> to vector<288x128xf32>
    %35 = arith.truncf %34 : vector<288x128xf32> to vector<288x128xbf16>
    %c5 = arith.constant 5 : index
    %c0_18 = arith.constant 0 : index
    %c0_19 = arith.constant 0 : index
    %36 = vector.load %arg2[%c5, %c0_18, %c0_19] : memref<9x128x128xbf16, #tpu.memory_space<vmem>>, vector<1x128x128xbf16>
    %37 = vector.shape_cast %36 : vector<1x128x128xbf16> to vector<128x128xbf16>
    %cst_20 = arith.constant dense<0.000000e+00> : vector<288x128xf32>
    %38 = tpu.matmul %35, %37, %cst_20 {dimension_numbers = #tpu.dot_dimension_numbers<[1], [0], [0], [1], [0, 0, 1, 1], [], []>} : vector<288x128xbf16>, vector<128x128xbf16>, vector<288x128xf32> -> vector<288x128xf32>
    %39 = arith.addf %33, %38 : vector<288x128xf32>
    %40 = vector.extract_strided_slice %2 {offsets = [48, 0], sizes = [288, 128], strides = [1, 1]} : vector<352x128xf32> to vector<288x128xf32>
    %41 = arith.truncf %40 : vector<288x128xf32> to vector<288x128xbf16>
    %c6 = arith.constant 6 : index
    %c0_21 = arith.constant 0 : index
    %c0_22 = arith.constant 0 : index
    %42 = vector.load %arg2[%c6, %c0_21, %c0_22] : memref<9x128x128xbf16, #tpu.memory_space<vmem>>, vector<1x128x128xbf16>
    %43 = vector.shape_cast %42 : vector<1x128x128xbf16> to vector<128x128xbf16>
    %cst_23 = arith.constant dense<0.000000e+00> : vector<288x128xf32>
    %44 = tpu.matmul %41, %43, %cst_23 {dimension_numbers = #tpu.dot_dimension_numbers<[1], [0], [0], [1], [0, 0, 1, 1], [], []>} : vector<288x128xbf16>, vector<128x128xbf16>, vector<288x128xf32> -> vector<288x128xf32>
    %45 = arith.addf %39, %44 : vector<288x128xf32>
    %46 = vector.extract_strided_slice %2 {offsets = [49, 0], sizes = [288, 128], strides = [1, 1]} : vector<352x128xf32> to vector<288x128xf32>
    %47 = arith.truncf %46 : vector<288x128xf32> to vector<288x128xbf16>
    %c7 = arith.constant 7 : index
    %c0_24 = arith.constant 0 : index
    %c0_25 = arith.constant 0 : index
    %48 = vector.load %arg2[%c7, %c0_24, %c0_25] : memref<9x128x128xbf16, #tpu.memory_space<vmem>>, vector<1x128x128xbf16>
    %49 = vector.shape_cast %48 : vector<1x128x128xbf16> to vector<128x128xbf16>
    %cst_26 = arith.constant dense<0.000000e+00> : vector<288x128xf32>
    %50 = tpu.matmul %47, %49, %cst_26 {dimension_numbers = #tpu.dot_dimension_numbers<[1], [0], [0], [1], [0, 0, 1, 1], [], []>} : vector<288x128xbf16>, vector<128x128xbf16>, vector<288x128xf32> -> vector<288x128xf32>
    %51 = arith.addf %45, %50 : vector<288x128xf32>
    %52 = vector.extract_strided_slice %2 {offsets = [50, 0], sizes = [288, 128], strides = [1, 1]} : vector<352x128xf32> to vector<288x128xf32>
    %53 = arith.truncf %52 : vector<288x128xf32> to vector<288x128xbf16>
    %c8 = arith.constant 8 : index
    %c0_27 = arith.constant 0 : index
    %c0_28 = arith.constant 0 : index
    %54 = vector.load %arg2[%c8, %c0_27, %c0_28] : memref<9x128x128xbf16, #tpu.memory_space<vmem>>, vector<1x128x128xbf16>
    %55 = vector.shape_cast %54 : vector<1x128x128xbf16> to vector<128x128xbf16>
    %cst_29 = arith.constant dense<0.000000e+00> : vector<288x128xf32>
    %56 = tpu.matmul %53, %55, %cst_29 {dimension_numbers = #tpu.dot_dimension_numbers<[1], [0], [0], [1], [0, 0, 1, 1], [], []>} : vector<288x128xbf16>, vector<128x128xbf16>, vector<288x128xf32> -> vector<288x128xf32>
    %57 = arith.addf %51, %56 : vector<288x128xf32>
    %c0_30 = arith.constant 0 : index
    %c0_31 = arith.constant 0 : index
    %58 = vector.load %arg3[%c0_30, %c0_31] : memref<1x128xf32, #tpu.memory_space<vmem>>, vector<1x128xf32>
    %59 = vector.broadcast %58 : vector<1x128xf32> to vector<288x128xf32>
    %60 = arith.addf %57, %59 : vector<288x128xf32>
    %cst_32 = arith.constant 0.000000e+00 : f32
    %61 = vector.broadcast %cst_32 : f32 to vector<288x128xf32>
    %62 = arith.maximumf %60, %61 : vector<288x128xf32>
    %c32 = arith.constant 32 : index
    %c0_33 = arith.constant 0 : index
    %63 = vector.load %arg4[%c32, %c0_33] : memref<352x1xf32, #tpu.memory_space<vmem>>, vector<288x1xf32>
    %64 = vector.broadcast %63 : vector<288x1xf32> to vector<288x128xf32>
    %65 = arith.mulf %62, %64 : vector<288x128xf32>
    %cst_34 = arith.constant dense<0.000000e+00> : vector<128xf32>
    %66 = vector.multi_reduction <add>, %65, %cst_34 [0] : vector<288x128xf32> to vector<128xf32>
    %67 = vector.shape_cast %66 : vector<128xf32> to vector<1x128xf32>
    %c0_35 = arith.constant 0 : index
    %c0_36 = arith.constant 0 : index
    %c0_37 = arith.constant 0 : index
    %68 = vector.load %arg6[%c0_35, %c0_36, %c0_37] : memref<1x1x128xf32, #tpu.memory_space<vmem>>, vector<1x1x128xf32>
    %69 = vector.shape_cast %68 : vector<1x1x128xf32> to vector<1x128xf32>
    %70 = vector.shape_cast %67 : vector<1x128xf32> to vector<1x1x128xf32>
    tpu.vector_store %arg6[%c0_35, %c0_36, %c0_37], %70 {strides = array<i32>} : memref<1x1x128xf32, #tpu.memory_space<vmem>>, vector<1x1x128xf32>,
    %71 = arith.mulf %65, %62 : vector<288x128xf32>
    %cst_38 = arith.constant dense<0.000000e+00> : vector<128xf32>
    %72 = vector.multi_reduction <add>, %71, %cst_38 [0] : vector<288x128xf32> to vector<128xf32>
    %73 = vector.shape_cast %72 : vector<128xf32> to vector<1x128xf32>
    %c0_39 = arith.constant 0 : index
    %c0_40 = arith.constant 0 : index
    %c0_41 = arith.constant 0 : index
    %74 = vector.load %arg7[%c0_39, %c0_40, %c0_41] : memref<1x1x128xf32, #tpu.memory_space<vmem>>, vector<1x1x128xf32>
    %75 = vector.shape_cast %74 : vector<1x1x128xf32> to vector<1x128xf32>
    %76 = vector.shape_cast %73 : vector<1x128xf32> to vector<1x1x128xf32>
    tpu.vector_store %arg7[%c0_39, %c0_40, %c0_41], %76 {strides = array<i32>} : memref<1x1x128xf32, #tpu.memory_space<vmem>>, vector<1x1x128xf32>,
    %cst_42 = arith.constant 0.000000e+00 : bf16
    %77 = vector.broadcast %cst_42 : bf16 to vector<352x128xbf16>
    %c0_43 = arith.constant 0 : index
    %c0_44 = arith.constant 0 : index
    %c0_45 = arith.constant 0 : index
    %78 = vector.load %arg5[%c0_43, %c0_44, %c0_45] : memref<1x352x128xbf16, #tpu.memory_space<vmem>>, vector<1x352x128xbf16>
    %79 = vector.shape_cast %78 : vector<1x352x128xbf16> to vector<352x128xbf16>
    %80 = vector.shape_cast %77 : vector<352x128xbf16> to vector<1x352x128xbf16>
    tpu.vector_store %arg5[%c0_43, %c0_44, %c0_45], %80 {strides = array<i32>} : memref<1x352x128xbf16, #tpu.memory_space<vmem>>, vector<1x352x128xbf16>,
    %81 = arith.truncf %65 : vector<288x128xf32> to vector<288x128xbf16>
    %c0_46 = arith.constant 0 : index
    %c32_47 = arith.constant 32 : index
    %c0_48 = arith.constant 0 : index
    %82 = vector.load %arg5[%c0_46, %c32_47, %c0_48] : memref<1x352x128xbf16, #tpu.memory_space<vmem>>, vector<1x288x128xbf16>
    %83 = vector.shape_cast %82 : vector<1x288x128xbf16> to vector<288x128xbf16>
    %84 = vector.shape_cast %81 : vector<288x128xbf16> to vector<1x288x128xbf16>
    tpu.vector_store %arg5[%c0_46, %c32_47, %c0_48], %84 {strides = array<i32>} : memref<1x352x128xbf16, #tpu.memory_space<vmem>>, vector<1x288x128xbf16>,
    return
  }
  func.func @transform_0(%arg0: i32) -> (i32, i32, i32) {
    %c0_i32 = arith.constant 0 : i32
    %c0_i32_0 = arith.constant 0 : i32
    %c0_i32_1 = arith.constant 0 : i32
    return %arg0, %c0_i32, %c0_i32_0 : i32, i32, i32
  }
  func.func @transform_1(%arg0: i32) -> (i32, i32, i32) {
    %c0_i32 = arith.constant 0 : i32
    %c0_i32_0 = arith.constant 0 : i32
    %c0_i32_1 = arith.constant 0 : i32
    %c0_i32_2 = arith.constant 0 : i32
    return %c0_i32, %c0_i32_0, %c0_i32_1 : i32, i32, i32
  }
  func.func @transform_2(%arg0: i32) -> (i32, i32) {
    %c0_i32 = arith.constant 0 : i32
    %c0_i32_0 = arith.constant 0 : i32
    %c0_i32_1 = arith.constant 0 : i32
    return %c0_i32, %c0_i32_0 : i32, i32
  }
  func.func @transform_3(%arg0: i32) -> (i32, i32) {
    %c0_i32 = arith.constant 0 : i32
    %c0_i32_0 = arith.constant 0 : i32
    %c0_i32_1 = arith.constant 0 : i32
    return %c0_i32, %c0_i32_0 : i32, i32
  }
  func.func @transform_4(%arg0: i32) -> (i32, i32, i32) {
    %c0_i32 = arith.constant 0 : i32
    %c0_i32_0 = arith.constant 0 : i32
    %c0_i32_1 = arith.constant 0 : i32
    return %arg0, %c0_i32, %c0_i32_0 : i32, i32, i32
  }
  func.func @transform_5(%arg0: i32) -> (i32, i32, i32) {
    %c0_i32 = arith.constant 0 : i32
    %c0_i32_0 = arith.constant 0 : i32
    %c0_i32_1 = arith.constant 0 : i32
    return %arg0, %c0_i32, %c0_i32_0 : i32, i32, i32
  }
  func.func @transform_6(%arg0: i32) -> (i32, i32, i32) {
    %c0_i32 = arith.constant 0 : i32
    %c0_i32_0 = arith.constant 0 : i32
    %c0_i32_1 = arith.constant 0 : i32
    return %arg0, %c0_i32, %c0_i32_0 : i32, i32, i32
  }
}

module attributes {stable_mosaic.version = 11 : i64} {
  func.func @_bn_apply_kernel(%arg0: i32, %arg1: memref<1x352x128xbf16, #tpu.memory_space<vmem>>, %arg2: memref<1x128xf32, #tpu.memory_space<vmem>>, %arg3: memref<1x128xf32, #tpu.memory_space<vmem>>, %arg4: memref<352x1xf32, #tpu.memory_space<vmem>>, %arg5: memref<1x352x128xbf16, #tpu.memory_space<vmem>>) attributes {dimension_semantics = [#tpu.dimension_semantics<parallel>], iteration_bounds = array<i64: 2>, scalar_prefetch = 0 : i64, scratch_operands = 0 : i64, tpu.core_type = #tpu.core_type<tc>, window_params = [{transform_indices = @transform_0, window_bounds = array<i64: 1, 352, 128>}, {pipeline_mode = #tpu.pipeline_mode<synchronous>, transform_indices = @transform_1, window_bounds = array<i64: 1, 128>}, {pipeline_mode = #tpu.pipeline_mode<synchronous>, transform_indices = @transform_2, window_bounds = array<i64: 1, 128>}, {pipeline_mode = #tpu.pipeline_mode<synchronous>, transform_indices = @transform_3, window_bounds = array<i64: 352, 1>}, {transform_indices = @transform_4, window_bounds = array<i64: 1, 352, 128>}]} {
    %c0 = arith.constant 0 : index
    %c0_0 = arith.constant 0 : index
    %c0_1 = arith.constant 0 : index
    %0 = vector.load %arg1[%c0, %c0_0, %c0_1] : memref<1x352x128xbf16, #tpu.memory_space<vmem>>, vector<1x352x128xbf16>
    %1 = vector.shape_cast %0 : vector<1x352x128xbf16> to vector<352x128xbf16>
    %2 = arith.extf %1 : vector<352x128xbf16> to vector<352x128xf32>
    %c0_2 = arith.constant 0 : index
    %c0_3 = arith.constant 0 : index
    %3 = vector.load %arg2[%c0_2, %c0_3] : memref<1x128xf32, #tpu.memory_space<vmem>>, vector<1x128xf32>
    %4 = vector.broadcast %3 : vector<1x128xf32> to vector<352x128xf32>
    %5 = arith.mulf %2, %4 : vector<352x128xf32>
    %c0_4 = arith.constant 0 : index
    %c0_5 = arith.constant 0 : index
    %6 = vector.load %arg3[%c0_4, %c0_5] : memref<1x128xf32, #tpu.memory_space<vmem>>, vector<1x128xf32>
    %7 = vector.broadcast %6 : vector<1x128xf32> to vector<352x128xf32>
    %8 = arith.addf %5, %7 : vector<352x128xf32>
    %cst = arith.constant 0.000000e+00 : f32
    %9 = vector.broadcast %cst : f32 to vector<352x128xf32>
    %10 = arith.maximumf %8, %9 : vector<352x128xf32>
    %c0_6 = arith.constant 0 : index
    %c0_7 = arith.constant 0 : index
    %11 = vector.load %arg4[%c0_6, %c0_7] : memref<352x1xf32, #tpu.memory_space<vmem>>, vector<352x1xf32>
    %12 = vector.broadcast %11 : vector<352x1xf32> to vector<352x128xf32>
    %13 = arith.mulf %10, %12 : vector<352x128xf32>
    %14 = arith.truncf %13 : vector<352x128xf32> to vector<352x128xbf16>
    %c0_8 = arith.constant 0 : index
    %c0_9 = arith.constant 0 : index
    %c0_10 = arith.constant 0 : index
    %15 = vector.load %arg5[%c0_8, %c0_9, %c0_10] : memref<1x352x128xbf16, #tpu.memory_space<vmem>>, vector<1x352x128xbf16>
    %16 = vector.shape_cast %15 : vector<1x352x128xbf16> to vector<352x128xbf16>
    %17 = vector.shape_cast %14 : vector<352x128xbf16> to vector<1x352x128xbf16>
    tpu.vector_store %arg5[%c0_8, %c0_9, %c0_10], %17 {strides = array<i32>} : memref<1x352x128xbf16, #tpu.memory_space<vmem>>, vector<1x352x128xbf16>,
    return
  }
  func.func @transform_0(%arg0: i32) -> (i32, i32, i32) {
    %c0_i32 = arith.constant 0 : i32
    %c0_i32_0 = arith.constant 0 : i32
    %c0_i32_1 = arith.constant 0 : i32
    return %arg0, %c0_i32, %c0_i32_0 : i32, i32, i32
  }
  func.func @transform_1(%arg0: i32) -> (i32, i32) {
    %c0_i32 = arith.constant 0 : i32
    %c0_i32_0 = arith.constant 0 : i32
    %c0_i32_1 = arith.constant 0 : i32
    return %c0_i32, %c0_i32_0 : i32, i32
  }
  func.func @transform_2(%arg0: i32) -> (i32, i32) {
    %c0_i32 = arith.constant 0 : i32
    %c0_i32_0 = arith.constant 0 : i32
    %c0_i32_1 = arith.constant 0 : i32
    return %c0_i32, %c0_i32_0 : i32, i32
  }
  func.func @transform_3(%arg0: i32) -> (i32, i32) {
    %c0_i32 = arith.constant 0 : i32
    %c0_i32_0 = arith.constant 0 : i32
    %c0_i32_1 = arith.constant 0 : i32
    return %c0_i32, %c0_i32_0 : i32, i32
  }
  func.func @transform_4(%arg0: i32) -> (i32, i32, i32) {
    %c0_i32 = arith.constant 0 : i32
    %c0_i32_0 = arith.constant 0 : i32
    %c0_i32_1 = arith.constant 0 : i32
    return %arg0, %c0_i32, %c0_i32_0 : i32, i32, i32
  }
}

module attributes {stable_mosaic.version = 11 : i64} {
  func.func @_conv_kernel(%arg0: i32, %arg1: memref<1x352x128xbf16, #tpu.memory_space<vmem>>, %arg2: memref<9x128x128xbf16, #tpu.memory_space<vmem>>, %arg3: memref<352x1xf32, #tpu.memory_space<vmem>>, %arg4: memref<1x352x128xbf16, #tpu.memory_space<vmem>>, %arg5: memref<1x1x128xf32, #tpu.memory_space<vmem>>, %arg6: memref<1x1x128xf32, #tpu.memory_space<vmem>>) attributes {dimension_semantics = [#tpu.dimension_semantics<parallel>], iteration_bounds = array<i64: 2>, scalar_prefetch = 0 : i64, scratch_operands = 0 : i64, tpu.core_type = #tpu.core_type<tc>, window_params = [{transform_indices = @transform_0, window_bounds = array<i64: 1, 352, 128>}, {pipeline_mode = #tpu.pipeline_mode<synchronous>, transform_indices = @transform_1, window_bounds = array<i64: 9, 128, 128>}, {pipeline_mode = #tpu.pipeline_mode<synchronous>, transform_indices = @transform_2, window_bounds = array<i64: 352, 1>}, {transform_indices = @transform_3, window_bounds = array<i64: 1, 352, 128>}, {transform_indices = @transform_4, window_bounds = array<i64: 1, 1, 128>}, {transform_indices = @transform_5, window_bounds = array<i64: 1, 1, 128>}]} {
    %c0 = arith.constant 0 : index
    %c0_0 = arith.constant 0 : index
    %c0_1 = arith.constant 0 : index
    %0 = vector.load %arg1[%c0, %c0_0, %c0_1] : memref<1x352x128xbf16, #tpu.memory_space<vmem>>, vector<1x352x128xbf16>
    %1 = vector.shape_cast %0 : vector<1x352x128xbf16> to vector<352x128xbf16>
    %2 = arith.extf %1 : vector<352x128xbf16> to vector<352x128xf32>
    %cst = arith.constant 0.000000e+00 : f32
    %3 = vector.broadcast %cst : f32 to vector<288x128xf32>
    %4 = vector.extract_strided_slice %2 {offsets = [12, 0], sizes = [288, 128], strides = [1, 1]} : vector<352x128xf32> to vector<288x128xf32>
    %5 = arith.truncf %4 : vector<288x128xf32> to vector<288x128xbf16>
    %c0_2 = arith.constant 0 : index
    %c0_3 = arith.constant 0 : index
    %c0_4 = arith.constant 0 : index
    %6 = vector.load %arg2[%c0_2, %c0_3, %c0_4] : memref<9x128x128xbf16, #tpu.memory_space<vmem>>, vector<1x128x128xbf16>
    %7 = vector.shape_cast %6 : vector<1x128x128xbf16> to vector<128x128xbf16>
    %cst_5 = arith.constant dense<0.000000e+00> : vector<288x128xf32>
    %8 = tpu.matmul %5, %7, %cst_5 {dimension_numbers = #tpu.dot_dimension_numbers<[1], [0], [0], [1], [0, 0, 1, 1], [], []>} : vector<288x128xbf16>, vector<128x128xbf16>, vector<288x128xf32> -> vector<288x128xf32>
    %9 = arith.addf %3, %8 : vector<288x128xf32>
    %10 = vector.extract_strided_slice %2 {offsets = [13, 0], sizes = [288, 128], strides = [1, 1]} : vector<352x128xf32> to vector<288x128xf32>
    %11 = arith.truncf %10 : vector<288x128xf32> to vector<288x128xbf16>
    %c1 = arith.constant 1 : index
    %c0_6 = arith.constant 0 : index
    %c0_7 = arith.constant 0 : index
    %12 = vector.load %arg2[%c1, %c0_6, %c0_7] : memref<9x128x128xbf16, #tpu.memory_space<vmem>>, vector<1x128x128xbf16>
    %13 = vector.shape_cast %12 : vector<1x128x128xbf16> to vector<128x128xbf16>
    %cst_8 = arith.constant dense<0.000000e+00> : vector<288x128xf32>
    %14 = tpu.matmul %11, %13, %cst_8 {dimension_numbers = #tpu.dot_dimension_numbers<[1], [0], [0], [1], [0, 0, 1, 1], [], []>} : vector<288x128xbf16>, vector<128x128xbf16>, vector<288x128xf32> -> vector<288x128xf32>
    %15 = arith.addf %9, %14 : vector<288x128xf32>
    %16 = vector.extract_strided_slice %2 {offsets = [14, 0], sizes = [288, 128], strides = [1, 1]} : vector<352x128xf32> to vector<288x128xf32>
    %17 = arith.truncf %16 : vector<288x128xf32> to vector<288x128xbf16>
    %c2 = arith.constant 2 : index
    %c0_9 = arith.constant 0 : index
    %c0_10 = arith.constant 0 : index
    %18 = vector.load %arg2[%c2, %c0_9, %c0_10] : memref<9x128x128xbf16, #tpu.memory_space<vmem>>, vector<1x128x128xbf16>
    %19 = vector.shape_cast %18 : vector<1x128x128xbf16> to vector<128x128xbf16>
    %cst_11 = arith.constant dense<0.000000e+00> : vector<288x128xf32>
    %20 = tpu.matmul %17, %19, %cst_11 {dimension_numbers = #tpu.dot_dimension_numbers<[1], [0], [0], [1], [0, 0, 1, 1], [], []>} : vector<288x128xbf16>, vector<128x128xbf16>, vector<288x128xf32> -> vector<288x128xf32>
    %21 = arith.addf %15, %20 : vector<288x128xf32>
    %22 = vector.extract_strided_slice %2 {offsets = [30, 0], sizes = [288, 128], strides = [1, 1]} : vector<352x128xf32> to vector<288x128xf32>
    %23 = arith.truncf %22 : vector<288x128xf32> to vector<288x128xbf16>
    %c3 = arith.constant 3 : index
    %c0_12 = arith.constant 0 : index
    %c0_13 = arith.constant 0 : index
    %24 = vector.load %arg2[%c3, %c0_12, %c0_13] : memref<9x128x128xbf16, #tpu.memory_space<vmem>>, vector<1x128x128xbf16>
    %25 = vector.shape_cast %24 : vector<1x128x128xbf16> to vector<128x128xbf16>
    %cst_14 = arith.constant dense<0.000000e+00> : vector<288x128xf32>
    %26 = tpu.matmul %23, %25, %cst_14 {dimension_numbers = #tpu.dot_dimension_numbers<[1], [0], [0], [1], [0, 0, 1, 1], [], []>} : vector<288x128xbf16>, vector<128x128xbf16>, vector<288x128xf32> -> vector<288x128xf32>
    %27 = arith.addf %21, %26 : vector<288x128xf32>
    %28 = vector.extract_strided_slice %2 {offsets = [31, 0], sizes = [288, 128], strides = [1, 1]} : vector<352x128xf32> to vector<288x128xf32>
    %29 = arith.truncf %28 : vector<288x128xf32> to vector<288x128xbf16>
    %c4 = arith.constant 4 : index
    %c0_15 = arith.constant 0 : index
    %c0_16 = arith.constant 0 : index
    %30 = vector.load %arg2[%c4, %c0_15, %c0_16] : memref<9x128x128xbf16, #tpu.memory_space<vmem>>, vector<1x128x128xbf16>
    %31 = vector.shape_cast %30 : vector<1x128x128xbf16> to vector<128x128xbf16>
    %cst_17 = arith.constant dense<0.000000e+00> : vector<288x128xf32>
    %32 = tpu.matmul %29, %31, %cst_17 {dimension_numbers = #tpu.dot_dimension_numbers<[1], [0], [0], [1], [0, 0, 1, 1], [], []>} : vector<288x128xbf16>, vector<128x128xbf16>, vector<288x128xf32> -> vector<288x128xf32>
    %33 = arith.addf %27, %32 : vector<288x128xf32>
    %34 = vector.extract_strided_slice %2 {offsets = [32, 0], sizes = [288, 128], strides = [1, 1]} : vector<352x128xf32> to vector<288x128xf32>
    %35 = arith.truncf %34 : vector<288x128xf32> to vector<288x128xbf16>
    %c5 = arith.constant 5 : index
    %c0_18 = arith.constant 0 : index
    %c0_19 = arith.constant 0 : index
    %36 = vector.load %arg2[%c5, %c0_18, %c0_19] : memref<9x128x128xbf16, #tpu.memory_space<vmem>>, vector<1x128x128xbf16>
    %37 = vector.shape_cast %36 : vector<1x128x128xbf16> to vector<128x128xbf16>
    %cst_20 = arith.constant dense<0.000000e+00> : vector<288x128xf32>
    %38 = tpu.matmul %35, %37, %cst_20 {dimension_numbers = #tpu.dot_dimension_numbers<[1], [0], [0], [1], [0, 0, 1, 1], [], []>} : vector<288x128xbf16>, vector<128x128xbf16>, vector<288x128xf32> -> vector<288x128xf32>
    %39 = arith.addf %33, %38 : vector<288x128xf32>
    %40 = vector.extract_strided_slice %2 {offsets = [48, 0], sizes = [288, 128], strides = [1, 1]} : vector<352x128xf32> to vector<288x128xf32>
    %41 = arith.truncf %40 : vector<288x128xf32> to vector<288x128xbf16>
    %c6 = arith.constant 6 : index
    %c0_21 = arith.constant 0 : index
    %c0_22 = arith.constant 0 : index
    %42 = vector.load %arg2[%c6, %c0_21, %c0_22] : memref<9x128x128xbf16, #tpu.memory_space<vmem>>, vector<1x128x128xbf16>
    %43 = vector.shape_cast %42 : vector<1x128x128xbf16> to vector<128x128xbf16>
    %cst_23 = arith.constant dense<0.000000e+00> : vector<288x128xf32>
    %44 = tpu.matmul %41, %43, %cst_23 {dimension_numbers = #tpu.dot_dimension_numbers<[1], [0], [0], [1], [0, 0, 1, 1], [], []>} : vector<288x128xbf16>, vector<128x128xbf16>, vector<288x128xf32> -> vector<288x128xf32>
    %45 = arith.addf %39, %44 : vector<288x128xf32>
    %46 = vector.extract_strided_slice %2 {offsets = [49, 0], sizes = [288, 128], strides = [1, 1]} : vector<352x128xf32> to vector<288x128xf32>
    %47 = arith.truncf %46 : vector<288x128xf32> to vector<288x128xbf16>
    %c7 = arith.constant 7 : index
    %c0_24 = arith.constant 0 : index
    %c0_25 = arith.constant 0 : index
    %48 = vector.load %arg2[%c7, %c0_24, %c0_25] : memref<9x128x128xbf16, #tpu.memory_space<vmem>>, vector<1x128x128xbf16>
    %49 = vector.shape_cast %48 : vector<1x128x128xbf16> to vector<128x128xbf16>
    %cst_26 = arith.constant dense<0.000000e+00> : vector<288x128xf32>
    %50 = tpu.matmul %47, %49, %cst_26 {dimension_numbers = #tpu.dot_dimension_numbers<[1], [0], [0], [1], [0, 0, 1, 1], [], []>} : vector<288x128xbf16>, vector<128x128xbf16>, vector<288x128xf32> -> vector<288x128xf32>
    %51 = arith.addf %45, %50 : vector<288x128xf32>
    %52 = vector.extract_strided_slice %2 {offsets = [50, 0], sizes = [288, 128], strides = [1, 1]} : vector<352x128xf32> to vector<288x128xf32>
    %53 = arith.truncf %52 : vector<288x128xf32> to vector<288x128xbf16>
    %c8 = arith.constant 8 : index
    %c0_27 = arith.constant 0 : index
    %c0_28 = arith.constant 0 : index
    %54 = vector.load %arg2[%c8, %c0_27, %c0_28] : memref<9x128x128xbf16, #tpu.memory_space<vmem>>, vector<1x128x128xbf16>
    %55 = vector.shape_cast %54 : vector<1x128x128xbf16> to vector<128x128xbf16>
    %cst_29 = arith.constant dense<0.000000e+00> : vector<288x128xf32>
    %56 = tpu.matmul %53, %55, %cst_29 {dimension_numbers = #tpu.dot_dimension_numbers<[1], [0], [0], [1], [0, 0, 1, 1], [], []>} : vector<288x128xbf16>, vector<128x128xbf16>, vector<288x128xf32> -> vector<288x128xf32>
    %57 = arith.addf %51, %56 : vector<288x128xf32>
    %c32 = arith.constant 32 : index
    %c0_30 = arith.constant 0 : index
    %58 = vector.load %arg3[%c32, %c0_30] : memref<352x1xf32, #tpu.memory_space<vmem>>, vector<288x1xf32>
    %59 = vector.broadcast %58 : vector<288x1xf32> to vector<288x128xf32>
    %60 = arith.mulf %57, %59 : vector<288x128xf32>
    %cst_31 = arith.constant dense<0.000000e+00> : vector<128xf32>
    %61 = vector.multi_reduction <add>, %60, %cst_31 [0] : vector<288x128xf32> to vector<128xf32>
    %62 = vector.shape_cast %61 : vector<128xf32> to vector<1x128xf32>
    %c0_32 = arith.constant 0 : index
    %c0_33 = arith.constant 0 : index
    %c0_34 = arith.constant 0 : index
    %63 = vector.load %arg5[%c0_32, %c0_33, %c0_34] : memref<1x1x128xf32, #tpu.memory_space<vmem>>, vector<1x1x128xf32>
    %64 = vector.shape_cast %63 : vector<1x1x128xf32> to vector<1x128xf32>
    %65 = vector.shape_cast %62 : vector<1x128xf32> to vector<1x1x128xf32>
    tpu.vector_store %arg5[%c0_32, %c0_33, %c0_34], %65 {strides = array<i32>} : memref<1x1x128xf32, #tpu.memory_space<vmem>>, vector<1x1x128xf32>,
    %66 = arith.mulf %60, %57 : vector<288x128xf32>
    %cst_35 = arith.constant dense<0.000000e+00> : vector<128xf32>
    %67 = vector.multi_reduction <add>, %66, %cst_35 [0] : vector<288x128xf32> to vector<128xf32>
    %68 = vector.shape_cast %67 : vector<128xf32> to vector<1x128xf32>
    %c0_36 = arith.constant 0 : index
    %c0_37 = arith.constant 0 : index
    %c0_38 = arith.constant 0 : index
    %69 = vector.load %arg6[%c0_36, %c0_37, %c0_38] : memref<1x1x128xf32, #tpu.memory_space<vmem>>, vector<1x1x128xf32>
    %70 = vector.shape_cast %69 : vector<1x1x128xf32> to vector<1x128xf32>
    %71 = vector.shape_cast %68 : vector<1x128xf32> to vector<1x1x128xf32>
    tpu.vector_store %arg6[%c0_36, %c0_37, %c0_38], %71 {strides = array<i32>} : memref<1x1x128xf32, #tpu.memory_space<vmem>>, vector<1x1x128xf32>,
    %cst_39 = arith.constant 0.000000e+00 : bf16
    %72 = vector.broadcast %cst_39 : bf16 to vector<352x128xbf16>
    %c0_40 = arith.constant 0 : index
    %c0_41 = arith.constant 0 : index
    %c0_42 = arith.constant 0 : index
    %73 = vector.load %arg4[%c0_40, %c0_41, %c0_42] : memref<1x352x128xbf16, #tpu.memory_space<vmem>>, vector<1x352x128xbf16>
    %74 = vector.shape_cast %73 : vector<1x352x128xbf16> to vector<352x128xbf16>
    %75 = vector.shape_cast %72 : vector<352x128xbf16> to vector<1x352x128xbf16>
    tpu.vector_store %arg4[%c0_40, %c0_41, %c0_42], %75 {strides = array<i32>} : memref<1x352x128xbf16, #tpu.memory_space<vmem>>, vector<1x352x128xbf16>,
    %76 = arith.truncf %60 : vector<288x128xf32> to vector<288x128xbf16>
    %c0_43 = arith.constant 0 : index
    %c32_44 = arith.constant 32 : index
    %c0_45 = arith.constant 0 : index
    %77 = vector.load %arg4[%c0_43, %c32_44, %c0_45] : memref<1x352x128xbf16, #tpu.memory_space<vmem>>, vector<1x288x128xbf16>
    %78 = vector.shape_cast %77 : vector<1x288x128xbf16> to vector<288x128xbf16>
    %79 = vector.shape_cast %76 : vector<288x128xbf16> to vector<1x288x128xbf16>
    tpu.vector_store %arg4[%c0_43, %c32_44, %c0_45], %79 {strides = array<i32>} : memref<1x352x128xbf16, #tpu.memory_space<vmem>>, vector<1x288x128xbf16>,
    return
  }
  func.func @transform_0(%arg0: i32) -> (i32, i32, i32) {
    %c0_i32 = arith.constant 0 : i32
    %c0_i32_0 = arith.constant 0 : i32
    %c0_i32_1 = arith.constant 0 : i32
    return %arg0, %c0_i32, %c0_i32_0 : i32, i32, i32
  }
  func.func @transform_1(%arg0: i32) -> (i32, i32, i32) {
    %c0_i32 = arith.constant 0 : i32
    %c0_i32_0 = arith.constant 0 : i32
    %c0_i32_1 = arith.constant 0 : i32
    %c0_i32_2 = arith.constant 0 : i32
    return %c0_i32, %c0_i32_0, %c0_i32_1 : i32, i32, i32
  }
  func.func @transform_2(%arg0: i32) -> (i32, i32) {
    %c0_i32 = arith.constant 0 : i32
    %c0_i32_0 = arith.constant 0 : i32
    %c0_i32_1 = arith.constant 0 : i32
    return %c0_i32, %c0_i32_0 : i32, i32
  }
  func.func @transform_3(%arg0: i32) -> (i32, i32, i32) {
    %c0_i32 = arith.constant 0 : i32
    %c0_i32_0 = arith.constant 0 : i32
    %c0_i32_1 = arith.constant 0 : i32
    return %arg0, %c0_i32, %c0_i32_0 : i32, i32, i32
  }
  func.func @transform_4(%arg0: i32) -> (i32, i32, i32) {
    %c0_i32 = arith.constant 0 : i32
    %c0_i32_0 = arith.constant 0 : i32
    %c0_i32_1 = arith.constant 0 : i32
    return %arg0, %c0_i32, %c0_i32_0 : i32, i32, i32
  }
  func.func @transform_5(%arg0: i32) -> (i32, i32, i32) {
    %c0_i32 = arith.constant 0 : i32
    %c0_i32_0 = arith.constant 0 : i32
    %c0_i32_1 = arith.constant 0 : i32
    return %arg0, %c0_i32, %c0_i32_0 : i32, i32, i32
  }
}

module attributes {stable_mosaic.version = 11 : i64} {
  func.func @_bn_apply_kernel(%arg0: i32, %arg1: memref<1x352x128xbf16, #tpu.memory_space<vmem>>, %arg2: memref<1x352x128xbf16, #tpu.memory_space<vmem>>, %arg3: memref<1x128xf32, #tpu.memory_space<vmem>>, %arg4: memref<1x128xf32, #tpu.memory_space<vmem>>, %arg5: memref<352x1xf32, #tpu.memory_space<vmem>>, %arg6: memref<1x352x128xbf16, #tpu.memory_space<vmem>>) attributes {dimension_semantics = [#tpu.dimension_semantics<parallel>], iteration_bounds = array<i64: 2>, scalar_prefetch = 0 : i64, scratch_operands = 0 : i64, tpu.core_type = #tpu.core_type<tc>, window_params = [{transform_indices = @transform_0, window_bounds = array<i64: 1, 352, 128>}, {transform_indices = @transform_1, window_bounds = array<i64: 1, 352, 128>}, {pipeline_mode = #tpu.pipeline_mode<synchronous>, transform_indices = @transform_2, window_bounds = array<i64: 1, 128>}, {pipeline_mode = #tpu.pipeline_mode<synchronous>, transform_indices = @transform_3, window_bounds = array<i64: 1, 128>}, {pipeline_mode = #tpu.pipeline_mode<synchronous>, transform_indices = @transform_4, window_bounds = array<i64: 352, 1>}, {transform_indices = @transform_5, window_bounds = array<i64: 1, 352, 128>}]} {
    %c0 = arith.constant 0 : index
    %c0_0 = arith.constant 0 : index
    %c0_1 = arith.constant 0 : index
    %0 = vector.load %arg1[%c0, %c0_0, %c0_1] : memref<1x352x128xbf16, #tpu.memory_space<vmem>>, vector<1x352x128xbf16>
    %1 = vector.shape_cast %0 : vector<1x352x128xbf16> to vector<352x128xbf16>
    %2 = arith.extf %1 : vector<352x128xbf16> to vector<352x128xf32>
    %c0_2 = arith.constant 0 : index
    %c0_3 = arith.constant 0 : index
    %3 = vector.load %arg3[%c0_2, %c0_3] : memref<1x128xf32, #tpu.memory_space<vmem>>, vector<1x128xf32>
    %4 = vector.broadcast %3 : vector<1x128xf32> to vector<352x128xf32>
    %5 = arith.mulf %2, %4 : vector<352x128xf32>
    %c0_4 = arith.constant 0 : index
    %c0_5 = arith.constant 0 : index
    %6 = vector.load %arg4[%c0_4, %c0_5] : memref<1x128xf32, #tpu.memory_space<vmem>>, vector<1x128xf32>
    %7 = vector.broadcast %6 : vector<1x128xf32> to vector<352x128xf32>
    %8 = arith.addf %5, %7 : vector<352x128xf32>
    %c0_6 = arith.constant 0 : index
    %c0_7 = arith.constant 0 : index
    %c0_8 = arith.constant 0 : index
    %9 = vector.load %arg2[%c0_6, %c0_7, %c0_8] : memref<1x352x128xbf16, #tpu.memory_space<vmem>>, vector<1x352x128xbf16>
    %10 = vector.shape_cast %9 : vector<1x352x128xbf16> to vector<352x128xbf16>
    %11 = arith.extf %10 : vector<352x128xbf16> to vector<352x128xf32>
    %12 = arith.addf %8, %11 : vector<352x128xf32>
    %c0_9 = arith.constant 0 : index
    %c0_10 = arith.constant 0 : index
    %13 = vector.load %arg5[%c0_9, %c0_10] : memref<352x1xf32, #tpu.memory_space<vmem>>, vector<352x1xf32>
    %14 = vector.broadcast %13 : vector<352x1xf32> to vector<352x128xf32>
    %15 = arith.mulf %12, %14 : vector<352x128xf32>
    %16 = arith.truncf %15 : vector<352x128xf32> to vector<352x128xbf16>
    %c0_11 = arith.constant 0 : index
    %c0_12 = arith.constant 0 : index
    %c0_13 = arith.constant 0 : index
    %17 = vector.load %arg6[%c0_11, %c0_12, %c0_13] : memref<1x352x128xbf16, #tpu.memory_space<vmem>>, vector<1x352x128xbf16>
    %18 = vector.shape_cast %17 : vector<1x352x128xbf16> to vector<352x128xbf16>
    %19 = vector.shape_cast %16 : vector<352x128xbf16> to vector<1x352x128xbf16>
    tpu.vector_store %arg6[%c0_11, %c0_12, %c0_13], %19 {strides = array<i32>} : memref<1x352x128xbf16, #tpu.memory_space<vmem>>, vector<1x352x128xbf16>,
    return
  }
  func.func @transform_0(%arg0: i32) -> (i32, i32, i32) {
    %c0_i32 = arith.constant 0 : i32
    %c0_i32_0 = arith.constant 0 : i32
    %c0_i32_1 = arith.constant 0 : i32
    return %arg0, %c0_i32, %c0_i32_0 : i32, i32, i32
  }
  func.func @transform_1(%arg0: i32) -> (i32, i32, i32) {
    %c0_i32 = arith.constant 0 : i32
    %c0_i32_0 = arith.constant 0 : i32
    %c0_i32_1 = arith.constant 0 : i32
    return %arg0, %c0_i32, %c0_i32_0 : i32, i32, i32
  }
  func.func @transform_2(%arg0: i32) -> (i32, i32) {
    %c0_i32 = arith.constant 0 : i32
    %c0_i32_0 = arith.constant 0 : i32
    %c0_i32_1 = arith.constant 0 : i32
    return %c0_i32, %c0_i32_0 : i32, i32
  }
  func.func @transform_3(%arg0: i32) -> (i32, i32) {
    %c0_i32 = arith.constant 0 : i32
    %c0_i32_0 = arith.constant 0 : i32
    %c0_i32_1 = arith.constant 0 : i32
    return %c0_i32, %c0_i32_0 : i32, i32
  }
  func.func @transform_4(%arg0: i32) -> (i32, i32) {
    %c0_i32 = arith.constant 0 : i32
    %c0_i32_0 = arith.constant 0 : i32
    %c0_i32_1 = arith.constant 0 : i32
    return %c0_i32, %c0_i32_0 : i32, i32
  }
  func.func @transform_5(%arg0: i32) -> (i32, i32, i32) {
    %c0_i32 = arith.constant 0 : i32
    %c0_i32_0 = arith.constant 0 : i32
    %c0_i32_1 = arith.constant 0 : i32
    return %arg0, %c0_i32, %c0_i32_0 : i32, i32, i32
  }
}

module attributes {stable_mosaic.version = 11 : i64} {
  func.func @_bn_apply_kernel(%arg0: i32, %arg1: memref<1x352x128xbf16, #tpu.memory_space<vmem>>, %arg2: memref<1x352x128xbf16, #tpu.memory_space<vmem>>, %arg3: memref<1x128xf32, #tpu.memory_space<vmem>>, %arg4: memref<1x128xf32, #tpu.memory_space<vmem>>, %arg5: memref<352x1xf32, #tpu.memory_space<vmem>>, %arg6: memref<1x352x128xf32, #tpu.memory_space<vmem>>) attributes {dimension_semantics = [#tpu.dimension_semantics<parallel>], iteration_bounds = array<i64: 2>, scalar_prefetch = 0 : i64, scratch_operands = 0 : i64, tpu.core_type = #tpu.core_type<tc>, window_params = [{transform_indices = @transform_0, window_bounds = array<i64: 1, 352, 128>}, {transform_indices = @transform_1, window_bounds = array<i64: 1, 352, 128>}, {pipeline_mode = #tpu.pipeline_mode<synchronous>, transform_indices = @transform_2, window_bounds = array<i64: 1, 128>}, {pipeline_mode = #tpu.pipeline_mode<synchronous>, transform_indices = @transform_3, window_bounds = array<i64: 1, 128>}, {pipeline_mode = #tpu.pipeline_mode<synchronous>, transform_indices = @transform_4, window_bounds = array<i64: 352, 1>}, {transform_indices = @transform_5, window_bounds = array<i64: 1, 352, 128>}]} {
    %c0 = arith.constant 0 : index
    %c0_0 = arith.constant 0 : index
    %c0_1 = arith.constant 0 : index
    %0 = vector.load %arg1[%c0, %c0_0, %c0_1] : memref<1x352x128xbf16, #tpu.memory_space<vmem>>, vector<1x352x128xbf16>
    %1 = vector.shape_cast %0 : vector<1x352x128xbf16> to vector<352x128xbf16>
    %2 = arith.extf %1 : vector<352x128xbf16> to vector<352x128xf32>
    %c0_2 = arith.constant 0 : index
    %c0_3 = arith.constant 0 : index
    %3 = vector.load %arg3[%c0_2, %c0_3] : memref<1x128xf32, #tpu.memory_space<vmem>>, vector<1x128xf32>
    %4 = vector.broadcast %3 : vector<1x128xf32> to vector<352x128xf32>
    %5 = arith.mulf %2, %4 : vector<352x128xf32>
    %c0_4 = arith.constant 0 : index
    %c0_5 = arith.constant 0 : index
    %6 = vector.load %arg4[%c0_4, %c0_5] : memref<1x128xf32, #tpu.memory_space<vmem>>, vector<1x128xf32>
    %7 = vector.broadcast %6 : vector<1x128xf32> to vector<352x128xf32>
    %8 = arith.addf %5, %7 : vector<352x128xf32>
    %c0_6 = arith.constant 0 : index
    %c0_7 = arith.constant 0 : index
    %c0_8 = arith.constant 0 : index
    %9 = vector.load %arg2[%c0_6, %c0_7, %c0_8] : memref<1x352x128xbf16, #tpu.memory_space<vmem>>, vector<1x352x128xbf16>
    %10 = vector.shape_cast %9 : vector<1x352x128xbf16> to vector<352x128xbf16>
    %11 = arith.extf %10 : vector<352x128xbf16> to vector<352x128xf32>
    %12 = arith.addf %8, %11 : vector<352x128xf32>
    %c0_9 = arith.constant 0 : index
    %c0_10 = arith.constant 0 : index
    %13 = vector.load %arg5[%c0_9, %c0_10] : memref<352x1xf32, #tpu.memory_space<vmem>>, vector<352x1xf32>
    %14 = vector.broadcast %13 : vector<352x1xf32> to vector<352x128xf32>
    %15 = arith.mulf %12, %14 : vector<352x128xf32>
    %c0_11 = arith.constant 0 : index
    %c0_12 = arith.constant 0 : index
    %c0_13 = arith.constant 0 : index
    %16 = vector.load %arg6[%c0_11, %c0_12, %c0_13] : memref<1x352x128xf32, #tpu.memory_space<vmem>>, vector<1x352x128xf32>
    %17 = vector.shape_cast %16 : vector<1x352x128xf32> to vector<352x128xf32>
    %18 = vector.shape_cast %15 : vector<352x128xf32> to vector<1x352x128xf32>
    tpu.vector_store %arg6[%c0_11, %c0_12, %c0_13], %18 {strides = array<i32>} : memref<1x352x128xf32, #tpu.memory_space<vmem>>, vector<1x352x128xf32>,
    return
  }
  func.func @transform_0(%arg0: i32) -> (i32, i32, i32) {
    %c0_i32 = arith.constant 0 : i32
    %c0_i32_0 = arith.constant 0 : i32
    %c0_i32_1 = arith.constant 0 : i32
    return %arg0, %c0_i32, %c0_i32_0 : i32, i32, i32
  }
  func.func @transform_1(%arg0: i32) -> (i32, i32, i32) {
    %c0_i32 = arith.constant 0 : i32
    %c0_i32_0 = arith.constant 0 : i32
    %c0_i32_1 = arith.constant 0 : i32
    return %arg0, %c0_i32, %c0_i32_0 : i32, i32, i32
  }
  func.func @transform_2(%arg0: i32) -> (i32, i32) {
    %c0_i32 = arith.constant 0 : i32
    %c0_i32_0 = arith.constant 0 : i32
    %c0_i32_1 = arith.constant 0 : i32
    return %c0_i32, %c0_i32_0 : i32, i32
  }
  func.func @transform_3(%arg0: i32) -> (i32, i32) {
    %c0_i32 = arith.constant 0 : i32
    %c0_i32_0 = arith.constant 0 : i32
    %c0_i32_1 = arith.constant 0 : i32
    return %c0_i32, %c0_i32_0 : i32, i32
  }
  func.func @transform_4(%arg0: i32) -> (i32, i32) {
    %c0_i32 = arith.constant 0 : i32
    %c0_i32_0 = arith.constant 0 : i32
    %c0_i32_1 = arith.constant 0 : i32
    return %c0_i32, %c0_i32_0 : i32, i32
  }
  func.func @transform_5(%arg0: i32) -> (i32, i32, i32) {
    %c0_i32 = arith.constant 0 : i32
    %c0_i32_0 = arith.constant 0 : i32
    %c0_i32_1 = arith.constant 0 : i32
    return %arg0, %c0_i32, %c0_i32_0 : i32, i32, i32
  }
}

</mosaic_0001>

<llo_original>
// kernel: basic_block_forward.13
$region0: #{basic_block_forward.13}
  #allocation0 [shape = 'u32[]', space=smem, size = 0x4, offset = 0x4, fixed_abs, tag = 'smem constant byte address 0x4 - core index']
  #allocation1 [shape = 'u32[72,128]{1,0:T(1,128)}', space=vmem, size = 0x9000, scoped, tag = 'internal scratch']
  %s0 = inlined_call_operand.vmem [shape: bf16[2,352,128], index: 0, kind: input, shape index: {}]
  %s1 = inlined_call_operand.vmem [shape: f32[1,128], index: 1, kind: input, shape index: {}]
  %s2 = inlined_call_operand.vmem [shape: f32[1,128], index: 2, kind: input, shape index: {}]
  %s3 = inlined_call_operand.vmem [shape: f32[352,1], index: 3, kind: input, shape index: {}]
  %s4 = inlined_call_operand.vmem [shape: bf16[2,352,128], index: 4, kind: output, shape index: {}]
  %s5 = sld [smem:[#allocation0]]
  $region49: #{basic_block_forward.13} parent=0
    _
  %s7 = ssub.s32 1, %s5
  %s8 = scalar_select 0, %s7, %s5
  loop: start=0, step=1, limit=4
  $region2: #{basic_block_forward.13} parent=0 // loop_pre_header
    _
  $region3: #{basic_block_forward.13} parent=0 // loop_header
    %s10 = sphi 0, %s14
    %p11 = scmp.ge.s32.totalorder %s10, 4
    %s20 = sphi 0, %s22
    %s23 = sphi 0, %s20
    %s24 = sphi 0, %s23
    %s40 = sphi 0, %s24
    %s44 = sphi 0, %s44
    %s46 = sphi 0, %s44
    %s47 = sphi 0, %s46
    %s61 = sphi 0, %s47
    %s65 = sphi 0, %s65
    %s67 = sphi 0, %s65
    %s68 = sphi 0, %s67
    %s82 = sphi 0, %s68
    %s86 = sphi 0, %s86
    %s88 = sphi 0, %s86
    %s89 = sphi 0, %s88
    %s103 = sphi 0, %s89
    %s109 = sphi 0, %s111
    %s112 = sphi 0, %s109
    %s113 = sphi 0, %s112
    %s129 = sphi 0, %s113
  $region4: #{basic_block_forward.13} parent=0 // loop_header_branch
    %13 = sbr.rel (%p11) target = $region8
  $region5: #{basic_block_forward.13} parent=0 // loop_body
    %s15 = ssub.s32 %s10, 1
    %s16 = ssub.s32 %s10, 2
    %s17 = sadd.s32 %s10, 1
    %s18 = ssub.s32 %s10, %s17
    %p19 = scmp.eq.s32.totalorder %s18, 0
    %s21 = sadd.s32 %s20, 1
    %s22 = scalar_select %p19, %s20, %s21
    %p25 = pneg %p19
    %p26 = scmp.eq.s32.totalorder %s10, 1
    %p27 = por %p25, %p26
    %p28 = scmp.ne.s32.totalorder %s20, %s23
    %p29 = scmp.eq.s32.totalorder %s10, 0
    %p30 = por %p28, %p29
    %p31 = scmp.ne.s32.totalorder %s20, %s23
    %p32 = scmp.eq.s32.totalorder %s15, 1
    %p33 = por %p31, %p32
    %p34 = scmp.ne.s32.totalorder %s23, %s24
    %p35 = scmp.eq.s32.totalorder %s15, 0
    %p36 = por %p34, %p35
    %p37 = scmp.ne.s32.totalorder %s23, %s24
    %p38 = scmp.eq.s32.totalorder %s16, 1
    %p39 = por %p37, %p38
    %p41 = scmp.ne.s32.totalorder %s24, %s40
    %p42 = scmp.eq.s32.totalorder %s16, 0
    %p43 = por %p41, %p42
    %s45 = sadd.s32 %s44, 1
    %p48 = scmp.eq.s32.totalorder %s10, 1
    %p49 = scmp.ne.s32.totalorder %s44, %s46
    %p50 = scmp.eq.s32.totalorder %s10, 0
    %p51 = por %p49, %p50
    %p52 = scmp.ne.s32.totalorder %s44, %s46
    %p53 = scmp.eq.s32.totalorder %s15, 1
    %p54 = por %p52, %p53
    %p55 = scmp.ne.s32.totalorder %s46, %s47
    %p56 = scmp.eq.s32.totalorder %s15, 0
    %p57 = por %p55, %p56
    %p58 = scmp.ne.s32.totalorder %s46, %s47
    %p59 = scmp.eq.s32.totalorder %s16, 1
    %p60 = por %p58, %p59
    %p62 = scmp.ne.s32.totalorder %s47, %s61
    %p63 = scmp.eq.s32.totalorder %s16, 0
    %p64 = por %p62, %p63
    %s66 = sadd.s32 %s65, 1
    %p69 = scmp.eq.s32.totalorder %s10, 1
    %p70 = scmp.ne.s32.totalorder %s65, %s67
    %p71 = scmp.eq.s32.totalorder %s10, 0
    %p72 = por %p70, %p71
    %p73 = scmp.ne.s32.totalorder %s65, %s67
    %p74 = scmp.eq.s32.totalorder %s15, 1
    %p75 = por %p73, %p74
    %p76 = scmp.ne.s32.totalorder %s67, %s68
    %p77 = scmp.eq.s32.totalorder %s15, 0
    %p78 = por %p76, %p77
    %p79 = scmp.ne.s32.totalorder %s67, %s68
    %p80 = scmp.eq.s32.totalorder %s16, 1
    %p81 = por %p79, %p80
    %p83 = scmp.ne.s32.totalorder %s68, %s82
    %p84 = scmp.eq.s32.totalorder %s16, 0
    %p85 = por %p83, %p84
    %s87 = sadd.s32 %s86, 1
    %p90 = scmp.eq.s32.totalorder %s10, 1
    %p91 = scmp.ne.s32.totalorder %s86, %s88
    %p92 = scmp.eq.s32.totalorder %s10, 0
    %p93 = por %p91, %p92
    %p94 = scmp.ne.s32.totalorder %s86, %s88
    %p95 = scmp.eq.s32.totalorder %s15, 1
    %p96 = por %p94, %p95
    %p97 = scmp.ne.s32.totalorder %s88, %s89
    %p98 = scmp.eq.s32.totalorder %s15, 0
    %p99 = por %p97, %p98
    %p100 = scmp.ne.s32.totalorder %s88, %s89
    %p101 = scmp.eq.s32.totalorder %s16, 1
    %p102 = por %p100, %p101
    %p104 = scmp.ne.s32.totalorder %s89, %s103
    %p105 = scmp.eq.s32.totalorder %s16, 0
    %p106 = por %p104, %p105
    %s107 = ssub.s32 %s10, %s17
    %p108 = scmp.eq.s32.totalorder %s107, 0
    %s110 = sadd.s32 %s109, 1
    %s111 = scalar_select %p108, %s109, %s110
    %p114 = pneg %p108
    %p115 = scmp.eq.s32.totalorder %s10, 1
    %p116 = por %p114, %p115
    %p117 = scmp.ne.s32.totalorder %s109, %s112
    %p118 = scmp.eq.s32.totalorder %s10, 0
    %p119 = por %p117, %p118
    %p120 = scmp.ne.s32.totalorder %s109, %s112
    %p121 = scmp.eq.s32.totalorder %s15, 1
    %p122 = por %p120, %p121
    %p123 = scmp.ne.s32.totalorder %s112, %s113
    %p124 = scmp.eq.s32.totalorder %s15, 0
    %p125 = por %p123, %p124
    %p126 = scmp.ne.s32.totalorder %s112, %s113
    %p127 = scmp.eq.s32.totalorder %s16, 1
    %p128 = por %p126, %p127
    %p130 = scmp.ne.s32.totalorder %s113, %s129
    %p131 = scmp.eq.s32.totalorder %s16, 0
    %p132 = por %p130, %p131
    %p133 = scmp.le.s32.totalorder 1, %s10
    %p134 = scmp.lt.s32.totalorder %s10, 3
    %p135 = pnand %p133, %p134
    %p136 = pneg %p135
    // Predicated region
    $region9: #{basic_block_forward.13} parent=5 // pred_check
      _
    $region10: #{basic_block_forward.13} parent=5 // pred_check_branch
      %138 = sbr.rel (%p135) target = $region12
    $region11: #{basic_block_forward.13} parent=5 // pred_region
      %s139 = ssub.s32 %s10, 1
      // Predicated region
      $region13: #{basic_block_forward.13} parent=11 // pred_check
        %p140 = pneg %p57
      $region14: #{basic_block_forward.13} parent=11 // pred_check_branch
        %142 = sbr.rel (%p140) target = $region16
      $region15: #{basic_block_forward.13} parent=11 // pred_region
        _
      $region16: #{basic_block_forward.13} parent=11 // pred_fallthru
        _
      // Predicated region
      $region17: #{basic_block_forward.13} parent=11 // pred_check
        %p143 = pneg %p78
      $region18: #{basic_block_forward.13} parent=11 // pred_check_branch
        %145 = sbr.rel (%p143) target = $region20
      $region19: #{basic_block_forward.13} parent=11 // pred_region
        _
      $region20: #{basic_block_forward.13} parent=11 // pred_fallthru
        _
      // Predicated region
      $region21: #{basic_block_forward.13} parent=11 // pred_check
        %p146 = pneg %p99
      $region22: #{basic_block_forward.13} parent=11 // pred_check_branch
        %148 = sbr.rel (%p146) target = $region24
      $region23: #{basic_block_forward.13} parent=11 // pred_region
        _
      $region24: #{basic_block_forward.13} parent=11 // pred_fallthru
        _
    $region12: #{basic_block_forward.13} parent=5 // pred_fallthru
      _
    %p149 = scmp.lt.s32.totalorder %s10, 2
    // Predicated region
    $region25: #{basic_block_forward.13} parent=5 // pred_check
      %p150 = pneg %p149
    $region26: #{basic_block_forward.13} parent=5 // pred_check_branch
      %152 = sbr.rel (%p150) target = $region28
    $region27: #{basic_block_forward.13} parent=5 // pred_region
      // Predicated region
      $region29: #{basic_block_forward.13} parent=27 // pred_check
        %p153 = pneg %p30
      $region30: #{basic_block_forward.13} parent=27 // pred_check_branch
        %155 = sbr.rel (%p153) target = $region32
      $region31: #{basic_block_forward.13} parent=27 // pred_region
        %p156 = scmp.lt.s32.totalorder %s10, 1
        %s157 = scalar_select %p156, %s10, 1
        %s158 = smul.addr %s157, 44
        %s159 = smul.addr %s158, 4
        %s160 = scalar_lea.vmem %s0, %s159
      $region32: #{basic_block_forward.13} parent=27 // pred_fallthru
        _
    $region28: #{basic_block_forward.13} parent=5 // pred_fallthru
      _
    %p161 = scmp.le.s32.totalorder 1, %s10
    %p162 = scmp.lt.s32.totalorder %s10, 3
    %p163 = pnand %p161, %p162
    %p164 = pneg %p163
    // Predicated region
    $region33: #{basic_block_forward.13} parent=5 // pred_check
      _
    $region34: #{basic_block_forward.13} parent=5 // pred_check_branch
      %166 = sbr.rel (%p163) target = $region36
    $region35: #{basic_block_forward.13} parent=5 // pred_region
      %s167 = ssub.s32 %s10, 1
      %p168 = scmp.lt.s32.totalorder %s15, 1
      %s169 = scalar_select %p168, %s15, 1
      %s170 = smul.addr %s169, 44
      %s171 = smul.addr %s170, 4
      %s172 = scalar_lea.vmem %s0, %s171
      %p173 = pneg %p36
      %p174 = pneg %p33
      %p175 = pneg %p57
      %p176 = pneg %p54
      %p177 = pneg %p78
      %p178 = pneg %p75
      %p179 = pneg %p99
      %p180 = pneg %p96
      %p181 = pneg %p125
      %p182 = pneg %p122
      %p183 = scmp.lt.s32.totalorder %s15, 1
      %s184 = scalar_select %p183, %s15, 1
      %s185 = smul.addr %s184, 44
      %s186 = smul.addr %s185, 4
      %s187 = scalar_lea.vmem %s4, %s186
      %p188 = scmp.lt.s32.totalorder %s15, 1
      %s189 = scalar_select %p188, %s15, 1
      %s190 = smul.addr %s189, 44
      %s191 = smul.addr %s190, 4
      %s192 = scalar_lea.vmem %s0, %s191
      %p193 = scmp.lt.s32.totalorder %s15, 1
      %s194 = scalar_select %p193, %s15, 1
      %s195 = smul.addr %s194, 44
      %s196 = smul.addr %s195, 4
      %s197 = scalar_lea.vmem %s4, %s196
      %v198 = vld [vmem:[%s192] sm:$0xf]
      %v199 = vld [vmem:[%s192 + $0x4] sm:$0xf]
      %v200 = vld [vmem:[%s192 + $0x8] sm:$0xf]
      %v201 = vld [vmem:[%s192 + $0xc] sm:$0xf]
      %v202 = vld [vmem:[%s192 + $0x10] sm:$0xf]
      %v203 = vld [vmem:[%s192 + $0x14] sm:$0xf]
      %v204 = vld [vmem:[%s192 + $0x18] sm:$0xf]
      %v205 = vld [vmem:[%s192 + $0x1c] sm:$0xf]
      %v206 = vld [vmem:[%s192 + $0x20] sm:$0xf]
      %v207 = vld [vmem:[%s192 + $0x24] sm:$0xf]
      %v208 = vld [vmem:[%s192 + $0x28] sm:$0xf]
      %v209 = vld [vmem:[%s192 + $0x2c] sm:$0xf]
      %v210 = vld [vmem:[%s192 + $0x30] sm:$0xf]
      %v211 = vld [vmem:[%s192 + $0x34] sm:$0xf]
      %v212 = vld [vmem:[%s192 + $0x38] sm:$0xf]
      %v213 = vld [vmem:[%s192 + $0x3c] sm:$0xf]
      %v214 = vld [vmem:[%s192 + $0x40] sm:$0xf]
      %v215 = vld [vmem:[%s192 + $0x44] sm:$0xf]
      %v216 = vld [vmem:[%s192 + $0x48] sm:$0xf]
      %v217 = vld [vmem:[%s192 + $0x4c] sm:$0xf]
      %v218 = vld [vmem:[%s192 + $0x50] sm:$0xf]
      %v219 = vld [vmem:[%s192 + $0x54] sm:$0xf]
      %v220 = vld [vmem:[%s192 + $0x58] sm:$0xf]
      %v221 = vld [vmem:[%s192 + $0x5c] sm:$0xf]
      %v222 = vld [vmem:[%s192 + $0x60] sm:$0xf]
      %v223 = vld [vmem:[%s192 + $0x64] sm:$0xf]
      %v224 = vld [vmem:[%s192 + $0x68] sm:$0xf]
      %v225 = vld [vmem:[%s192 + $0x6c] sm:$0xf]
      %v226 = vld [vmem:[%s192 + $0x70] sm:$0xf]
      %v227 = vld [vmem:[%s192 + $0x74] sm:$0xf]
      %v228 = vld [vmem:[%s192 + $0x78] sm:$0xf]
      %v229 = vld [vmem:[%s192 + $0x7c] sm:$0xf]
      %v230 = vld [vmem:[%s192 + $0x80] sm:$0xf]
      %v231 = vld [vmem:[%s192 + $0x84] sm:$0xf]
      %v232 = vld [vmem:[%s192 + $0x88] sm:$0xf]
      %v233 = vld [vmem:[%s192 + $0x8c] sm:$0xf]
      %v234 = vld [vmem:[%s192 + $0x90] sm:$0xf]
      %v235 = vld [vmem:[%s192 + $0x94] sm:$0xf]
      %v236 = vld [vmem:[%s192 + $0x98] sm:$0xf]
      %v237 = vld [vmem:[%s192 + $0x9c] sm:$0xf]
      %v238 = vld [vmem:[%s192 + $0xa0] sm:$0xf]
      %v239 = vld [vmem:[%s192 + $0xa4] sm:$0xf]
      %v240 = vld [vmem:[%s192 + $0xa8] sm:$0xf]
      %v241 = vld [vmem:[%s192 + $0xac] sm:$0xf]
      %v242 = vunpack.c.l.bf16 %v198
      %v243 = vunpack.c.l.bf16 %v199
      %v244 = vunpack.c.l.bf16 %v200
      %v245 = vunpack.c.l.bf16 %v201
      %v246 = vunpack.c.l.bf16 %v202
      %v247 = vunpack.c.l.bf16 %v203
      %v248 = vunpack.c.l.bf16 %v204
      %v249 = vunpack.c.l.bf16 %v205
      %v250 = vunpack.c.l.bf16 %v206
      %v251 = vunpack.c.l.bf16 %v207
      %v252 = vunpack.c.l.bf16 %v208
      %v253 = vunpack.c.l.bf16 %v209
      %v254 = vunpack.c.l.bf16 %v210
      %v255 = vunpack.c.l.bf16 %v211
      %v256 = vunpack.c.l.bf16 %v212
      %v257 = vunpack.c.l.bf16 %v213
      %v258 = vunpack.c.l.bf16 %v214
      %v259 = vunpack.c.l.bf16 %v215
      %v260 = vunpack.c.l.bf16 %v216
      %v261 = vunpack.c.l.bf16 %v217
      %v262 = vunpack.c.l.bf16 %v218
      %v263 = vunpack.c.l.bf16 %v219
      %v264 = vunpack.c.l.bf16 %v220
      %v265 = vunpack.c.l.bf16 %v221
      %v266 = vunpack.c.l.bf16 %v222
      %v267 = vunpack.c.l.bf16 %v223
      %v268 = vunpack.c.l.bf16 %v224
      %v269 = vunpack.c.l.bf16 %v225
      %v270 = vunpack.c.l.bf16 %v226
      %v271 = vunpack.c.l.bf16 %v227
      %v272 = vunpack.c.l.bf16 %v228
      %v273 = vunpack.c.l.bf16 %v229
      %v274 = vunpack.c.l.bf16 %v230
      %v275 = vunpack.c.l.bf16 %v231
      %v276 = vunpack.c.l.bf16 %v232
      %v277 = vunpack.c.l.bf16 %v233
      %v278 = vunpack.c.l.bf16 %v234
      %v279 = vunpack.c.l.bf16 %v235
      %v280 = vunpack.c.l.bf16 %v236
      %v281 = vunpack.c.l.bf16 %v237
      %v282 = vunpack.c.l.bf16 %v238
      %v283 = vunpack.c.l.bf16 %v239
      %v284 = vunpack.c.l.bf16 %v240
      %v285 = vunpack.c.l.bf16 %v241
      %v286 = vld [vmem:[%s1] sm:$0x1]
      %v288 = vperm.slane %v286, 0
      %v290 = vmul.f32 %v242, %v288
      %v291 = vmul.f32 %v243, %v288
      %v292 = vmul.f32 %v244, %v288
      %v293 = vmul.f32 %v245, %v288
      %v294 = vmul.f32 %v246, %v288
      %v295 = vmul.f32 %v247, %v288
      %v296 = vmul.f32 %v248, %v288
      %v297 = vmul.f32 %v249, %v288
      %v298 = vmul.f32 %v250, %v288
      %v299 = vmul.f32 %v251, %v288
      %v300 = vmul.f32 %v252, %v288
      %v301 = vmul.f32 %v253, %v288
      %v302 = vmul.f32 %v254, %v288
      %v303 = vmul.f32 %v255, %v288
      %v304 = vmul.f32 %v256, %v288
      %v305 = vmul.f32 %v257, %v288
      %v306 = vmul.f32 %v258, %v288
      %v307 = vmul.f32 %v259, %v288
      %v308 = vmul.f32 %v260, %v288
      %v309 = vmul.f32 %v261, %v288
      %v310 = vmul.f32 %v262, %v288
      %v311 = vmul.f32 %v263, %v288
      %v312 = vmul.f32 %v264, %v288
      %v313 = vmul.f32 %v265, %v288
      %v314 = vmul.f32 %v266, %v288
      %v315 = vmul.f32 %v267, %v288
      %v316 = vmul.f32 %v268, %v288
      %v317 = vmul.f32 %v269, %v288
      %v318 = vmul.f32 %v270, %v288
      %v319 = vmul.f32 %v271, %v288
      %v320 = vmul.f32 %v272, %v288
      %v321 = vmul.f32 %v273, %v288
      %v322 = vmul.f32 %v274, %v288
      %v323 = vmul.f32 %v275, %v288
      %v324 = vmul.f32 %v276, %v288
      %v325 = vmul.f32 %v277, %v288
      %v326 = vmul.f32 %v278, %v288
      %v327 = vmul.f32 %v279, %v288
      %v328 = vmul.f32 %v280, %v288
      %v329 = vmul.f32 %v281, %v288
      %v330 = vmul.f32 %v282, %v288
      %v331 = vmul.f32 %v283, %v288
      %v332 = vmul.f32 %v284, %v288
      %v333 = vmul.f32 %v285, %v288
      %v334 = vld [vmem:[%s2] sm:$0x1]
      %v336 = vperm.slane %v334, 0
      %v338 = vadd.f32 %v290, %v336
      %v339 = vadd.f32 %v291, %v336
      %v340 = vadd.f32 %v292, %v336
      %v341 = vadd.f32 %v293, %v336
      %v342 = vadd.f32 %v294, %v336
      %v343 = vadd.f32 %v295, %v336
      %v344 = vadd.f32 %v296, %v336
      %v345 = vadd.f32 %v297, %v336
      %v346 = vadd.f32 %v298, %v336
      %v347 = vadd.f32 %v299, %v336
      %v348 = vadd.f32 %v300, %v336
      %v349 = vadd.f32 %v301, %v336
      %v350 = vadd.f32 %v302, %v336
      %v351 = vadd.f32 %v303, %v336
      %v352 = vadd.f32 %v304, %v336
      %v353 = vadd.f32 %v305, %v336
      %v354 = vadd.f32 %v306, %v336
      %v355 = vadd.f32 %v307, %v336
      %v356 = vadd.f32 %v308, %v336
      %v357 = vadd.f32 %v309, %v336
      %v358 = vadd.f32 %v310, %v336
      %v359 = vadd.f32 %v311, %v336
      %v360 = vadd.f32 %v312, %v336
      %v361 = vadd.f32 %v313, %v336
      %v362 = vadd.f32 %v314, %v336
      %v363 = vadd.f32 %v315, %v336
      %v364 = vadd.f32 %v316, %v336
      %v365 = vadd.f32 %v317, %v336
      %v366 = vadd.f32 %v318, %v336
      %v367 = vadd.f32 %v319, %v336
      %v368 = vadd.f32 %v320, %v336
      %v369 = vadd.f32 %v321, %v336
      %v370 = vadd.f32 %v322, %v336
      %v371 = vadd.f32 %v323, %v336
      %v372 = vadd.f32 %v324, %v336
      %v373 = vadd.f32 %v325, %v336
      %v374 = vadd.f32 %v326, %v336
      %v375 = vadd.f32 %v327, %v336
      %v376 = vadd.f32 %v328, %v336
      %v377 = vadd.f32 %v329, %v336
      %v378 = vadd.f32 %v330, %v336
      %v379 = vadd.f32 %v331, %v336
      %v380 = vadd.f32 %v332, %v336
      %v381 = vadd.f32 %v333, %v336
      %v382 = vmax.f32 %v338, 0.0
      %v383 = vmax.f32 %v339, 0.0
      %v384 = vmax.f32 %v340, 0.0
      %v385 = vmax.f32 %v341, 0.0
      %v386 = vmax.f32 %v342, 0.0
      %v387 = vmax.f32 %v343, 0.0
      %v388 = vmax.f32 %v344, 0.0
      %v389 = vmax.f32 %v345, 0.0
      %v390 = vmax.f32 %v346, 0.0
      %v391 = vmax.f32 %v347, 0.0
      %v392 = vmax.f32 %v348, 0.0
      %v393 = vmax.f32 %v349, 0.0
      %v394 = vmax.f32 %v350, 0.0
      %v395 = vmax.f32 %v351, 0.0
      %v396 = vmax.f32 %v352, 0.0
      %v397 = vmax.f32 %v353, 0.0
      %v398 = vmax.f32 %v354, 0.0
      %v399 = vmax.f32 %v355, 0.0
      %v400 = vmax.f32 %v356, 0.0
      %v401 = vmax.f32 %v357, 0.0
      %v402 = vmax.f32 %v358, 0.0
      %v403 = vmax.f32 %v359, 0.0
      %v404 = vmax.f32 %v360, 0.0
      %v405 = vmax.f32 %v361, 0.0
      %v406 = vmax.f32 %v362, 0.0
      %v407 = vmax.f32 %v363, 0.0
      %v408 = vmax.f32 %v364, 0.0
      %v409 = vmax.f32 %v365, 0.0
      %v410 = vmax.f32 %v366, 0.0
      %v411 = vmax.f32 %v367, 0.0
      %v412 = vmax.f32 %v368, 0.0
      %v413 = vmax.f32 %v369, 0.0
      %v414 = vmax.f32 %v370, 0.0
      %v415 = vmax.f32 %v371, 0.0
      %v416 = vmax.f32 %v372, 0.0
      %v417 = vmax.f32 %v373, 0.0
      %v418 = vmax.f32 %v374, 0.0
      %v419 = vmax.f32 %v375, 0.0
      %v420 = vmax.f32 %v376, 0.0
      %v421 = vmax.f32 %v377, 0.0
      %v422 = vmax.f32 %v378, 0.0
      %v423 = vmax.f32 %v379, 0.0
      %v424 = vmax.f32 %v380, 0.0
      %v425 = vmax.f32 %v381, 0.0
      %v426 = vld [vmem:[%s3] sm:$0xff]
      %v427 = vld [vmem:[%s3 + $0x8] sm:$0xff]
      %v428 = vld [vmem:[%s3 + $0x10] sm:$0xff]
      %v429 = vld [vmem:[%s3 + $0x18] sm:$0xff]
      %v430 = vld [vmem:[%s3 + $0x20] sm:$0xff]
      %v431 = vld [vmem:[%s3 + $0x28] sm:$0xff]
      %v432 = vld [vmem:[%s3 + $0x30] sm:$0xff]
      %v433 = vld [vmem:[%s3 + $0x38] sm:$0xff]
      %v434 = vld [vmem:[%s3 + $0x40] sm:$0xff]
      %v435 = vld [vmem:[%s3 + $0x48] sm:$0xff]
      %v436 = vld [vmem:[%s3 + $0x50] sm:$0xff]
      %v437 = vld [vmem:[%s3 + $0x58] sm:$0xff]
      %v438 = vld [vmem:[%s3 + $0x60] sm:$0xff]
      %v439 = vld [vmem:[%s3 + $0x68] sm:$0xff]
      %v440 = vld [vmem:[%s3 + $0x70] sm:$0xff]
      %v441 = vld [vmem:[%s3 + $0x78] sm:$0xff]
      %v442 = vld [vmem:[%s3 + $0x80] sm:$0xff]
      %v443 = vld [vmem:[%s3 + $0x88] sm:$0xff]
      %v444 = vld [vmem:[%s3 + $0x90] sm:$0xff]
      %v445 = vld [vmem:[%s3 + $0x98] sm:$0xff]
      %v446 = vld [vmem:[%s3 + $0xa0] sm:$0xff]
      %v447 = vld [vmem:[%s3 + $0xa8] sm:$0xff]
      %v448 = vld [vmem:[%s3 + $0xb0] sm:$0xff]
      %v449 = vld [vmem:[%s3 + $0xb8] sm:$0xff]
      %v450 = vld [vmem:[%s3 + $0xc0] sm:$0xff]
      %v451 = vld [vmem:[%s3 + $0xc8] sm:$0xff]
      %v452 = vld [vmem:[%s3 + $0xd0] sm:$0xff]
      %v453 = vld [vmem:[%s3 + $0xd8] sm:$0xff]
      %v454 = vld [vmem:[%s3 + $0xe0] sm:$0xff]
      %v455 = vld [vmem:[%s3 + $0xe8] sm:$0xff]
      %v456 = vld [vmem:[%s3 + $0xf0] sm:$0xff]
      %v457 = vld [vmem:[%s3 + $0xf8] sm:$0xff]
      %v458 = vld [vmem:[%s3 + $0x100] sm:$0xff]
      %v459 = vld [vmem:[%s3 + $0x108] sm:$0xff]
      %v460 = vld [vmem:[%s3 + $0x110] sm:$0xff]
      %v461 = vld [vmem:[%s3 + $0x118] sm:$0xff]
      %v462 = vld [vmem:[%s3 + $0x120] sm:$0xff]
      %v463 = vld [vmem:[%s3 + $0x128] sm:$0xff]
      %v464 = vld [vmem:[%s3 + $0x130] sm:$0xff]
      %v465 = vld [vmem:[%s3 + $0x138] sm:$0xff]
      %v466 = vld [vmem:[%s3 + $0x140] sm:$0xff]
      %v467 = vld [vmem:[%s3 + $0x148] sm:$0xff]
      %v468 = vld [vmem:[%s3 + $0x150] sm:$0xff]
      %v469 = vld [vmem:[%s3 + $0x158] sm:$0xff]
      %471 = vset.pattern.permute.xlu0 0
      %472 = vperm.xlu0 %471, %v426
      %v473 = vpop.permute.xlu0 %472
      %476 = vset.pattern.permute.xlu0 0
      %477 = vperm.xlu0 %476, %v427
      %v478 = vpop.permute.xlu0 %477
      %481 = vset.pattern.permute.xlu0 0
      %482 = vperm.xlu0 %481, %v428
      %v483 = vpop.permute.xlu0 %482
      %486 = vset.pattern.permute.xlu0 0
      %487 = vperm.xlu0 %486, %v429
      %v488 = vpop.permute.xlu0 %487
      %491 = vset.pattern.permute.xlu0 0
      %492 = vperm.xlu0 %491, %v430
      %v493 = vpop.permute.xlu0 %492
      %496 = vset.pattern.permute.xlu0 0
      %497 = vperm.xlu0 %496, %v431
      %v498 = vpop.permute.xlu0 %497
      %501 = vset.pattern.permute.xlu0 0
      %502 = vperm.xlu0 %501, %v432
      %v503 = vpop.permute.xlu0 %502
      %506 = vset.pattern.permute.xlu0 0
      %507 = vperm.xlu0 %506, %v433
      %v508 = vpop.permute.xlu0 %507
      %511 = vset.pattern.permute.xlu0 0
      %512 = vperm.xlu0 %511, %v434
      %v513 = vpop.permute.xlu0 %512
      %516 = vset.pattern.permute.xlu0 0
      %517 = vperm.xlu0 %516, %v435
      %v518 = vpop.permute.xlu0 %517
      %521 = vset.pattern.permute.xlu0 0
      %522 = vperm.xlu0 %521, %v436
      %v523 = vpop.permute.xlu0 %522
      %526 = vset.pattern.permute.xlu0 0
      %527 = vperm.xlu0 %526, %v437
      %v528 = vpop.permute.xlu0 %527
      %531 = vset.pattern.permute.xlu0 0
      %532 = vperm.xlu0 %531, %v438
      %v533 = vpop.permute.xlu0 %532
      %536 = vset.pattern.permute.xlu0 0
      %537 = vperm.xlu0 %536, %v439
      %v538 = vpop.permute.xlu0 %537
      %541 = vset.pattern.permute.xlu0 0
      %542 = vperm.xlu0 %541, %v440
      %v543 = vpop.permute.xlu0 %542
      %546 = vset.pattern.permute.xlu0 0
      %547 = vperm.xlu0 %546, %v441
      %v548 = vpop.permute.xlu0 %547
      %551 = vset.pattern.permute.xlu0 0
      %552 = vperm.xlu0 %551, %v442
      %v553 = vpop.permute.xlu0 %552
      %556 = vset.pattern.permute.xlu0 0
      %557 = vperm.xlu0 %556, %v443
      %v558 = vpop.permute.xlu0 %557
      %561 = vset.pattern.permute.xlu0 0
      %562 = vperm.xlu0 %561, %v444
      %v563 = vpop.permute.xlu0 %562
      %566 = vset.pattern.permute.xlu0 0
      %567 = vperm.xlu0 %566, %v445
      %v568 = vpop.permute.xlu0 %567
      %571 = vset.pattern.permute.xlu0 0
      %572 = vperm.xlu0 %571, %v446
      %v573 = vpop.permute.xlu0 %572
      %576 = vset.pattern.permute.xlu0 0
      %577 = vperm.xlu0 %576, %v447
      %v578 = vpop.permute.xlu0 %577
      %581 = vset.pattern.permute.xlu0 0
      %582 = vperm.xlu0 %581, %v448
      %v583 = vpop.permute.xlu0 %582
      %586 = vset.pattern.permute.xlu0 0
      %587 = vperm.xlu0 %586, %v449
      %v588 = vpop.permute.xlu0 %587
      %591 = vset.pattern.permute.xlu0 0
      %592 = vperm.xlu0 %591, %v450
      %v593 = vpop.permute.xlu0 %592
      %596 = vset.pattern.permute.xlu0 0
      %597 = vperm.xlu0 %596, %v451
      %v598 = vpop.permute.xlu0 %597
      %601 = vset.pattern.permute.xlu0 0
      %602 = vperm.xlu0 %601, %v452
      %v603 = vpop.permute.xlu0 %602
      %606 = vset.pattern.permute.xlu0 0
      %607 = vperm.xlu0 %606, %v453
      %v608 = vpop.permute.xlu0 %607
      %611 = vset.pattern.permute.xlu0 0
      %612 = vperm.xlu0 %611, %v454
      %v613 = vpop.permute.xlu0 %612
      %616 = vset.pattern.permute.xlu0 0
      %617 = vperm.xlu0 %616, %v455
      %v618 = vpop.permute.xlu0 %617
      %621 = vset.pattern.permute.xlu0 0
      %622 = vperm.xlu0 %621, %v456
      %v623 = vpop.permute.xlu0 %622
      %626 = vset.pattern.permute.xlu0 0
      %627 = vperm.xlu0 %626, %v457
      %v628 = vpop.permute.xlu0 %627
      %631 = vset.pattern.permute.xlu0 0
      %632 = vperm.xlu0 %631, %v458
      %v633 = vpop.permute.xlu0 %632
      %636 = vset.pattern.permute.xlu0 0
      %637 = vperm.xlu0 %636, %v459
      %v638 = vpop.permute.xlu0 %637
      %641 = vset.pattern.permute.xlu0 0
      %642 = vperm.xlu0 %641, %v460
      %v643 = vpop.permute.xlu0 %642
      %646 = vset.pattern.permute.xlu0 0
      %647 = vperm.xlu0 %646, %v461
      %v648 = vpop.permute.xlu0 %647
      %651 = vset.pattern.permute.xlu0 0
      %652 = vperm.xlu0 %651, %v462
      %v653 = vpop.permute.xlu0 %652
      %656 = vset.pattern.permute.xlu0 0
      %657 = vperm.xlu0 %656, %v463
      %v658 = vpop.permute.xlu0 %657
      %661 = vset.pattern.permute.xlu0 0
      %662 = vperm.xlu0 %661, %v464
      %v663 = vpop.permute.xlu0 %662
      %666 = vset.pattern.permute.xlu0 0
      %667 = vperm.xlu0 %666, %v465
      %v668 = vpop.permute.xlu0 %667
      %671 = vset.pattern.permute.xlu0 0
      %672 = vperm.xlu0 %671, %v466
      %v673 = vpop.permute.xlu0 %672
      %676 = vset.pattern.permute.xlu0 0
      %677 = vperm.xlu0 %676, %v467
      %v678 = vpop.permute.xlu0 %677
      %681 = vset.pattern.permute.xlu0 0
      %682 = vperm.xlu0 %681, %v468
      %v683 = vpop.permute.xlu0 %682
      %686 = vset.pattern.permute.xlu0 0
      %687 = vperm.xlu0 %686, %v469
      %v688 = vpop.permute.xlu0 %687
      %v690 = vmul.f32 %v382, %v473
      %v691 = vmul.f32 %v383, %v478
      %v692 = vmul.f32 %v384, %v483
      %v693 = vmul.f32 %v385, %v488
      %v694 = vmul.f32 %v386, %v493
      %v695 = vmul.f32 %v387, %v498
      %v696 = vmul.f32 %v388, %v503
      %v697 = vmul.f32 %v389, %v508
      %v698 = vmul.f32 %v390, %v513
      %v699 = vmul.f32 %v391, %v518
      %v700 = vmul.f32 %v392, %v523
      %v701 = vmul.f32 %v393, %v528
      %v702 = vmul.f32 %v394, %v533
      %v703 = vmul.f32 %v395, %v538
      %v704 = vmul.f32 %v396, %v543
      %v705 = vmul.f32 %v397, %v548
      %v706 = vmul.f32 %v398, %v553
      %v707 = vmul.f32 %v399, %v558
      %v708 = vmul.f32 %v400, %v563
      %v709 = vmul.f32 %v401, %v568
      %v710 = vmul.f32 %v402, %v573
      %v711 = vmul.f32 %v403, %v578
      %v712 = vmul.f32 %v404, %v583
      %v713 = vmul.f32 %v405, %v588
      %v714 = vmul.f32 %v406, %v593
      %v715 = vmul.f32 %v407, %v598
      %v716 = vmul.f32 %v408, %v603
      %v717 = vmul.f32 %v409, %v608
      %v718 = vmul.f32 %v410, %v613
      %v719 = vmul.f32 %v411, %v618
      %v720 = vmul.f32 %v412, %v623
      %v721 = vmul.f32 %v413, %v628
      %v722 = vmul.f32 %v414, %v633
      %v723 = vmul.f32 %v415, %v638
      %v724 = vmul.f32 %v416, %v643
      %v725 = vmul.f32 %v417, %v648
      %v726 = vmul.f32 %v418, %v653
      %v727 = vmul.f32 %v419, %v658
      %v728 = vmul.f32 %v420, %v663
      %v729 = vmul.f32 %v421, %v668
      %v730 = vmul.f32 %v422, %v673
      %v731 = vmul.f32 %v423, %v678
      %v732 = vmul.f32 %v424, %v683
      %v733 = vmul.f32 %v425, %v688
      %v734 = vpack.c.bf16 %v690, %v690
      %v735 = vpack.c.bf16 %v691, %v691
      %v736 = vpack.c.bf16 %v692, %v692
      %v737 = vpack.c.bf16 %v693, %v693
      %v738 = vpack.c.bf16 %v694, %v694
      %v739 = vpack.c.bf16 %v695, %v695
      %v740 = vpack.c.bf16 %v696, %v696
      %v741 = vpack.c.bf16 %v697, %v697
      %v742 = vpack.c.bf16 %v698, %v698
      %v743 = vpack.c.bf16 %v699, %v699
      %v744 = vpack.c.bf16 %v700, %v700
      %v745 = vpack.c.bf16 %v701, %v701
      %v746 = vpack.c.bf16 %v702, %v702
      %v747 = vpack.c.bf16 %v703, %v703
      %v748 = vpack.c.bf16 %v704, %v704
      %v749 = vpack.c.bf16 %v705, %v705
      %v750 = vpack.c.bf16 %v706, %v706
      %v751 = vpack.c.bf16 %v707, %v707
      %v752 = vpack.c.bf16 %v708, %v708
      %v753 = vpack.c.bf16 %v709, %v709
      %v754 = vpack.c.bf16 %v710, %v710
      %v755 = vpack.c.bf16 %v711, %v711
      %v756 = vpack.c.bf16 %v712, %v712
      %v757 = vpack.c.bf16 %v713, %v713
      %v758 = vpack.c.bf16 %v714, %v714
      %v759 = vpack.c.bf16 %v715, %v715
      %v760 = vpack.c.bf16 %v716, %v716
      %v761 = vpack.c.bf16 %v717, %v717
      %v762 = vpack.c.bf16 %v718, %v718
      %v763 = vpack.c.bf16 %v719, %v719
      %v764 = vpack.c.bf16 %v720, %v720
      %v765 = vpack.c.bf16 %v721, %v721
      %v766 = vpack.c.bf16 %v722, %v722
      %v767 = vpack.c.bf16 %v723, %v723
      %v768 = vpack.c.bf16 %v724, %v724
      %v769 = vpack.c.bf16 %v725, %v725
      %v770 = vpack.c.bf16 %v726, %v726
      %v771 = vpack.c.bf16 %v727, %v727
      %v772 = vpack.c.bf16 %v728, %v728
      %v773 = vpack.c.bf16 %v729, %v729
      %v774 = vpack.c.bf16 %v730, %v730
      %v775 = vpack.c.bf16 %v731, %v731
      %v776 = vpack.c.bf16 %v732, %v732
      %v777 = vpack.c.bf16 %v733, %v733
      %778 = vst [vmem:[%s197] sm:$0xf] %v734
      %779 = vst [vmem:[%s197 + $0x4] sm:$0xf] %v735
      %780 = vst [vmem:[%s197 + $0x8] sm:$0xf] %v736
      %781 = vst [vmem:[%s197 + $0xc] sm:$0xf] %v737
      %782 = vst [vmem:[%s197 + $0x10] sm:$0xf] %v738
      %783 = vst [vmem:[%s197 + $0x14] sm:$0xf] %v739
      %784 = vst [vmem:[%s197 + $0x18] sm:$0xf] %v740
      %785 = vst [vmem:[%s197 + $0x1c] sm:$0xf] %v741
      %786 = vst [vmem:[%s197 + $0x20] sm:$0xf] %v742
      %787 = vst [vmem:[%s197 + $0x24] sm:$0xf] %v743
      %788 = vst [vmem:[%s197 + $0x28] sm:$0xf] %v744
      %789 = vst [vmem:[%s197 + $0x2c] sm:$0xf] %v745
      %790 = vst [vmem:[%s197 + $0x30] sm:$0xf] %v746
      %791 = vst [vmem:[%s197 + $0x34] sm:$0xf] %v747
      %792 = vst [vmem:[%s197 + $0x38] sm:$0xf] %v748
      %793 = vst [vmem:[%s197 + $0x3c] sm:$0xf] %v749
      %794 = vst [vmem:[%s197 + $0x40] sm:$0xf] %v750
      %795 = vst [vmem:[%s197 + $0x44] sm:$0xf] %v751
      %796 = vst [vmem:[%s197 + $0x48] sm:$0xf] %v752
      %797 = vst [vmem:[%s197 + $0x4c] sm:$0xf] %v753
      %798 = vst [vmem:[%s197 + $0x50] sm:$0xf] %v754
      %799 = vst [vmem:[%s197 + $0x54] sm:$0xf] %v755
      %800 = vst [vmem:[%s197 + $0x58] sm:$0xf] %v756
      %801 = vst [vmem:[%s197 + $0x5c] sm:$0xf] %v757
      %802 = vst [vmem:[%s197 + $0x60] sm:$0xf] %v758
      %803 = vst [vmem:[%s197 + $0x64] sm:$0xf] %v759
      %804 = vst [vmem:[%s197 + $0x68] sm:$0xf] %v760
      %805 = vst [vmem:[%s197 + $0x6c] sm:$0xf] %v761
      %806 = vst [vmem:[%s197 + $0x70] sm:$0xf] %v762
      %807 = vst [vmem:[%s197 + $0x74] sm:$0xf] %v763
      %808 = vst [vmem:[%s197 + $0x78] sm:$0xf] %v764
      %809 = vst [vmem:[%s197 + $0x7c] sm:$0xf] %v765
      %810 = vst [vmem:[%s197 + $0x80] sm:$0xf] %v766
      %811 = vst [vmem:[%s197 + $0x84] sm:$0xf] %v767
      %812 = vst [vmem:[%s197 + $0x88] sm:$0xf] %v768
      %813 = vst [vmem:[%s197 + $0x8c] sm:$0xf] %v769
      %814 = vst [vmem:[%s197 + $0x90] sm:$0xf] %v770
      %815 = vst [vmem:[%s197 + $0x94] sm:$0xf] %v771
      %816 = vst [vmem:[%s197 + $0x98] sm:$0xf] %v772
      %817 = vst [vmem:[%s197 + $0x9c] sm:$0xf] %v773
      %818 = vst [vmem:[%s197 + $0xa0] sm:$0xf] %v774
      %819 = vst [vmem:[%s197 + $0xa4] sm:$0xf] %v775
      %820 = vst [vmem:[%s197 + $0xa8] sm:$0xf] %v776
      %821 = vst [vmem:[%s197 + $0xac] sm:$0xf] %v777
      %p822 = scmp.lt.s32.totalorder %s15, 1
      %s823 = scalar_select %p822, %s15, 1
      %s824 = smul.addr %s823, 44
      %s825 = smul.addr %s824, 4
      %s826 = scalar_lea.vmem %s4, %s825
      // Predicated region
      $region37: #{basic_block_forward.13} parent=35 // pred_check
        %p827 = pneg %p122
      $region38: #{basic_block_forward.13} parent=35 // pred_check_branch
        %829 = sbr.rel (%p827) target = $region40
      $region39: #{basic_block_forward.13} parent=35 // pred_region
        _
      $region40: #{basic_block_forward.13} parent=35 // pred_fallthru
        _
    $region36: #{basic_block_forward.13} parent=5 // pred_fallthru
      _
    %p830 = scmp.le.s32.totalorder 2, %s10
    // Predicated region
    $region41: #{basic_block_forward.13} parent=5 // pred_check
      %p831 = pneg %p830
    $region42: #{basic_block_forward.13} parent=5 // pred_check_branch
      %833 = sbr.rel (%p831) target = $region44
    $region43: #{basic_block_forward.13} parent=5 // pred_region
      %s834 = ssub.s32 %s10, 2
      // Predicated region
      $region45: #{basic_block_forward.13} parent=43 // pred_check
        %p835 = pneg %p128
      $region46: #{basic_block_forward.13} parent=43 // pred_check_branch
        %837 = sbr.rel (%p835) target = $region48
      $region47: #{basic_block_forward.13} parent=43 // pred_region
        %p838 = scmp.lt.s32.totalorder %s16, 1
        %s839 = scalar_select %p838, %s16, 1
        %s840 = smul.addr %s839, 44
        %s841 = smul.addr %s840, 4
        %s842 = scalar_lea.vmem %s4, %s841
      $region48: #{basic_block_forward.13} parent=43 // pred_fallthru
        _
    $region44: #{basic_block_forward.13} parent=5 // pred_fallthru
      _
  $region6: #{basic_block_forward.13} parent=0 // loop_footer
    %s14 = sadd.s32 1, %s10
  $region7: #{basic_block_forward.13} parent=0 // loop_footer_branch
    %9 = sbr.rel target = $region3
  $region8: #{basic_block_forward.13} parent=0 // loop_exit
    _

// kernel: basic_block_forward.15
$region0: #{basic_block_forward.15}
  #allocation0 [shape = 'u32[]', space=smem, size = 0x4, offset = 0x4, fixed_abs, tag = 'smem constant byte address 0x4 - core index']
  #allocation1 [shape = 'u32[72,128]{1,0:T(1,128)}', space=vmem, size = 0x9000, scoped, tag = 'internal scratch']
  %s0 = inlined_call_operand.vmem [shape: bf16[2,352,128], index: 0, kind: input, shape index: {}]
  %s1 = inlined_call_operand.vmem [shape: bf16[2,352,128], index: 1, kind: input, shape index: {}]
  %s2 = inlined_call_operand.vmem [shape: f32[1,128], index: 2, kind: input, shape index: {}]
  %s3 = inlined_call_operand.vmem [shape: f32[1,128], index: 3, kind: input, shape index: {}]
  %s4 = inlined_call_operand.vmem [shape: f32[352,1], index: 4, kind: input, shape index: {}]
  %s5 = inlined_call_operand.vmem [shape: bf16[2,352,128], index: 5, kind: output, shape index: {}]
  %s6 = sld [smem:[#allocation0]]
  $region53: #{basic_block_forward.15} parent=0
    _
  %s8 = ssub.s32 1, %s6
  %s9 = scalar_select 0, %s8, %s6
  loop: start=0, step=1, limit=4
  $region2: #{basic_block_forward.15} parent=0 // loop_pre_header
    _
  $region3: #{basic_block_forward.15} parent=0 // loop_header
    %s11 = sphi 0, %s15
    %p12 = scmp.ge.s32.totalorder %s11, 4
    %s21 = sphi 0, %s23
    %s24 = sphi 0, %s21
    %s25 = sphi 0, %s24
    %s41 = sphi 0, %s25
    %s47 = sphi 0, %s49
    %s50 = sphi 0, %s47
    %s51 = sphi 0, %s50
    %s67 = sphi 0, %s51
    %s71 = sphi 0, %s71
    %s73 = sphi 0, %s71
    %s74 = sphi 0, %s73
    %s88 = sphi 0, %s74
    %s92 = sphi 0, %s92
    %s94 = sphi 0, %s92
    %s95 = sphi 0, %s94
    %s109 = sphi 0, %s95
    %s113 = sphi 0, %s113
    %s115 = sphi 0, %s113
    %s116 = sphi 0, %s115
    %s130 = sphi 0, %s116
    %s136 = sphi 0, %s138
    %s139 = sphi 0, %s136
    %s140 = sphi 0, %s139
    %s156 = sphi 0, %s140
  $region4: #{basic_block_forward.15} parent=0 // loop_header_branch
    %14 = sbr.rel (%p12) target = $region8
  $region5: #{basic_block_forward.15} parent=0 // loop_body
    %s16 = ssub.s32 %s11, 1
    %s17 = ssub.s32 %s11, 2
    %s18 = sadd.s32 %s11, 1
    %s19 = ssub.s32 %s11, %s18
    %p20 = scmp.eq.s32.totalorder %s19, 0
    %s22 = sadd.s32 %s21, 1
    %s23 = scalar_select %p20, %s21, %s22
    %p26 = pneg %p20
    %p27 = scmp.eq.s32.totalorder %s11, 1
    %p28 = por %p26, %p27
    %p29 = scmp.ne.s32.totalorder %s21, %s24
    %p30 = scmp.eq.s32.totalorder %s11, 0
    %p31 = por %p29, %p30
    %p32 = scmp.ne.s32.totalorder %s21, %s24
    %p33 = scmp.eq.s32.totalorder %s16, 1
    %p34 = por %p32, %p33
    %p35 = scmp.ne.s32.totalorder %s24, %s25
    %p36 = scmp.eq.s32.totalorder %s16, 0
    %p37 = por %p35, %p36
    %p38 = scmp.ne.s32.totalorder %s24, %s25
    %p39 = scmp.eq.s32.totalorder %s17, 1
    %p40 = por %p38, %p39
    %p42 = scmp.ne.s32.totalorder %s25, %s41
    %p43 = scmp.eq.s32.totalorder %s17, 0
    %p44 = por %p42, %p43
    %s45 = ssub.s32 %s11, %s18
    %p46 = scmp.eq.s32.totalorder %s45, 0
    %s48 = sadd.s32 %s47, 1
    %s49 = scalar_select %p46, %s47, %s48
    %p52 = pneg %p46
    %p53 = scmp.eq.s32.totalorder %s11, 1
    %p54 = por %p52, %p53
    %p55 = scmp.ne.s32.totalorder %s47, %s50
    %p56 = scmp.eq.s32.totalorder %s11, 0
    %p57 = por %p55, %p56
    %p58 = scmp.ne.s32.totalorder %s47, %s50
    %p59 = scmp.eq.s32.totalorder %s16, 1
    %p60 = por %p58, %p59
    %p61 = scmp.ne.s32.totalorder %s50, %s51
    %p62 = scmp.eq.s32.totalorder %s16, 0
    %p63 = por %p61, %p62
    %p64 = scmp.ne.s32.totalorder %s50, %s51
    %p65 = scmp.eq.s32.totalorder %s17, 1
    %p66 = por %p64, %p65
    %p68 = scmp.ne.s32.totalorder %s51, %s67
    %p69 = scmp.eq.s32.totalorder %s17, 0
    %p70 = por %p68, %p69
    %s72 = sadd.s32 %s71, 1
    %p75 = scmp.eq.s32.totalorder %s11, 1
    %p76 = scmp.ne.s32.totalorder %s71, %s73
    %p77 = scmp.eq.s32.totalorder %s11, 0
    %p78 = por %p76, %p77
    %p79 = scmp.ne.s32.totalorder %s71, %s73
    %p80 = scmp.eq.s32.totalorder %s16, 1
    %p81 = por %p79, %p80
    %p82 = scmp.ne.s32.totalorder %s73, %s74
    %p83 = scmp.eq.s32.totalorder %s16, 0
    %p84 = por %p82, %p83
    %p85 = scmp.ne.s32.totalorder %s73, %s74
    %p86 = scmp.eq.s32.totalorder %s17, 1
    %p87 = por %p85, %p86
    %p89 = scmp.ne.s32.totalorder %s74, %s88
    %p90 = scmp.eq.s32.totalorder %s17, 0
    %p91 = por %p89, %p90
    %s93 = sadd.s32 %s92, 1
    %p96 = scmp.eq.s32.totalorder %s11, 1
    %p97 = scmp.ne.s32.totalorder %s92, %s94
    %p98 = scmp.eq.s32.totalorder %s11, 0
    %p99 = por %p97, %p98
    %p100 = scmp.ne.s32.totalorder %s92, %s94
    %p101 = scmp.eq.s32.totalorder %s16, 1
    %p102 = por %p100, %p101
    %p103 = scmp.ne.s32.totalorder %s94, %s95
    %p104 = scmp.eq.s32.totalorder %s16, 0
    %p105 = por %p103, %p104
    %p106 = scmp.ne.s32.totalorder %s94, %s95
    %p107 = scmp.eq.s32.totalorder %s17, 1
    %p108 = por %p106, %p107
    %p110 = scmp.ne.s32.totalorder %s95, %s109
    %p111 = scmp.eq.s32.totalorder %s17, 0
    %p112 = por %p110, %p111
    %s114 = sadd.s32 %s113, 1
    %p117 = scmp.eq.s32.totalorder %s11, 1
    %p118 = scmp.ne.s32.totalorder %s113, %s115
    %p119 = scmp.eq.s32.totalorder %s11, 0
    %p120 = por %p118, %p119
    %p121 = scmp.ne.s32.totalorder %s113, %s115
    %p122 = scmp.eq.s32.totalorder %s16, 1
    %p123 = por %p121, %p122
    %p124 = scmp.ne.s32.totalorder %s115, %s116
    %p125 = scmp.eq.s32.totalorder %s16, 0
    %p126 = por %p124, %p125
    %p127 = scmp.ne.s32.totalorder %s115, %s116
    %p128 = scmp.eq.s32.totalorder %s17, 1
    %p129 = por %p127, %p128
    %p131 = scmp.ne.s32.totalorder %s116, %s130
    %p132 = scmp.eq.s32.totalorder %s17, 0
    %p133 = por %p131, %p132
    %s134 = ssub.s32 %s11, %s18
    %p135 = scmp.eq.s32.totalorder %s134, 0
    %s137 = sadd.s32 %s136, 1
    %s138 = scalar_select %p135, %s136, %s137
    %p141 = pneg %p135
    %p142 = scmp.eq.s32.totalorder %s11, 1
    %p143 = por %p141, %p142
    %p144 = scmp.ne.s32.totalorder %s136, %s139
    %p145 = scmp.eq.s32.totalorder %s11, 0
    %p146 = por %p144, %p145
    %p147 = scmp.ne.s32.totalorder %s136, %s139
    %p148 = scmp.eq.s32.totalorder %s16, 1
    %p149 = por %p147, %p148
    %p150 = scmp.ne.s32.totalorder %s139, %s140
    %p151 = scmp.eq.s32.totalorder %s16, 0
    %p152 = por %p150, %p151
    %p153 = scmp.ne.s32.totalorder %s139, %s140
    %p154 = scmp.eq.s32.totalorder %s17, 1
    %p155 = por %p153, %p154
    %p157 = scmp.ne.s32.totalorder %s140, %s156
    %p158 = scmp.eq.s32.totalorder %s17, 0
    %p159 = por %p157, %p158
    %p160 = scmp.le.s32.totalorder 1, %s11
    %p161 = scmp.lt.s32.totalorder %s11, 3
    %p162 = pnand %p160, %p161
    %p163 = pneg %p162
    // Predicated region
    $region9: #{basic_block_forward.15} parent=5 // pred_check
      _
    $region10: #{basic_block_forward.15} parent=5 // pred_check_branch
      %165 = sbr.rel (%p162) target = $region12
    $region11: #{basic_block_forward.15} parent=5 // pred_region
      %s166 = ssub.s32 %s11, 1
      // Predicated region
      $region13: #{basic_block_forward.15} parent=11 // pred_check
        %p167 = pneg %p84
      $region14: #{basic_block_forward.15} parent=11 // pred_check_branch
        %169 = sbr.rel (%p167) target = $region16
      $region15: #{basic_block_forward.15} parent=11 // pred_region
        _
      $region16: #{basic_block_forward.15} parent=11 // pred_fallthru
        _
      // Predicated region
      $region17: #{basic_block_forward.15} parent=11 // pred_check
        %p170 = pneg %p105
      $region18: #{basic_block_forward.15} parent=11 // pred_check_branch
        %172 = sbr.rel (%p170) target = $region20
      $region19: #{basic_block_forward.15} parent=11 // pred_region
        _
      $region20: #{basic_block_forward.15} parent=11 // pred_fallthru
        _
      // Predicated region
      $region21: #{basic_block_forward.15} parent=11 // pred_check
        %p173 = pneg %p126
      $region22: #{basic_block_forward.15} parent=11 // pred_check_branch
        %175 = sbr.rel (%p173) target = $region24
      $region23: #{basic_block_forward.15} parent=11 // pred_region
        _
      $region24: #{basic_block_forward.15} parent=11 // pred_fallthru
        _
    $region12: #{basic_block_forward.15} parent=5 // pred_fallthru
      _
    %p176 = scmp.lt.s32.totalorder %s11, 2
    // Predicated region
    $region25: #{basic_block_forward.15} parent=5 // pred_check
      %p177 = pneg %p176
    $region26: #{basic_block_forward.15} parent=5 // pred_check_branch
      %179 = sbr.rel (%p177) target = $region28
    $region27: #{basic_block_forward.15} parent=5 // pred_region
      // Predicated region
      $region29: #{basic_block_forward.15} parent=27 // pred_check
        %p180 = pneg %p31
      $region30: #{basic_block_forward.15} parent=27 // pred_check_branch
        %182 = sbr.rel (%p180) target = $region32
      $region31: #{basic_block_forward.15} parent=27 // pred_region
        %p183 = scmp.lt.s32.totalorder %s11, 1
        %s184 = scalar_select %p183, %s11, 1
        %s185 = smul.addr %s184, 44
        %s186 = smul.addr %s185, 4
        %s187 = scalar_lea.vmem %s0, %s186
      $region32: #{basic_block_forward.15} parent=27 // pred_fallthru
        _
      // Predicated region
      $region33: #{basic_block_forward.15} parent=27 // pred_check
        %p188 = pneg %p57
      $region34: #{basic_block_forward.15} parent=27 // pred_check_branch
        %190 = sbr.rel (%p188) target = $region36
      $region35: #{basic_block_forward.15} parent=27 // pred_region
        %p191 = scmp.lt.s32.totalorder %s11, 1
        %s192 = scalar_select %p191, %s11, 1
        %s193 = smul.addr %s192, 44
        %s194 = smul.addr %s193, 4
        %s195 = scalar_lea.vmem %s1, %s194
      $region36: #{basic_block_forward.15} parent=27 // pred_fallthru
        _
    $region28: #{basic_block_forward.15} parent=5 // pred_fallthru
      _
    %p196 = scmp.le.s32.totalorder 1, %s11
    %p197 = scmp.lt.s32.totalorder %s11, 3
    %p198 = pnand %p196, %p197
    %p199 = pneg %p198
    // Predicated region
    $region37: #{basic_block_forward.15} parent=5 // pred_check
      _
    $region38: #{basic_block_forward.15} parent=5 // pred_check_branch
      %201 = sbr.rel (%p198) target = $region40
    $region39: #{basic_block_forward.15} parent=5 // pred_region
      %s202 = ssub.s32 %s11, 1
      %p203 = scmp.lt.s32.totalorder %s16, 1
      %s204 = scalar_select %p203, %s16, 1
      %s205 = smul.addr %s204, 44
      %s206 = smul.addr %s205, 4
      %s207 = scalar_lea.vmem %s0, %s206
      %p208 = pneg %p37
      %p209 = pneg %p34
      %p210 = scmp.lt.s32.totalorder %s16, 1
      %s211 = scalar_select %p210, %s16, 1
      %s212 = smul.addr %s211, 44
      %s213 = smul.addr %s212, 4
      %s214 = scalar_lea.vmem %s1, %s213
      %p215 = pneg %p63
      %p216 = pneg %p60
      %p217 = pneg %p84
      %p218 = pneg %p81
      %p219 = pneg %p105
      %p220 = pneg %p102
      %p221 = pneg %p126
      %p222 = pneg %p123
      %p223 = pneg %p152
      %p224 = pneg %p149
      %p225 = scmp.lt.s32.totalorder %s16, 1
      %s226 = scalar_select %p225, %s16, 1
      %s227 = smul.addr %s226, 44
      %s228 = smul.addr %s227, 4
      %s229 = scalar_lea.vmem %s5, %s228
      %p230 = scmp.lt.s32.totalorder %s16, 1
      %s231 = scalar_select %p230, %s16, 1
      %s232 = smul.addr %s231, 44
      %s233 = smul.addr %s232, 4
      %s234 = scalar_lea.vmem %s0, %s233
      %p235 = scmp.lt.s32.totalorder %s16, 1
      %s236 = scalar_select %p235, %s16, 1
      %s237 = smul.addr %s236, 44
      %s238 = smul.addr %s237, 4
      %s239 = scalar_lea.vmem %s1, %s238
      %p240 = scmp.lt.s32.totalorder %s16, 1
      %s241 = scalar_select %p240, %s16, 1
      %s242 = smul.addr %s241, 44
      %s243 = smul.addr %s242, 4
      %s244 = scalar_lea.vmem %s5, %s243
      %v245 = vld [vmem:[%s234] sm:$0xf]
      %v246 = vld [vmem:[%s234 + $0x4] sm:$0xf]
      %v247 = vld [vmem:[%s234 + $0x8] sm:$0xf]
      %v248 = vld [vmem:[%s234 + $0xc] sm:$0xf]
      %v249 = vld [vmem:[%s234 + $0x10] sm:$0xf]
      %v250 = vld [vmem:[%s234 + $0x14] sm:$0xf]
      %v251 = vld [vmem:[%s234 + $0x18] sm:$0xf]
      %v252 = vld [vmem:[%s234 + $0x1c] sm:$0xf]
      %v253 = vld [vmem:[%s234 + $0x20] sm:$0xf]
      %v254 = vld [vmem:[%s234 + $0x24] sm:$0xf]
      %v255 = vld [vmem:[%s234 + $0x28] sm:$0xf]
      %v256 = vld [vmem:[%s234 + $0x2c] sm:$0xf]
      %v257 = vld [vmem:[%s234 + $0x30] sm:$0xf]
      %v258 = vld [vmem:[%s234 + $0x34] sm:$0xf]
      %v259 = vld [vmem:[%s234 + $0x38] sm:$0xf]
      %v260 = vld [vmem:[%s234 + $0x3c] sm:$0xf]
      %v261 = vld [vmem:[%s234 + $0x40] sm:$0xf]
      %v262 = vld [vmem:[%s234 + $0x44] sm:$0xf]
      %v263 = vld [vmem:[%s234 + $0x48] sm:$0xf]
      %v264 = vld [vmem:[%s234 + $0x4c] sm:$0xf]
      %v265 = vld [vmem:[%s234 + $0x50] sm:$0xf]
      %v266 = vld [vmem:[%s234 + $0x54] sm:$0xf]
      %v267 = vld [vmem:[%s234 + $0x58] sm:$0xf]
      %v268 = vld [vmem:[%s234 + $0x5c] sm:$0xf]
      %v269 = vld [vmem:[%s234 + $0x60] sm:$0xf]
      %v270 = vld [vmem:[%s234 + $0x64] sm:$0xf]
      %v271 = vld [vmem:[%s234 + $0x68] sm:$0xf]
      %v272 = vld [vmem:[%s234 + $0x6c] sm:$0xf]
      %v273 = vld [vmem:[%s234 + $0x70] sm:$0xf]
      %v274 = vld [vmem:[%s234 + $0x74] sm:$0xf]
      %v275 = vld [vmem:[%s234 + $0x78] sm:$0xf]
      %v276 = vld [vmem:[%s234 + $0x7c] sm:$0xf]
      %v277 = vld [vmem:[%s234 + $0x80] sm:$0xf]
      %v278 = vld [vmem:[%s234 + $0x84] sm:$0xf]
      %v279 = vld [vmem:[%s234 + $0x88] sm:$0xf]
      %v280 = vld [vmem:[%s234 + $0x8c] sm:$0xf]
      %v281 = vld [vmem:[%s234 + $0x90] sm:$0xf]
      %v282 = vld [vmem:[%s234 + $0x94] sm:$0xf]
      %v283 = vld [vmem:[%s234 + $0x98] sm:$0xf]
      %v284 = vld [vmem:[%s234 + $0x9c] sm:$0xf]
      %v285 = vld [vmem:[%s234 + $0xa0] sm:$0xf]
      %v286 = vld [vmem:[%s234 + $0xa4] sm:$0xf]
      %v287 = vld [vmem:[%s234 + $0xa8] sm:$0xf]
      %v288 = vld [vmem:[%s234 + $0xac] sm:$0xf]
      %v289 = vunpack.c.l.bf16 %v245
      %v290 = vunpack.c.l.bf16 %v246
      %v291 = vunpack.c.l.bf16 %v247
      %v292 = vunpack.c.l.bf16 %v248
      %v293 = vunpack.c.l.bf16 %v249
      %v294 = vunpack.c.l.bf16 %v250
      %v295 = vunpack.c.l.bf16 %v251
      %v296 = vunpack.c.l.bf16 %v252
      %v297 = vunpack.c.l.bf16 %v253
      %v298 = vunpack.c.l.bf16 %v254
      %v299 = vunpack.c.l.bf16 %v255
      %v300 = vunpack.c.l.bf16 %v256
      %v301 = vunpack.c.l.bf16 %v257
      %v302 = vunpack.c.l.bf16 %v258
      %v303 = vunpack.c.l.bf16 %v259
      %v304 = vunpack.c.l.bf16 %v260
      %v305 = vunpack.c.l.bf16 %v261
      %v306 = vunpack.c.l.bf16 %v262
      %v307 = vunpack.c.l.bf16 %v263
      %v308 = vunpack.c.l.bf16 %v264
      %v309 = vunpack.c.l.bf16 %v265
      %v310 = vunpack.c.l.bf16 %v266
      %v311 = vunpack.c.l.bf16 %v267
      %v312 = vunpack.c.l.bf16 %v268
      %v313 = vunpack.c.l.bf16 %v269
      %v314 = vunpack.c.l.bf16 %v270
      %v315 = vunpack.c.l.bf16 %v271
      %v316 = vunpack.c.l.bf16 %v272
      %v317 = vunpack.c.l.bf16 %v273
      %v318 = vunpack.c.l.bf16 %v274
      %v319 = vunpack.c.l.bf16 %v275
      %v320 = vunpack.c.l.bf16 %v276
      %v321 = vunpack.c.l.bf16 %v277
      %v322 = vunpack.c.l.bf16 %v278
      %v323 = vunpack.c.l.bf16 %v279
      %v324 = vunpack.c.l.bf16 %v280
      %v325 = vunpack.c.l.bf16 %v281
      %v326 = vunpack.c.l.bf16 %v282
      %v327 = vunpack.c.l.bf16 %v283
      %v328 = vunpack.c.l.bf16 %v284
      %v329 = vunpack.c.l.bf16 %v285
      %v330 = vunpack.c.l.bf16 %v286
      %v331 = vunpack.c.l.bf16 %v287
      %v332 = vunpack.c.l.bf16 %v288
      %v333 = vld [vmem:[%s2] sm:$0x1]
      %v335 = vperm.slane %v333, 0
      %v337 = vmul.f32 %v289, %v335
      %v338 = vmul.f32 %v290, %v335
      %v339 = vmul.f32 %v291, %v335
      %v340 = vmul.f32 %v292, %v335
      %v341 = vmul.f32 %v293, %v335
      %v342 = vmul.f32 %v294, %v335
      %v343 = vmul.f32 %v295, %v335
      %v344 = vmul.f32 %v296, %v335
      %v345 = vmul.f32 %v297, %v335
      %v346 = vmul.f32 %v298, %v335
      %v347 = vmul.f32 %v299, %v335
      %v348 = vmul.f32 %v300, %v335
      %v349 = vmul.f32 %v301, %v335
      %v350 = vmul.f32 %v302, %v335
      %v351 = vmul.f32 %v303, %v335
      %v352 = vmul.f32 %v304, %v335
      %v353 = vmul.f32 %v305, %v335
      %v354 = vmul.f32 %v306, %v335
      %v355 = vmul.f32 %v307, %v335
      %v356 = vmul.f32 %v308, %v335
      %v357 = vmul.f32 %v309, %v335
      %v358 = vmul.f32 %v310, %v335
      %v359 = vmul.f32 %v311, %v335
      %v360 = vmul.f32 %v312, %v335
      %v361 = vmul.f32 %v313, %v335
      %v362 = vmul.f32 %v314, %v335
      %v363 = vmul.f32 %v315, %v335
      %v364 = vmul.f32 %v316, %v335
      %v365 = vmul.f32 %v317, %v335
      %v366 = vmul.f32 %v318, %v335
      %v367 = vmul.f32 %v319, %v335
      %v368 = vmul.f32 %v320, %v335
      %v369 = vmul.f32 %v321, %v335
      %v370 = vmul.f32 %v322, %v335
      %v371 = vmul.f32 %v323, %v335
      %v372 = vmul.f32 %v324, %v335
      %v373 = vmul.f32 %v325, %v335
      %v374 = vmul.f32 %v326, %v335
      %v375 = vmul.f32 %v327, %v335
      %v376 = vmul.f32 %v328, %v335
      %v377 = vmul.f32 %v329, %v335
      %v378 = vmul.f32 %v330, %v335
      %v379 = vmul.f32 %v331, %v335
      %v380 = vmul.f32 %v332, %v335
      %v381 = vld [vmem:[%s3] sm:$0x1]
      %v383 = vperm.slane %v381, 0
      %v385 = vadd.f32 %v337, %v383
      %v386 = vadd.f32 %v338, %v383
      %v387 = vadd.f32 %v339, %v383
      %v388 = vadd.f32 %v340, %v383
      %v389 = vadd.f32 %v341, %v383
      %v390 = vadd.f32 %v342, %v383
      %v391 = vadd.f32 %v343, %v383
      %v392 = vadd.f32 %v344, %v383
      %v393 = vadd.f32 %v345, %v383
      %v394 = vadd.f32 %v346, %v383
      %v395 = vadd.f32 %v347, %v383
      %v396 = vadd.f32 %v348, %v383
      %v397 = vadd.f32 %v349, %v383
      %v398 = vadd.f32 %v350, %v383
      %v399 = vadd.f32 %v351, %v383
      %v400 = vadd.f32 %v352, %v383
      %v401 = vadd.f32 %v353, %v383
      %v402 = vadd.f32 %v354, %v383
      %v403 = vadd.f32 %v355, %v383
      %v404 = vadd.f32 %v356, %v383
      %v405 = vadd.f32 %v357, %v383
      %v406 = vadd.f32 %v358, %v383
      %v407 = vadd.f32 %v359, %v383
      %v408 = vadd.f32 %v360, %v383
      %v409 = vadd.f32 %v361, %v383
      %v410 = vadd.f32 %v362, %v383
      %v411 = vadd.f32 %v363, %v383
      %v412 = vadd.f32 %v364, %v383
      %v413 = vadd.f32 %v365, %v383
      %v414 = vadd.f32 %v366, %v383
      %v415 = vadd.f32 %v367, %v383
      %v416 = vadd.f32 %v368, %v383
      %v417 = vadd.f32 %v369, %v383
      %v418 = vadd.f32 %v370, %v383
      %v419 = vadd.f32 %v371, %v383
      %v420 = vadd.f32 %v372, %v383
      %v421 = vadd.f32 %v373, %v383
      %v422 = vadd.f32 %v374, %v383
      %v423 = vadd.f32 %v375, %v383
      %v424 = vadd.f32 %v376, %v383
      %v425 = vadd.f32 %v377, %v383
      %v426 = vadd.f32 %v378, %v383
      %v427 = vadd.f32 %v379, %v383
      %v428 = vadd.f32 %v380, %v383
      %v429 = vld [vmem:[%s239] sm:$0xf]
      %v430 = vld [vmem:[%s239 + $0x4] sm:$0xf]
      %v431 = vld [vmem:[%s239 + $0x8] sm:$0xf]
      %v432 = vld [vmem:[%s239 + $0xc] sm:$0xf]
      %v433 = vld [vmem:[%s239 + $0x10] sm:$0xf]
      %v434 = vld [vmem:[%s239 + $0x14] sm:$0xf]
      %v435 = vld [vmem:[%s239 + $0x18] sm:$0xf]
      %v436 = vld [vmem:[%s239 + $0x1c] sm:$0xf]
      %v437 = vld [vmem:[%s239 + $0x20] sm:$0xf]
      %v438 = vld [vmem:[%s239 + $0x24] sm:$0xf]
      %v439 = vld [vmem:[%s239 + $0x28] sm:$0xf]
      %v440 = vld [vmem:[%s239 + $0x2c] sm:$0xf]
      %v441 = vld [vmem:[%s239 + $0x30] sm:$0xf]
      %v442 = vld [vmem:[%s239 + $0x34] sm:$0xf]
      %v443 = vld [vmem:[%s239 + $0x38] sm:$0xf]
      %v444 = vld [vmem:[%s239 + $0x3c] sm:$0xf]
      %v445 = vld [vmem:[%s239 + $0x40] sm:$0xf]
      %v446 = vld [vmem:[%s239 + $0x44] sm:$0xf]
      %v447 = vld [vmem:[%s239 + $0x48] sm:$0xf]
      %v448 = vld [vmem:[%s239 + $0x4c] sm:$0xf]
      %v449 = vld [vmem:[%s239 + $0x50] sm:$0xf]
      %v450 = vld [vmem:[%s239 + $0x54] sm:$0xf]
      %v451 = vld [vmem:[%s239 + $0x58] sm:$0xf]
      %v452 = vld [vmem:[%s239 + $0x5c] sm:$0xf]
      %v453 = vld [vmem:[%s239 + $0x60] sm:$0xf]
      %v454 = vld [vmem:[%s239 + $0x64] sm:$0xf]
      %v455 = vld [vmem:[%s239 + $0x68] sm:$0xf]
      %v456 = vld [vmem:[%s239 + $0x6c] sm:$0xf]
      %v457 = vld [vmem:[%s239 + $0x70] sm:$0xf]
      %v458 = vld [vmem:[%s239 + $0x74] sm:$0xf]
      %v459 = vld [vmem:[%s239 + $0x78] sm:$0xf]
      %v460 = vld [vmem:[%s239 + $0x7c] sm:$0xf]
      %v461 = vld [vmem:[%s239 + $0x80] sm:$0xf]
      %v462 = vld [vmem:[%s239 + $0x84] sm:$0xf]
      %v463 = vld [vmem:[%s239 + $0x88] sm:$0xf]
      %v464 = vld [vmem:[%s239 + $0x8c] sm:$0xf]
      %v465 = vld [vmem:[%s239 + $0x90] sm:$0xf]
      %v466 = vld [vmem:[%s239 + $0x94] sm:$0xf]
      %v467 = vld [vmem:[%s239 + $0x98] sm:$0xf]
      %v468 = vld [vmem:[%s239 + $0x9c] sm:$0xf]
      %v469 = vld [vmem:[%s239 + $0xa0] sm:$0xf]
      %v470 = vld [vmem:[%s239 + $0xa4] sm:$0xf]
      %v471 = vld [vmem:[%s239 + $0xa8] sm:$0xf]
      %v472 = vld [vmem:[%s239 + $0xac] sm:$0xf]
      %v473 = vunpack.c.l.bf16 %v429
      %v474 = vunpack.c.l.bf16 %v430
      %v475 = vunpack.c.l.bf16 %v431
      %v476 = vunpack.c.l.bf16 %v432
      %v477 = vunpack.c.l.bf16 %v433
      %v478 = vunpack.c.l.bf16 %v434
      %v479 = vunpack.c.l.bf16 %v435
      %v480 = vunpack.c.l.bf16 %v436
      %v481 = vunpack.c.l.bf16 %v437
      %v482 = vunpack.c.l.bf16 %v438
      %v483 = vunpack.c.l.bf16 %v439
      %v484 = vunpack.c.l.bf16 %v440
      %v485 = vunpack.c.l.bf16 %v441
      %v486 = vunpack.c.l.bf16 %v442
      %v487 = vunpack.c.l.bf16 %v443
      %v488 = vunpack.c.l.bf16 %v444
      %v489 = vunpack.c.l.bf16 %v445
      %v490 = vunpack.c.l.bf16 %v446
      %v491 = vunpack.c.l.bf16 %v447
      %v492 = vunpack.c.l.bf16 %v448
      %v493 = vunpack.c.l.bf16 %v449
      %v494 = vunpack.c.l.bf16 %v450
      %v495 = vunpack.c.l.bf16 %v451
      %v496 = vunpack.c.l.bf16 %v452
      %v497 = vunpack.c.l.bf16 %v453
      %v498 = vunpack.c.l.bf16 %v454
      %v499 = vunpack.c.l.bf16 %v455
      %v500 = vunpack.c.l.bf16 %v456
      %v501 = vunpack.c.l.bf16 %v457
      %v502 = vunpack.c.l.bf16 %v458
      %v503 = vunpack.c.l.bf16 %v459
      %v504 = vunpack.c.l.bf16 %v460
      %v505 = vunpack.c.l.bf16 %v461
      %v506 = vunpack.c.l.bf16 %v462
      %v507 = vunpack.c.l.bf16 %v463
      %v508 = vunpack.c.l.bf16 %v464
      %v509 = vunpack.c.l.bf16 %v465
      %v510 = vunpack.c.l.bf16 %v466
      %v511 = vunpack.c.l.bf16 %v467
      %v512 = vunpack.c.l.bf16 %v468
      %v513 = vunpack.c.l.bf16 %v469
      %v514 = vunpack.c.l.bf16 %v470
      %v515 = vunpack.c.l.bf16 %v471
      %v516 = vunpack.c.l.bf16 %v472
      %v517 = vadd.f32 %v385, %v473
      %v518 = vadd.f32 %v386, %v474
      %v519 = vadd.f32 %v387, %v475
      %v520 = vadd.f32 %v388, %v476
      %v521 = vadd.f32 %v389, %v477
      %v522 = vadd.f32 %v390, %v478
      %v523 = vadd.f32 %v391, %v479
      %v524 = vadd.f32 %v392, %v480
      %v525 = vadd.f32 %v393, %v481
      %v526 = vadd.f32 %v394, %v482
      %v527 = vadd.f32 %v395, %v483
      %v528 = vadd.f32 %v396, %v484
      %v529 = vadd.f32 %v397, %v485
      %v530 = vadd.f32 %v398, %v486
      %v531 = vadd.f32 %v399, %v487
      %v532 = vadd.f32 %v400, %v488
      %v533 = vadd.f32 %v401, %v489
      %v534 = vadd.f32 %v402, %v490
      %v535 = vadd.f32 %v403, %v491
      %v536 = vadd.f32 %v404, %v492
      %v537 = vadd.f32 %v405, %v493
      %v538 = vadd.f32 %v406, %v494
      %v539 = vadd.f32 %v407, %v495
      %v540 = vadd.f32 %v408, %v496
      %v541 = vadd.f32 %v409, %v497
      %v542 = vadd.f32 %v410, %v498
      %v543 = vadd.f32 %v411, %v499
      %v544 = vadd.f32 %v412, %v500
      %v545 = vadd.f32 %v413, %v501
      %v546 = vadd.f32 %v414, %v502
      %v547 = vadd.f32 %v415, %v503
      %v548 = vadd.f32 %v416, %v504
      %v549 = vadd.f32 %v417, %v505
      %v550 = vadd.f32 %v418, %v506
      %v551 = vadd.f32 %v419, %v507
      %v552 = vadd.f32 %v420, %v508
      %v553 = vadd.f32 %v421, %v509
      %v554 = vadd.f32 %v422, %v510
      %v555 = vadd.f32 %v423, %v511
      %v556 = vadd.f32 %v424, %v512
      %v557 = vadd.f32 %v425, %v513
      %v558 = vadd.f32 %v426, %v514
      %v559 = vadd.f32 %v427, %v515
      %v560 = vadd.f32 %v428, %v516
      %v561 = vld [vmem:[%s4] sm:$0xff]
      %v562 = vld [vmem:[%s4 + $0x8] sm:$0xff]
      %v563 = vld [vmem:[%s4 + $0x10] sm:$0xff]
      %v564 = vld [vmem:[%s4 + $0x18] sm:$0xff]
      %v565 = vld [vmem:[%s4 + $0x20] sm:$0xff]
      %v566 = vld [vmem:[%s4 + $0x28] sm:$0xff]
      %v567 = vld [vmem:[%s4 + $0x30] sm:$0xff]
      %v568 = vld [vmem:[%s4 + $0x38] sm:$0xff]
      %v569 = vld [vmem:[%s4 + $0x40] sm:$0xff]
      %v570 = vld [vmem:[%s4 + $0x48] sm:$0xff]
      %v571 = vld [vmem:[%s4 + $0x50] sm:$0xff]
      %v572 = vld [vmem:[%s4 + $0x58] sm:$0xff]
      %v573 = vld [vmem:[%s4 + $0x60] sm:$0xff]
      %v574 = vld [vmem:[%s4 + $0x68] sm:$0xff]
      %v575 = vld [vmem:[%s4 + $0x70] sm:$0xff]
      %v576 = vld [vmem:[%s4 + $0x78] sm:$0xff]
      %v577 = vld [vmem:[%s4 + $0x80] sm:$0xff]
      %v578 = vld [vmem:[%s4 + $0x88] sm:$0xff]
      %v579 = vld [vmem:[%s4 + $0x90] sm:$0xff]
      %v580 = vld [vmem:[%s4 + $0x98] sm:$0xff]
      %v581 = vld [vmem:[%s4 + $0xa0] sm:$0xff]
      %v582 = vld [vmem:[%s4 + $0xa8] sm:$0xff]
      %v583 = vld [vmem:[%s4 + $0xb0] sm:$0xff]
      %v584 = vld [vmem:[%s4 + $0xb8] sm:$0xff]
      %v585 = vld [vmem:[%s4 + $0xc0] sm:$0xff]
      %v586 = vld [vmem:[%s4 + $0xc8] sm:$0xff]
      %v587 = vld [vmem:[%s4 + $0xd0] sm:$0xff]
      %v588 = vld [vmem:[%s4 + $0xd8] sm:$0xff]
      %v589 = vld [vmem:[%s4 + $0xe0] sm:$0xff]
      %v590 = vld [vmem:[%s4 + $0xe8] sm:$0xff]
      %v591 = vld [vmem:[%s4 + $0xf0] sm:$0xff]
      %v592 = vld [vmem:[%s4 + $0xf8] sm:$0xff]
      %v593 = vld [vmem:[%s4 + $0x100] sm:$0xff]
      %v594 = vld [vmem:[%s4 + $0x108] sm:$0xff]
      %v595 = vld [vmem:[%s4 + $0x110] sm:$0xff]
      %v596 = vld [vmem:[%s4 + $0x118] sm:$0xff]
      %v597 = vld [vmem:[%s4 + $0x120] sm:$0xff]
      %v598 = vld [vmem:[%s4 + $0x128] sm:$0xff]
      %v599 = vld [vmem:[%s4 + $0x130] sm:$0xff]
      %v600 = vld [vmem:[%s4 + $0x138] sm:$0xff]
      %v601 = vld [vmem:[%s4 + $0x140] sm:$0xff]
      %v602 = vld [vmem:[%s4 + $0x148] sm:$0xff]
      %v603 = vld [vmem:[%s4 + $0x150] sm:$0xff]
      %v604 = vld [vmem:[%s4 + $0x158] sm:$0xff]
      %606 = vset.pattern.permute.xlu0 0
      %607 = vperm.xlu0 %606, %v561
      %v608 = vpop.permute.xlu0 %607
      %611 = vset.pattern.permute.xlu0 0
      %612 = vperm.xlu0 %611, %v562
      %v613 = vpop.permute.xlu0 %612
      %616 = vset.pattern.permute.xlu0 0
      %617 = vperm.xlu0 %616, %v563
      %v618 = vpop.permute.xlu0 %617
      %621 = vset.pattern.permute.xlu0 0
      %622 = vperm.xlu0 %621, %v564
      %v623 = vpop.permute.xlu0 %622
      %626 = vset.pattern.permute.xlu0 0
      %627 = vperm.xlu0 %626, %v565
      %v628 = vpop.permute.xlu0 %627
      %631 = vset.pattern.permute.xlu0 0
      %632 = vperm.xlu0 %631, %v566
      %v633 = vpop.permute.xlu0 %632
      %636 = vset.pattern.permute.xlu0 0
      %637 = vperm.xlu0 %636, %v567
      %v638 = vpop.permute.xlu0 %637
      %641 = vset.pattern.permute.xlu0 0
      %642 = vperm.xlu0 %641, %v568
      %v643 = vpop.permute.xlu0 %642
      %646 = vset.pattern.permute.xlu0 0
      %647 = vperm.xlu0 %646, %v569
      %v648 = vpop.permute.xlu0 %647
      %651 = vset.pattern.permute.xlu0 0
      %652 = vperm.xlu0 %651, %v570
      %v653 = vpop.permute.xlu0 %652
      %656 = vset.pattern.permute.xlu0 0
      %657 = vperm.xlu0 %656, %v571
      %v658 = vpop.permute.xlu0 %657
      %661 = vset.pattern.permute.xlu0 0
      %662 = vperm.xlu0 %661, %v572
      %v663 = vpop.permute.xlu0 %662
      %666 = vset.pattern.permute.xlu0 0
      %667 = vperm.xlu0 %666, %v573
      %v668 = vpop.permute.xlu0 %667
      %671 = vset.pattern.permute.xlu0 0
      %672 = vperm.xlu0 %671, %v574
      %v673 = vpop.permute.xlu0 %672
      %676 = vset.pattern.permute.xlu0 0
      %677 = vperm.xlu0 %676, %v575
      %v678 = vpop.permute.xlu0 %677
      %681 = vset.pattern.permute.xlu0 0
      %682 = vperm.xlu0 %681, %v576
      %v683 = vpop.permute.xlu0 %682
      %686 = vset.pattern.permute.xlu0 0
      %687 = vperm.xlu0 %686, %v577
      %v688 = vpop.permute.xlu0 %687
      %691 = vset.pattern.permute.xlu0 0
      %692 = vperm.xlu0 %691, %v578
      %v693 = vpop.permute.xlu0 %692
      %696 = vset.pattern.permute.xlu0 0
      %697 = vperm.xlu0 %696, %v579
      %v698 = vpop.permute.xlu0 %697
      %701 = vset.pattern.permute.xlu0 0
      %702 = vperm.xlu0 %701, %v580
      %v703 = vpop.permute.xlu0 %702
      %706 = vset.pattern.permute.xlu0 0
      %707 = vperm.xlu0 %706, %v581
      %v708 = vpop.permute.xlu0 %707
      %711 = vset.pattern.permute.xlu0 0
      %712 = vperm.xlu0 %711, %v582
      %v713 = vpop.permute.xlu0 %712
      %716 = vset.pattern.permute.xlu0 0
      %717 = vperm.xlu0 %716, %v583
      %v718 = vpop.permute.xlu0 %717
      %721 = vset.pattern.permute.xlu0 0
      %722 = vperm.xlu0 %721, %v584
      %v723 = vpop.permute.xlu0 %722
      %726 = vset.pattern.permute.xlu0 0
      %727 = vperm.xlu0 %726, %v585
      %v728 = vpop.permute.xlu0 %727
      %731 = vset.pattern.permute.xlu0 0
      %732 = vperm.xlu0 %731, %v586
      %v733 = vpop.permute.xlu0 %732
      %736 = vset.pattern.permute.xlu0 0
      %737 = vperm.xlu0 %736, %v587
      %v738 = vpop.permute.xlu0 %737
      %741 = vset.pattern.permute.xlu0 0
      %742 = vperm.xlu0 %741, %v588
      %v743 = vpop.permute.xlu0 %742
      %746 = vset.pattern.permute.xlu0 0
      %747 = vperm.xlu0 %746, %v589
      %v748 = vpop.permute.xlu0 %747
      %751 = vset.pattern.permute.xlu0 0
      %752 = vperm.xlu0 %751, %v590
      %v753 = vpop.permute.xlu0 %752
      %756 = vset.pattern.permute.xlu0 0
      %757 = vperm.xlu0 %756, %v591
      %v758 = vpop.permute.xlu0 %757
      %761 = vset.pattern.permute.xlu0 0
      %762 = vperm.xlu0 %761, %v592
      %v763 = vpop.permute.xlu0 %762
      %766 = vset.pattern.permute.xlu0 0
      %767 = vperm.xlu0 %766, %v593
      %v768 = vpop.permute.xlu0 %767
      %771 = vset.pattern.permute.xlu0 0
      %772 = vperm.xlu0 %771, %v594
      %v773 = vpop.permute.xlu0 %772
      %776 = vset.pattern.permute.xlu0 0
      %777 = vperm.xlu0 %776, %v595
      %v778 = vpop.permute.xlu0 %777
      %781 = vset.pattern.permute.xlu0 0
      %782 = vperm.xlu0 %781, %v596
      %v783 = vpop.permute.xlu0 %782
      %786 = vset.pattern.permute.xlu0 0
      %787 = vperm.xlu0 %786, %v597
      %v788 = vpop.permute.xlu0 %787
      %791 = vset.pattern.permute.xlu0 0
      %792 = vperm.xlu0 %791, %v598
      %v793 = vpop.permute.xlu0 %792
      %796 = vset.pattern.permute.xlu0 0
      %797 = vperm.xlu0 %796, %v599
      %v798 = vpop.permute.xlu0 %797
      %801 = vset.pattern.permute.xlu0 0
      %802 = vperm.xlu0 %801, %v600
      %v803 = vpop.permute.xlu0 %802
      %806 = vset.pattern.permute.xlu0 0
      %807 = vperm.xlu0 %806, %v601
      %v808 = vpop.permute.xlu0 %807
      %811 = vset.pattern.permute.xlu0 0
      %812 = vperm.xlu0 %811, %v602
      %v813 = vpop.permute.xlu0 %812
      %816 = vset.pattern.permute.xlu0 0
      %817 = vperm.xlu0 %816, %v603
      %v818 = vpop.permute.xlu0 %817
      %821 = vset.pattern.permute.xlu0 0
      %822 = vperm.xlu0 %821, %v604
      %v823 = vpop.permute.xlu0 %822
      %v825 = vmul.f32 %v517, %v608
      %v826 = vmul.f32 %v518, %v613
      %v827 = vmul.f32 %v519, %v618
      %v828 = vmul.f32 %v520, %v623
      %v829 = vmul.f32 %v521, %v628
      %v830 = vmul.f32 %v522, %v633
      %v831 = vmul.f32 %v523, %v638
      %v832 = vmul.f32 %v524, %v643
      %v833 = vmul.f32 %v525, %v648
      %v834 = vmul.f32 %v526, %v653
      %v835 = vmul.f32 %v527, %v658
      %v836 = vmul.f32 %v528, %v663
      %v837 = vmul.f32 %v529, %v668
      %v838 = vmul.f32 %v530, %v673
      %v839 = vmul.f32 %v531, %v678
      %v840 = vmul.f32 %v532, %v683
      %v841 = vmul.f32 %v533, %v688
      %v842 = vmul.f32 %v534, %v693
      %v843 = vmul.f32 %v535, %v698
      %v844 = vmul.f32 %v536, %v703
      %v845 = vmul.f32 %v537, %v708
      %v846 = vmul.f32 %v538, %v713
      %v847 = vmul.f32 %v539, %v718
      %v848 = vmul.f32 %v540, %v723
      %v849 = vmul.f32 %v541, %v728
      %v850 = vmul.f32 %v542, %v733
      %v851 = vmul.f32 %v543, %v738
      %v852 = vmul.f32 %v544, %v743
      %v853 = vmul.f32 %v545, %v748
      %v854 = vmul.f32 %v546, %v753
      %v855 = vmul.f32 %v547, %v758
      %v856 = vmul.f32 %v548, %v763
      %v857 = vmul.f32 %v549, %v768
      %v858 = vmul.f32 %v550, %v773
      %v859 = vmul.f32 %v551, %v778
      %v860 = vmul.f32 %v552, %v783
      %v861 = vmul.f32 %v553, %v788
      %v862 = vmul.f32 %v554, %v793
      %v863 = vmul.f32 %v555, %v798
      %v864 = vmul.f32 %v556, %v803
      %v865 = vmul.f32 %v557, %v808
      %v866 = vmul.f32 %v558, %v813
      %v867 = vmul.f32 %v559, %v818
      %v868 = vmul.f32 %v560, %v823
      %v869 = vpack.c.bf16 %v825, %v825
      %v870 = vpack.c.bf16 %v826, %v826
      %v871 = vpack.c.bf16 %v827, %v827
      %v872 = vpack.c.bf16 %v828, %v828
      %v873 = vpack.c.bf16 %v829, %v829
      %v874 = vpack.c.bf16 %v830, %v830
      %v875 = vpack.c.bf16 %v831, %v831
      %v876 = vpack.c.bf16 %v832, %v832
      %v877 = vpack.c.bf16 %v833, %v833
      %v878 = vpack.c.bf16 %v834, %v834
      %v879 = vpack.c.bf16 %v835, %v835
      %v880 = vpack.c.bf16 %v836, %v836
      %v881 = vpack.c.bf16 %v837, %v837
      %v882 = vpack.c.bf16 %v838, %v838
      %v883 = vpack.c.bf16 %v839, %v839
      %v884 = vpack.c.bf16 %v840, %v840
      %v885 = vpack.c.bf16 %v841, %v841
      %v886 = vpack.c.bf16 %v842, %v842
      %v887 = vpack.c.bf16 %v843, %v843
      %v888 = vpack.c.bf16 %v844, %v844
      %v889 = vpack.c.bf16 %v845, %v845
      %v890 = vpack.c.bf16 %v846, %v846
      %v891 = vpack.c.bf16 %v847, %v847
      %v892 = vpack.c.bf16 %v848, %v848
      %v893 = vpack.c.bf16 %v849, %v849
      %v894 = vpack.c.bf16 %v850, %v850
      %v895 = vpack.c.bf16 %v851, %v851
      %v896 = vpack.c.bf16 %v852, %v852
      %v897 = vpack.c.bf16 %v853, %v853
      %v898 = vpack.c.bf16 %v854, %v854
      %v899 = vpack.c.bf16 %v855, %v855
      %v900 = vpack.c.bf16 %v856, %v856
      %v901 = vpack.c.bf16 %v857, %v857
      %v902 = vpack.c.bf16 %v858, %v858
      %v903 = vpack.c.bf16 %v859, %v859
      %v904 = vpack.c.bf16 %v860, %v860
      %v905 = vpack.c.bf16 %v861, %v861
      %v906 = vpack.c.bf16 %v862, %v862
      %v907 = vpack.c.bf16 %v863, %v863
      %v908 = vpack.c.bf16 %v864, %v864
      %v909 = vpack.c.bf16 %v865, %v865
      %v910 = vpack.c.bf16 %v866, %v866
      %v911 = vpack.c.bf16 %v867, %v867
      %v912 = vpack.c.bf16 %v868, %v868
      %913 = vst [vmem:[%s244] sm:$0xf] %v869
      %914 = vst [vmem:[%s244 + $0x4] sm:$0xf] %v870
      %915 = vst [vmem:[%s244 + $0x8] sm:$0xf] %v871
      %916 = vst [vmem:[%s244 + $0xc] sm:$0xf] %v872
      %917 = vst [vmem:[%s244 + $0x10] sm:$0xf] %v873
      %918 = vst [vmem:[%s244 + $0x14] sm:$0xf] %v874
      %919 = vst [vmem:[%s244 + $0x18] sm:$0xf] %v875
      %920 = vst [vmem:[%s244 + $0x1c] sm:$0xf] %v876
      %921 = vst [vmem:[%s244 + $0x20] sm:$0xf] %v877
      %922 = vst [vmem:[%s244 + $0x24] sm:$0xf] %v878
      %923 = vst [vmem:[%s244 + $0x28] sm:$0xf] %v879
      %924 = vst [vmem:[%s244 + $0x2c] sm:$0xf] %v880
      %925 = vst [vmem:[%s244 + $0x30] sm:$0xf] %v881
      %926 = vst [vmem:[%s244 + $0x34] sm:$0xf] %v882
      %927 = vst [vmem:[%s244 + $0x38] sm:$0xf] %v883
      %928 = vst [vmem:[%s244 + $0x3c] sm:$0xf] %v884
      %929 = vst [vmem:[%s244 + $0x40] sm:$0xf] %v885
      %930 = vst [vmem:[%s244 + $0x44] sm:$0xf] %v886
      %931 = vst [vmem:[%s244 + $0x48] sm:$0xf] %v887
      %932 = vst [vmem:[%s244 + $0x4c] sm:$0xf] %v888
      %933 = vst [vmem:[%s244 + $0x50] sm:$0xf] %v889
      %934 = vst [vmem:[%s244 + $0x54] sm:$0xf] %v890
      %935 = vst [vmem:[%s244 + $0x58] sm:$0xf] %v891
      %936 = vst [vmem:[%s244 + $0x5c] sm:$0xf] %v892
      %937 = vst [vmem:[%s244 + $0x60] sm:$0xf] %v893
      %938 = vst [vmem:[%s244 + $0x64] sm:$0xf] %v894
      %939 = vst [vmem:[%s244 + $0x68] sm:$0xf] %v895
      %940 = vst [vmem:[%s244 + $0x6c] sm:$0xf] %v896
      %941 = vst [vmem:[%s244 + $0x70] sm:$0xf] %v897
      %942 = vst [vmem:[%s244 + $0x74] sm:$0xf] %v898
      %943 = vst [vmem:[%s244 + $0x78] sm:$0xf] %v899
      %944 = vst [vmem:[%s244 + $0x7c] sm:$0xf] %v900
      %945 = vst [vmem:[%s244 + $0x80] sm:$0xf] %v901
      %946 = vst [vmem:[%s244 + $0x84] sm:$0xf] %v902
      %947 = vst [vmem:[%s244 + $0x88] sm:$0xf] %v903
      %948 = vst [vmem:[%s244 + $0x8c] sm:$0xf] %v904
      %949 = vst [vmem:[%s244 + $0x90] sm:$0xf] %v905
      %950 = vst [vmem:[%s244 + $0x94] sm:$0xf] %v906
      %951 = vst [vmem:[%s244 + $0x98] sm:$0xf] %v907
      %952 = vst [vmem:[%s244 + $0x9c] sm:$0xf] %v908
      %953 = vst [vmem:[%s244 + $0xa0] sm:$0xf] %v909
      %954 = vst [vmem:[%s244 + $0xa4] sm:$0xf] %v910
      %955 = vst [vmem:[%s244 + $0xa8] sm:$0xf] %v911
      %956 = vst [vmem:[%s244 + $0xac] sm:$0xf] %v912
      %p957 = scmp.lt.s32.totalorder %s16, 1
      %s958 = scalar_select %p957, %s16, 1
      %s959 = smul.addr %s958, 44
      %s960 = smul.addr %s959, 4
      %s961 = scalar_lea.vmem %s5, %s960
      // Predicated region
      $region41: #{basic_block_forward.15} parent=39 // pred_check
        %p962 = pneg %p149
      $region42: #{basic_block_forward.15} parent=39 // pred_check_branch
        %964 = sbr.rel (%p962) target = $region44
      $region43: #{basic_block_forward.15} parent=39 // pred_region
        _
      $region44: #{basic_block_forward.15} parent=39 // pred_fallthru
        _
    $region40: #{basic_block_forward.15} parent=5 // pred_fallthru
      _
    %p965 = scmp.le.s32.totalorder 2, %s11
    // Predicated region
    $region45: #{basic_block_forward.15} parent=5 // pred_check
      %p966 = pneg %p965
    $region46: #{basic_block_forward.15} parent=5 // pred_check_branch
      %968 = sbr.rel (%p966) target = $region48
    $region47: #{basic_block_forward.15} parent=5 // pred_region
      %s969 = ssub.s32 %s11, 2
      // Predicated region
      $region49: #{basic_block_forward.15} parent=47 // pred_check
        %p970 = pneg %p155
      $region50: #{basic_block_forward.15} parent=47 // pred_check_branch
        %972 = sbr.rel (%p970) target = $region52
      $region51: #{basic_block_forward.15} parent=47 // pred_region
        %p973 = scmp.lt.s32.totalorder %s17, 1
        %s974 = scalar_select %p973, %s17, 1
        %s975 = smul.addr %s974, 44
        %s976 = smul.addr %s975, 4
        %s977 = scalar_lea.vmem %s5, %s976
      $region52: #{basic_block_forward.15} parent=47 // pred_fallthru
        _
    $region48: #{basic_block_forward.15} parent=5 // pred_fallthru
      _
  $region6: #{basic_block_forward.15} parent=0 // loop_footer
    %s15 = sadd.s32 1, %s11
  $region7: #{basic_block_forward.15} parent=0 // loop_footer_branch
    %10 = sbr.rel target = $region3
  $region8: #{basic_block_forward.15} parent=0 // loop_exit
    _

// kernel: basic_block_forward.11
$region0: #{basic_block_forward.11}
  #allocation0 [shape = 'u32[]', space=smem, size = 0x4, offset = 0x4, fixed_abs, tag = 'smem constant byte address 0x4 - core index']
  #allocation1 [shape = 'u32[72,128]{1,0:T(1,128)}', space=vmem, size = 0x9000, scoped, tag = 'internal scratch']
  %s0 = inlined_call_operand.vmem [shape: bf16[2,352,128], index: 0, kind: input, shape index: {}]
  %s1 = inlined_call_operand.vmem [shape: bf16[9,128,128], index: 1, kind: input, shape index: {}]
  %s2 = inlined_call_operand.vmem [shape: f32[1,128], index: 2, kind: input, shape index: {}]
  %s3 = inlined_call_operand.vmem [shape: f32[352,1], index: 3, kind: input, shape index: {}]
  %s4 = inlined_call_operand.vmem [shape: bf16[2,352,128], index: 4, kind: output, shape index: {0}]
  %s5 = inlined_call_operand.hbm [shape: f32[2,1,128], index: 5, kind: output, shape index: {1}]
  %s6 = inlined_call_operand.hbm [shape: f32[2,1,128], index: 6, kind: output, shape index: {2}]
  %7 = xla_tuple %s4, %s5, %s6
  %s8 = sld [smem:[#allocation0]]
  $region65: #{basic_block_forward.11} parent=0
    _
  %s10 = ssub.s32 1, %s8
  %s11 = scalar_select 0, %s10, %s8
  $region1: #{basic_block_forward.11} parent=0
    #allocation2 [shape = 'u8[1024]{0}', space=vmem, size = 0x400, scoped, tag = 'output window, operand 1']
    #allocation3 [shape = 's32[2]{0}', space=sflag, size = 0x8, scoped, tag = 'scoped memory for basic_block_forward.11']
    #allocation4 [shape = 'u8[1024]{0}', space=vmem, size = 0x400, scoped, tag = 'output window, operand 2']
    #allocation5 [shape = 's32[2]{0}', space=sflag, size = 0x8, scoped, tag = 'scoped memory for basic_block_forward.11']
    %12 = vsyncpa [#allocation3], 0
    %s13 = scalar_lea.sflag [#allocation3], 1
    %14 = vsyncpa %s13, 0
    %15 = vsyncpa [#allocation5], 0
    %s16 = scalar_lea.sflag [#allocation5], 1
    %17 = vsyncpa %s16, 0
    loop: start=0, step=1, limit=4
    $region2: #{basic_block_forward.11} parent=1 // loop_pre_header
      _
    $region3: #{basic_block_forward.11} parent=1 // loop_header
      %s19 = sphi 0, %s23
      %p20 = scmp.ge.s32.totalorder %s19, 4
      %s29 = sphi 0, %s31
      %s32 = sphi 0, %s29
      %s33 = sphi 0, %s32
      %s49 = sphi 0, %s33
      %s53 = sphi 0, %s53
      %s55 = sphi 0, %s53
      %s56 = sphi 0, %s55
      %s70 = sphi 0, %s56
      %s74 = sphi 0, %s74
      %s76 = sphi 0, %s74
      %s77 = sphi 0, %s76
      %s91 = sphi 0, %s77
      %s95 = sphi 0, %s95
      %s97 = sphi 0, %s95
      %s98 = sphi 0, %s97
      %s112 = sphi 0, %s98
      %s118 = sphi 0, %s120
      %s121 = sphi 0, %s118
      %s122 = sphi 0, %s121
      %s138 = sphi 0, %s122
      %s144 = sphi 0, %s146
      %s147 = sphi 0, %s144
      %s148 = sphi 0, %s147
      %s164 = sphi 0, %s148
      %s170 = sphi 0, %s172
      %s173 = sphi 0, %s170
      %s174 = sphi 0, %s173
      %s190 = sphi 0, %s174
    $region4: #{basic_block_forward.11} parent=1 // loop_header_branch
      %22 = sbr.rel (%p20) target = $region8
    $region5: #{basic_block_forward.11} parent=1 // loop_body
      %s24 = ssub.s32 %s19, 1
      %s25 = ssub.s32 %s19, 2
      %s26 = sadd.s32 %s19, 1
      %s27 = ssub.s32 %s19, %s26
      %p28 = scmp.eq.s32.totalorder %s27, 0
      %s30 = sadd.s32 %s29, 1
      %s31 = scalar_select %p28, %s29, %s30
      %p34 = pneg %p28
      %p35 = scmp.eq.s32.totalorder %s19, 1
      %p36 = por %p34, %p35
      %p37 = scmp.ne.s32.totalorder %s29, %s32
      %p38 = scmp.eq.s32.totalorder %s19, 0
      %p39 = por %p37, %p38
      %p40 = scmp.ne.s32.totalorder %s29, %s32
      %p41 = scmp.eq.s32.totalorder %s24, 1
      %p42 = por %p40, %p41
      %p43 = scmp.ne.s32.totalorder %s32, %s33
      %p44 = scmp.eq.s32.totalorder %s24, 0
      %p45 = por %p43, %p44
      %p46 = scmp.ne.s32.totalorder %s32, %s33
      %p47 = scmp.eq.s32.totalorder %s25, 1
      %p48 = por %p46, %p47
      %p50 = scmp.ne.s32.totalorder %s33, %s49
      %p51 = scmp.eq.s32.totalorder %s25, 0
      %p52 = por %p50, %p51
      %s54 = sadd.s32 %s53, 1
      %p57 = scmp.eq.s32.totalorder %s19, 1
      %p58 = scmp.ne.s32.totalorder %s53, %s55
      %p59 = scmp.eq.s32.totalorder %s19, 0
      %p60 = por %p58, %p59
      %p61 = scmp.ne.s32.totalorder %s53, %s55
      %p62 = scmp.eq.s32.totalorder %s24, 1
      %p63 = por %p61, %p62
      %p64 = scmp.ne.s32.totalorder %s55, %s56
      %p65 = scmp.eq.s32.totalorder %s24, 0
      %p66 = por %p64, %p65
      %p67 = scmp.ne.s32.totalorder %s55, %s56
      %p68 = scmp.eq.s32.totalorder %s25, 1
      %p69 = por %p67, %p68
      %p71 = scmp.ne.s32.totalorder %s56, %s70
      %p72 = scmp.eq.s32.totalorder %s25, 0
      %p73 = por %p71, %p72
      %s75 = sadd.s32 %s74, 1
      %p78 = scmp.eq.s32.totalorder %s19, 1
      %p79 = scmp.ne.s32.totalorder %s74, %s76
      %p80 = scmp.eq.s32.totalorder %s19, 0
      %p81 = por %p79, %p80
      %p82 = scmp.ne.s32.totalorder %s74, %s76
      %p83 = scmp.eq.s32.totalorder %s24, 1
      %p84 = por %p82, %p83
      %p85 = scmp.ne.s32.totalorder %s76, %s77
      %p86 = scmp.eq.s32.totalorder %s24, 0
      %p87 = por %p85, %p86
      %p88 = scmp.ne.s32.totalorder %s76, %s77
      %p89 = scmp.eq.s32.totalorder %s25, 1
      %p90 = por %p88, %p89
      %p92 = scmp.ne.s32.totalorder %s77, %s91
      %p93 = scmp.eq.s32.totalorder %s25, 0
      %p94 = por %p92, %p93
      %s96 = sadd.s32 %s95, 1
      %p99 = scmp.eq.s32.totalorder %s19, 1
      %p100 = scmp.ne.s32.totalorder %s95, %s97
      %p101 = scmp.eq.s32.totalorder %s19, 0
      %p102 = por %p100, %p101
      %p103 = scmp.ne.s32.totalorder %s95, %s97
      %p104 = scmp.eq.s32.totalorder %s24, 1
      %p105 = por %p103, %p104
      %p106 = scmp.ne.s32.totalorder %s97, %s98
      %p107 = scmp.eq.s32.totalorder %s24, 0
      %p108 = por %p106, %p107
      %p109 = scmp.ne.s32.totalorder %s97, %s98
      %p110 = scmp.eq.s32.totalorder %s25, 1
      %p111 = por %p109, %p110
      %p113 = scmp.ne.s32.totalorder %s98, %s112
      %p114 = scmp.eq.s32.totalorder %s25, 0
      %p115 = por %p113, %p114
      %s116 = ssub.s32 %s19, %s26
      %p117 = scmp.eq.s32.totalorder %s116, 0
      %s119 = sadd.s32 %s118, 1
      %s120 = scalar_select %p117, %s118, %s119
      %p123 = pneg %p117
      %p124 = scmp.eq.s32.totalorder %s19, 1
      %p125 = por %p123, %p124
      %p126 = scmp.ne.s32.totalorder %s118, %s121
      %p127 = scmp.eq.s32.totalorder %s19, 0
      %p128 = por %p126, %p127
      %p129 = scmp.ne.s32.totalorder %s118, %s121
      %p130 = scmp.eq.s32.totalorder %s24, 1
      %p131 = por %p129, %p130
      %p132 = scmp.ne.s32.totalorder %s121, %s122
      %p133 = scmp.eq.s32.totalorder %s24, 0
      %p134 = por %p132, %p133
      %p135 = scmp.ne.s32.totalorder %s121, %s122
      %p136 = scmp.eq.s32.totalorder %s25, 1
      %p137 = por %p135, %p136
      %p139 = scmp.ne.s32.totalorder %s122, %s138
      %p140 = scmp.eq.s32.totalorder %s25, 0
      %p141 = por %p139, %p140
      %s142 = ssub.s32 %s19, %s26
      %p143 = scmp.eq.s32.totalorder %s142, 0
      %s145 = sadd.s32 %s144, 1
      %s146 = scalar_select %p143, %s144, %s145
      %p149 = pneg %p143
      %p150 = scmp.eq.s32.totalorder %s19, 1
      %p151 = por %p149, %p150
      %p152 = scmp.ne.s32.totalorder %s144, %s147
      %p153 = scmp.eq.s32.totalorder %s19, 0
      %p154 = por %p152, %p153
      %p155 = scmp.ne.s32.totalorder %s144, %s147
      %p156 = scmp.eq.s32.totalorder %s24, 1
      %p157 = por %p155, %p156
      %p158 = scmp.ne.s32.totalorder %s147, %s148
      %p159 = scmp.eq.s32.totalorder %s24, 0
      %p160 = por %p158, %p159
      %p161 = scmp.ne.s32.totalorder %s147, %s148
      %p162 = scmp.eq.s32.totalorder %s25, 1
      %p163 = por %p161, %p162
      %p165 = scmp.ne.s32.totalorder %s148, %s164
      %p166 = scmp.eq.s32.totalorder %s25, 0
      %p167 = por %p165, %p166
      %s168 = ssub.s32 %s19, %s26
      %p169 = scmp.eq.s32.totalorder %s168, 0
      %s171 = sadd.s32 %s170, 1
      %s172 = scalar_select %p169, %s170, %s171
      %p175 = pneg %p169
      %p176 = scmp.eq.s32.totalorder %s19, 1
      %p177 = por %p175, %p176
      %p178 = scmp.ne.s32.totalorder %s170, %s173
      %p179 = scmp.eq.s32.totalorder %s19, 0
      %p180 = por %p178, %p179
      %p181 = scmp.ne.s32.totalorder %s170, %s173
      %p182 = scmp.eq.s32.totalorder %s24, 1
      %p183 = por %p181, %p182
      %p184 = scmp.ne.s32.totalorder %s173, %s174
      %p185 = scmp.eq.s32.totalorder %s24, 0
      %p186 = por %p184, %p185
      %p187 = scmp.ne.s32.totalorder %s173, %s174
      %p188 = scmp.eq.s32.totalorder %s25, 1
      %p189 = por %p187, %p188
      %p191 = scmp.ne.s32.totalorder %s174, %s190
      %p192 = scmp.eq.s32.totalorder %s25, 0
      %p193 = por %p191, %p192
      %p194 = scmp.le.s32.totalorder 1, %s19
      %p195 = scmp.lt.s32.totalorder %s19, 3
      %p196 = pnand %p194, %p195
      %p197 = pneg %p196
      // Predicated region
      $region9: #{basic_block_forward.11} parent=5 // pred_check
        _
      $region10: #{basic_block_forward.11} parent=5 // pred_check_branch
        %199 = sbr.rel (%p196) target = $region12
      $region11: #{basic_block_forward.11} parent=5 // pred_region
        %s200 = ssub.s32 %s19, 1
        // Predicated region
        $region13: #{basic_block_forward.11} parent=11 // pred_check
          %p201 = pneg %p66
        $region14: #{basic_block_forward.11} parent=11 // pred_check_branch
          %203 = sbr.rel (%p201) target = $region16
        $region15: #{basic_block_forward.11} parent=11 // pred_region
          _
        $region16: #{basic_block_forward.11} parent=11 // pred_fallthru
          _
        // Predicated region
        $region17: #{basic_block_forward.11} parent=11 // pred_check
          %p204 = pneg %p87
        $region18: #{basic_block_forward.11} parent=11 // pred_check_branch
          %206 = sbr.rel (%p204) target = $region20
        $region19: #{basic_block_forward.11} parent=11 // pred_region
          _
        $region20: #{basic_block_forward.11} parent=11 // pred_fallthru
          _
        // Predicated region
        $region21: #{basic_block_forward.11} parent=11 // pred_check
          %p207 = pneg %p108
        $region22: #{basic_block_forward.11} parent=11 // pred_check_branch
          %209 = sbr.rel (%p207) target = $region24
        $region23: #{basic_block_forward.11} parent=11 // pred_region
          _
        $region24: #{basic_block_forward.11} parent=11 // pred_fallthru
          _
      $region12: #{basic_block_forward.11} parent=5 // pred_fallthru
        _
      %p210 = scmp.lt.s32.totalorder %s19, 2
      // Predicated region
      $region25: #{basic_block_forward.11} parent=5 // pred_check
        %p211 = pneg %p210
      $region26: #{basic_block_forward.11} parent=5 // pred_check_branch
        %213 = sbr.rel (%p211) target = $region28
      $region27: #{basic_block_forward.11} parent=5 // pred_region
        // Predicated region
        $region29: #{basic_block_forward.11} parent=27 // pred_check
          %p214 = pneg %p39
        $region30: #{basic_block_forward.11} parent=27 // pred_check_branch
          %216 = sbr.rel (%p214) target = $region32
        $region31: #{basic_block_forward.11} parent=27 // pred_region
          %p217 = scmp.lt.s32.totalorder %s19, 1
          %s218 = scalar_select %p217, %s19, 1
          %s219 = smul.addr %s218, 44
          %s220 = smul.addr %s219, 4
          %s221 = scalar_lea.vmem %s0, %s220
        $region32: #{basic_block_forward.11} parent=27 // pred_fallthru
          _
      $region28: #{basic_block_forward.11} parent=5 // pred_fallthru
        _
      %p222 = scmp.le.s32.totalorder 1, %s19
      %p223 = scmp.lt.s32.totalorder %s19, 3
      %p224 = pnand %p222, %p223
      %p225 = pneg %p224
      // Predicated region
      $region33: #{basic_block_forward.11} parent=5 // pred_check
        _
      $region34: #{basic_block_forward.11} parent=5 // pred_check_branch
        %227 = sbr.rel (%p224) target = $region36
      $region35: #{basic_block_forward.11} parent=5 // pred_region
        %s228 = ssub.s32 %s19, 1
        %p229 = scmp.lt.s32.totalorder %s24, 1
        %s230 = scalar_select %p229, %s24, 1
        %s231 = smul.addr %s230, 44
        %s232 = smul.addr %s231, 4
        %s233 = scalar_lea.vmem %s0, %s232
        %p234 = pneg %p45
        %p235 = pneg %p42
        %p236 = pneg %p66
        %p237 = pneg %p63
        %p238 = pneg %p87
        %p239 = pneg %p84
        %p240 = pneg %p108
        %p241 = pneg %p105
        %p242 = pneg %p134
        %p243 = pneg %p131
        %p244 = scmp.lt.s32.totalorder %s24, 1
        %s245 = scalar_select %p244, %s24, 1
        %s246 = smul.addr %s245, 44
        %s247 = smul.addr %s246, 4
        %s248 = scalar_lea.vmem %s4, %s247
        %p249 = pneg %p160
        %p250 = pneg %p157
        %s251 = sand.u32 %s147, 1
        %s252 = scalar_lea.sflag [#allocation3], %s251
        %s253 = sand.u32 %s147, 1
        %s254 = scalar_lea.vmem [#allocation2], %s253
        %p255 = pneg %p186
        %p256 = pneg %p183
        %s257 = sand.u32 %s173, 1
        %s258 = scalar_lea.sflag [#allocation5], %s257
        %s259 = sand.u32 %s173, 1
        %s260 = scalar_lea.vmem [#allocation4], %s259
        %p261 = scmp.lt.s32.totalorder %s24, 1
        %s262 = scalar_select %p261, %s24, 1
        %s263 = smul.addr %s262, 44
        %s264 = smul.addr %s263, 4
        %s265 = scalar_lea.vmem %s0, %s264
        %p266 = scmp.lt.s32.totalorder %s24, 1
        %s267 = scalar_select %p266, %s24, 1
        %s268 = smul.addr %s267, 44
        %s269 = smul.addr %s268, 4
        %s270 = scalar_lea.vmem %s4, %s269
        %v272 = vld [vmem:[%s265 + $0x4] sm:$0xf]
        %v273 = vld [vmem:[%s265 + $0x8] sm:$0xf]
        %v274 = vld [vmem:[%s265 + $0xc] sm:$0xf]
        %v275 = vld [vmem:[%s265 + $0x10] sm:$0xf]
        %v276 = vld [vmem:[%s265 + $0x14] sm:$0xf]
        %v277 = vld [vmem:[%s265 + $0x18] sm:$0xf]
        %v278 = vld [vmem:[%s265 + $0x1c] sm:$0xf]
        %v279 = vld [vmem:[%s265 + $0x20] sm:$0xf]
        %v280 = vld [vmem:[%s265 + $0x24] sm:$0xf]
        %v281 = vld [vmem:[%s265 + $0x28] sm:$0xf]
        %v282 = vld [vmem:[%s265 + $0x2c] sm:$0xf]
        %v283 = vld [vmem:[%s265 + $0x30] sm:$0xf]
        %v284 = vld [vmem:[%s265 + $0x34] sm:$0xf]
        %v285 = vld [vmem:[%s265 + $0x38] sm:$0xf]
        %v286 = vld [vmem:[%s265 + $0x3c] sm:$0xf]
        %v287 = vld [vmem:[%s265 + $0x40] sm:$0xf]
        %v288 = vld [vmem:[%s265 + $0x44] sm:$0xf]
        %v289 = vld [vmem:[%s265 + $0x48] sm:$0xf]
        %v290 = vld [vmem:[%s265 + $0x4c] sm:$0xf]
        %v291 = vld [vmem:[%s265 + $0x50] sm:$0xf]
        %v292 = vld [vmem:[%s265 + $0x54] sm:$0xf]
        %v293 = vld [vmem:[%s265 + $0x58] sm:$0xf]
        %v294 = vld [vmem:[%s265 + $0x5c] sm:$0xf]
        %v295 = vld [vmem:[%s265 + $0x60] sm:$0xf]
        %v296 = vld [vmem:[%s265 + $0x64] sm:$0xf]
        %v297 = vld [vmem:[%s265 + $0x68] sm:$0xf]
        %v298 = vld [vmem:[%s265 + $0x6c] sm:$0xf]
        %v299 = vld [vmem:[%s265 + $0x70] sm:$0xf]
        %v300 = vld [vmem:[%s265 + $0x74] sm:$0xf]
        %v301 = vld [vmem:[%s265 + $0x78] sm:$0xf]
        %v302 = vld [vmem:[%s265 + $0x7c] sm:$0xf]
        %v303 = vld [vmem:[%s265 + $0x80] sm:$0xf]
        %v304 = vld [vmem:[%s265 + $0x84] sm:$0xf]
        %v305 = vld [vmem:[%s265 + $0x88] sm:$0xf]
        %v306 = vld [vmem:[%s265 + $0x8c] sm:$0xf]
        %v307 = vld [vmem:[%s265 + $0x90] sm:$0xf]
        %v308 = vld [vmem:[%s265 + $0x94] sm:$0xf]
        %v309 = vld [vmem:[%s265 + $0x98] sm:$0xf]
        %v310 = vld [vmem:[%s265 + $0x9c] sm:$0xf]
        %v311 = vld [vmem:[%s265 + $0xa0] sm:$0xf]
        %v312 = vld [vmem:[%s265 + $0xa4] sm:$0xf]
        %v313 = vld [vmem:[%s265 + $0xa8] sm:$0xf]
        %v314 = vunpack.c.l.bf16 %v272
        %v315 = vunpack.c.l.bf16 %v273
        %v316 = vunpack.c.l.bf16 %v274
        %v317 = vunpack.c.l.bf16 %v275
        %v318 = vunpack.c.l.bf16 %v276
        %v319 = vunpack.c.l.bf16 %v277
        %v320 = vunpack.c.l.bf16 %v278
        %v321 = vunpack.c.l.bf16 %v279
        %v322 = vunpack.c.l.bf16 %v280
        %v323 = vunpack.c.l.bf16 %v281
        %v324 = vunpack.c.l.bf16 %v282
        %v325 = vunpack.c.l.bf16 %v283
        %v326 = vunpack.c.l.bf16 %v284
        %v327 = vunpack.c.l.bf16 %v285
        %v328 = vunpack.c.l.bf16 %v286
        %v329 = vunpack.c.l.bf16 %v287
        %v330 = vunpack.c.l.bf16 %v288
        %v331 = vunpack.c.l.bf16 %v289
        %v332 = vunpack.c.l.bf16 %v290
        %v333 = vunpack.c.l.bf16 %v291
        %v334 = vunpack.c.l.bf16 %v292
        %v335 = vunpack.c.l.bf16 %v293
        %v336 = vunpack.c.l.bf16 %v294
        %v337 = vunpack.c.l.bf16 %v295
        %v338 = vunpack.c.l.bf16 %v296
        %v339 = vunpack.c.l.bf16 %v297
        %v340 = vunpack.c.l.bf16 %v298
        %v341 = vunpack.c.l.bf16 %v299
        %v342 = vunpack.c.l.bf16 %v300
        %v343 = vunpack.c.l.bf16 %v301
        %v344 = vunpack.c.l.bf16 %v302
        %v345 = vunpack.c.l.bf16 %v303
        %v346 = vunpack.c.l.bf16 %v304
        %v347 = vunpack.c.l.bf16 %v305
        %v348 = vunpack.c.l.bf16 %v306
        %v349 = vunpack.c.l.bf16 %v307
        %v350 = vunpack.c.l.bf16 %v308
        %v351 = vunpack.c.l.bf16 %v309
        %v352 = vunpack.c.l.bf16 %v310
        %v353 = vunpack.c.l.bf16 %v311
        %v354 = vunpack.c.l.bf16 %v312
        %v355 = vunpack.c.l.bf16 %v313
        %v356 = vpack.c.bf16 %v315, %v314
        %v357 = vpack.c.bf16 %v317, %v316
        %v358 = vpack.c.bf16 %v319, %v318
        %v359 = vpack.c.bf16 %v321, %v320
        %v360 = vpack.c.bf16 %v323, %v322
        %v361 = vpack.c.bf16 %v325, %v324
        %v362 = vpack.c.bf16 %v327, %v326
        %v363 = vpack.c.bf16 %v329, %v328
        %v364 = vpack.c.bf16 %v331, %v330
        %v365 = vpack.c.bf16 %v333, %v332
        %v366 = vpack.c.bf16 %v335, %v334
        %v367 = vpack.c.bf16 %v337, %v336
        %v368 = vpack.c.bf16 %v339, %v338
        %v369 = vpack.c.bf16 %v341, %v340
        %v370 = vpack.c.bf16 %v343, %v342
        %v371 = vpack.c.bf16 %v345, %v344
        %v372 = vpack.c.bf16 %v347, %v346
        %v373 = vpack.c.bf16 %v349, %v348
        %v374 = vpack.c.bf16 %v350, %v350
        %v375 = vld [vmem:[%s1] sm:$0xf]
        %v376 = vld [vmem:[%s1 + $0x4] sm:$0xf]
        %v377 = vld [vmem:[%s1 + $0x8] sm:$0xf]
        %v378 = vld [vmem:[%s1 + $0xc] sm:$0xf]
        %v379 = vld [vmem:[%s1 + $0x10] sm:$0xf]
        %v380 = vld [vmem:[%s1 + $0x14] sm:$0xf]
        %v381 = vld [vmem:[%s1 + $0x18] sm:$0xf]
        %v382 = vld [vmem:[%s1 + $0x1c] sm:$0xf]
        %v383 = vld [vmem:[%s1 + $0x20] sm:$0xf]
        %v384 = vld [vmem:[%s1 + $0x24] sm:$0xf]
        %v385 = vld [vmem:[%s1 + $0x28] sm:$0xf]
        %v386 = vld [vmem:[%s1 + $0x2c] sm:$0xf]
        %v387 = vld [vmem:[%s1 + $0x30] sm:$0xf]
        %v388 = vld [vmem:[%s1 + $0x34] sm:$0xf]
        %v389 = vld [vmem:[%s1 + $0x38] sm:$0xf]
        %v390 = vld [vmem:[%s1 + $0x3c] sm:$0xf]
        %s391 = scalar_lea.vmem %s1, 64
        %v392 = vld [vmem:[%s391] sm:$0xf]
        %v393 = vld [vmem:[%s391 + $0x4] sm:$0xf]
        %v394 = vld [vmem:[%s391 + $0x8] sm:$0xf]
        %v395 = vld [vmem:[%s391 + $0xc] sm:$0xf]
        %v396 = vld [vmem:[%s391 + $0x10] sm:$0xf]
        %v397 = vld [vmem:[%s391 + $0x14] sm:$0xf]
        %v398 = vld [vmem:[%s391 + $0x18] sm:$0xf]
        %v399 = vld [vmem:[%s391 + $0x1c] sm:$0xf]
        %v400 = vld [vmem:[%s391 + $0x20] sm:$0xf]
        %v401 = vld [vmem:[%s391 + $0x24] sm:$0xf]
        %v402 = vld [vmem:[%s391 + $0x28] sm:$0xf]
        %v403 = vld [vmem:[%s391 + $0x2c] sm:$0xf]
        %v404 = vld [vmem:[%s391 + $0x30] sm:$0xf]
        %v405 = vld [vmem:[%s391 + $0x34] sm:$0xf]
        %v406 = vld [vmem:[%s391 + $0x38] sm:$0xf]
        %v407 = vld [vmem:[%s391 + $0x3c] sm:$0xf]
        %vm408 = vsmask.f32 5376
        %v410 = vshrl.u32 %v356, 16
        %v412 = vrot.slane %v410, 2
        %v413 = vshll.u32 %v356, 16
        %v415 = vrot.slane %v413, 3
        %v416 = vor.u32 %v412, %v415
        %v418 = vshrl.u32 %v357, 16
        %v420 = vrot.slane %v418, 2
        %v421 = vshll.u32 %v357, 16
        %v423 = vrot.slane %v421, 3
        %v424 = vor.u32 %v420, %v423
        %v425 = vsel %vm408, %v416, %v424
        %v427 = vshrl.u32 %v358, 16
        %v429 = vrot.slane %v427, 2
        %v430 = vshll.u32 %v358, 16
        %v432 = vrot.slane %v430, 3
        %v433 = vor.u32 %v429, %v432
        %v434 = vsel %vm408, %v424, %v433
        %v436 = vshrl.u32 %v359, 16
        %v438 = vrot.slane %v436, 2
        %v439 = vshll.u32 %v359, 16
        %v441 = vrot.slane %v439, 3
        %v442 = vor.u32 %v438, %v441
        %v443 = vsel %vm408, %v433, %v442
        %v445 = vshrl.u32 %v360, 16
        %v447 = vrot.slane %v445, 2
        %v448 = vshll.u32 %v360, 16
        %v450 = vrot.slane %v448, 3
        %v451 = vor.u32 %v447, %v450
        %v452 = vsel %vm408, %v442, %v451
        %v454 = vshrl.u32 %v361, 16
        %v456 = vrot.slane %v454, 2
        %v457 = vshll.u32 %v361, 16
        %v459 = vrot.slane %v457, 3
        %v460 = vor.u32 %v456, %v459
        %v461 = vsel %vm408, %v451, %v460
        %v463 = vshrl.u32 %v362, 16
        %v465 = vrot.slane %v463, 2
        %v466 = vshll.u32 %v362, 16
        %v468 = vrot.slane %v466, 3
        %v469 = vor.u32 %v465, %v468
        %v470 = vsel %vm408, %v460, %v469
        %v472 = vshrl.u32 %v363, 16
        %v474 = vrot.slane %v472, 2
        %v475 = vshll.u32 %v363, 16
        %v477 = vrot.slane %v475, 3
        %v478 = vor.u32 %v474, %v477
        %v479 = vsel %vm408, %v469, %v478
        %v481 = vshrl.u32 %v364, 16
        %v483 = vrot.slane %v481, 2
        %v484 = vshll.u32 %v364, 16
        %v486 = vrot.slane %v484, 3
        %v487 = vor.u32 %v483, %v486
        %v488 = vsel %vm408, %v478, %v487
        %v490 = vshrl.u32 %v365, 16
        %v492 = vrot.slane %v490, 2
        %v493 = vshll.u32 %v365, 16
        %v495 = vrot.slane %v493, 3
        %v496 = vor.u32 %v492, %v495
        %v497 = vsel %vm408, %v487, %v496
        %v499 = vshrl.u32 %v366, 16
        %v501 = vrot.slane %v499, 2
        %v502 = vshll.u32 %v366, 16
        %v504 = vrot.slane %v502, 3
        %v505 = vor.u32 %v501, %v504
        %v506 = vsel %vm408, %v496, %v505
        %v508 = vshrl.u32 %v367, 16
        %v510 = vrot.slane %v508, 2
        %v511 = vshll.u32 %v367, 16
        %v513 = vrot.slane %v511, 3
        %v514 = vor.u32 %v510, %v513
        %v515 = vsel %vm408, %v505, %v514
        %v517 = vshrl.u32 %v368, 16
        %v519 = vrot.slane %v517, 2
        %v520 = vshll.u32 %v368, 16
        %v522 = vrot.slane %v520, 3
        %v523 = vor.u32 %v519, %v522
        %v524 = vsel %vm408, %v514, %v523
        %v526 = vshrl.u32 %v369, 16
        %v528 = vrot.slane %v526, 2
        %v529 = vshll.u32 %v369, 16
        %v531 = vrot.slane %v529, 3
        %v532 = vor.u32 %v528, %v531
        %v533 = vsel %vm408, %v523, %v532
        %v535 = vshrl.u32 %v370, 16
        %v537 = vrot.slane %v535, 2
        %v538 = vshll.u32 %v370, 16
        %v540 = vrot.slane %v538, 3
        %v541 = vor.u32 %v537, %v540
        %v542 = vsel %vm408, %v532, %v541
        %v544 = vshrl.u32 %v371, 16
        %v546 = vrot.slane %v544, 2
        %v547 = vshll.u32 %v371, 16
        %v549 = vrot.slane %v547, 3
        %v550 = vor.u32 %v546, %v549
        %v551 = vsel %vm408, %v541, %v550
        %v553 = vshrl.u32 %v372, 16
        %v555 = vrot.slane %v553, 2
        %v556 = vshll.u32 %v372, 16
        %v558 = vrot.slane %v556, 3
        %v559 = vor.u32 %v555, %v558
        %v560 = vsel %vm408, %v550, %v559
        %v562 = vshrl.u32 %v373, 16
        %v564 = vrot.slane %v562, 2
        %v565 = vshll.u32 %v373, 16
        %v567 = vrot.slane %v565, 3
        %v568 = vor.u32 %v564, %v567
        %v569 = vsel %vm408, %v559, %v568
        %v571 = vshrl.u32 %v374, 16
        %v573 = vrot.slane %v571, 2
        %v574 = vshll.u32 %v374, 16
        %v576 = vrot.slane %v574, 3
        %v577 = vor.u32 %v573, %v576
        %v578 = vsel %vm408, %v568, %v577
        %v613 = vunpack.c.l.b16 %v392
        %v614 = vunpack.c.l.b16 %v393
        %v615 = vunpack.c.l.b16 %v394
        %v616 = vunpack.c.l.b16 %v395
        %v617 = vunpack.c.l.b16 %v396
        %v618 = vunpack.c.l.b16 %v397
        %v619 = vunpack.c.l.b16 %v398
        %v620 = vunpack.c.l.b16 %v399
        %v621 = vunpack.c.l.b16 %v400
        %v622 = vunpack.c.l.b16 %v401
        %v623 = vunpack.c.l.b16 %v402
        %v624 = vunpack.c.l.b16 %v403
        %v625 = vunpack.c.l.b16 %v404
        %v626 = vunpack.c.l.b16 %v405
        %v627 = vunpack.c.l.b16 %v406
        %v628 = vunpack.c.l.b16 %v407
        %v629 = vpack.c.b16 %v614, %v613
        %v630 = vpack.c.b16 %v616, %v615
        %v631 = vpack.c.b16 %v618, %v617
        %v632 = vpack.c.b16 %v620, %v619
        %v633 = vpack.c.b16 %v622, %v621
        %v634 = vpack.c.b16 %v624, %v623
        %v635 = vpack.c.b16 %v626, %v625
        %v636 = vpack.c.b16 %v628, %v627
        %645 = vmatpush.bf16.msra.mxu0 %v636
        %646 = vmatpush.bf16.msra.mxu0 %v635
        %647 = vmatpush.bf16.msra.mxu0 %v634
        %648 = vmatpush.bf16.msra.mxu0 %v633
        %649 = vmatpush.bf16.msra.mxu0 %v632
        %650 = vmatpush.bf16.msra.mxu0 %v631
        %651 = vmatpush.bf16.msra.mxu0 %v630
        %652 = vmatpush.bf16.msra.mxu0 %v629
        %653 = vmatmul.bf16.gmra.mxu0 %v425
        %v654 = vpop.f32.mrf.mxu0
        %v655 = vadd.f32 0.0, %v654
        %v656 = vpop.f32.mrf.mxu0
        %v657 = vadd.f32 0.0, %v656
        %658 = vmatmul.bf16.gmra.mxu0 %v434
        %v659 = vpop.f32.mrf.mxu0
        %v660 = vadd.f32 0.0, %v659
        %v661 = vpop.f32.mrf.mxu0
        %v662 = vadd.f32 0.0, %v661
        %663 = vmatmul.bf16.gmra.mxu0 %v443
        %v664 = vpop.f32.mrf.mxu0
        %v665 = vadd.f32 0.0, %v664
        %v666 = vpop.f32.mrf.mxu0
        %v667 = vadd.f32 0.0, %v666
        %668 = vmatmul.bf16.gmra.mxu0 %v452
        %v669 = vpop.f32.mrf.mxu0
        %v670 = vadd.f32 0.0, %v669
        %v671 = vpop.f32.mrf.mxu0
        %v672 = vadd.f32 0.0, %v671
        %673 = vmatmul.bf16.gmra.mxu0 %v461
        %v674 = vpop.f32.mrf.mxu0
        %v675 = vadd.f32 0.0, %v674
        %v676 = vpop.f32.mrf.mxu0
        %v677 = vadd.f32 0.0, %v676
        %678 = vmatmul.bf16.gmra.mxu0 %v470
        %v679 = vpop.f32.mrf.mxu0
        %v680 = vadd.f32 0.0, %v679
        %v681 = vpop.f32.mrf.mxu0
        %v682 = vadd.f32 0.0, %v681
        %683 = vmatmul.bf16.gmra.mxu0 %v479
        %v684 = vpop.f32.mrf.mxu0
        %v685 = vadd.f32 0.0, %v684
        %v686 = vpop.f32.mrf.mxu0
        %v687 = vadd.f32 0.0, %v686
        %688 = vmatmul.bf16.gmra.mxu0 %v488
        %v689 = vpop.f32.mrf.mxu0
        %v690 = vadd.f32 0.0, %v689
        %v691 = vpop.f32.mrf.mxu0
        %v692 = vadd.f32 0.0, %v691
        %693 = vmatmul.bf16.gmra.mxu0 %v497
        %v694 = vpop.f32.mrf.mxu0
        %v695 = vadd.f32 0.0, %v694
        %v696 = vpop.f32.mrf.mxu0
        %v697 = vadd.f32 0.0, %v696
        %698 = vmatmul.bf16.gmra.mxu0 %v506
        %v699 = vpop.f32.mrf.mxu0
        %v700 = vadd.f32 0.0, %v699
        %v701 = vpop.f32.mrf.mxu0
        %v702 = vadd.f32 0.0, %v701
        %703 = vmatmul.bf16.gmra.mxu0 %v515
        %v704 = vpop.f32.mrf.mxu0
        %v705 = vadd.f32 0.0, %v704
        %v706 = vpop.f32.mrf.mxu0
        %v707 = vadd.f32 0.0, %v706
        %708 = vmatmul.bf16.gmra.mxu0 %v524
        %v709 = vpop.f32.mrf.mxu0
        %v710 = vadd.f32 0.0, %v709
        %v711 = vpop.f32.mrf.mxu0
        %v712 = vadd.f32 0.0, %v711
        %713 = vmatmul.bf16.gmra.mxu0 %v533
        %v714 = vpop.f32.mrf.mxu0
        %v715 = vadd.f32 0.0, %v714
        %v716 = vpop.f32.mrf.mxu0
        %v717 = vadd.f32 0.0, %v716
        %718 = vmatmul.bf16.gmra.mxu0 %v542
        %v719 = vpop.f32.mrf.mxu0
        %v720 = vadd.f32 0.0, %v719
        %v721 = vpop.f32.mrf.mxu0
        %v722 = vadd.f32 0.0, %v721
        %723 = vmatmul.bf16.gmra.mxu0 %v551
        %v724 = vpop.f32.mrf.mxu0
        %v725 = vadd.f32 0.0, %v724
        %v726 = vpop.f32.mrf.mxu0
        %v727 = vadd.f32 0.0, %v726
        %728 = vmatmul.bf16.gmra.mxu0 %v560
        %v729 = vpop.f32.mrf.mxu0
        %v730 = vadd.f32 0.0, %v729
        %v731 = vpop.f32.mrf.mxu0
        %v732 = vadd.f32 0.0, %v731
        %733 = vmatmul.bf16.gmra.mxu0 %v569
        %v734 = vpop.f32.mrf.mxu0
        %v735 = vadd.f32 0.0, %v734
        %v736 = vpop.f32.mrf.mxu0
        %v737 = vadd.f32 0.0, %v736
        %738 = vmatmul.bf16.gmra.mxu0 %v578
        %v739 = vpop.f32.mrf.mxu0
        %v740 = vadd.f32 0.0, %v739
        %v741 = vpop.f32.mrf.mxu0
        %v742 = vadd.f32 0.0, %v741
        %743 = vdwg.mxu0
        %vm763 = vcmask 1045504
        %v764 = vrot.slane %v356, 2
        %v765 = vrot.slane %v357, 2
        %v766 = vsel %vm763, %v764, %v765
        %v767 = vrot.slane %v358, 2
        %v768 = vsel %vm763, %v765, %v767
        %v769 = vrot.slane %v359, 2
        %v770 = vsel %vm763, %v767, %v769
        %v771 = vrot.slane %v360, 2
        %v772 = vsel %vm763, %v769, %v771
        %v773 = vrot.slane %v361, 2
        %v774 = vsel %vm763, %v771, %v773
        %v775 = vrot.slane %v362, 2
        %v776 = vsel %vm763, %v773, %v775
        %v777 = vrot.slane %v363, 2
        %v778 = vsel %vm763, %v775, %v777
        %v779 = vrot.slane %v364, 2
        %v780 = vsel %vm763, %v777, %v779
        %v781 = vrot.slane %v365, 2
        %v782 = vsel %vm763, %v779, %v781
        %v783 = vrot.slane %v366, 2
        %v784 = vsel %vm763, %v781, %v783
        %v785 = vrot.slane %v367, 2
        %v786 = vsel %vm763, %v783, %v785
        %v787 = vrot.slane %v368, 2
        %v788 = vsel %vm763, %v785, %v787
        %v789 = vrot.slane %v369, 2
        %v790 = vsel %vm763, %v787, %v789
        %v791 = vrot.slane %v370, 2
        %v792 = vsel %vm763, %v789, %v791
        %v793 = vrot.slane %v371, 2
        %v794 = vsel %vm763, %v791, %v793
        %v795 = vrot.slane %v372, 2
        %v796 = vsel %vm763, %v793, %v795
        %v797 = vrot.slane %v373, 2
        %v798 = vsel %vm763, %v795, %v797
        %v799 = vrot.slane %v374, 2
        %v800 = vsel %vm763, %v797, %v799
        %v835 = vunpack.c.l.b16 %v375
        %v836 = vunpack.c.l.b16 %v376
        %v837 = vunpack.c.l.b16 %v377
        %v838 = vunpack.c.l.b16 %v378
        %v839 = vunpack.c.l.b16 %v379
        %v840 = vunpack.c.l.b16 %v380
        %v841 = vunpack.c.l.b16 %v381
        %v842 = vunpack.c.l.b16 %v382
        %v843 = vunpack.c.l.b16 %v383
        %v844 = vunpack.c.l.b16 %v384
        %v845 = vunpack.c.l.b16 %v385
        %v846 = vunpack.c.l.b16 %v386
        %v847 = vunpack.c.l.b16 %v387
        %v848 = vunpack.c.l.b16 %v388
        %v849 = vunpack.c.l.b16 %v389
        %v850 = vunpack.c.l.b16 %v390
        %v851 = vpack.c.b16 %v836, %v835
        %v852 = vpack.c.b16 %v838, %v837
        %v853 = vpack.c.b16 %v840, %v839
        %v854 = vpack.c.b16 %v842, %v841
        %v855 = vpack.c.b16 %v844, %v843
        %v856 = vpack.c.b16 %v846, %v845
        %v857 = vpack.c.b16 %v848, %v847
        %v858 = vpack.c.b16 %v850, %v849
        %867 = vmatpush.bf16.msra.mxu0 %v858
        %868 = vmatpush.bf16.msra.mxu0 %v857
        %869 = vmatpush.bf16.msra.mxu0 %v856
        %870 = vmatpush.bf16.msra.mxu0 %v855
        %871 = vmatpush.bf16.msra.mxu0 %v854
        %872 = vmatpush.bf16.msra.mxu0 %v853
        %873 = vmatpush.bf16.msra.mxu0 %v852
        %874 = vmatpush.bf16.msra.mxu0 %v851
        %875 = vmatmul.bf16.gmra.mxu0 %v766
        %v876 = vpop.f32.mrf.mxu0
        %v877 = vadd.f32 %v655, %v876
        %v878 = vpop.f32.mrf.mxu0
        %v879 = vadd.f32 %v657, %v878
        %880 = vmatmul.bf16.gmra.mxu0 %v768
        %v881 = vpop.f32.mrf.mxu0
        %v882 = vadd.f32 %v660, %v881
        %v883 = vpop.f32.mrf.mxu0
        %v884 = vadd.f32 %v662, %v883
        %885 = vmatmul.bf16.gmra.mxu0 %v770
        %v886 = vpop.f32.mrf.mxu0
        %v887 = vadd.f32 %v665, %v886
        %v888 = vpop.f32.mrf.mxu0
        %v889 = vadd.f32 %v667, %v888
        %890 = vmatmul.bf16.gmra.mxu0 %v772
        %v891 = vpop.f32.mrf.mxu0
        %v892 = vadd.f32 %v670, %v891
        %v893 = vpop.f32.mrf.mxu0
        %v894 = vadd.f32 %v672, %v893
        %895 = vmatmul.bf16.gmra.mxu0 %v774
        %v896 = vpop.f32.mrf.mxu0
        %v897 = vadd.f32 %v675, %v896
        %v898 = vpop.f32.mrf.mxu0
        %v899 = vadd.f32 %v677, %v898
        %900 = vmatmul.bf16.gmra.mxu0 %v776
        %v901 = vpop.f32.mrf.mxu0
        %v902 = vadd.f32 %v680, %v901
        %v903 = vpop.f32.mrf.mxu0
        %v904 = vadd.f32 %v682, %v903
        %905 = vmatmul.bf16.gmra.mxu0 %v778
        %v906 = vpop.f32.mrf.mxu0
        %v907 = vadd.f32 %v685, %v906
        %v908 = vpop.f32.mrf.mxu0
        %v909 = vadd.f32 %v687, %v908
        %910 = vmatmul.bf16.gmra.mxu0 %v780
        %v911 = vpop.f32.mrf.mxu0
        %v912 = vadd.f32 %v690, %v911
        %v913 = vpop.f32.mrf.mxu0
        %v914 = vadd.f32 %v692, %v913
        %915 = vmatmul.bf16.gmra.mxu0 %v782
        %v916 = vpop.f32.mrf.mxu0
        %v917 = vadd.f32 %v695, %v916
        %v918 = vpop.f32.mrf.mxu0
        %v919 = vadd.f32 %v697, %v918
        %920 = vmatmul.bf16.gmra.mxu0 %v784
        %v921 = vpop.f32.mrf.mxu0
        %v922 = vadd.f32 %v700, %v921
        %v923 = vpop.f32.mrf.mxu0
        %v924 = vadd.f32 %v702, %v923
        %925 = vmatmul.bf16.gmra.mxu0 %v786
        %v926 = vpop.f32.mrf.mxu0
        %v927 = vadd.f32 %v705, %v926
        %v928 = vpop.f32.mrf.mxu0
        %v929 = vadd.f32 %v707, %v928
        %930 = vmatmul.bf16.gmra.mxu0 %v788
        %v931 = vpop.f32.mrf.mxu0
        %v932 = vadd.f32 %v710, %v931
        %v933 = vpop.f32.mrf.mxu0
        %v934 = vadd.f32 %v712, %v933
        %935 = vmatmul.bf16.gmra.mxu0 %v790
        %v936 = vpop.f32.mrf.mxu0
        %v937 = vadd.f32 %v715, %v936
        %v938 = vpop.f32.mrf.mxu0
        %v939 = vadd.f32 %v717, %v938
        %940 = vmatmul.bf16.gmra.mxu0 %v792
        %v941 = vpop.f32.mrf.mxu0
        %v942 = vadd.f32 %v720, %v941
        %v943 = vpop.f32.mrf.mxu0
        %v944 = vadd.f32 %v722, %v943
        %945 = vmatmul.bf16.gmra.mxu0 %v794
        %v946 = vpop.f32.mrf.mxu0
        %v947 = vadd.f32 %v725, %v946
        %v948 = vpop.f32.mrf.mxu0
        %v949 = vadd.f32 %v727, %v948
        %950 = vmatmul.bf16.gmra.mxu0 %v796
        %v951 = vpop.f32.mrf.mxu0
        %v952 = vadd.f32 %v730, %v951
        %v953 = vpop.f32.mrf.mxu0
        %v954 = vadd.f32 %v732, %v953
        %955 = vmatmul.bf16.gmra.mxu0 %v798
        %v956 = vpop.f32.mrf.mxu0
        %v957 = vadd.f32 %v735, %v956
        %v958 = vpop.f32.mrf.mxu0
        %v959 = vadd.f32 %v737, %v958
        %960 = vmatmul.bf16.gmra.mxu0 %v800
        %v961 = vpop.f32.mrf.mxu0
        %v962 = vadd.f32 %v740, %v961
        %v963 = vpop.f32.mrf.mxu0
        %v964 = vadd.f32 %v742, %v963
        %965 = vdwg.mxu0
        %s966 = scalar_lea.vmem %s1, 128
        %v967 = vld [vmem:[%s966] sm:$0xf]
        %v968 = vld [vmem:[%s966 + $0x4] sm:$0xf]
        %v969 = vld [vmem:[%s966 + $0x8] sm:$0xf]
        %v970 = vld [vmem:[%s966 + $0xc] sm:$0xf]
        %v971 = vld [vmem:[%s966 + $0x10] sm:$0xf]
        %v972 = vld [vmem:[%s966 + $0x14] sm:$0xf]
        %v973 = vld [vmem:[%s966 + $0x18] sm:$0xf]
        %v974 = vld [vmem:[%s966 + $0x1c] sm:$0xf]
        %v975 = vld [vmem:[%s966 + $0x20] sm:$0xf]
        %v976 = vld [vmem:[%s966 + $0x24] sm:$0xf]
        %v977 = vld [vmem:[%s966 + $0x28] sm:$0xf]
        %v978 = vld [vmem:[%s966 + $0x2c] sm:$0xf]
        %v979 = vld [vmem:[%s966 + $0x30] sm:$0xf]
        %v980 = vld [vmem:[%s966 + $0x34] sm:$0xf]
        %v981 = vld [vmem:[%s966 + $0x38] sm:$0xf]
        %v982 = vld [vmem:[%s966 + $0x3c] sm:$0xf]
        %vm983 = vcmask 1044480
        %v984 = vrot.slane %v356, 3
        %v985 = vrot.slane %v357, 3
        %v986 = vsel %vm983, %v984, %v985
        %v987 = vrot.slane %v358, 3
        %v988 = vsel %vm983, %v985, %v987
        %v989 = vrot.slane %v359, 3
        %v990 = vsel %vm983, %v987, %v989
        %v991 = vrot.slane %v360, 3
        %v992 = vsel %vm983, %v989, %v991
        %v993 = vrot.slane %v361, 3
        %v994 = vsel %vm983, %v991, %v993
        %v995 = vrot.slane %v362, 3
        %v996 = vsel %vm983, %v993, %v995
        %v997 = vrot.slane %v363, 3
        %v998 = vsel %vm983, %v995, %v997
        %v999 = vrot.slane %v364, 3
        %v1000 = vsel %vm983, %v997, %v999
        %v1001 = vrot.slane %v365, 3
        %v1002 = vsel %vm983, %v999, %v1001
        %v1003 = vrot.slane %v366, 3
        %v1004 = vsel %vm983, %v1001, %v1003
        %v1005 = vrot.slane %v367, 3
        %v1006 = vsel %vm983, %v1003, %v1005
        %v1007 = vrot.slane %v368, 3
        %v1008 = vsel %vm983, %v1005, %v1007
        %v1009 = vrot.slane %v369, 3
        %v1010 = vsel %vm983, %v1007, %v1009
        %v1011 = vrot.slane %v370, 3
        %v1012 = vsel %vm983, %v1009, %v1011
        %v1013 = vrot.slane %v371, 3
        %v1014 = vsel %vm983, %v1011, %v1013
        %v1015 = vrot.slane %v372, 3
        %v1016 = vsel %vm983, %v1013, %v1015
        %v1017 = vrot.slane %v373, 3
        %v1018 = vsel %vm983, %v1015, %v1017
        %v1019 = vrot.slane %v374, 3
        %v1020 = vsel %vm983, %v1017, %v1019
        %v1055 = vunpack.c.l.b16 %v967
        %v1056 = vunpack.c.l.b16 %v968
        %v1057 = vunpack.c.l.b16 %v969
        %v1058 = vunpack.c.l.b16 %v970
        %v1059 = vunpack.c.l.b16 %v971
        %v1060 = vunpack.c.l.b16 %v972
        %v1061 = vunpack.c.l.b16 %v973
        %v1062 = vunpack.c.l.b16 %v974
        %v1063 = vunpack.c.l.b16 %v975
        %v1064 = vunpack.c.l.b16 %v976
        %v1065 = vunpack.c.l.b16 %v977
        %v1066 = vunpack.c.l.b16 %v978
        %v1067 = vunpack.c.l.b16 %v979
        %v1068 = vunpack.c.l.b16 %v980
        %v1069 = vunpack.c.l.b16 %v981
        %v1070 = vunpack.c.l.b16 %v982
        %v1071 = vpack.c.b16 %v1056, %v1055
        %v1072 = vpack.c.b16 %v1058, %v1057
        %v1073 = vpack.c.b16 %v1060, %v1059
        %v1074 = vpack.c.b16 %v1062, %v1061
        %v1075 = vpack.c.b16 %v1064, %v1063
        %v1076 = vpack.c.b16 %v1066, %v1065
        %v1077 = vpack.c.b16 %v1068, %v1067
        %v1078 = vpack.c.b16 %v1070, %v1069
        %1087 = vmatpush.bf16.msra.mxu0 %v1078
        %1088 = vmatpush.bf16.msra.mxu0 %v1077
        %1089 = vmatpush.bf16.msra.mxu0 %v1076
        %1090 = vmatpush.bf16.msra.mxu0 %v1075
        %1091 = vmatpush.bf16.msra.mxu0 %v1074
        %1092 = vmatpush.bf16.msra.mxu0 %v1073
        %1093 = vmatpush.bf16.msra.mxu0 %v1072
        %1094 = vmatpush.bf16.msra.mxu0 %v1071
        %1095 = vmatmul.bf16.gmra.mxu0 %v986
        %v1096 = vpop.f32.mrf.mxu0
        %v1097 = vadd.f32 0.0, %v1096
        %v1098 = vpop.f32.mrf.mxu0
        %v1099 = vadd.f32 0.0, %v1098
        %1100 = vmatmul.bf16.gmra.mxu0 %v988
        %v1101 = vpop.f32.mrf.mxu0
        %v1102 = vadd.f32 0.0, %v1101
        %v1103 = vpop.f32.mrf.mxu0
        %v1104 = vadd.f32 0.0, %v1103
        %1105 = vmatmul.bf16.gmra.mxu0 %v990
        %v1106 = vpop.f32.mrf.mxu0
        %v1107 = vadd.f32 0.0, %v1106
        %v1108 = vpop.f32.mrf.mxu0
        %v1109 = vadd.f32 0.0, %v1108
        %1110 = vmatmul.bf16.gmra.mxu0 %v992
        %v1111 = vpop.f32.mrf.mxu0
        %v1112 = vadd.f32 0.0, %v1111
        %v1113 = vpop.f32.mrf.mxu0
        %v1114 = vadd.f32 0.0, %v1113
        %1115 = vmatmul.bf16.gmra.mxu0 %v994
        %v1116 = vpop.f32.mrf.mxu0
        %v1117 = vadd.f32 0.0, %v1116
        %v1118 = vpop.f32.mrf.mxu0
        %v1119 = vadd.f32 0.0, %v1118
        %1120 = vmatmul.bf16.gmra.mxu0 %v996
        %v1121 = vpop.f32.mrf.mxu0
        %v1122 = vadd.f32 0.0, %v1121
        %v1123 = vpop.f32.mrf.mxu0
        %v1124 = vadd.f32 0.0, %v1123
        %1125 = vmatmul.bf16.gmra.mxu0 %v998
        %v1126 = vpop.f32.mrf.mxu0
        %v1127 = vadd.f32 0.0, %v1126
        %v1128 = vpop.f32.mrf.mxu0
        %v1129 = vadd.f32 0.0, %v1128
        %1130 = vmatmul.bf16.gmra.mxu0 %v1000
        %v1131 = vpop.f32.mrf.mxu0
        %v1132 = vadd.f32 0.0, %v1131
        %v1133 = vpop.f32.mrf.mxu0
        %v1134 = vadd.f32 0.0, %v1133
        %1135 = vmatmul.bf16.gmra.mxu0 %v1002
        %v1136 = vpop.f32.mrf.mxu0
        %v1137 = vadd.f32 0.0, %v1136
        %v1138 = vpop.f32.mrf.mxu0
        %v1139 = vadd.f32 0.0, %v1138
        %1140 = vmatmul.bf16.gmra.mxu0 %v1004
        %v1141 = vpop.f32.mrf.mxu0
        %v1142 = vadd.f32 0.0, %v1141
        %v1143 = vpop.f32.mrf.mxu0
        %v1144 = vadd.f32 0.0, %v1143
        %1145 = vmatmul.bf16.gmra.mxu0 %v1006
        %v1146 = vpop.f32.mrf.mxu0
        %v1147 = vadd.f32 0.0, %v1146
        %v1148 = vpop.f32.mrf.mxu0
        %v1149 = vadd.f32 0.0, %v1148
        %1150 = vmatmul.bf16.gmra.mxu0 %v1008
        %v1151 = vpop.f32.mrf.mxu0
        %v1152 = vadd.f32 0.0, %v1151
        %v1153 = vpop.f32.mrf.mxu0
        %v1154 = vadd.f32 0.0, %v1153
        %1155 = vmatmul.bf16.gmra.mxu0 %v1010
        %v1156 = vpop.f32.mrf.mxu0
        %v1157 = vadd.f32 0.0, %v1156
        %v1158 = vpop.f32.mrf.mxu0
        %v1159 = vadd.f32 0.0, %v1158
        %1160 = vmatmul.bf16.gmra.mxu0 %v1012
        %v1161 = vpop.f32.mrf.mxu0
        %v1162 = vadd.f32 0.0, %v1161
        %v1163 = vpop.f32.mrf.mxu0
        %v1164 = vadd.f32 0.0, %v1163
        %1165 = vmatmul.bf16.gmra.mxu0 %v1014
        %v1166 = vpop.f32.mrf.mxu0
        %v1167 = vadd.f32 0.0, %v1166
        %v1168 = vpop.f32.mrf.mxu0
        %v1169 = vadd.f32 0.0, %v1168
        %1170 = vmatmul.bf16.gmra.mxu0 %v1016
        %v1171 = vpop.f32.mrf.mxu0
        %v1172 = vadd.f32 0.0, %v1171
        %v1173 = vpop.f32.mrf.mxu0
        %v1174 = vadd.f32 0.0, %v1173
        %1175 = vmatmul.bf16.gmra.mxu0 %v1018
        %v1176 = vpop.f32.mrf.mxu0
        %v1177 = vadd.f32 0.0, %v1176
        %v1178 = vpop.f32.mrf.mxu0
        %v1179 = vadd.f32 0.0, %v1178
        %1180 = vmatmul.bf16.gmra.mxu0 %v1020
        %v1181 = vpop.f32.mrf.mxu0
        %v1182 = vadd.f32 0.0, %v1181
        %v1183 = vpop.f32.mrf.mxu0
        %v1184 = vadd.f32 0.0, %v1183
        %1185 = vdwg.mxu0
        %v1186 = vadd.f32 %v877, %v1097
        %v1187 = vadd.f32 %v879, %v1099
        %v1188 = vadd.f32 %v882, %v1102
        %v1189 = vadd.f32 %v884, %v1104
        %v1190 = vadd.f32 %v887, %v1107
        %v1191 = vadd.f32 %v889, %v1109
        %v1192 = vadd.f32 %v892, %v1112
        %v1193 = vadd.f32 %v894, %v1114
        %v1194 = vadd.f32 %v897, %v1117
        %v1195 = vadd.f32 %v899, %v1119
        %v1196 = vadd.f32 %v902, %v1122
        %v1197 = vadd.f32 %v904, %v1124
        %v1198 = vadd.f32 %v907, %v1127
        %v1199 = vadd.f32 %v909, %v1129
        %v1200 = vadd.f32 %v912, %v1132
        %v1201 = vadd.f32 %v914, %v1134
        %v1202 = vadd.f32 %v917, %v1137
        %v1203 = vadd.f32 %v919, %v1139
        %v1204 = vadd.f32 %v922, %v1142
        %v1205 = vadd.f32 %v924, %v1144
        %v1206 = vadd.f32 %v927, %v1147
        %v1207 = vadd.f32 %v929, %v1149
        %v1208 = vadd.f32 %v932, %v1152
        %v1209 = vadd.f32 %v934, %v1154
        %v1210 = vadd.f32 %v937, %v1157
        %v1211 = vadd.f32 %v939, %v1159
        %v1212 = vadd.f32 %v942, %v1162
        %v1213 = vadd.f32 %v944, %v1164
        %v1214 = vadd.f32 %v947, %v1167
        %v1215 = vadd.f32 %v949, %v1169
        %v1216 = vadd.f32 %v952, %v1172
        %v1217 = vadd.f32 %v954, %v1174
        %v1218 = vadd.f32 %v957, %v1177
        %v1219 = vadd.f32 %v959, %v1179
        %v1220 = vadd.f32 %v962, %v1182
        %v1221 = vadd.f32 %v964, %v1184
        %v1222 = vpack.c.bf16 %v351, %v350
        %v1223 = vpack.c.bf16 %v352, %v352
        %s1224 = scalar_lea.vmem %s1, 192
        %v1225 = vld [vmem:[%s1224] sm:$0xf]
        %v1226 = vld [vmem:[%s1224 + $0x4] sm:$0xf]
        %v1227 = vld [vmem:[%s1224 + $0x8] sm:$0xf]
        %v1228 = vld [vmem:[%s1224 + $0xc] sm:$0xf]
        %v1229 = vld [vmem:[%s1224 + $0x10] sm:$0xf]
        %v1230 = vld [vmem:[%s1224 + $0x14] sm:$0xf]
        %v1231 = vld [vmem:[%s1224 + $0x18] sm:$0xf]
        %v1232 = vld [vmem:[%s1224 + $0x1c] sm:$0xf]
        %v1233 = vld [vmem:[%s1224 + $0x20] sm:$0xf]
        %v1234 = vld [vmem:[%s1224 + $0x24] sm:$0xf]
        %v1235 = vld [vmem:[%s1224 + $0x28] sm:$0xf]
        %v1236 = vld [vmem:[%s1224 + $0x2c] sm:$0xf]
        %v1237 = vld [vmem:[%s1224 + $0x30] sm:$0xf]
        %v1238 = vld [vmem:[%s1224 + $0x34] sm:$0xf]
        %v1239 = vld [vmem:[%s1224 + $0x38] sm:$0xf]
        %v1240 = vld [vmem:[%s1224 + $0x3c] sm:$0xf]
        %v1243 = vrot.slane %v1222, 3
        %v1244 = vsel %vm983, %v1017, %v1243
        %v1245 = vrot.slane %v1223, 3
        %v1246 = vsel %vm983, %v1243, %v1245
        %v1265 = vunpack.c.l.b16 %v1225
        %v1266 = vunpack.c.l.b16 %v1226
        %v1267 = vunpack.c.l.b16 %v1227
        %v1268 = vunpack.c.l.b16 %v1228
        %v1269 = vunpack.c.l.b16 %v1229
        %v1270 = vunpack.c.l.b16 %v1230
        %v1271 = vunpack.c.l.b16 %v1231
        %v1272 = vunpack.c.l.b16 %v1232
        %v1273 = vunpack.c.l.b16 %v1233
        %v1274 = vunpack.c.l.b16 %v1234
        %v1275 = vunpack.c.l.b16 %v1235
        %v1276 = vunpack.c.l.b16 %v1236
        %v1277 = vunpack.c.l.b16 %v1237
        %v1278 = vunpack.c.l.b16 %v1238
        %v1279 = vunpack.c.l.b16 %v1239
        %v1280 = vunpack.c.l.b16 %v1240
        %v1281 = vpack.c.b16 %v1266, %v1265
        %v1282 = vpack.c.b16 %v1268, %v1267
        %v1283 = vpack.c.b16 %v1270, %v1269
        %v1284 = vpack.c.b16 %v1272, %v1271
        %v1285 = vpack.c.b16 %v1274, %v1273
        %v1286 = vpack.c.b16 %v1276, %v1275
        %v1287 = vpack.c.b16 %v1278, %v1277
        %v1288 = vpack.c.b16 %v1280, %v1279
        %1297 = vmatpush.bf16.msra.mxu0 %v1288
        %1298 = vmatpush.bf16.msra.mxu0 %v1287
        %1299 = vmatpush.bf16.msra.mxu0 %v1286
        %1300 = vmatpush.bf16.msra.mxu0 %v1285
        %1301 = vmatpush.bf16.msra.mxu0 %v1284
        %1302 = vmatpush.bf16.msra.mxu0 %v1283
        %1303 = vmatpush.bf16.msra.mxu0 %v1282
        %1304 = vmatpush.bf16.msra.mxu0 %v1281
        %1305 = vmatmul.bf16.gmra.mxu0 %v988
        %v1306 = vpop.f32.mrf.mxu0
        %v1307 = vadd.f32 0.0, %v1306
        %v1308 = vpop.f32.mrf.mxu0
        %v1309 = vadd.f32 0.0, %v1308
        %1310 = vmatmul.bf16.gmra.mxu0 %v990
        %v1311 = vpop.f32.mrf.mxu0
        %v1312 = vadd.f32 0.0, %v1311
        %v1313 = vpop.f32.mrf.mxu0
        %v1314 = vadd.f32 0.0, %v1313
        %1315 = vmatmul.bf16.gmra.mxu0 %v992
        %v1316 = vpop.f32.mrf.mxu0
        %v1317 = vadd.f32 0.0, %v1316
        %v1318 = vpop.f32.mrf.mxu0
        %v1319 = vadd.f32 0.0, %v1318
        %1320 = vmatmul.bf16.gmra.mxu0 %v994
        %v1321 = vpop.f32.mrf.mxu0
        %v1322 = vadd.f32 0.0, %v1321
        %v1323 = vpop.f32.mrf.mxu0
        %v1324 = vadd.f32 0.0, %v1323
        %1325 = vmatmul.bf16.gmra.mxu0 %v996
        %v1326 = vpop.f32.mrf.mxu0
        %v1327 = vadd.f32 0.0, %v1326
        %v1328 = vpop.f32.mrf.mxu0
        %v1329 = vadd.f32 0.0, %v1328
        %1330 = vmatmul.bf16.gmra.mxu0 %v998
        %v1331 = vpop.f32.mrf.mxu0
        %v1332 = vadd.f32 0.0, %v1331
        %v1333 = vpop.f32.mrf.mxu0
        %v1334 = vadd.f32 0.0, %v1333
        %1335 = vmatmul.bf16.gmra.mxu0 %v1000
        %v1336 = vpop.f32.mrf.mxu0
        %v1337 = vadd.f32 0.0, %v1336
        %v1338 = vpop.f32.mrf.mxu0
        %v1339 = vadd.f32 0.0, %v1338
        %1340 = vmatmul.bf16.gmra.mxu0 %v1002
        %v1341 = vpop.f32.mrf.mxu0
        %v1342 = vadd.f32 0.0, %v1341
        %v1343 = vpop.f32.mrf.mxu0
        %v1344 = vadd.f32 0.0, %v1343
        %1345 = vmatmul.bf16.gmra.mxu0 %v1004
        %v1346 = vpop.f32.mrf.mxu0
        %v1347 = vadd.f32 0.0, %v1346
        %v1348 = vpop.f32.mrf.mxu0
        %v1349 = vadd.f32 0.0, %v1348
        %1350 = vmatmul.bf16.gmra.mxu0 %v1006
        %v1351 = vpop.f32.mrf.mxu0
        %v1352 = vadd.f32 0.0, %v1351
        %v1353 = vpop.f32.mrf.mxu0
        %v1354 = vadd.f32 0.0, %v1353
        %1355 = vmatmul.bf16.gmra.mxu0 %v1008
        %v1356 = vpop.f32.mrf.mxu0
        %v1357 = vadd.f32 0.0, %v1356
        %v1358 = vpop.f32.mrf.mxu0
        %v1359 = vadd.f32 0.0, %v1358
        %1360 = vmatmul.bf16.gmra.mxu0 %v1010
        %v1361 = vpop.f32.mrf.mxu0
        %v1362 = vadd.f32 0.0, %v1361
        %v1363 = vpop.f32.mrf.mxu0
        %v1364 = vadd.f32 0.0, %v1363
        %1365 = vmatmul.bf16.gmra.mxu0 %v1012
        %v1366 = vpop.f32.mrf.mxu0
        %v1367 = vadd.f32 0.0, %v1366
        %v1368 = vpop.f32.mrf.mxu0
        %v1369 = vadd.f32 0.0, %v1368
        %1370 = vmatmul.bf16.gmra.mxu0 %v1014
        %v1371 = vpop.f32.mrf.mxu0
        %v1372 = vadd.f32 0.0, %v1371
        %v1373 = vpop.f32.mrf.mxu0
        %v1374 = vadd.f32 0.0, %v1373
        %1375 = vmatmul.bf16.gmra.mxu0 %v1016
        %v1376 = vpop.f32.mrf.mxu0
        %v1377 = vadd.f32 0.0, %v1376
        %v1378 = vpop.f32.mrf.mxu0
        %v1379 = vadd.f32 0.0, %v1378
        %1380 = vmatmul.bf16.gmra.mxu0 %v1018
        %v1381 = vpop.f32.mrf.mxu0
        %v1382 = vadd.f32 0.0, %v1381
        %v1383 = vpop.f32.mrf.mxu0
        %v1384 = vadd.f32 0.0, %v1383
        %1385 = vmatmul.bf16.gmra.mxu0 %v1244
        %v1386 = vpop.f32.mrf.mxu0
        %v1387 = vadd.f32 0.0, %v1386
        %v1388 = vpop.f32.mrf.mxu0
        %v1389 = vadd.f32 0.0, %v1388
        %1390 = vmatmul.bf16.gmra.mxu0 %v1246
        %v1391 = vpop.f32.mrf.mxu0
        %v1392 = vadd.f32 0.0, %v1391
        %v1393 = vpop.f32.mrf.mxu0
        %v1394 = vadd.f32 0.0, %v1393
        %1395 = vdwg.mxu0
        %v1396 = vadd.f32 %v1186, %v1307
        %v1397 = vadd.f32 %v1187, %v1309
        %v1398 = vadd.f32 %v1188, %v1312
        %v1399 = vadd.f32 %v1189, %v1314
        %v1400 = vadd.f32 %v1190, %v1317
        %v1401 = vadd.f32 %v1191, %v1319
        %v1402 = vadd.f32 %v1192, %v1322
        %v1403 = vadd.f32 %v1193, %v1324
        %v1404 = vadd.f32 %v1194, %v1327
        %v1405 = vadd.f32 %v1195, %v1329
        %v1406 = vadd.f32 %v1196, %v1332
        %v1407 = vadd.f32 %v1197, %v1334
        %v1408 = vadd.f32 %v1198, %v1337
        %v1409 = vadd.f32 %v1199, %v1339
        %v1410 = vadd.f32 %v1200, %v1342
        %v1411 = vadd.f32 %v1201, %v1344
        %v1412 = vadd.f32 %v1202, %v1347
        %v1413 = vadd.f32 %v1203, %v1349
        %v1414 = vadd.f32 %v1204, %v1352
        %v1415 = vadd.f32 %v1205, %v1354
        %v1416 = vadd.f32 %v1206, %v1357
        %v1417 = vadd.f32 %v1207, %v1359
        %v1418 = vadd.f32 %v1208, %v1362
        %v1419 = vadd.f32 %v1209, %v1364
        %v1420 = vadd.f32 %v1210, %v1367
        %v1421 = vadd.f32 %v1211, %v1369
        %v1422 = vadd.f32 %v1212, %v1372
        %v1423 = vadd.f32 %v1213, %v1374
        %v1424 = vadd.f32 %v1214, %v1377
        %v1425 = vadd.f32 %v1215, %v1379
        %v1426 = vadd.f32 %v1216, %v1382
        %v1427 = vadd.f32 %v1217, %v1384
        %v1428 = vadd.f32 %v1218, %v1387
        %v1429 = vadd.f32 %v1219, %v1389
        %v1430 = vadd.f32 %v1220, %v1392
        %v1431 = vadd.f32 %v1221, %v1394
        %s1432 = scalar_lea.vmem %s1, 256
        %v1433 = vld [vmem:[%s1432] sm:$0xf]
        %v1434 = vld [vmem:[%s1432 + $0x4] sm:$0xf]
        %v1435 = vld [vmem:[%s1432 + $0x8] sm:$0xf]
        %v1436 = vld [vmem:[%s1432 + $0xc] sm:$0xf]
        %v1437 = vld [vmem:[%s1432 + $0x10] sm:$0xf]
        %v1438 = vld [vmem:[%s1432 + $0x14] sm:$0xf]
        %v1439 = vld [vmem:[%s1432 + $0x18] sm:$0xf]
        %v1440 = vld [vmem:[%s1432 + $0x1c] sm:$0xf]
        %v1441 = vld [vmem:[%s1432 + $0x20] sm:$0xf]
        %v1442 = vld [vmem:[%s1432 + $0x24] sm:$0xf]
        %v1443 = vld [vmem:[%s1432 + $0x28] sm:$0xf]
        %v1444 = vld [vmem:[%s1432 + $0x2c] sm:$0xf]
        %v1445 = vld [vmem:[%s1432 + $0x30] sm:$0xf]
        %v1446 = vld [vmem:[%s1432 + $0x34] sm:$0xf]
        %v1447 = vld [vmem:[%s1432 + $0x38] sm:$0xf]
        %v1448 = vld [vmem:[%s1432 + $0x3c] sm:$0xf]
        %vm1449 = vsmask.f32 4352
        %v1450 = vrot.slane %v418, 3
        %v1451 = vrot.slane %v421, 4
        %v1452 = vor.u32 %v1450, %v1451
        %v1453 = vrot.slane %v427, 3
        %v1454 = vrot.slane %v430, 4
        %v1455 = vor.u32 %v1453, %v1454
        %v1456 = vsel %vm1449, %v1452, %v1455
        %v1457 = vrot.slane %v436, 3
        %v1458 = vrot.slane %v439, 4
        %v1459 = vor.u32 %v1457, %v1458
        %v1460 = vsel %vm1449, %v1455, %v1459
        %v1461 = vrot.slane %v445, 3
        %v1462 = vrot.slane %v448, 4
        %v1463 = vor.u32 %v1461, %v1462
        %v1464 = vsel %vm1449, %v1459, %v1463
        %v1465 = vrot.slane %v454, 3
        %v1466 = vrot.slane %v457, 4
        %v1467 = vor.u32 %v1465, %v1466
        %v1468 = vsel %vm1449, %v1463, %v1467
        %v1469 = vrot.slane %v463, 3
        %v1470 = vrot.slane %v466, 4
        %v1471 = vor.u32 %v1469, %v1470
        %v1472 = vsel %vm1449, %v1467, %v1471
        %v1473 = vrot.slane %v472, 3
        %v1474 = vrot.slane %v475, 4
        %v1475 = vor.u32 %v1473, %v1474
        %v1476 = vsel %vm1449, %v1471, %v1475
        %v1477 = vrot.slane %v481, 3
        %v1478 = vrot.slane %v484, 4
        %v1479 = vor.u32 %v1477, %v1478
        %v1480 = vsel %vm1449, %v1475, %v1479
        %v1481 = vrot.slane %v490, 3
        %v1482 = vrot.slane %v493, 4
        %v1483 = vor.u32 %v1481, %v1482
        %v1484 = vsel %vm1449, %v1479, %v1483
        %v1485 = vrot.slane %v499, 3
        %v1486 = vrot.slane %v502, 4
        %v1487 = vor.u32 %v1485, %v1486
        %v1488 = vsel %vm1449, %v1483, %v1487
        %v1489 = vrot.slane %v508, 3
        %v1490 = vrot.slane %v511, 4
        %v1491 = vor.u32 %v1489, %v1490
        %v1492 = vsel %vm1449, %v1487, %v1491
        %v1493 = vrot.slane %v517, 3
        %v1494 = vrot.slane %v520, 4
        %v1495 = vor.u32 %v1493, %v1494
        %v1496 = vsel %vm1449, %v1491, %v1495
        %v1497 = vrot.slane %v526, 3
        %v1498 = vrot.slane %v529, 4
        %v1499 = vor.u32 %v1497, %v1498
        %v1500 = vsel %vm1449, %v1495, %v1499
        %v1501 = vrot.slane %v535, 3
        %v1502 = vrot.slane %v538, 4
        %v1503 = vor.u32 %v1501, %v1502
        %v1504 = vsel %vm1449, %v1499, %v1503
        %v1505 = vrot.slane %v544, 3
        %v1506 = vrot.slane %v547, 4
        %v1507 = vor.u32 %v1505, %v1506
        %v1508 = vsel %vm1449, %v1503, %v1507
        %v1509 = vrot.slane %v553, 3
        %v1510 = vrot.slane %v556, 4
        %v1511 = vor.u32 %v1509, %v1510
        %v1512 = vsel %vm1449, %v1507, %v1511
        %v1513 = vrot.slane %v562, 3
        %v1514 = vrot.slane %v565, 4
        %v1515 = vor.u32 %v1513, %v1514
        %v1516 = vsel %vm1449, %v1511, %v1515
        %v1518 = vshrl.u32 %v1222, 16
        %v1520 = vrot.slane %v1518, 3
        %v1521 = vshll.u32 %v1222, 16
        %v1523 = vrot.slane %v1521, 4
        %v1524 = vor.u32 %v1520, %v1523
        %v1525 = vsel %vm1449, %v1515, %v1524
        %v1527 = vshrl.u32 %v1223, 16
        %v1529 = vrot.slane %v1527, 3
        %v1530 = vshll.u32 %v1223, 16
        %v1532 = vrot.slane %v1530, 4
        %v1533 = vor.u32 %v1529, %v1532
        %v1534 = vsel %vm1449, %v1524, %v1533
        %v1569 = vunpack.c.l.b16 %v1433
        %v1570 = vunpack.c.l.b16 %v1434
        %v1571 = vunpack.c.l.b16 %v1435
        %v1572 = vunpack.c.l.b16 %v1436
        %v1573 = vunpack.c.l.b16 %v1437
        %v1574 = vunpack.c.l.b16 %v1438
        %v1575 = vunpack.c.l.b16 %v1439
        %v1576 = vunpack.c.l.b16 %v1440
        %v1577 = vunpack.c.l.b16 %v1441
        %v1578 = vunpack.c.l.b16 %v1442
        %v1579 = vunpack.c.l.b16 %v1443
        %v1580 = vunpack.c.l.b16 %v1444
        %v1581 = vunpack.c.l.b16 %v1445
        %v1582 = vunpack.c.l.b16 %v1446
        %v1583 = vunpack.c.l.b16 %v1447
        %v1584 = vunpack.c.l.b16 %v1448
        %v1585 = vpack.c.b16 %v1570, %v1569
        %v1586 = vpack.c.b16 %v1572, %v1571
        %v1587 = vpack.c.b16 %v1574, %v1573
        %v1588 = vpack.c.b16 %v1576, %v1575
        %v1589 = vpack.c.b16 %v1578, %v1577
        %v1590 = vpack.c.b16 %v1580, %v1579
        %v1591 = vpack.c.b16 %v1582, %v1581
        %v1592 = vpack.c.b16 %v1584, %v1583
        %1601 = vmatpush.bf16.msra.mxu0 %v1592
        %1602 = vmatpush.bf16.msra.mxu0 %v1591
        %1603 = vmatpush.bf16.msra.mxu0 %v1590
        %1604 = vmatpush.bf16.msra.mxu0 %v1589
        %1605 = vmatpush.bf16.msra.mxu0 %v1588
        %1606 = vmatpush.bf16.msra.mxu0 %v1587
        %1607 = vmatpush.bf16.msra.mxu0 %v1586
        %1608 = vmatpush.bf16.msra.mxu0 %v1585
        %1609 = vmatmul.bf16.gmra.mxu0 %v1456
        %v1610 = vpop.f32.mrf.mxu0
        %v1611 = vadd.f32 0.0, %v1610
        %v1612 = vpop.f32.mrf.mxu0
        %v1613 = vadd.f32 0.0, %v1612
        %1614 = vmatmul.bf16.gmra.mxu0 %v1460
        %v1615 = vpop.f32.mrf.mxu0
        %v1616 = vadd.f32 0.0, %v1615
        %v1617 = vpop.f32.mrf.mxu0
        %v1618 = vadd.f32 0.0, %v1617
        %1619 = vmatmul.bf16.gmra.mxu0 %v1464
        %v1620 = vpop.f32.mrf.mxu0
        %v1621 = vadd.f32 0.0, %v1620
        %v1622 = vpop.f32.mrf.mxu0
        %v1623 = vadd.f32 0.0, %v1622
        %1624 = vmatmul.bf16.gmra.mxu0 %v1468
        %v1625 = vpop.f32.mrf.mxu0
        %v1626 = vadd.f32 0.0, %v1625
        %v1627 = vpop.f32.mrf.mxu0
        %v1628 = vadd.f32 0.0, %v1627
        %1629 = vmatmul.bf16.gmra.mxu0 %v1472
        %v1630 = vpop.f32.mrf.mxu0
        %v1631 = vadd.f32 0.0, %v1630
        %v1632 = vpop.f32.mrf.mxu0
        %v1633 = vadd.f32 0.0, %v1632
        %1634 = vmatmul.bf16.gmra.mxu0 %v1476
        %v1635 = vpop.f32.mrf.mxu0
        %v1636 = vadd.f32 0.0, %v1635
        %v1637 = vpop.f32.mrf.mxu0
        %v1638 = vadd.f32 0.0, %v1637
        %1639 = vmatmul.bf16.gmra.mxu0 %v1480
        %v1640 = vpop.f32.mrf.mxu0
        %v1641 = vadd.f32 0.0, %v1640
        %v1642 = vpop.f32.mrf.mxu0
        %v1643 = vadd.f32 0.0, %v1642
        %1644 = vmatmul.bf16.gmra.mxu0 %v1484
        %v1645 = vpop.f32.mrf.mxu0
        %v1646 = vadd.f32 0.0, %v1645
        %v1647 = vpop.f32.mrf.mxu0
        %v1648 = vadd.f32 0.0, %v1647
        %1649 = vmatmul.bf16.gmra.mxu0 %v1488
        %v1650 = vpop.f32.mrf.mxu0
        %v1651 = vadd.f32 0.0, %v1650
        %v1652 = vpop.f32.mrf.mxu0
        %v1653 = vadd.f32 0.0, %v1652
        %1654 = vmatmul.bf16.gmra.mxu0 %v1492
        %v1655 = vpop.f32.mrf.mxu0
        %v1656 = vadd.f32 0.0, %v1655
        %v1657 = vpop.f32.mrf.mxu0
        %v1658 = vadd.f32 0.0, %v1657
        %1659 = vmatmul.bf16.gmra.mxu0 %v1496
        %v1660 = vpop.f32.mrf.mxu0
        %v1661 = vadd.f32 0.0, %v1660
        %v1662 = vpop.f32.mrf.mxu0
        %v1663 = vadd.f32 0.0, %v1662
        %1664 = vmatmul.bf16.gmra.mxu0 %v1500
        %v1665 = vpop.f32.mrf.mxu0
        %v1666 = vadd.f32 0.0, %v1665
        %v1667 = vpop.f32.mrf.mxu0
        %v1668 = vadd.f32 0.0, %v1667
        %1669 = vmatmul.bf16.gmra.mxu0 %v1504
        %v1670 = vpop.f32.mrf.mxu0
        %v1671 = vadd.f32 0.0, %v1670
        %v1672 = vpop.f32.mrf.mxu0
        %v1673 = vadd.f32 0.0, %v1672
        %1674 = vmatmul.bf16.gmra.mxu0 %v1508
        %v1675 = vpop.f32.mrf.mxu0
        %v1676 = vadd.f32 0.0, %v1675
        %v1677 = vpop.f32.mrf.mxu0
        %v1678 = vadd.f32 0.0, %v1677
        %1679 = vmatmul.bf16.gmra.mxu0 %v1512
        %v1680 = vpop.f32.mrf.mxu0
        %v1681 = vadd.f32 0.0, %v1680
        %v1682 = vpop.f32.mrf.mxu0
        %v1683 = vadd.f32 0.0, %v1682
        %1684 = vmatmul.bf16.gmra.mxu0 %v1516
        %v1685 = vpop.f32.mrf.mxu0
        %v1686 = vadd.f32 0.0, %v1685
        %v1687 = vpop.f32.mrf.mxu0
        %v1688 = vadd.f32 0.0, %v1687
        %1689 = vmatmul.bf16.gmra.mxu0 %v1525
        %v1690 = vpop.f32.mrf.mxu0
        %v1691 = vadd.f32 0.0, %v1690
        %v1692 = vpop.f32.mrf.mxu0
        %v1693 = vadd.f32 0.0, %v1692
        %1694 = vmatmul.bf16.gmra.mxu0 %v1534
        %v1695 = vpop.f32.mrf.mxu0
        %v1696 = vadd.f32 0.0, %v1695
        %v1697 = vpop.f32.mrf.mxu0
        %v1698 = vadd.f32 0.0, %v1697
        %1699 = vdwg.mxu0
        %v1700 = vadd.f32 %v1396, %v1611
        %v1701 = vadd.f32 %v1397, %v1613
        %v1702 = vadd.f32 %v1398, %v1616
        %v1703 = vadd.f32 %v1399, %v1618
        %v1704 = vadd.f32 %v1400, %v1621
        %v1705 = vadd.f32 %v1401, %v1623
        %v1706 = vadd.f32 %v1402, %v1626
        %v1707 = vadd.f32 %v1403, %v1628
        %v1708 = vadd.f32 %v1404, %v1631
        %v1709 = vadd.f32 %v1405, %v1633
        %v1710 = vadd.f32 %v1406, %v1636
        %v1711 = vadd.f32 %v1407, %v1638
        %v1712 = vadd.f32 %v1408, %v1641
        %v1713 = vadd.f32 %v1409, %v1643
        %v1714 = vadd.f32 %v1410, %v1646
        %v1715 = vadd.f32 %v1411, %v1648
        %v1716 = vadd.f32 %v1412, %v1651
        %v1717 = vadd.f32 %v1413, %v1653
        %v1718 = vadd.f32 %v1414, %v1656
        %v1719 = vadd.f32 %v1415, %v1658
        %v1720 = vadd.f32 %v1416, %v1661
        %v1721 = vadd.f32 %v1417, %v1663
        %v1722 = vadd.f32 %v1418, %v1666
        %v1723 = vadd.f32 %v1419, %v1668
        %v1724 = vadd.f32 %v1420, %v1671
        %v1725 = vadd.f32 %v1421, %v1673
        %v1726 = vadd.f32 %v1422, %v1676
        %v1727 = vadd.f32 %v1423, %v1678
        %v1728 = vadd.f32 %v1424, %v1681
        %v1729 = vadd.f32 %v1425, %v1683
        %v1730 = vadd.f32 %v1426, %v1686
        %v1731 = vadd.f32 %v1427, %v1688
        %v1732 = vadd.f32 %v1428, %v1691
        %v1733 = vadd.f32 %v1429, %v1693
        %v1734 = vadd.f32 %v1430, %v1696
        %v1735 = vadd.f32 %v1431, %v1698
        %v1736 = vpack.c.bf16 %v318, %v317
        %v1737 = vpack.c.bf16 %v320, %v319
        %v1738 = vpack.c.bf16 %v322, %v321
        %v1739 = vpack.c.bf16 %v324, %v323
        %v1740 = vpack.c.bf16 %v326, %v325
        %v1741 = vpack.c.bf16 %v328, %v327
        %v1742 = vpack.c.bf16 %v330, %v329
        %v1743 = vpack.c.bf16 %v332, %v331
        %v1744 = vpack.c.bf16 %v334, %v333
        %v1745 = vpack.c.bf16 %v336, %v335
        %v1746 = vpack.c.bf16 %v338, %v337
        %v1747 = vpack.c.bf16 %v340, %v339
        %v1748 = vpack.c.bf16 %v342, %v341
        %v1749 = vpack.c.bf16 %v344, %v343
        %v1750 = vpack.c.bf16 %v346, %v345
        %v1751 = vpack.c.bf16 %v348, %v347
        %v1752 = vpack.c.bf16 %v350, %v349
        %v1753 = vpack.c.bf16 %v352, %v351
        %s1754 = scalar_lea.vmem %s1, 320
        %v1755 = vld [vmem:[%s1754] sm:$0xf]
        %v1756 = vld [vmem:[%s1754 + $0x4] sm:$0xf]
        %v1757 = vld [vmem:[%s1754 + $0x8] sm:$0xf]
        %v1758 = vld [vmem:[%s1754 + $0xc] sm:$0xf]
        %v1759 = vld [vmem:[%s1754 + $0x10] sm:$0xf]
        %v1760 = vld [vmem:[%s1754 + $0x14] sm:$0xf]
        %v1761 = vld [vmem:[%s1754 + $0x18] sm:$0xf]
        %v1762 = vld [vmem:[%s1754 + $0x1c] sm:$0xf]
        %v1763 = vld [vmem:[%s1754 + $0x20] sm:$0xf]
        %v1764 = vld [vmem:[%s1754 + $0x24] sm:$0xf]
        %v1765 = vld [vmem:[%s1754 + $0x28] sm:$0xf]
        %v1766 = vld [vmem:[%s1754 + $0x2c] sm:$0xf]
        %v1767 = vld [vmem:[%s1754 + $0x30] sm:$0xf]
        %v1768 = vld [vmem:[%s1754 + $0x34] sm:$0xf]
        %v1769 = vld [vmem:[%s1754 + $0x38] sm:$0xf]
        %v1770 = vld [vmem:[%s1754 + $0x3c] sm:$0xf]
        %v1787 = vunpack.c.l.b16 %v1755
        %v1788 = vunpack.c.l.b16 %v1756
        %v1789 = vunpack.c.l.b16 %v1757
        %v1790 = vunpack.c.l.b16 %v1758
        %v1791 = vunpack.c.l.b16 %v1759
        %v1792 = vunpack.c.l.b16 %v1760
        %v1793 = vunpack.c.l.b16 %v1761
        %v1794 = vunpack.c.l.b16 %v1762
        %v1795 = vunpack.c.l.b16 %v1763
        %v1796 = vunpack.c.l.b16 %v1764
        %v1797 = vunpack.c.l.b16 %v1765
        %v1798 = vunpack.c.l.b16 %v1766
        %v1799 = vunpack.c.l.b16 %v1767
        %v1800 = vunpack.c.l.b16 %v1768
        %v1801 = vunpack.c.l.b16 %v1769
        %v1802 = vunpack.c.l.b16 %v1770
        %v1803 = vpack.c.b16 %v1788, %v1787
        %v1804 = vpack.c.b16 %v1790, %v1789
        %v1805 = vpack.c.b16 %v1792, %v1791
        %v1806 = vpack.c.b16 %v1794, %v1793
        %v1807 = vpack.c.b16 %v1796, %v1795
        %v1808 = vpack.c.b16 %v1798, %v1797
        %v1809 = vpack.c.b16 %v1800, %v1799
        %v1810 = vpack.c.b16 %v1802, %v1801
        %1819 = vmatpush.bf16.msra.mxu0 %v1810
        %1820 = vmatpush.bf16.msra.mxu0 %v1809
        %1821 = vmatpush.bf16.msra.mxu0 %v1808
        %1822 = vmatpush.bf16.msra.mxu0 %v1807
        %1823 = vmatpush.bf16.msra.mxu0 %v1806
        %1824 = vmatpush.bf16.msra.mxu0 %v1805
        %1825 = vmatpush.bf16.msra.mxu0 %v1804
        %1826 = vmatpush.bf16.msra.mxu0 %v1803
        %1827 = vmatmul.bf16.gmra.mxu0 %v1736
        %v1828 = vpop.f32.mrf.mxu0
        %v1829 = vadd.f32 0.0, %v1828
        %v1830 = vpop.f32.mrf.mxu0
        %v1831 = vadd.f32 0.0, %v1830
        %1832 = vmatmul.bf16.gmra.mxu0 %v1737
        %v1833 = vpop.f32.mrf.mxu0
        %v1834 = vadd.f32 0.0, %v1833
        %v1835 = vpop.f32.mrf.mxu0
        %v1836 = vadd.f32 0.0, %v1835
        %1837 = vmatmul.bf16.gmra.mxu0 %v1738
        %v1838 = vpop.f32.mrf.mxu0
        %v1839 = vadd.f32 0.0, %v1838
        %v1840 = vpop.f32.mrf.mxu0
        %v1841 = vadd.f32 0.0, %v1840
        %1842 = vmatmul.bf16.gmra.mxu0 %v1739
        %v1843 = vpop.f32.mrf.mxu0
        %v1844 = vadd.f32 0.0, %v1843
        %v1845 = vpop.f32.mrf.mxu0
        %v1846 = vadd.f32 0.0, %v1845
        %1847 = vmatmul.bf16.gmra.mxu0 %v1740
        %v1848 = vpop.f32.mrf.mxu0
        %v1849 = vadd.f32 0.0, %v1848
        %v1850 = vpop.f32.mrf.mxu0
        %v1851 = vadd.f32 0.0, %v1850
        %1852 = vmatmul.bf16.gmra.mxu0 %v1741
        %v1853 = vpop.f32.mrf.mxu0
        %v1854 = vadd.f32 0.0, %v1853
        %v1855 = vpop.f32.mrf.mxu0
        %v1856 = vadd.f32 0.0, %v1855
        %1857 = vmatmul.bf16.gmra.mxu0 %v1742
        %v1858 = vpop.f32.mrf.mxu0
        %v1859 = vadd.f32 0.0, %v1858
        %v1860 = vpop.f32.mrf.mxu0
        %v1861 = vadd.f32 0.0, %v1860
        %1862 = vmatmul.bf16.gmra.mxu0 %v1743
        %v1863 = vpop.f32.mrf.mxu0
        %v1864 = vadd.f32 0.0, %v1863
        %v1865 = vpop.f32.mrf.mxu0
        %v1866 = vadd.f32 0.0, %v1865
        %1867 = vmatmul.bf16.gmra.mxu0 %v1744
        %v1868 = vpop.f32.mrf.mxu0
        %v1869 = vadd.f32 0.0, %v1868
        %v1870 = vpop.f32.mrf.mxu0
        %v1871 = vadd.f32 0.0, %v1870
        %1872 = vmatmul.bf16.gmra.mxu0 %v1745
        %v1873 = vpop.f32.mrf.mxu0
        %v1874 = vadd.f32 0.0, %v1873
        %v1875 = vpop.f32.mrf.mxu0
        %v1876 = vadd.f32 0.0, %v1875
        %1877 = vmatmul.bf16.gmra.mxu0 %v1746
        %v1878 = vpop.f32.mrf.mxu0
        %v1879 = vadd.f32 0.0, %v1878
        %v1880 = vpop.f32.mrf.mxu0
        %v1881 = vadd.f32 0.0, %v1880
        %1882 = vmatmul.bf16.gmra.mxu0 %v1747
        %v1883 = vpop.f32.mrf.mxu0
        %v1884 = vadd.f32 0.0, %v1883
        %v1885 = vpop.f32.mrf.mxu0
        %v1886 = vadd.f32 0.0, %v1885
        %1887 = vmatmul.bf16.gmra.mxu0 %v1748
        %v1888 = vpop.f32.mrf.mxu0
        %v1889 = vadd.f32 0.0, %v1888
        %v1890 = vpop.f32.mrf.mxu0
        %v1891 = vadd.f32 0.0, %v1890
        %1892 = vmatmul.bf16.gmra.mxu0 %v1749
        %v1893 = vpop.f32.mrf.mxu0
        %v1894 = vadd.f32 0.0, %v1893
        %v1895 = vpop.f32.mrf.mxu0
        %v1896 = vadd.f32 0.0, %v1895
        %1897 = vmatmul.bf16.gmra.mxu0 %v1750
        %v1898 = vpop.f32.mrf.mxu0
        %v1899 = vadd.f32 0.0, %v1898
        %v1900 = vpop.f32.mrf.mxu0
        %v1901 = vadd.f32 0.0, %v1900
        %1902 = vmatmul.bf16.gmra.mxu0 %v1751
        %v1903 = vpop.f32.mrf.mxu0
        %v1904 = vadd.f32 0.0, %v1903
        %v1905 = vpop.f32.mrf.mxu0
        %v1906 = vadd.f32 0.0, %v1905
        %1907 = vmatmul.bf16.gmra.mxu0 %v1752
        %v1908 = vpop.f32.mrf.mxu0
        %v1909 = vadd.f32 0.0, %v1908
        %v1910 = vpop.f32.mrf.mxu0
        %v1911 = vadd.f32 0.0, %v1910
        %1912 = vmatmul.bf16.gmra.mxu0 %v1753
        %v1913 = vpop.f32.mrf.mxu0
        %v1914 = vadd.f32 0.0, %v1913
        %v1915 = vpop.f32.mrf.mxu0
        %v1916 = vadd.f32 0.0, %v1915
        %1917 = vdwg.mxu0
        %v1918 = vadd.f32 %v1700, %v1829
        %v1919 = vadd.f32 %v1701, %v1831
        %v1920 = vadd.f32 %v1702, %v1834
        %v1921 = vadd.f32 %v1703, %v1836
        %v1922 = vadd.f32 %v1704, %v1839
        %v1923 = vadd.f32 %v1705, %v1841
        %v1924 = vadd.f32 %v1706, %v1844
        %v1925 = vadd.f32 %v1707, %v1846
        %v1926 = vadd.f32 %v1708, %v1849
        %v1927 = vadd.f32 %v1709, %v1851
        %v1928 = vadd.f32 %v1710, %v1854
        %v1929 = vadd.f32 %v1711, %v1856
        %v1930 = vadd.f32 %v1712, %v1859
        %v1931 = vadd.f32 %v1713, %v1861
        %v1932 = vadd.f32 %v1714, %v1864
        %v1933 = vadd.f32 %v1715, %v1866
        %v1934 = vadd.f32 %v1716, %v1869
        %v1935 = vadd.f32 %v1717, %v1871
        %v1936 = vadd.f32 %v1718, %v1874
        %v1937 = vadd.f32 %v1719, %v1876
        %v1938 = vadd.f32 %v1720, %v1879
        %v1939 = vadd.f32 %v1721, %v1881
        %v1940 = vadd.f32 %v1722, %v1884
        %v1941 = vadd.f32 %v1723, %v1886
        %v1942 = vadd.f32 %v1724, %v1889
        %v1943 = vadd.f32 %v1725, %v1891
        %v1944 = vadd.f32 %v1726, %v1894
        %v1945 = vadd.f32 %v1727, %v1896
        %v1946 = vadd.f32 %v1728, %v1899
        %v1947 = vadd.f32 %v1729, %v1901
        %v1948 = vadd.f32 %v1730, %v1904
        %v1949 = vadd.f32 %v1731, %v1906
        %v1950 = vadd.f32 %v1732, %v1909
        %v1951 = vadd.f32 %v1733, %v1911
        %v1952 = vadd.f32 %v1734, %v1914
        %v1953 = vadd.f32 %v1735, %v1916
        %v1954 = vpack.c.bf16 %v354, %v353
        %s1955 = scalar_lea.vmem %s1, 384
        %v1956 = vld [vmem:[%s1955] sm:$0xf]
        %v1957 = vld [vmem:[%s1955 + $0x4] sm:$0xf]
        %v1958 = vld [vmem:[%s1955 + $0x8] sm:$0xf]
        %v1959 = vld [vmem:[%s1955 + $0xc] sm:$0xf]
        %v1960 = vld [vmem:[%s1955 + $0x10] sm:$0xf]
        %v1961 = vld [vmem:[%s1955 + $0x14] sm:$0xf]
        %v1962 = vld [vmem:[%s1955 + $0x18] sm:$0xf]
        %v1963 = vld [vmem:[%s1955 + $0x1c] sm:$0xf]
        %v1964 = vld [vmem:[%s1955 + $0x20] sm:$0xf]
        %v1965 = vld [vmem:[%s1955 + $0x24] sm:$0xf]
        %v1966 = vld [vmem:[%s1955 + $0x28] sm:$0xf]
        %v1967 = vld [vmem:[%s1955 + $0x2c] sm:$0xf]
        %v1968 = vld [vmem:[%s1955 + $0x30] sm:$0xf]
        %v1969 = vld [vmem:[%s1955 + $0x34] sm:$0xf]
        %v1970 = vld [vmem:[%s1955 + $0x38] sm:$0xf]
        %v1971 = vld [vmem:[%s1955 + $0x3c] sm:$0xf]
        %v1988 = vunpack.c.l.b16 %v1956
        %v1989 = vunpack.c.l.b16 %v1957
        %v1990 = vunpack.c.l.b16 %v1958
        %v1991 = vunpack.c.l.b16 %v1959
        %v1992 = vunpack.c.l.b16 %v1960
        %v1993 = vunpack.c.l.b16 %v1961
        %v1994 = vunpack.c.l.b16 %v1962
        %v1995 = vunpack.c.l.b16 %v1963
        %v1996 = vunpack.c.l.b16 %v1964
        %v1997 = vunpack.c.l.b16 %v1965
        %v1998 = vunpack.c.l.b16 %v1966
        %v1999 = vunpack.c.l.b16 %v1967
        %v2000 = vunpack.c.l.b16 %v1968
        %v2001 = vunpack.c.l.b16 %v1969
        %v2002 = vunpack.c.l.b16 %v1970
        %v2003 = vunpack.c.l.b16 %v1971
        %v2004 = vpack.c.b16 %v1989, %v1988
        %v2005 = vpack.c.b16 %v1991, %v1990
        %v2006 = vpack.c.b16 %v1993, %v1992
        %v2007 = vpack.c.b16 %v1995, %v1994
        %v2008 = vpack.c.b16 %v1997, %v1996
        %v2009 = vpack.c.b16 %v1999, %v1998
        %v2010 = vpack.c.b16 %v2001, %v2000
        %v2011 = vpack.c.b16 %v2003, %v2002
        %2020 = vmatpush.bf16.msra.mxu0 %v2011
        %2021 = vmatpush.bf16.msra.mxu0 %v2010
        %2022 = vmatpush.bf16.msra.mxu0 %v2009
        %2023 = vmatpush.bf16.msra.mxu0 %v2008
        %2024 = vmatpush.bf16.msra.mxu0 %v2007
        %2025 = vmatpush.bf16.msra.mxu0 %v2006
        %2026 = vmatpush.bf16.msra.mxu0 %v2005
        %2027 = vmatpush.bf16.msra.mxu0 %v2004
        %2028 = vmatmul.bf16.gmra.mxu0 %v1737
        %v2029 = vpop.f32.mrf.mxu0
        %v2030 = vadd.f32 0.0, %v2029
        %v2031 = vpop.f32.mrf.mxu0
        %v2032 = vadd.f32 0.0, %v2031
        %2033 = vmatmul.bf16.gmra.mxu0 %v1738
        %v2034 = vpop.f32.mrf.mxu0
        %v2035 = vadd.f32 0.0, %v2034
        %v2036 = vpop.f32.mrf.mxu0
        %v2037 = vadd.f32 0.0, %v2036
        %2038 = vmatmul.bf16.gmra.mxu0 %v1739
        %v2039 = vpop.f32.mrf.mxu0
        %v2040 = vadd.f32 0.0, %v2039
        %v2041 = vpop.f32.mrf.mxu0
        %v2042 = vadd.f32 0.0, %v2041
        %2043 = vmatmul.bf16.gmra.mxu0 %v1740
        %v2044 = vpop.f32.mrf.mxu0
        %v2045 = vadd.f32 0.0, %v2044
        %v2046 = vpop.f32.mrf.mxu0
        %v2047 = vadd.f32 0.0, %v2046
        %2048 = vmatmul.bf16.gmra.mxu0 %v1741
        %v2049 = vpop.f32.mrf.mxu0
        %v2050 = vadd.f32 0.0, %v2049
        %v2051 = vpop.f32.mrf.mxu0
        %v2052 = vadd.f32 0.0, %v2051
        %2053 = vmatmul.bf16.gmra.mxu0 %v1742
        %v2054 = vpop.f32.mrf.mxu0
        %v2055 = vadd.f32 0.0, %v2054
        %v2056 = vpop.f32.mrf.mxu0
        %v2057 = vadd.f32 0.0, %v2056
        %2058 = vmatmul.bf16.gmra.mxu0 %v1743
        %v2059 = vpop.f32.mrf.mxu0
        %v2060 = vadd.f32 0.0, %v2059
        %v2061 = vpop.f32.mrf.mxu0
        %v2062 = vadd.f32 0.0, %v2061
        %2063 = vmatmul.bf16.gmra.mxu0 %v1744
        %v2064 = vpop.f32.mrf.mxu0
        %v2065 = vadd.f32 0.0, %v2064
        %v2066 = vpop.f32.mrf.mxu0
        %v2067 = vadd.f32 0.0, %v2066
        %2068 = vmatmul.bf16.gmra.mxu0 %v1745
        %v2069 = vpop.f32.mrf.mxu0
        %v2070 = vadd.f32 0.0, %v2069
        %v2071 = vpop.f32.mrf.mxu0
        %v2072 = vadd.f32 0.0, %v2071
        %2073 = vmatmul.bf16.gmra.mxu0 %v1746
        %v2074 = vpop.f32.mrf.mxu0
        %v2075 = vadd.f32 0.0, %v2074
        %v2076 = vpop.f32.mrf.mxu0
        %v2077 = vadd.f32 0.0, %v2076
        %2078 = vmatmul.bf16.gmra.mxu0 %v1747
        %v2079 = vpop.f32.mrf.mxu0
        %v2080 = vadd.f32 0.0, %v2079
        %v2081 = vpop.f32.mrf.mxu0
        %v2082 = vadd.f32 0.0, %v2081
        %2083 = vmatmul.bf16.gmra.mxu0 %v1748
        %v2084 = vpop.f32.mrf.mxu0
        %v2085 = vadd.f32 0.0, %v2084
        %v2086 = vpop.f32.mrf.mxu0
        %v2087 = vadd.f32 0.0, %v2086
        %2088 = vmatmul.bf16.gmra.mxu0 %v1749
        %v2089 = vpop.f32.mrf.mxu0
        %v2090 = vadd.f32 0.0, %v2089
        %v2091 = vpop.f32.mrf.mxu0
        %v2092 = vadd.f32 0.0, %v2091
        %2093 = vmatmul.bf16.gmra.mxu0 %v1750
        %v2094 = vpop.f32.mrf.mxu0
        %v2095 = vadd.f32 0.0, %v2094
        %v2096 = vpop.f32.mrf.mxu0
        %v2097 = vadd.f32 0.0, %v2096
        %2098 = vmatmul.bf16.gmra.mxu0 %v1751
        %v2099 = vpop.f32.mrf.mxu0
        %v2100 = vadd.f32 0.0, %v2099
        %v2101 = vpop.f32.mrf.mxu0
        %v2102 = vadd.f32 0.0, %v2101
        %2103 = vmatmul.bf16.gmra.mxu0 %v1752
        %v2104 = vpop.f32.mrf.mxu0
        %v2105 = vadd.f32 0.0, %v2104
        %v2106 = vpop.f32.mrf.mxu0
        %v2107 = vadd.f32 0.0, %v2106
        %2108 = vmatmul.bf16.gmra.mxu0 %v1753
        %v2109 = vpop.f32.mrf.mxu0
        %v2110 = vadd.f32 0.0, %v2109
        %v2111 = vpop.f32.mrf.mxu0
        %v2112 = vadd.f32 0.0, %v2111
        %2113 = vmatmul.bf16.gmra.mxu0 %v1954
        %v2114 = vpop.f32.mrf.mxu0
        %v2115 = vadd.f32 0.0, %v2114
        %v2116 = vpop.f32.mrf.mxu0
        %v2117 = vadd.f32 0.0, %v2116
        %2118 = vdwg.mxu0
        %v2119 = vadd.f32 %v1918, %v2030
        %v2120 = vadd.f32 %v1919, %v2032
        %v2121 = vadd.f32 %v1920, %v2035
        %v2122 = vadd.f32 %v1921, %v2037
        %v2123 = vadd.f32 %v1922, %v2040
        %v2124 = vadd.f32 %v1923, %v2042
        %v2125 = vadd.f32 %v1924, %v2045
        %v2126 = vadd.f32 %v1925, %v2047
        %v2127 = vadd.f32 %v1926, %v2050
        %v2128 = vadd.f32 %v1927, %v2052
        %v2129 = vadd.f32 %v1928, %v2055
        %v2130 = vadd.f32 %v1929, %v2057
        %v2131 = vadd.f32 %v1930, %v2060
        %v2132 = vadd.f32 %v1931, %v2062
        %v2133 = vadd.f32 %v1932, %v2065
        %v2134 = vadd.f32 %v1933, %v2067
        %v2135 = vadd.f32 %v1934, %v2070
        %v2136 = vadd.f32 %v1935, %v2072
        %v2137 = vadd.f32 %v1936, %v2075
        %v2138 = vadd.f32 %v1937, %v2077
        %v2139 = vadd.f32 %v1938, %v2080
        %v2140 = vadd.f32 %v1939, %v2082
        %v2141 = vadd.f32 %v1940, %v2085
        %v2142 = vadd.f32 %v1941, %v2087
        %v2143 = vadd.f32 %v1942, %v2090
        %v2144 = vadd.f32 %v1943, %v2092
        %v2145 = vadd.f32 %v1944, %v2095
        %v2146 = vadd.f32 %v1945, %v2097
        %v2147 = vadd.f32 %v1946, %v2100
        %v2148 = vadd.f32 %v1947, %v2102
        %v2149 = vadd.f32 %v1948, %v2105
        %v2150 = vadd.f32 %v1949, %v2107
        %v2151 = vadd.f32 %v1950, %v2110
        %v2152 = vadd.f32 %v1951, %v2112
        %v2153 = vadd.f32 %v1952, %v2115
        %v2154 = vadd.f32 %v1953, %v2117
        %v2155 = vpack.c.bf16 %v355, %v355
        %s2156 = scalar_lea.vmem %s1, 448
        %v2157 = vld [vmem:[%s2156] sm:$0xf]
        %v2158 = vld [vmem:[%s2156 + $0x4] sm:$0xf]
        %v2159 = vld [vmem:[%s2156 + $0x8] sm:$0xf]
        %v2160 = vld [vmem:[%s2156 + $0xc] sm:$0xf]
        %v2161 = vld [vmem:[%s2156 + $0x10] sm:$0xf]
        %v2162 = vld [vmem:[%s2156 + $0x14] sm:$0xf]
        %v2163 = vld [vmem:[%s2156 + $0x18] sm:$0xf]
        %v2164 = vld [vmem:[%s2156 + $0x1c] sm:$0xf]
        %v2165 = vld [vmem:[%s2156 + $0x20] sm:$0xf]
        %v2166 = vld [vmem:[%s2156 + $0x24] sm:$0xf]
        %v2167 = vld [vmem:[%s2156 + $0x28] sm:$0xf]
        %v2168 = vld [vmem:[%s2156 + $0x2c] sm:$0xf]
        %v2169 = vld [vmem:[%s2156 + $0x30] sm:$0xf]
        %v2170 = vld [vmem:[%s2156 + $0x34] sm:$0xf]
        %v2171 = vld [vmem:[%s2156 + $0x38] sm:$0xf]
        %v2172 = vld [vmem:[%s2156 + $0x3c] sm:$0xf]
        %vm2173 = vsmask.f32 7424
        %v2175 = vshrl.u32 %v1737, 16
        %v2177 = vshll.u32 %v1737, 16
        %v2179 = vrot.slane %v2177, 1
        %v2180 = vor.u32 %v2175, %v2179
        %v2182 = vshll.u32 %v1738, 16
        %v2184 = vrot.slane %v2182, 1
        %v2185 = vsel %vm2173, %v2180, %v2184
        %v2186 = vshrl.u32 %v1738, 16
        %v2188 = vor.u32 %v2186, %v2184
        %v2190 = vshll.u32 %v1739, 16
        %v2192 = vrot.slane %v2190, 1
        %v2193 = vsel %vm2173, %v2188, %v2192
        %v2194 = vshrl.u32 %v1739, 16
        %v2196 = vor.u32 %v2194, %v2192
        %v2198 = vshll.u32 %v1740, 16
        %v2200 = vrot.slane %v2198, 1
        %v2201 = vsel %vm2173, %v2196, %v2200
        %v2202 = vshrl.u32 %v1740, 16
        %v2204 = vor.u32 %v2202, %v2200
        %v2206 = vshll.u32 %v1741, 16
        %v2208 = vrot.slane %v2206, 1
        %v2209 = vsel %vm2173, %v2204, %v2208
        %v2210 = vshrl.u32 %v1741, 16
        %v2212 = vor.u32 %v2210, %v2208
        %v2214 = vshll.u32 %v1742, 16
        %v2216 = vrot.slane %v2214, 1
        %v2217 = vsel %vm2173, %v2212, %v2216
        %v2218 = vshrl.u32 %v1742, 16
        %v2220 = vor.u32 %v2218, %v2216
        %v2222 = vshll.u32 %v1743, 16
        %v2224 = vrot.slane %v2222, 1
        %v2225 = vsel %vm2173, %v2220, %v2224
        %v2226 = vshrl.u32 %v1743, 16
        %v2228 = vor.u32 %v2226, %v2224
        %v2230 = vshll.u32 %v1744, 16
        %v2232 = vrot.slane %v2230, 1
        %v2233 = vsel %vm2173, %v2228, %v2232
        %v2234 = vshrl.u32 %v1744, 16
        %v2236 = vor.u32 %v2234, %v2232
        %v2238 = vshll.u32 %v1745, 16
        %v2240 = vrot.slane %v2238, 1
        %v2241 = vsel %vm2173, %v2236, %v2240
        %v2242 = vshrl.u32 %v1745, 16
        %v2244 = vor.u32 %v2242, %v2240
        %v2246 = vshll.u32 %v1746, 16
        %v2248 = vrot.slane %v2246, 1
        %v2249 = vsel %vm2173, %v2244, %v2248
        %v2250 = vshrl.u32 %v1746, 16
        %v2252 = vor.u32 %v2250, %v2248
        %v2254 = vshll.u32 %v1747, 16
        %v2256 = vrot.slane %v2254, 1
        %v2257 = vsel %vm2173, %v2252, %v2256
        %v2258 = vshrl.u32 %v1747, 16
        %v2260 = vor.u32 %v2258, %v2256
        %v2262 = vshll.u32 %v1748, 16
        %v2264 = vrot.slane %v2262, 1
        %v2265 = vsel %vm2173, %v2260, %v2264
        %v2266 = vshrl.u32 %v1748, 16
        %v2268 = vor.u32 %v2266, %v2264
        %v2270 = vshll.u32 %v1749, 16
        %v2272 = vrot.slane %v2270, 1
        %v2273 = vsel %vm2173, %v2268, %v2272
        %v2274 = vshrl.u32 %v1749, 16
        %v2276 = vor.u32 %v2274, %v2272
        %v2278 = vshll.u32 %v1750, 16
        %v2280 = vrot.slane %v2278, 1
        %v2281 = vsel %vm2173, %v2276, %v2280
        %v2282 = vshrl.u32 %v1750, 16
        %v2284 = vor.u32 %v2282, %v2280
        %v2286 = vshll.u32 %v1751, 16
        %v2288 = vrot.slane %v2286, 1
        %v2289 = vsel %vm2173, %v2284, %v2288
        %v2290 = vshrl.u32 %v1751, 16
        %v2292 = vor.u32 %v2290, %v2288
        %v2294 = vshll.u32 %v1752, 16
        %v2296 = vrot.slane %v2294, 1
        %v2297 = vsel %vm2173, %v2292, %v2296
        %v2298 = vshrl.u32 %v1752, 16
        %v2300 = vor.u32 %v2298, %v2296
        %v2302 = vshll.u32 %v1753, 16
        %v2304 = vrot.slane %v2302, 1
        %v2305 = vsel %vm2173, %v2300, %v2304
        %v2306 = vshrl.u32 %v1753, 16
        %v2308 = vor.u32 %v2306, %v2304
        %v2310 = vshll.u32 %v1954, 16
        %v2312 = vrot.slane %v2310, 1
        %v2313 = vsel %vm2173, %v2308, %v2312
        %v2314 = vshrl.u32 %v1954, 16
        %v2316 = vor.u32 %v2314, %v2312
        %v2318 = vshll.u32 %v2155, 16
        %v2320 = vrot.slane %v2318, 1
        %v2321 = vsel %vm2173, %v2316, %v2320
        %v2356 = vunpack.c.l.b16 %v2157
        %v2357 = vunpack.c.l.b16 %v2158
        %v2358 = vunpack.c.l.b16 %v2159
        %v2359 = vunpack.c.l.b16 %v2160
        %v2360 = vunpack.c.l.b16 %v2161
        %v2361 = vunpack.c.l.b16 %v2162
        %v2362 = vunpack.c.l.b16 %v2163
        %v2363 = vunpack.c.l.b16 %v2164
        %v2364 = vunpack.c.l.b16 %v2165
        %v2365 = vunpack.c.l.b16 %v2166
        %v2366 = vunpack.c.l.b16 %v2167
        %v2367 = vunpack.c.l.b16 %v2168
        %v2368 = vunpack.c.l.b16 %v2169
        %v2369 = vunpack.c.l.b16 %v2170
        %v2370 = vunpack.c.l.b16 %v2171
        %v2371 = vunpack.c.l.b16 %v2172
        %v2372 = vpack.c.b16 %v2357, %v2356
        %v2373 = vpack.c.b16 %v2359, %v2358
        %v2374 = vpack.c.b16 %v2361, %v2360
        %v2375 = vpack.c.b16 %v2363, %v2362
        %v2376 = vpack.c.b16 %v2365, %v2364
        %v2377 = vpack.c.b16 %v2367, %v2366
        %v2378 = vpack.c.b16 %v2369, %v2368
        %v2379 = vpack.c.b16 %v2371, %v2370
        %2388 = vmatpush.bf16.msra.mxu0 %v2379
        %2389 = vmatpush.bf16.msra.mxu0 %v2378
        %2390 = vmatpush.bf16.msra.mxu0 %v2377
        %2391 = vmatpush.bf16.msra.mxu0 %v2376
        %2392 = vmatpush.bf16.msra.mxu0 %v2375
        %2393 = vmatpush.bf16.msra.mxu0 %v2374
        %2394 = vmatpush.bf16.msra.mxu0 %v2373
        %2395 = vmatpush.bf16.msra.mxu0 %v2372
        %2396 = vmatmul.bf16.gmra.mxu0 %v2185
        %v2397 = vpop.f32.mrf.mxu0
        %v2398 = vadd.f32 0.0, %v2397
        %v2399 = vpop.f32.mrf.mxu0
        %v2400 = vadd.f32 0.0, %v2399
        %2401 = vmatmul.bf16.gmra.mxu0 %v2193
        %v2402 = vpop.f32.mrf.mxu0
        %v2403 = vadd.f32 0.0, %v2402
        %v2404 = vpop.f32.mrf.mxu0
        %v2405 = vadd.f32 0.0, %v2404
        %2406 = vmatmul.bf16.gmra.mxu0 %v2201
        %v2407 = vpop.f32.mrf.mxu0
        %v2408 = vadd.f32 0.0, %v2407
        %v2409 = vpop.f32.mrf.mxu0
        %v2410 = vadd.f32 0.0, %v2409
        %2411 = vmatmul.bf16.gmra.mxu0 %v2209
        %v2412 = vpop.f32.mrf.mxu0
        %v2413 = vadd.f32 0.0, %v2412
        %v2414 = vpop.f32.mrf.mxu0
        %v2415 = vadd.f32 0.0, %v2414
        %2416 = vmatmul.bf16.gmra.mxu0 %v2217
        %v2417 = vpop.f32.mrf.mxu0
        %v2418 = vadd.f32 0.0, %v2417
        %v2419 = vpop.f32.mrf.mxu0
        %v2420 = vadd.f32 0.0, %v2419
        %2421 = vmatmul.bf16.gmra.mxu0 %v2225
        %v2422 = vpop.f32.mrf.mxu0
        %v2423 = vadd.f32 0.0, %v2422
        %v2424 = vpop.f32.mrf.mxu0
        %v2425 = vadd.f32 0.0, %v2424
        %2426 = vmatmul.bf16.gmra.mxu0 %v2233
        %v2427 = vpop.f32.mrf.mxu0
        %v2428 = vadd.f32 0.0, %v2427
        %v2429 = vpop.f32.mrf.mxu0
        %v2430 = vadd.f32 0.0, %v2429
        %2431 = vmatmul.bf16.gmra.mxu0 %v2241
        %v2432 = vpop.f32.mrf.mxu0
        %v2433 = vadd.f32 0.0, %v2432
        %v2434 = vpop.f32.mrf.mxu0
        %v2435 = vadd.f32 0.0, %v2434
        %2436 = vmatmul.bf16.gmra.mxu0 %v2249
        %v2437 = vpop.f32.mrf.mxu0
        %v2438 = vadd.f32 0.0, %v2437
        %v2439 = vpop.f32.mrf.mxu0
        %v2440 = vadd.f32 0.0, %v2439
        %2441 = vmatmul.bf16.gmra.mxu0 %v2257
        %v2442 = vpop.f32.mrf.mxu0
        %v2443 = vadd.f32 0.0, %v2442
        %v2444 = vpop.f32.mrf.mxu0
        %v2445 = vadd.f32 0.0, %v2444
        %2446 = vmatmul.bf16.gmra.mxu0 %v2265
        %v2447 = vpop.f32.mrf.mxu0
        %v2448 = vadd.f32 0.0, %v2447
        %v2449 = vpop.f32.mrf.mxu0
        %v2450 = vadd.f32 0.0, %v2449
        %2451 = vmatmul.bf16.gmra.mxu0 %v2273
        %v2452 = vpop.f32.mrf.mxu0
        %v2453 = vadd.f32 0.0, %v2452
        %v2454 = vpop.f32.mrf.mxu0
        %v2455 = vadd.f32 0.0, %v2454
        %2456 = vmatmul.bf16.gmra.mxu0 %v2281
        %v2457 = vpop.f32.mrf.mxu0
        %v2458 = vadd.f32 0.0, %v2457
        %v2459 = vpop.f32.mrf.mxu0
        %v2460 = vadd.f32 0.0, %v2459
        %2461 = vmatmul.bf16.gmra.mxu0 %v2289
        %v2462 = vpop.f32.mrf.mxu0
        %v2463 = vadd.f32 0.0, %v2462
        %v2464 = vpop.f32.mrf.mxu0
        %v2465 = vadd.f32 0.0, %v2464
        %2466 = vmatmul.bf16.gmra.mxu0 %v2297
        %v2467 = vpop.f32.mrf.mxu0
        %v2468 = vadd.f32 0.0, %v2467
        %v2469 = vpop.f32.mrf.mxu0
        %v2470 = vadd.f32 0.0, %v2469
        %2471 = vmatmul.bf16.gmra.mxu0 %v2305
        %v2472 = vpop.f32.mrf.mxu0
        %v2473 = vadd.f32 0.0, %v2472
        %v2474 = vpop.f32.mrf.mxu0
        %v2475 = vadd.f32 0.0, %v2474
        %2476 = vmatmul.bf16.gmra.mxu0 %v2313
        %v2477 = vpop.f32.mrf.mxu0
        %v2478 = vadd.f32 0.0, %v2477
        %v2479 = vpop.f32.mrf.mxu0
        %v2480 = vadd.f32 0.0, %v2479
        %2481 = vmatmul.bf16.gmra.mxu0 %v2321
        %v2482 = vpop.f32.mrf.mxu0
        %v2483 = vadd.f32 0.0, %v2482
        %v2484 = vpop.f32.mrf.mxu0
        %v2485 = vadd.f32 0.0, %v2484
        %2486 = vdwg.mxu0
        %v2487 = vadd.f32 %v2119, %v2398
        %v2488 = vadd.f32 %v2120, %v2400
        %v2489 = vadd.f32 %v2121, %v2403
        %v2490 = vadd.f32 %v2122, %v2405
        %v2491 = vadd.f32 %v2123, %v2408
        %v2492 = vadd.f32 %v2124, %v2410
        %v2493 = vadd.f32 %v2125, %v2413
        %v2494 = vadd.f32 %v2126, %v2415
        %v2495 = vadd.f32 %v2127, %v2418
        %v2496 = vadd.f32 %v2128, %v2420
        %v2497 = vadd.f32 %v2129, %v2423
        %v2498 = vadd.f32 %v2130, %v2425
        %v2499 = vadd.f32 %v2131, %v2428
        %v2500 = vadd.f32 %v2132, %v2430
        %v2501 = vadd.f32 %v2133, %v2433
        %v2502 = vadd.f32 %v2134, %v2435
        %v2503 = vadd.f32 %v2135, %v2438
        %v2504 = vadd.f32 %v2136, %v2440
        %v2505 = vadd.f32 %v2137, %v2443
        %v2506 = vadd.f32 %v2138, %v2445
        %v2507 = vadd.f32 %v2139, %v2448
        %v2508 = vadd.f32 %v2140, %v2450
        %v2509 = vadd.f32 %v2141, %v2453
        %v2510 = vadd.f32 %v2142, %v2455
        %v2511 = vadd.f32 %v2143, %v2458
        %v2512 = vadd.f32 %v2144, %v2460
        %v2513 = vadd.f32 %v2145, %v2463
        %v2514 = vadd.f32 %v2146, %v2465
        %v2515 = vadd.f32 %v2147, %v2468
        %v2516 = vadd.f32 %v2148, %v2470
        %v2517 = vadd.f32 %v2149, %v2473
        %v2518 = vadd.f32 %v2150, %v2475
        %v2519 = vadd.f32 %v2151, %v2478
        %v2520 = vadd.f32 %v2152, %v2480
        %v2521 = vadd.f32 %v2153, %v2483
        %v2522 = vadd.f32 %v2154, %v2485
        %s2523 = scalar_lea.vmem %s1, 512
        %v2524 = vld [vmem:[%s2523] sm:$0xf]
        %v2525 = vld [vmem:[%s2523 + $0x4] sm:$0xf]
        %v2526 = vld [vmem:[%s2523 + $0x8] sm:$0xf]
        %v2527 = vld [vmem:[%s2523 + $0xc] sm:$0xf]
        %v2528 = vld [vmem:[%s2523 + $0x10] sm:$0xf]
        %v2529 = vld [vmem:[%s2523 + $0x14] sm:$0xf]
        %v2530 = vld [vmem:[%s2523 + $0x18] sm:$0xf]
        %v2531 = vld [vmem:[%s2523 + $0x1c] sm:$0xf]
        %v2532 = vld [vmem:[%s2523 + $0x20] sm:$0xf]
        %v2533 = vld [vmem:[%s2523 + $0x24] sm:$0xf]
        %v2534 = vld [vmem:[%s2523 + $0x28] sm:$0xf]
        %v2535 = vld [vmem:[%s2523 + $0x2c] sm:$0xf]
        %v2536 = vld [vmem:[%s2523 + $0x30] sm:$0xf]
        %v2537 = vld [vmem:[%s2523 + $0x34] sm:$0xf]
        %v2538 = vld [vmem:[%s2523 + $0x38] sm:$0xf]
        %v2539 = vld [vmem:[%s2523 + $0x3c] sm:$0xf]
        %vm2559 = vcmask 1046528
        %v2560 = vrot.slane %v1737, 1
        %v2561 = vrot.slane %v1738, 1
        %v2562 = vsel %vm2559, %v2560, %v2561
        %v2563 = vrot.slane %v1739, 1
        %v2564 = vsel %vm2559, %v2561, %v2563
        %v2565 = vrot.slane %v1740, 1
        %v2566 = vsel %vm2559, %v2563, %v2565
        %v2567 = vrot.slane %v1741, 1
        %v2568 = vsel %vm2559, %v2565, %v2567
        %v2569 = vrot.slane %v1742, 1
        %v2570 = vsel %vm2559, %v2567, %v2569
        %v2571 = vrot.slane %v1743, 1
        %v2572 = vsel %vm2559, %v2569, %v2571
        %v2573 = vrot.slane %v1744, 1
        %v2574 = vsel %vm2559, %v2571, %v2573
        %v2575 = vrot.slane %v1745, 1
        %v2576 = vsel %vm2559, %v2573, %v2575
        %v2577 = vrot.slane %v1746, 1
        %v2578 = vsel %vm2559, %v2575, %v2577
        %v2579 = vrot.slane %v1747, 1
        %v2580 = vsel %vm2559, %v2577, %v2579
        %v2581 = vrot.slane %v1748, 1
        %v2582 = vsel %vm2559, %v2579, %v2581
        %v2583 = vrot.slane %v1749, 1
        %v2584 = vsel %vm2559, %v2581, %v2583
        %v2585 = vrot.slane %v1750, 1
        %v2586 = vsel %vm2559, %v2583, %v2585
        %v2587 = vrot.slane %v1751, 1
        %v2588 = vsel %vm2559, %v2585, %v2587
        %v2589 = vrot.slane %v1752, 1
        %v2590 = vsel %vm2559, %v2587, %v2589
        %v2591 = vrot.slane %v1753, 1
        %v2592 = vsel %vm2559, %v2589, %v2591
        %v2593 = vrot.slane %v1954, 1
        %v2594 = vsel %vm2559, %v2591, %v2593
        %v2595 = vrot.slane %v2155, 1
        %v2596 = vsel %vm2559, %v2593, %v2595
        %v2631 = vunpack.c.l.b16 %v2524
        %v2632 = vunpack.c.l.b16 %v2525
        %v2633 = vunpack.c.l.b16 %v2526
        %v2634 = vunpack.c.l.b16 %v2527
        %v2635 = vunpack.c.l.b16 %v2528
        %v2636 = vunpack.c.l.b16 %v2529
        %v2637 = vunpack.c.l.b16 %v2530
        %v2638 = vunpack.c.l.b16 %v2531
        %v2639 = vunpack.c.l.b16 %v2532
        %v2640 = vunpack.c.l.b16 %v2533
        %v2641 = vunpack.c.l.b16 %v2534
        %v2642 = vunpack.c.l.b16 %v2535
        %v2643 = vunpack.c.l.b16 %v2536
        %v2644 = vunpack.c.l.b16 %v2537
        %v2645 = vunpack.c.l.b16 %v2538
        %v2646 = vunpack.c.l.b16 %v2539
        %v2647 = vpack.c.b16 %v2632, %v2631
        %v2648 = vpack.c.b16 %v2634, %v2633
        %v2649 = vpack.c.b16 %v2636, %v2635
        %v2650 = vpack.c.b16 %v2638, %v2637
        %v2651 = vpack.c.b16 %v2640, %v2639
        %v2652 = vpack.c.b16 %v2642, %v2641
        %v2653 = vpack.c.b16 %v2644, %v2643
        %v2654 = vpack.c.b16 %v2646, %v2645
        %2663 = vmatpush.bf16.msra.mxu0 %v2654
        %2664 = vmatpush.bf16.msra.mxu0 %v2653
        %2665 = vmatpush.bf16.msra.mxu0 %v2652
        %2666 = vmatpush.bf16.msra.mxu0 %v2651
        %2667 = vmatpush.bf16.msra.mxu0 %v2650
        %2668 = vmatpush.bf16.msra.mxu0 %v2649
        %2669 = vmatpush.bf16.msra.mxu0 %v2648
        %2670 = vmatpush.bf16.msra.mxu0 %v2647
        %2671 = vmatmul.bf16.gmra.mxu0 %v2562
        %v2672 = vpop.f32.mrf.mxu0
        %v2673 = vadd.f32 0.0, %v2672
        %v2674 = vpop.f32.mrf.mxu0
        %v2675 = vadd.f32 0.0, %v2674
        %2676 = vmatmul.bf16.gmra.mxu0 %v2564
        %v2677 = vpop.f32.mrf.mxu0
        %v2678 = vadd.f32 0.0, %v2677
        %v2679 = vpop.f32.mrf.mxu0
        %v2680 = vadd.f32 0.0, %v2679
        %2681 = vmatmul.bf16.gmra.mxu0 %v2566
        %v2682 = vpop.f32.mrf.mxu0
        %v2683 = vadd.f32 0.0, %v2682
        %v2684 = vpop.f32.mrf.mxu0
        %v2685 = vadd.f32 0.0, %v2684
        %2686 = vmatmul.bf16.gmra.mxu0 %v2568
        %v2687 = vpop.f32.mrf.mxu0
        %v2688 = vadd.f32 0.0, %v2687
        %v2689 = vpop.f32.mrf.mxu0
        %v2690 = vadd.f32 0.0, %v2689
        %2691 = vmatmul.bf16.gmra.mxu0 %v2570
        %v2692 = vpop.f32.mrf.mxu0
        %v2693 = vadd.f32 0.0, %v2692
        %v2694 = vpop.f32.mrf.mxu0
        %v2695 = vadd.f32 0.0, %v2694
        %2696 = vmatmul.bf16.gmra.mxu0 %v2572
        %v2697 = vpop.f32.mrf.mxu0
        %v2698 = vadd.f32 0.0, %v2697
        %v2699 = vpop.f32.mrf.mxu0
        %v2700 = vadd.f32 0.0, %v2699
        %2701 = vmatmul.bf16.gmra.mxu0 %v2574
        %v2702 = vpop.f32.mrf.mxu0
        %v2703 = vadd.f32 0.0, %v2702
        %v2704 = vpop.f32.mrf.mxu0
        %v2705 = vadd.f32 0.0, %v2704
        %2706 = vmatmul.bf16.gmra.mxu0 %v2576
        %v2707 = vpop.f32.mrf.mxu0
        %v2708 = vadd.f32 0.0, %v2707
        %v2709 = vpop.f32.mrf.mxu0
        %v2710 = vadd.f32 0.0, %v2709
        %2711 = vmatmul.bf16.gmra.mxu0 %v2578
        %v2712 = vpop.f32.mrf.mxu0
        %v2713 = vadd.f32 0.0, %v2712
        %v2714 = vpop.f32.mrf.mxu0
        %v2715 = vadd.f32 0.0, %v2714
        %2716 = vmatmul.bf16.gmra.mxu0 %v2580
        %v2717 = vpop.f32.mrf.mxu0
        %v2718 = vadd.f32 0.0, %v2717
        %v2719 = vpop.f32.mrf.mxu0
        %v2720 = vadd.f32 0.0, %v2719
        %2721 = vmatmul.bf16.gmra.mxu0 %v2582
        %v2722 = vpop.f32.mrf.mxu0
        %v2723 = vadd.f32 0.0, %v2722
        %v2724 = vpop.f32.mrf.mxu0
        %v2725 = vadd.f32 0.0, %v2724
        %2726 = vmatmul.bf16.gmra.mxu0 %v2584
        %v2727 = vpop.f32.mrf.mxu0
        %v2728 = vadd.f32 0.0, %v2727
        %v2729 = vpop.f32.mrf.mxu0
        %v2730 = vadd.f32 0.0, %v2729
        %2731 = vmatmul.bf16.gmra.mxu0 %v2586
        %v2732 = vpop.f32.mrf.mxu0
        %v2733 = vadd.f32 0.0, %v2732
        %v2734 = vpop.f32.mrf.mxu0
        %v2735 = vadd.f32 0.0, %v2734
        %2736 = vmatmul.bf16.gmra.mxu0 %v2588
        %v2737 = vpop.f32.mrf.mxu0
        %v2738 = vadd.f32 0.0, %v2737
        %v2739 = vpop.f32.mrf.mxu0
        %v2740 = vadd.f32 0.0, %v2739
        %2741 = vmatmul.bf16.gmra.mxu0 %v2590
        %v2742 = vpop.f32.mrf.mxu0
        %v2743 = vadd.f32 0.0, %v2742
        %v2744 = vpop.f32.mrf.mxu0
        %v2745 = vadd.f32 0.0, %v2744
        %2746 = vmatmul.bf16.gmra.mxu0 %v2592
        %v2747 = vpop.f32.mrf.mxu0
        %v2748 = vadd.f32 0.0, %v2747
        %v2749 = vpop.f32.mrf.mxu0
        %v2750 = vadd.f32 0.0, %v2749
        %2751 = vmatmul.bf16.gmra.mxu0 %v2594
        %v2752 = vpop.f32.mrf.mxu0
        %v2753 = vadd.f32 0.0, %v2752
        %v2754 = vpop.f32.mrf.mxu0
        %v2755 = vadd.f32 0.0, %v2754
        %2756 = vmatmul.bf16.gmra.mxu0 %v2596
        %v2757 = vpop.f32.mrf.mxu0
        %v2758 = vadd.f32 0.0, %v2757
        %v2759 = vpop.f32.mrf.mxu0
        %v2760 = vadd.f32 0.0, %v2759
        %2761 = vdwg.mxu0
        %v2762 = vadd.f32 %v2487, %v2673
        %v2763 = vadd.f32 %v2488, %v2675
        %v2764 = vadd.f32 %v2489, %v2678
        %v2765 = vadd.f32 %v2490, %v2680
        %v2766 = vadd.f32 %v2491, %v2683
        %v2767 = vadd.f32 %v2492, %v2685
        %v2768 = vadd.f32 %v2493, %v2688
        %v2769 = vadd.f32 %v2494, %v2690
        %v2770 = vadd.f32 %v2495, %v2693
        %v2771 = vadd.f32 %v2496, %v2695
        %v2772 = vadd.f32 %v2497, %v2698
        %v2773 = vadd.f32 %v2498, %v2700
        %v2774 = vadd.f32 %v2499, %v2703
        %v2775 = vadd.f32 %v2500, %v2705
        %v2776 = vadd.f32 %v2501, %v2708
        %v2777 = vadd.f32 %v2502, %v2710
        %v2778 = vadd.f32 %v2503, %v2713
        %v2779 = vadd.f32 %v2504, %v2715
        %v2780 = vadd.f32 %v2505, %v2718
        %v2781 = vadd.f32 %v2506, %v2720
        %v2782 = vadd.f32 %v2507, %v2723
        %v2783 = vadd.f32 %v2508, %v2725
        %v2784 = vadd.f32 %v2509, %v2728
        %v2785 = vadd.f32 %v2510, %v2730
        %v2786 = vadd.f32 %v2511, %v2733
        %v2787 = vadd.f32 %v2512, %v2735
        %v2788 = vadd.f32 %v2513, %v2738
        %v2789 = vadd.f32 %v2514, %v2740
        %v2790 = vadd.f32 %v2515, %v2743
        %v2791 = vadd.f32 %v2516, %v2745
        %v2792 = vadd.f32 %v2517, %v2748
        %v2793 = vadd.f32 %v2518, %v2750
        %v2794 = vadd.f32 %v2519, %v2753
        %v2795 = vadd.f32 %v2520, %v2755
        %v2796 = vadd.f32 %v2521, %v2758
        %v2797 = vadd.f32 %v2522, %v2760
        %v2798 = vld [vmem:[%s2] sm:$0x1]
        %v2800 = vperm.slane %v2798, 0
        %v2802 = vadd.f32 %v2762, %v2800
        %v2803 = vadd.f32 %v2763, %v2800
        %v2804 = vadd.f32 %v2764, %v2800
        %v2805 = vadd.f32 %v2765, %v2800
        %v2806 = vadd.f32 %v2766, %v2800
        %v2807 = vadd.f32 %v2767, %v2800
        %v2808 = vadd.f32 %v2768, %v2800
        %v2809 = vadd.f32 %v2769, %v2800
        %v2810 = vadd.f32 %v2770, %v2800
        %v2811 = vadd.f32 %v2771, %v2800
        %v2812 = vadd.f32 %v2772, %v2800
        %v2813 = vadd.f32 %v2773, %v2800
        %v2814 = vadd.f32 %v2774, %v2800
        %v2815 = vadd.f32 %v2775, %v2800
        %v2816 = vadd.f32 %v2776, %v2800
        %v2817 = vadd.f32 %v2777, %v2800
        %v2818 = vadd.f32 %v2778, %v2800
        %v2819 = vadd.f32 %v2779, %v2800
        %v2820 = vadd.f32 %v2780, %v2800
        %v2821 = vadd.f32 %v2781, %v2800
        %v2822 = vadd.f32 %v2782, %v2800
        %v2823 = vadd.f32 %v2783, %v2800
        %v2824 = vadd.f32 %v2784, %v2800
        %v2825 = vadd.f32 %v2785, %v2800
        %v2826 = vadd.f32 %v2786, %v2800
        %v2827 = vadd.f32 %v2787, %v2800
        %v2828 = vadd.f32 %v2788, %v2800
        %v2829 = vadd.f32 %v2789, %v2800
        %v2830 = vadd.f32 %v2790, %v2800
        %v2831 = vadd.f32 %v2791, %v2800
        %v2832 = vadd.f32 %v2792, %v2800
        %v2833 = vadd.f32 %v2793, %v2800
        %v2834 = vadd.f32 %v2794, %v2800
        %v2835 = vadd.f32 %v2795, %v2800
        %v2836 = vadd.f32 %v2796, %v2800
        %v2837 = vadd.f32 %v2797, %v2800
        %v2838 = vmax.f32 %v2802, 0.0
        %v2839 = vmax.f32 %v2803, 0.0
        %v2840 = vmax.f32 %v2804, 0.0
        %v2841 = vmax.f32 %v2805, 0.0
        %v2842 = vmax.f32 %v2806, 0.0
        %v2843 = vmax.f32 %v2807, 0.0
        %v2844 = vmax.f32 %v2808, 0.0
        %v2845 = vmax.f32 %v2809, 0.0
        %v2846 = vmax.f32 %v2810, 0.0
        %v2847 = vmax.f32 %v2811, 0.0
        %v2848 = vmax.f32 %v2812, 0.0
        %v2849 = vmax.f32 %v2813, 0.0
        %v2850 = vmax.f32 %v2814, 0.0
        %v2851 = vmax.f32 %v2815, 0.0
        %v2852 = vmax.f32 %v2816, 0.0
        %v2853 = vmax.f32 %v2817, 0.0
        %v2854 = vmax.f32 %v2818, 0.0
        %v2855 = vmax.f32 %v2819, 0.0
        %v2856 = vmax.f32 %v2820, 0.0
        %v2857 = vmax.f32 %v2821, 0.0
        %v2858 = vmax.f32 %v2822, 0.0
        %v2859 = vmax.f32 %v2823, 0.0
        %v2860 = vmax.f32 %v2824, 0.0
        %v2861 = vmax.f32 %v2825, 0.0
        %v2862 = vmax.f32 %v2826, 0.0
        %v2863 = vmax.f32 %v2827, 0.0
        %v2864 = vmax.f32 %v2828, 0.0
        %v2865 = vmax.f32 %v2829, 0.0
        %v2866 = vmax.f32 %v2830, 0.0
        %v2867 = vmax.f32 %v2831, 0.0
        %v2868 = vmax.f32 %v2832, 0.0
        %v2869 = vmax.f32 %v2833, 0.0
        %v2870 = vmax.f32 %v2834, 0.0
        %v2871 = vmax.f32 %v2835, 0.0
        %v2872 = vmax.f32 %v2836, 0.0
        %v2873 = vmax.f32 %v2837, 0.0
        %v2874 = vld [vmem:[%s3 + $0x20] sm:$0xff]
        %v2875 = vld [vmem:[%s3 + $0x28] sm:$0xff]
        %v2876 = vld [vmem:[%s3 + $0x30] sm:$0xff]
        %v2877 = vld [vmem:[%s3 + $0x38] sm:$0xff]
        %v2878 = vld [vmem:[%s3 + $0x40] sm:$0xff]
        %v2879 = vld [vmem:[%s3 + $0x48] sm:$0xff]
        %v2880 = vld [vmem:[%s3 + $0x50] sm:$0xff]
        %v2881 = vld [vmem:[%s3 + $0x58] sm:$0xff]
        %v2882 = vld [vmem:[%s3 + $0x60] sm:$0xff]
        %v2883 = vld [vmem:[%s3 + $0x68] sm:$0xff]
        %v2884 = vld [vmem:[%s3 + $0x70] sm:$0xff]
        %v2885 = vld [vmem:[%s3 + $0x78] sm:$0xff]
        %v2886 = vld [vmem:[%s3 + $0x80] sm:$0xff]
        %v2887 = vld [vmem:[%s3 + $0x88] sm:$0xff]
        %v2888 = vld [vmem:[%s3 + $0x90] sm:$0xff]
        %v2889 = vld [vmem:[%s3 + $0x98] sm:$0xff]
        %v2890 = vld [vmem:[%s3 + $0xa0] sm:$0xff]
        %v2891 = vld [vmem:[%s3 + $0xa8] sm:$0xff]
        %v2892 = vld [vmem:[%s3 + $0xb0] sm:$0xff]
        %v2893 = vld [vmem:[%s3 + $0xb8] sm:$0xff]
        %v2894 = vld [vmem:[%s3 + $0xc0] sm:$0xff]
        %v2895 = vld [vmem:[%s3 + $0xc8] sm:$0xff]
        %v2896 = vld [vmem:[%s3 + $0xd0] sm:$0xff]
        %v2897 = vld [vmem:[%s3 + $0xd8] sm:$0xff]
        %v2898 = vld [vmem:[%s3 + $0xe0] sm:$0xff]
        %v2899 = vld [vmem:[%s3 + $0xe8] sm:$0xff]
        %v2900 = vld [vmem:[%s3 + $0xf0] sm:$0xff]
        %v2901 = vld [vmem:[%s3 + $0xf8] sm:$0xff]
        %v2902 = vld [vmem:[%s3 + $0x100] sm:$0xff]
        %v2903 = vld [vmem:[%s3 + $0x108] sm:$0xff]
        %v2904 = vld [vmem:[%s3 + $0x110] sm:$0xff]
        %v2905 = vld [vmem:[%s3 + $0x118] sm:$0xff]
        %v2906 = vld [vmem:[%s3 + $0x120] sm:$0xff]
        %v2907 = vld [vmem:[%s3 + $0x128] sm:$0xff]
        %v2908 = vld [vmem:[%s3 + $0x130] sm:$0xff]
        %v2909 = vld [vmem:[%s3 + $0x138] sm:$0xff]
        %2911 = vset.pattern.permute.xlu0 0
        %2912 = vperm.xlu0 %2911, %v2874
        %v2913 = vpop.permute.xlu0 %2912
        %2916 = vset.pattern.permute.xlu0 0
        %2917 = vperm.xlu0 %2916, %v2875
        %v2918 = vpop.permute.xlu0 %2917
        %2921 = vset.pattern.permute.xlu0 0
        %2922 = vperm.xlu0 %2921, %v2876
        %v2923 = vpop.permute.xlu0 %2922
        %2926 = vset.pattern.permute.xlu0 0
        %2927 = vperm.xlu0 %2926, %v2877
        %v2928 = vpop.permute.xlu0 %2927
        %2931 = vset.pattern.permute.xlu0 0
        %2932 = vperm.xlu0 %2931, %v2878
        %v2933 = vpop.permute.xlu0 %2932
        %2936 = vset.pattern.permute.xlu0 0
        %2937 = vperm.xlu0 %2936, %v2879
        %v2938 = vpop.permute.xlu0 %2937
        %2941 = vset.pattern.permute.xlu0 0
        %2942 = vperm.xlu0 %2941, %v2880
        %v2943 = vpop.permute.xlu0 %2942
        %2946 = vset.pattern.permute.xlu0 0
        %2947 = vperm.xlu0 %2946, %v2881
        %v2948 = vpop.permute.xlu0 %2947
        %2951 = vset.pattern.permute.xlu0 0
        %2952 = vperm.xlu0 %2951, %v2882
        %v2953 = vpop.permute.xlu0 %2952
        %2956 = vset.pattern.permute.xlu0 0
        %2957 = vperm.xlu0 %2956, %v2883
        %v2958 = vpop.permute.xlu0 %2957
        %2961 = vset.pattern.permute.xlu0 0
        %2962 = vperm.xlu0 %2961, %v2884
        %v2963 = vpop.permute.xlu0 %2962
        %2966 = vset.pattern.permute.xlu0 0
        %2967 = vperm.xlu0 %2966, %v2885
        %v2968 = vpop.permute.xlu0 %2967
        %2971 = vset.pattern.permute.xlu0 0
        %2972 = vperm.xlu0 %2971, %v2886
        %v2973 = vpop.permute.xlu0 %2972
        %2976 = vset.pattern.permute.xlu0 0
        %2977 = vperm.xlu0 %2976, %v2887
        %v2978 = vpop.permute.xlu0 %2977
        %2981 = vset.pattern.permute.xlu0 0
        %2982 = vperm.xlu0 %2981, %v2888
        %v2983 = vpop.permute.xlu0 %2982
        %2986 = vset.pattern.permute.xlu0 0
        %2987 = vperm.xlu0 %2986, %v2889
        %v2988 = vpop.permute.xlu0 %2987
        %2991 = vset.pattern.permute.xlu0 0
        %2992 = vperm.xlu0 %2991, %v2890
        %v2993 = vpop.permute.xlu0 %2992
        %2996 = vset.pattern.permute.xlu0 0
        %2997 = vperm.xlu0 %2996, %v2891
        %v2998 = vpop.permute.xlu0 %2997
        %3001 = vset.pattern.permute.xlu0 0
        %3002 = vperm.xlu0 %3001, %v2892
        %v3003 = vpop.permute.xlu0 %3002
        %3006 = vset.pattern.permute.xlu0 0
        %3007 = vperm.xlu0 %3006, %v2893
        %v3008 = vpop.permute.xlu0 %3007
        %3011 = vset.pattern.permute.xlu0 0
        %3012 = vperm.xlu0 %3011, %v2894
        %v3013 = vpop.permute.xlu0 %3012
        %3016 = vset.pattern.permute.xlu0 0
        %3017 = vperm.xlu0 %3016, %v2895
        %v3018 = vpop.permute.xlu0 %3017
        %3021 = vset.pattern.permute.xlu0 0
        %3022 = vperm.xlu0 %3021, %v2896
        %v3023 = vpop.permute.xlu0 %3022
        %3026 = vset.pattern.permute.xlu0 0
        %3027 = vperm.xlu0 %3026, %v2897
        %v3028 = vpop.permute.xlu0 %3027
        %3031 = vset.pattern.permute.xlu0 0
        %3032 = vperm.xlu0 %3031, %v2898
        %v3033 = vpop.permute.xlu0 %3032
        %3036 = vset.pattern.permute.xlu0 0
        %3037 = vperm.xlu0 %3036, %v2899
        %v3038 = vpop.permute.xlu0 %3037
        %3041 = vset.pattern.permute.xlu0 0
        %3042 = vperm.xlu0 %3041, %v2900
        %v3043 = vpop.permute.xlu0 %3042
        %3046 = vset.pattern.permute.xlu0 0
        %3047 = vperm.xlu0 %3046, %v2901
        %v3048 = vpop.permute.xlu0 %3047
        %3051 = vset.pattern.permute.xlu0 0
        %3052 = vperm.xlu0 %3051, %v2902
        %v3053 = vpop.permute.xlu0 %3052
        %3056 = vset.pattern.permute.xlu0 0
        %3057 = vperm.xlu0 %3056, %v2903
        %v3058 = vpop.permute.xlu0 %3057
        %3061 = vset.pattern.permute.xlu0 0
        %3062 = vperm.xlu0 %3061, %v2904
        %v3063 = vpop.permute.xlu0 %3062
        %3066 = vset.pattern.permute.xlu0 0
        %3067 = vperm.xlu0 %3066, %v2905
        %v3068 = vpop.permute.xlu0 %3067
        %3071 = vset.pattern.permute.xlu0 0
        %3072 = vperm.xlu0 %3071, %v2906
        %v3073 = vpop.permute.xlu0 %3072
        %3076 = vset.pattern.permute.xlu0 0
        %3077 = vperm.xlu0 %3076, %v2907
        %v3078 = vpop.permute.xlu0 %3077
        %3081 = vset.pattern.permute.xlu0 0
        %3082 = vperm.xlu0 %3081, %v2908
        %v3083 = vpop.permute.xlu0 %3082
        %3086 = vset.pattern.permute.xlu0 0
        %3087 = vperm.xlu0 %3086, %v2909
        %v3088 = vpop.permute.xlu0 %3087
        %v3090 = vmul.f32 %v2838, %v2913
        %v3091 = vmul.f32 %v2839, %v2918
        %v3092 = vmul.f32 %v2840, %v2923
        %v3093 = vmul.f32 %v2841, %v2928
        %v3094 = vmul.f32 %v2842, %v2933
        %v3095 = vmul.f32 %v2843, %v2938
        %v3096 = vmul.f32 %v2844, %v2943
        %v3097 = vmul.f32 %v2845, %v2948
        %v3098 = vmul.f32 %v2846, %v2953
        %v3099 = vmul.f32 %v2847, %v2958
        %v3100 = vmul.f32 %v2848, %v2963
        %v3101 = vmul.f32 %v2849, %v2968
        %v3102 = vmul.f32 %v2850, %v2973
        %v3103 = vmul.f32 %v2851, %v2978
        %v3104 = vmul.f32 %v2852, %v2983
        %v3105 = vmul.f32 %v2853, %v2988
        %v3106 = vmul.f32 %v2854, %v2993
        %v3107 = vmul.f32 %v2855, %v2998
        %v3108 = vmul.f32 %v2856, %v3003
        %v3109 = vmul.f32 %v2857, %v3008
        %v3110 = vmul.f32 %v2858, %v3013
        %v3111 = vmul.f32 %v2859, %v3018
        %v3112 = vmul.f32 %v2860, %v3023
        %v3113 = vmul.f32 %v2861, %v3028
        %v3114 = vmul.f32 %v2862, %v3033
        %v3115 = vmul.f32 %v2863, %v3038
        %v3116 = vmul.f32 %v2864, %v3043
        %v3117 = vmul.f32 %v2865, %v3048
        %v3118 = vmul.f32 %v2866, %v3053
        %v3119 = vmul.f32 %v2867, %v3058
        %v3120 = vmul.f32 %v2868, %v3063
        %v3121 = vmul.f32 %v2869, %v3068
        %v3122 = vmul.f32 %v2870, %v3073
        %v3123 = vmul.f32 %v2871, %v3078
        %v3124 = vmul.f32 %v2872, %v3083
        %v3125 = vmul.f32 %v2873, %v3088
        %v3126 = vadd.f32 %v3090, %v3091
        %v3127 = vadd.f32 %v3126, %v3092
        %v3128 = vadd.f32 %v3127, %v3093
        %v3129 = vadd.f32 %v3128, %v3094
        %v3130 = vadd.f32 %v3129, %v3095
        %v3131 = vadd.f32 %v3130, %v3096
        %v3132 = vadd.f32 %v3131, %v3097
        %v3133 = vadd.f32 %v3132, %v3098
        %v3134 = vadd.f32 %v3133, %v3099
        %v3135 = vadd.f32 %v3134, %v3100
        %v3136 = vadd.f32 %v3135, %v3101
        %v3137 = vadd.f32 %v3136, %v3102
        %v3138 = vadd.f32 %v3137, %v3103
        %v3139 = vadd.f32 %v3138, %v3104
        %v3140 = vadd.f32 %v3139, %v3105
        %v3141 = vadd.f32 %v3140, %v3106
        %v3142 = vadd.f32 %v3141, %v3107
        %v3143 = vadd.f32 %v3142, %v3108
        %v3144 = vadd.f32 %v3143, %v3109
        %v3145 = vadd.f32 %v3144, %v3110
        %v3146 = vadd.f32 %v3145, %v3111
        %v3147 = vadd.f32 %v3146, %v3112
        %v3148 = vadd.f32 %v3147, %v3113
        %v3149 = vadd.f32 %v3148, %v3114
        %v3150 = vadd.f32 %v3149, %v3115
        %v3151 = vadd.f32 %v3150, %v3116
        %v3152 = vadd.f32 %v3151, %v3117
        %v3153 = vadd.f32 %v3152, %v3118
        %v3154 = vadd.f32 %v3153, %v3119
        %v3155 = vadd.f32 %v3154, %v3120
        %v3156 = vadd.f32 %v3155, %v3121
        %v3157 = vadd.f32 %v3156, %v3122
        %v3158 = vadd.f32 %v3157, %v3123
        %v3159 = vadd.f32 %v3158, %v3124
        %v3160 = vadd.f32 %v3159, %v3125
        %v3161 = vrot.slane %v3160, 4
        %v3162 = vadd.f32 %v3160, %v3161
        %v3163 = vrot.slane %v3162, 2
        %v3164 = vadd.f32 %v3162, %v3163
        %v3165 = vrot.slane %v3164, 1
        %v3166 = vadd.f32 %v3164, %v3165
        %3167 = vst [vmem:[%s254] sm:$0x1] %v3166
        %v3168 = vmul.f32 %v3090, %v2838
        %v3169 = vmul.f32 %v3091, %v2839
        %v3170 = vmul.f32 %v3092, %v2840
        %v3171 = vmul.f32 %v3093, %v2841
        %v3172 = vmul.f32 %v3094, %v2842
        %v3173 = vmul.f32 %v3095, %v2843
        %v3174 = vmul.f32 %v3096, %v2844
        %v3175 = vmul.f32 %v3097, %v2845
        %v3176 = vmul.f32 %v3098, %v2846
        %v3177 = vmul.f32 %v3099, %v2847
        %v3178 = vmul.f32 %v3100, %v2848
        %v3179 = vmul.f32 %v3101, %v2849
        %v3180 = vmul.f32 %v3102, %v2850
        %v3181 = vmul.f32 %v3103, %v2851
        %v3182 = vmul.f32 %v3104, %v2852
        %v3183 = vmul.f32 %v3105, %v2853
        %v3184 = vmul.f32 %v3106, %v2854
        %v3185 = vmul.f32 %v3107, %v2855
        %v3186 = vmul.f32 %v3108, %v2856
        %v3187 = vmul.f32 %v3109, %v2857
        %v3188 = vmul.f32 %v3110, %v2858
        %v3189 = vmul.f32 %v3111, %v2859
        %v3190 = vmul.f32 %v3112, %v2860
        %v3191 = vmul.f32 %v3113, %v2861
        %v3192 = vmul.f32 %v3114, %v2862
        %v3193 = vmul.f32 %v3115, %v2863
        %v3194 = vmul.f32 %v3116, %v2864
        %v3195 = vmul.f32 %v3117, %v2865
        %v3196 = vmul.f32 %v3118, %v2866
        %v3197 = vmul.f32 %v3119, %v2867
        %v3198 = vmul.f32 %v3120, %v2868
        %v3199 = vmul.f32 %v3121, %v2869
        %v3200 = vmul.f32 %v3122, %v2870
        %v3201 = vmul.f32 %v3123, %v2871
        %v3202 = vmul.f32 %v3124, %v2872
        %v3203 = vmul.f32 %v3125, %v2873
        %v3204 = vadd.f32 %v3168, %v3169
        %v3205 = vadd.f32 %v3204, %v3170
        %v3206 = vadd.f32 %v3205, %v3171
        %v3207 = vadd.f32 %v3206, %v3172
        %v3208 = vadd.f32 %v3207, %v3173
        %v3209 = vadd.f32 %v3208, %v3174
        %v3210 = vadd.f32 %v3209, %v3175
        %v3211 = vadd.f32 %v3210, %v3176
        %v3212 = vadd.f32 %v3211, %v3177
        %v3213 = vadd.f32 %v3212, %v3178
        %v3214 = vadd.f32 %v3213, %v3179
        %v3215 = vadd.f32 %v3214, %v3180
        %v3216 = vadd.f32 %v3215, %v3181
        %v3217 = vadd.f32 %v3216, %v3182
        %v3218 = vadd.f32 %v3217, %v3183
        %v3219 = vadd.f32 %v3218, %v3184
        %v3220 = vadd.f32 %v3219, %v3185
        %v3221 = vadd.f32 %v3220, %v3186
        %v3222 = vadd.f32 %v3221, %v3187
        %v3223 = vadd.f32 %v3222, %v3188
        %v3224 = vadd.f32 %v3223, %v3189
        %v3225 = vadd.f32 %v3224, %v3190
        %v3226 = vadd.f32 %v3225, %v3191
        %v3227 = vadd.f32 %v3226, %v3192
        %v3228 = vadd.f32 %v3227, %v3193
        %v3229 = vadd.f32 %v3228, %v3194
        %v3230 = vadd.f32 %v3229, %v3195
        %v3231 = vadd.f32 %v3230, %v3196
        %v3232 = vadd.f32 %v3231, %v3197
        %v3233 = vadd.f32 %v3232, %v3198
        %v3234 = vadd.f32 %v3233, %v3199
        %v3235 = vadd.f32 %v3234, %v3200
        %v3236 = vadd.f32 %v3235, %v3201
        %v3237 = vadd.f32 %v3236, %v3202
        %v3238 = vadd.f32 %v3237, %v3203
        %v3239 = vrot.slane %v3238, 4
        %v3240 = vadd.f32 %v3238, %v3239
        %v3241 = vrot.slane %v3240, 2
        %v3242 = vadd.f32 %v3240, %v3241
        %v3243 = vrot.slane %v3242, 1
        %v3244 = vadd.f32 %v3242, %v3243
        %3245 = vst [vmem:[%s260] sm:$0x1] %v3244
        %3246 = vst [vmem:[%s270] sm:$0xf] 0
        %3247 = vst [vmem:[%s270 + $0x4] sm:$0xf] 0
        %3248 = vst [vmem:[%s270 + $0x8] sm:$0xf] 0
        %3249 = vst [vmem:[%s270 + $0xc] sm:$0xf] 0
        %3250 = vst [vmem:[%s270 + $0x10] sm:$0xf] 0
        %3251 = vst [vmem:[%s270 + $0x14] sm:$0xf] 0
        %3252 = vst [vmem:[%s270 + $0x18] sm:$0xf] 0
        %3253 = vst [vmem:[%s270 + $0x1c] sm:$0xf] 0
        %3254 = vst [vmem:[%s270 + $0x20] sm:$0xf] 0
        %3255 = vst [vmem:[%s270 + $0x24] sm:$0xf] 0
        %3256 = vst [vmem:[%s270 + $0x28] sm:$0xf] 0
        %3257 = vst [vmem:[%s270 + $0x2c] sm:$0xf] 0
        %3258 = vst [vmem:[%s270 + $0x30] sm:$0xf] 0
        %3259 = vst [vmem:[%s270 + $0x34] sm:$0xf] 0
        %3260 = vst [vmem:[%s270 + $0x38] sm:$0xf] 0
        %3261 = vst [vmem:[%s270 + $0x3c] sm:$0xf] 0
        %3262 = vst [vmem:[%s270 + $0x40] sm:$0xf] 0
        %3263 = vst [vmem:[%s270 + $0x44] sm:$0xf] 0
        %3264 = vst [vmem:[%s270 + $0x48] sm:$0xf] 0
        %3265 = vst [vmem:[%s270 + $0x4c] sm:$0xf] 0
        %3266 = vst [vmem:[%s270 + $0x50] sm:$0xf] 0
        %3267 = vst [vmem:[%s270 + $0x54] sm:$0xf] 0
        %3268 = vst [vmem:[%s270 + $0x58] sm:$0xf] 0
        %3269 = vst [vmem:[%s270 + $0x5c] sm:$0xf] 0
        %3270 = vst [vmem:[%s270 + $0x60] sm:$0xf] 0
        %3271 = vst [vmem:[%s270 + $0x64] sm:$0xf] 0
        %3272 = vst [vmem:[%s270 + $0x68] sm:$0xf] 0
        %3273 = vst [vmem:[%s270 + $0x6c] sm:$0xf] 0
        %3274 = vst [vmem:[%s270 + $0x70] sm:$0xf] 0
        %3275 = vst [vmem:[%s270 + $0x74] sm:$0xf] 0
        %3276 = vst [vmem:[%s270 + $0x78] sm:$0xf] 0
        %3277 = vst [vmem:[%s270 + $0x7c] sm:$0xf] 0
        %3278 = vst [vmem:[%s270 + $0x80] sm:$0xf] 0
        %3279 = vst [vmem:[%s270 + $0x84] sm:$0xf] 0
        %3280 = vst [vmem:[%s270 + $0x88] sm:$0xf] 0
        %3281 = vst [vmem:[%s270 + $0x8c] sm:$0xf] 0
        %3282 = vst [vmem:[%s270 + $0x90] sm:$0xf] 0
        %3283 = vst [vmem:[%s270 + $0x94] sm:$0xf] 0
        %3284 = vst [vmem:[%s270 + $0x98] sm:$0xf] 0
        %3285 = vst [vmem:[%s270 + $0x9c] sm:$0xf] 0
        %3286 = vst [vmem:[%s270 + $0xa0] sm:$0xf] 0
        %3287 = vst [vmem:[%s270 + $0xa4] sm:$0xf] 0
        %3288 = vst [vmem:[%s270 + $0xa8] sm:$0xf] 0
        %3289 = vst [vmem:[%s270 + $0xac] sm:$0xf] 0
        %v3290 = vpack.c.bf16 %v3090, %v3090
        %v3291 = vpack.c.bf16 %v3091, %v3091
        %v3292 = vpack.c.bf16 %v3092, %v3092
        %v3293 = vpack.c.bf16 %v3093, %v3093
        %v3294 = vpack.c.bf16 %v3094, %v3094
        %v3295 = vpack.c.bf16 %v3095, %v3095
        %v3296 = vpack.c.bf16 %v3096, %v3096
        %v3297 = vpack.c.bf16 %v3097, %v3097
        %v3298 = vpack.c.bf16 %v3098, %v3098
        %v3299 = vpack.c.bf16 %v3099, %v3099
        %v3300 = vpack.c.bf16 %v3100, %v3100
        %v3301 = vpack.c.bf16 %v3101, %v3101
        %v3302 = vpack.c.bf16 %v3102, %v3102
        %v3303 = vpack.c.bf16 %v3103, %v3103
        %v3304 = vpack.c.bf16 %v3104, %v3104
        %v3305 = vpack.c.bf16 %v3105, %v3105
        %v3306 = vpack.c.bf16 %v3106, %v3106
        %v3307 = vpack.c.bf16 %v3107, %v3107
        %v3308 = vpack.c.bf16 %v3108, %v3108
        %v3309 = vpack.c.bf16 %v3109, %v3109
        %v3310 = vpack.c.bf16 %v3110, %v3110
        %v3311 = vpack.c.bf16 %v3111, %v3111
        %v3312 = vpack.c.bf16 %v3112, %v3112
        %v3313 = vpack.c.bf16 %v3113, %v3113
        %v3314 = vpack.c.bf16 %v3114, %v3114
        %v3315 = vpack.c.bf16 %v3115, %v3115
        %v3316 = vpack.c.bf16 %v3116, %v3116
        %v3317 = vpack.c.bf16 %v3117, %v3117
        %v3318 = vpack.c.bf16 %v3118, %v3118
        %v3319 = vpack.c.bf16 %v3119, %v3119
        %v3320 = vpack.c.bf16 %v3120, %v3120
        %v3321 = vpack.c.bf16 %v3121, %v3121
        %v3322 = vpack.c.bf16 %v3122, %v3122
        %v3323 = vpack.c.bf16 %v3123, %v3123
        %v3324 = vpack.c.bf16 %v3124, %v3124
        %v3325 = vpack.c.bf16 %v3125, %v3125
        %3326 = vst [vmem:[%s270 + $0x10] sm:$0xf] %v3290
        %3327 = vst [vmem:[%s270 + $0x14] sm:$0xf] %v3291
        %3328 = vst [vmem:[%s270 + $0x18] sm:$0xf] %v3292
        %3329 = vst [vmem:[%s270 + $0x1c] sm:$0xf] %v3293
        %3330 = vst [vmem:[%s270 + $0x20] sm:$0xf] %v3294
        %3331 = vst [vmem:[%s270 + $0x24] sm:$0xf] %v3295
        %3332 = vst [vmem:[%s270 + $0x28] sm:$0xf] %v3296
        %3333 = vst [vmem:[%s270 + $0x2c] sm:$0xf] %v3297
        %3334 = vst [vmem:[%s270 + $0x30] sm:$0xf] %v3298
        %3335 = vst [vmem:[%s270 + $0x34] sm:$0xf] %v3299
        %3336 = vst [vmem:[%s270 + $0x38] sm:$0xf] %v3300
        %3337 = vst [vmem:[%s270 + $0x3c] sm:$0xf] %v3301
        %3338 = vst [vmem:[%s270 + $0x40] sm:$0xf] %v3302
        %3339 = vst [vmem:[%s270 + $0x44] sm:$0xf] %v3303
        %3340 = vst [vmem:[%s270 + $0x48] sm:$0xf] %v3304
        %3341 = vst [vmem:[%s270 + $0x4c] sm:$0xf] %v3305
        %3342 = vst [vmem:[%s270 + $0x50] sm:$0xf] %v3306
        %3343 = vst [vmem:[%s270 + $0x54] sm:$0xf] %v3307
        %3344 = vst [vmem:[%s270 + $0x58] sm:$0xf] %v3308
        %3345 = vst [vmem:[%s270 + $0x5c] sm:$0xf] %v3309
        %3346 = vst [vmem:[%s270 + $0x60] sm:$0xf] %v3310
        %3347 = vst [vmem:[%s270 + $0x64] sm:$0xf] %v3311
        %3348 = vst [vmem:[%s270 + $0x68] sm:$0xf] %v3312
        %3349 = vst [vmem:[%s270 + $0x6c] sm:$0xf] %v3313
        %3350 = vst [vmem:[%s270 + $0x70] sm:$0xf] %v3314
        %3351 = vst [vmem:[%s270 + $0x74] sm:$0xf] %v3315
        %3352 = vst [vmem:[%s270 + $0x78] sm:$0xf] %v3316
        %3353 = vst [vmem:[%s270 + $0x7c] sm:$0xf] %v3317
        %3354 = vst [vmem:[%s270 + $0x80] sm:$0xf] %v3318
        %3355 = vst [vmem:[%s270 + $0x84] sm:$0xf] %v3319
        %3356 = vst [vmem:[%s270 + $0x88] sm:$0xf] %v3320
        %3357 = vst [vmem:[%s270 + $0x8c] sm:$0xf] %v3321
        %3358 = vst [vmem:[%s270 + $0x90] sm:$0xf] %v3322
        %3359 = vst [vmem:[%s270 + $0x94] sm:$0xf] %v3323
        %3360 = vst [vmem:[%s270 + $0x98] sm:$0xf] %v3324
        %3361 = vst [vmem:[%s270 + $0x9c] sm:$0xf] %v3325
        %p3362 = scmp.lt.s32.totalorder %s24, 1
        %s3363 = scalar_select %p3362, %s24, 1
        %s3364 = smul.addr %s3363, 44
        %s3365 = smul.addr %s3364, 4
        %s3366 = scalar_lea.vmem %s4, %s3365
        %s3367 = sand.u32 %s147, 1
        %s3368 = scalar_lea.sflag [#allocation3], %s3367
        %s3369 = sand.u32 %s147, 1
        %s3370 = scalar_lea.vmem [#allocation2], %s3369
        %s3371 = sand.u32 %s173, 1
        %s3372 = scalar_lea.sflag [#allocation5], %s3371
        %s3373 = sand.u32 %s173, 1
        %s3374 = scalar_lea.vmem [#allocation4], %s3373
        // Predicated region
        $region37: #{basic_block_forward.11} parent=35 // pred_check
          %p3375 = pneg %p131
        $region38: #{basic_block_forward.11} parent=35 // pred_check_branch
          %3377 = sbr.rel (%p3375) target = $region40
        $region39: #{basic_block_forward.11} parent=35 // pred_region
          _
        $region40: #{basic_block_forward.11} parent=35 // pred_fallthru
          _
        // Predicated region
        $region41: #{basic_block_forward.11} parent=35 // pred_check
          %p3378 = pneg %p157
        $region42: #{basic_block_forward.11} parent=35 // pred_check_branch
          %3380 = sbr.rel (%p3378) target = $region44
        $region43: #{basic_block_forward.11} parent=35 // pred_region
          %3382 = vsyncadd %s3368, 0
          %s3383 = scalar_lea.hbm %s5, %s24
          %s3385 = sshll.u32 %s3370, 4
          %s3386 = int_to_ptr.vmem [resolvable:$true] %s3385
          %s3387 = sshll.u32 %s3383, 4
          %s3388 = int_to_ptr.hbm [resolvable:$true] %s3387
          %3390 = dma.vmem_to_hbm [thread:$0]  %s3386, 16, %s3388, %s3368
        $region44: #{basic_block_forward.11} parent=35 // pred_fallthru
          _
        // Predicated region
        $region45: #{basic_block_forward.11} parent=35 // pred_check
          %p3391 = pneg %p183
        $region46: #{basic_block_forward.11} parent=35 // pred_check_branch
          %3393 = sbr.rel (%p3391) target = $region48
        $region47: #{basic_block_forward.11} parent=35 // pred_region
          %3395 = vsyncadd %s3372, 0
          %s3396 = scalar_lea.hbm %s6, %s24
          %s3398 = sshll.u32 %s3374, 4
          %s3399 = int_to_ptr.vmem [resolvable:$true] %s3398
          %s3400 = sshll.u32 %s3396, 4
          %s3401 = int_to_ptr.hbm [resolvable:$true] %s3400
          %3403 = dma.vmem_to_hbm [thread:$0]  %s3399, 16, %s3401, %s3372
        $region48: #{basic_block_forward.11} parent=35 // pred_fallthru
          _
      $region36: #{basic_block_forward.11} parent=5 // pred_fallthru
        _
      %p3404 = scmp.le.s32.totalorder 2, %s19
      // Predicated region
      $region49: #{basic_block_forward.11} parent=5 // pred_check
        %p3405 = pneg %p3404
      $region50: #{basic_block_forward.11} parent=5 // pred_check_branch
        %3407 = sbr.rel (%p3405) target = $region52
      $region51: #{basic_block_forward.11} parent=5 // pred_region
        %s3408 = ssub.s32 %s19, 2
        // Predicated region
        $region53: #{basic_block_forward.11} parent=51 // pred_check
          %p3409 = pneg %p137
        $region54: #{basic_block_forward.11} parent=51 // pred_check_branch
          %3411 = sbr.rel (%p3409) target = $region56
        $region55: #{basic_block_forward.11} parent=51 // pred_region
          %p3412 = scmp.lt.s32.totalorder %s25, 1
          %s3413 = scalar_select %p3412, %s25, 1
          %s3414 = smul.addr %s3413, 44
          %s3415 = smul.addr %s3414, 4
          %s3416 = scalar_lea.vmem %s4, %s3415
        $region56: #{basic_block_forward.11} parent=51 // pred_fallthru
          _
        // Predicated region
        $region57: #{basic_block_forward.11} parent=51 // pred_check
          %p3417 = pneg %p163
        $region58: #{basic_block_forward.11} parent=51 // pred_check_branch
          %3419 = sbr.rel (%p3417) target = $region60
        $region59: #{basic_block_forward.11} parent=51 // pred_region
          %s3420 = sand.u32 %s148, 1
          %s3421 = scalar_lea.sflag [#allocation3], %s3420
          %s3422 = sand.u32 %s148, 1
          %s3423 = scalar_lea.vmem [#allocation2], %s3422
          %3425 = dma.done %s3421, 16
        $region60: #{basic_block_forward.11} parent=51 // pred_fallthru
          _
        // Predicated region
        $region61: #{basic_block_forward.11} parent=51 // pred_check
          %p3426 = pneg %p189
        $region62: #{basic_block_forward.11} parent=51 // pred_check_branch
          %3428 = sbr.rel (%p3426) target = $region64
        $region63: #{basic_block_forward.11} parent=51 // pred_region
          %s3429 = sand.u32 %s174, 1
          %s3430 = scalar_lea.sflag [#allocation5], %s3429
          %s3431 = sand.u32 %s174, 1
          %s3432 = scalar_lea.vmem [#allocation4], %s3431
          %3434 = dma.done %s3430, 16
        $region64: #{basic_block_forward.11} parent=51 // pred_fallthru
          _
      $region52: #{basic_block_forward.11} parent=5 // pred_fallthru
        _
    $region6: #{basic_block_forward.11} parent=1 // loop_footer
      %s23 = sadd.s32 1, %s19
    $region7: #{basic_block_forward.11} parent=1 // loop_footer_branch
      %18 = sbr.rel target = $region3
    $region8: #{basic_block_forward.11} parent=1 // loop_exit
      _
    %3435 = vsyncpa [#allocation3], 1
    %s3436 = scalar_lea.sflag [#allocation3], 1
    %3437 = vsyncpa %s3436, 1
    %3438 = vsyncpa [#allocation5], 1
    %s3439 = scalar_lea.sflag [#allocation5], 1
    %3440 = vsyncpa %s3439, 1

// kernel: basic_block_forward.21
$region0: #{basic_block_forward.21}
  #allocation0 [shape = 'u32[]', space=smem, size = 0x4, offset = 0x4, fixed_abs, tag = 'smem constant byte address 0x4 - core index']
  #allocation1 [shape = 'u32[72,128]{1,0:T(1,128)}', space=vmem, size = 0x9000, scoped, tag = 'internal scratch']
  %s0 = inlined_call_operand.vmem [shape: bf16[2,352,128], index: 0, kind: input, shape index: {}]
  %s1 = inlined_call_operand.vmem [shape: bf16[2,352,128], index: 1, kind: input, shape index: {}]
  %s2 = inlined_call_operand.vmem [shape: f32[1,128], index: 2, kind: input, shape index: {}]
  %s3 = inlined_call_operand.vmem [shape: f32[1,128], index: 3, kind: input, shape index: {}]
  %s4 = inlined_call_operand.vmem [shape: f32[352,1], index: 4, kind: input, shape index: {}]
  %s5 = inlined_call_operand.vmem [shape: f32[2,352,128], index: 5, kind: output, shape index: {}]
  %s6 = sld [smem:[#allocation0]]
  $region53: #{basic_block_forward.21} parent=0
    _
  %s8 = ssub.s32 1, %s6
  %s9 = scalar_select 0, %s8, %s6
  loop: start=0, step=1, limit=4
  $region2: #{basic_block_forward.21} parent=0 // loop_pre_header
    _
  $region3: #{basic_block_forward.21} parent=0 // loop_header
    %s11 = sphi 0, %s15
    %p12 = scmp.ge.s32.totalorder %s11, 4
    %s21 = sphi 0, %s23
    %s24 = sphi 0, %s21
    %s25 = sphi 0, %s24
    %s41 = sphi 0, %s25
    %s47 = sphi 0, %s49
    %s50 = sphi 0, %s47
    %s51 = sphi 0, %s50
    %s67 = sphi 0, %s51
    %s71 = sphi 0, %s71
    %s73 = sphi 0, %s71
    %s74 = sphi 0, %s73
    %s88 = sphi 0, %s74
    %s92 = sphi 0, %s92
    %s94 = sphi 0, %s92
    %s95 = sphi 0, %s94
    %s109 = sphi 0, %s95
    %s113 = sphi 0, %s113
    %s115 = sphi 0, %s113
    %s116 = sphi 0, %s115
    %s130 = sphi 0, %s116
    %s136 = sphi 0, %s138
    %s139 = sphi 0, %s136
    %s140 = sphi 0, %s139
    %s156 = sphi 0, %s140
  $region4: #{basic_block_forward.21} parent=0 // loop_header_branch
    %14 = sbr.rel (%p12) target = $region8
  $region5: #{basic_block_forward.21} parent=0 // loop_body
    %s16 = ssub.s32 %s11, 1
    %s17 = ssub.s32 %s11, 2
    %s18 = sadd.s32 %s11, 1
    %s19 = ssub.s32 %s11, %s18
    %p20 = scmp.eq.s32.totalorder %s19, 0
    %s22 = sadd.s32 %s21, 1
    %s23 = scalar_select %p20, %s21, %s22
    %p26 = pneg %p20
    %p27 = scmp.eq.s32.totalorder %s11, 1
    %p28 = por %p26, %p27
    %p29 = scmp.ne.s32.totalorder %s21, %s24
    %p30 = scmp.eq.s32.totalorder %s11, 0
    %p31 = por %p29, %p30
    %p32 = scmp.ne.s32.totalorder %s21, %s24
    %p33 = scmp.eq.s32.totalorder %s16, 1
    %p34 = por %p32, %p33
    %p35 = scmp.ne.s32.totalorder %s24, %s25
    %p36 = scmp.eq.s32.totalorder %s16, 0
    %p37 = por %p35, %p36
    %p38 = scmp.ne.s32.totalorder %s24, %s25
    %p39 = scmp.eq.s32.totalorder %s17, 1
    %p40 = por %p38, %p39
    %p42 = scmp.ne.s32.totalorder %s25, %s41
    %p43 = scmp.eq.s32.totalorder %s17, 0
    %p44 = por %p42, %p43
    %s45 = ssub.s32 %s11, %s18
    %p46 = scmp.eq.s32.totalorder %s45, 0
    %s48 = sadd.s32 %s47, 1
    %s49 = scalar_select %p46, %s47, %s48
    %p52 = pneg %p46
    %p53 = scmp.eq.s32.totalorder %s11, 1
    %p54 = por %p52, %p53
    %p55 = scmp.ne.s32.totalorder %s47, %s50
    %p56 = scmp.eq.s32.totalorder %s11, 0
    %p57 = por %p55, %p56
    %p58 = scmp.ne.s32.totalorder %s47, %s50
    %p59 = scmp.eq.s32.totalorder %s16, 1
    %p60 = por %p58, %p59
    %p61 = scmp.ne.s32.totalorder %s50, %s51
    %p62 = scmp.eq.s32.totalorder %s16, 0
    %p63 = por %p61, %p62
    %p64 = scmp.ne.s32.totalorder %s50, %s51
    %p65 = scmp.eq.s32.totalorder %s17, 1
    %p66 = por %p64, %p65
    %p68 = scmp.ne.s32.totalorder %s51, %s67
    %p69 = scmp.eq.s32.totalorder %s17, 0
    %p70 = por %p68, %p69
    %s72 = sadd.s32 %s71, 1
    %p75 = scmp.eq.s32.totalorder %s11, 1
    %p76 = scmp.ne.s32.totalorder %s71, %s73
    %p77 = scmp.eq.s32.totalorder %s11, 0
    %p78 = por %p76, %p77
    %p79 = scmp.ne.s32.totalorder %s71, %s73
    %p80 = scmp.eq.s32.totalorder %s16, 1
    %p81 = por %p79, %p80
    %p82 = scmp.ne.s32.totalorder %s73, %s74
    %p83 = scmp.eq.s32.totalorder %s16, 0
    %p84 = por %p82, %p83
    %p85 = scmp.ne.s32.totalorder %s73, %s74
    %p86 = scmp.eq.s32.totalorder %s17, 1
    %p87 = por %p85, %p86
    %p89 = scmp.ne.s32.totalorder %s74, %s88
    %p90 = scmp.eq.s32.totalorder %s17, 0
    %p91 = por %p89, %p90
    %s93 = sadd.s32 %s92, 1
    %p96 = scmp.eq.s32.totalorder %s11, 1
    %p97 = scmp.ne.s32.totalorder %s92, %s94
    %p98 = scmp.eq.s32.totalorder %s11, 0
    %p99 = por %p97, %p98
    %p100 = scmp.ne.s32.totalorder %s92, %s94
    %p101 = scmp.eq.s32.totalorder %s16, 1
    %p102 = por %p100, %p101
    %p103 = scmp.ne.s32.totalorder %s94, %s95
    %p104 = scmp.eq.s32.totalorder %s16, 0
    %p105 = por %p103, %p104
    %p106 = scmp.ne.s32.totalorder %s94, %s95
    %p107 = scmp.eq.s32.totalorder %s17, 1
    %p108 = por %p106, %p107
    %p110 = scmp.ne.s32.totalorder %s95, %s109
    %p111 = scmp.eq.s32.totalorder %s17, 0
    %p112 = por %p110, %p111
    %s114 = sadd.s32 %s113, 1
    %p117 = scmp.eq.s32.totalorder %s11, 1
    %p118 = scmp.ne.s32.totalorder %s113, %s115
    %p119 = scmp.eq.s32.totalorder %s11, 0
    %p120 = por %p118, %p119
    %p121 = scmp.ne.s32.totalorder %s113, %s115
    %p122 = scmp.eq.s32.totalorder %s16, 1
    %p123 = por %p121, %p122
    %p124 = scmp.ne.s32.totalorder %s115, %s116
    %p125 = scmp.eq.s32.totalorder %s16, 0
    %p126 = por %p124, %p125
    %p127 = scmp.ne.s32.totalorder %s115, %s116
    %p128 = scmp.eq.s32.totalorder %s17, 1
    %p129 = por %p127, %p128
    %p131 = scmp.ne.s32.totalorder %s116, %s130
    %p132 = scmp.eq.s32.totalorder %s17, 0
    %p133 = por %p131, %p132
    %s134 = ssub.s32 %s11, %s18
    %p135 = scmp.eq.s32.totalorder %s134, 0
    %s137 = sadd.s32 %s136, 1
    %s138 = scalar_select %p135, %s136, %s137
    %p141 = pneg %p135
    %p142 = scmp.eq.s32.totalorder %s11, 1
    %p143 = por %p141, %p142
    %p144 = scmp.ne.s32.totalorder %s136, %s139
    %p145 = scmp.eq.s32.totalorder %s11, 0
    %p146 = por %p144, %p145
    %p147 = scmp.ne.s32.totalorder %s136, %s139
    %p148 = scmp.eq.s32.totalorder %s16, 1
    %p149 = por %p147, %p148
    %p150 = scmp.ne.s32.totalorder %s139, %s140
    %p151 = scmp.eq.s32.totalorder %s16, 0
    %p152 = por %p150, %p151
    %p153 = scmp.ne.s32.totalorder %s139, %s140
    %p154 = scmp.eq.s32.totalorder %s17, 1
    %p155 = por %p153, %p154
    %p157 = scmp.ne.s32.totalorder %s140, %s156
    %p158 = scmp.eq.s32.totalorder %s17, 0
    %p159 = por %p157, %p158
    %p160 = scmp.le.s32.totalorder 1, %s11
    %p161 = scmp.lt.s32.totalorder %s11, 3
    %p162 = pnand %p160, %p161
    %p163 = pneg %p162
    // Predicated region
    $region9: #{basic_block_forward.21} parent=5 // pred_check
      _
    $region10: #{basic_block_forward.21} parent=5 // pred_check_branch
      %165 = sbr.rel (%p162) target = $region12
    $region11: #{basic_block_forward.21} parent=5 // pred_region
      %s166 = ssub.s32 %s11, 1
      // Predicated region
      $region13: #{basic_block_forward.21} parent=11 // pred_check
        %p167 = pneg %p84
      $region14: #{basic_block_forward.21} parent=11 // pred_check_branch
        %169 = sbr.rel (%p167) target = $region16
      $region15: #{basic_block_forward.21} parent=11 // pred_region
        _
      $region16: #{basic_block_forward.21} parent=11 // pred_fallthru
        _
      // Predicated region
      $region17: #{basic_block_forward.21} parent=11 // pred_check
        %p170 = pneg %p105
      $region18: #{basic_block_forward.21} parent=11 // pred_check_branch
        %172 = sbr.rel (%p170) target = $region20
      $region19: #{basic_block_forward.21} parent=11 // pred_region
        _
      $region20: #{basic_block_forward.21} parent=11 // pred_fallthru
        _
      // Predicated region
      $region21: #{basic_block_forward.21} parent=11 // pred_check
        %p173 = pneg %p126
      $region22: #{basic_block_forward.21} parent=11 // pred_check_branch
        %175 = sbr.rel (%p173) target = $region24
      $region23: #{basic_block_forward.21} parent=11 // pred_region
        _
      $region24: #{basic_block_forward.21} parent=11 // pred_fallthru
        _
    $region12: #{basic_block_forward.21} parent=5 // pred_fallthru
      _
    %p176 = scmp.lt.s32.totalorder %s11, 2
    // Predicated region
    $region25: #{basic_block_forward.21} parent=5 // pred_check
      %p177 = pneg %p176
    $region26: #{basic_block_forward.21} parent=5 // pred_check_branch
      %179 = sbr.rel (%p177) target = $region28
    $region27: #{basic_block_forward.21} parent=5 // pred_region
      // Predicated region
      $region29: #{basic_block_forward.21} parent=27 // pred_check
        %p180 = pneg %p31
      $region30: #{basic_block_forward.21} parent=27 // pred_check_branch
        %182 = sbr.rel (%p180) target = $region32
      $region31: #{basic_block_forward.21} parent=27 // pred_region
        %p183 = scmp.lt.s32.totalorder %s11, 1
        %s184 = scalar_select %p183, %s11, 1
        %s185 = smul.addr %s184, 44
        %s186 = smul.addr %s185, 4
        %s187 = scalar_lea.vmem %s0, %s186
      $region32: #{basic_block_forward.21} parent=27 // pred_fallthru
        _
      // Predicated region
      $region33: #{basic_block_forward.21} parent=27 // pred_check
        %p188 = pneg %p57
      $region34: #{basic_block_forward.21} parent=27 // pred_check_branch
        %190 = sbr.rel (%p188) target = $region36
      $region35: #{basic_block_forward.21} parent=27 // pred_region
        %p191 = scmp.lt.s32.totalorder %s11, 1
        %s192 = scalar_select %p191, %s11, 1
        %s193 = smul.addr %s192, 44
        %s194 = smul.addr %s193, 4
        %s195 = scalar_lea.vmem %s1, %s194
      $region36: #{basic_block_forward.21} parent=27 // pred_fallthru
        _
    $region28: #{basic_block_forward.21} parent=5 // pred_fallthru
      _
    %p196 = scmp.le.s32.totalorder 1, %s11
    %p197 = scmp.lt.s32.totalorder %s11, 3
    %p198 = pnand %p196, %p197
    %p199 = pneg %p198
    // Predicated region
    $region37: #{basic_block_forward.21} parent=5 // pred_check
      _
    $region38: #{basic_block_forward.21} parent=5 // pred_check_branch
      %201 = sbr.rel (%p198) target = $region40
    $region39: #{basic_block_forward.21} parent=5 // pred_region
      %s202 = ssub.s32 %s11, 1
      %p203 = scmp.lt.s32.totalorder %s16, 1
      %s204 = scalar_select %p203, %s16, 1
      %s205 = smul.addr %s204, 44
      %s206 = smul.addr %s205, 4
      %s207 = scalar_lea.vmem %s0, %s206
      %p208 = pneg %p37
      %p209 = pneg %p34
      %p210 = scmp.lt.s32.totalorder %s16, 1
      %s211 = scalar_select %p210, %s16, 1
      %s212 = smul.addr %s211, 44
      %s213 = smul.addr %s212, 4
      %s214 = scalar_lea.vmem %s1, %s213
      %p215 = pneg %p63
      %p216 = pneg %p60
      %p217 = pneg %p84
      %p218 = pneg %p81
      %p219 = pneg %p105
      %p220 = pneg %p102
      %p221 = pneg %p126
      %p222 = pneg %p123
      %p223 = pneg %p152
      %p224 = pneg %p149
      %p225 = scmp.lt.s32.totalorder %s16, 1
      %s226 = scalar_select %p225, %s16, 1
      %s227 = smul.addr %s226, 44
      %s228 = smul.addr %s227, 8
      %s229 = scalar_lea.vmem %s5, %s228
      %p230 = scmp.lt.s32.totalorder %s16, 1
      %s231 = scalar_select %p230, %s16, 1
      %s232 = smul.addr %s231, 44
      %s233 = smul.addr %s232, 4
      %s234 = scalar_lea.vmem %s0, %s233
      %p235 = scmp.lt.s32.totalorder %s16, 1
      %s236 = scalar_select %p235, %s16, 1
      %s237 = smul.addr %s236, 44
      %s238 = smul.addr %s237, 4
      %s239 = scalar_lea.vmem %s1, %s238
      %p240 = scmp.lt.s32.totalorder %s16, 1
      %s241 = scalar_select %p240, %s16, 1
      %s242 = smul.addr %s241, 44
      %s243 = smul.addr %s242, 8
      %s244 = scalar_lea.vmem %s5, %s243
      %v245 = vld [vmem:[%s234] sm:$0xf]
      %v246 = vld [vmem:[%s234 + $0x4] sm:$0xf]
      %v247 = vld [vmem:[%s234 + $0x8] sm:$0xf]
      %v248 = vld [vmem:[%s234 + $0xc] sm:$0xf]
      %v249 = vld [vmem:[%s234 + $0x10] sm:$0xf]
      %v250 = vld [vmem:[%s234 + $0x14] sm:$0xf]
      %v251 = vld [vmem:[%s234 + $0x18] sm:$0xf]
      %v252 = vld [vmem:[%s234 + $0x1c] sm:$0xf]
      %v253 = vld [vmem:[%s234 + $0x20] sm:$0xf]
      %v254 = vld [vmem:[%s234 + $0x24] sm:$0xf]
      %v255 = vld [vmem:[%s234 + $0x28] sm:$0xf]
      %v256 = vld [vmem:[%s234 + $0x2c] sm:$0xf]
      %v257 = vld [vmem:[%s234 + $0x30] sm:$0xf]
      %v258 = vld [vmem:[%s234 + $0x34] sm:$0xf]
      %v259 = vld [vmem:[%s234 + $0x38] sm:$0xf]
      %v260 = vld [vmem:[%s234 + $0x3c] sm:$0xf]
      %v261 = vld [vmem:[%s234 + $0x40] sm:$0xf]
      %v262 = vld [vmem:[%s234 + $0x44] sm:$0xf]
      %v263 = vld [vmem:[%s234 + $0x48] sm:$0xf]
      %v264 = vld [vmem:[%s234 + $0x4c] sm:$0xf]
      %v265 = vld [vmem:[%s234 + $0x50] sm:$0xf]
      %v266 = vld [vmem:[%s234 + $0x54] sm:$0xf]
      %v267 = vld [vmem:[%s234 + $0x58] sm:$0xf]
      %v268 = vld [vmem:[%s234 + $0x5c] sm:$0xf]
      %v269 = vld [vmem:[%s234 + $0x60] sm:$0xf]
      %v270 = vld [vmem:[%s234 + $0x64] sm:$0xf]
      %v271 = vld [vmem:[%s234 + $0x68] sm:$0xf]
      %v272 = vld [vmem:[%s234 + $0x6c] sm:$0xf]
      %v273 = vld [vmem:[%s234 + $0x70] sm:$0xf]
      %v274 = vld [vmem:[%s234 + $0x74] sm:$0xf]
      %v275 = vld [vmem:[%s234 + $0x78] sm:$0xf]
      %v276 = vld [vmem:[%s234 + $0x7c] sm:$0xf]
      %v277 = vld [vmem:[%s234 + $0x80] sm:$0xf]
      %v278 = vld [vmem:[%s234 + $0x84] sm:$0xf]
      %v279 = vld [vmem:[%s234 + $0x88] sm:$0xf]
      %v280 = vld [vmem:[%s234 + $0x8c] sm:$0xf]
      %v281 = vld [vmem:[%s234 + $0x90] sm:$0xf]
      %v282 = vld [vmem:[%s234 + $0x94] sm:$0xf]
      %v283 = vld [vmem:[%s234 + $0x98] sm:$0xf]
      %v284 = vld [vmem:[%s234 + $0x9c] sm:$0xf]
      %v285 = vld [vmem:[%s234 + $0xa0] sm:$0xf]
      %v286 = vld [vmem:[%s234 + $0xa4] sm:$0xf]
      %v287 = vld [vmem:[%s234 + $0xa8] sm:$0xf]
      %v288 = vld [vmem:[%s234 + $0xac] sm:$0xf]
      %v289 = vunpack.c.l.bf16 %v245
      %v290 = vunpack.c.l.bf16 %v246
      %v291 = vunpack.c.l.bf16 %v247
      %v292 = vunpack.c.l.bf16 %v248
      %v293 = vunpack.c.l.bf16 %v249
      %v294 = vunpack.c.l.bf16 %v250
      %v295 = vunpack.c.l.bf16 %v251
      %v296 = vunpack.c.l.bf16 %v252
      %v297 = vunpack.c.l.bf16 %v253
      %v298 = vunpack.c.l.bf16 %v254
      %v299 = vunpack.c.l.bf16 %v255
      %v300 = vunpack.c.l.bf16 %v256
      %v301 = vunpack.c.l.bf16 %v257
      %v302 = vunpack.c.l.bf16 %v258
      %v303 = vunpack.c.l.bf16 %v259
      %v304 = vunpack.c.l.bf16 %v260
      %v305 = vunpack.c.l.bf16 %v261
      %v306 = vunpack.c.l.bf16 %v262
      %v307 = vunpack.c.l.bf16 %v263
      %v308 = vunpack.c.l.bf16 %v264
      %v309 = vunpack.c.l.bf16 %v265
      %v310 = vunpack.c.l.bf16 %v266
      %v311 = vunpack.c.l.bf16 %v267
      %v312 = vunpack.c.l.bf16 %v268
      %v313 = vunpack.c.l.bf16 %v269
      %v314 = vunpack.c.l.bf16 %v270
      %v315 = vunpack.c.l.bf16 %v271
      %v316 = vunpack.c.l.bf16 %v272
      %v317 = vunpack.c.l.bf16 %v273
      %v318 = vunpack.c.l.bf16 %v274
      %v319 = vunpack.c.l.bf16 %v275
      %v320 = vunpack.c.l.bf16 %v276
      %v321 = vunpack.c.l.bf16 %v277
      %v322 = vunpack.c.l.bf16 %v278
      %v323 = vunpack.c.l.bf16 %v279
      %v324 = vunpack.c.l.bf16 %v280
      %v325 = vunpack.c.l.bf16 %v281
      %v326 = vunpack.c.l.bf16 %v282
      %v327 = vunpack.c.l.bf16 %v283
      %v328 = vunpack.c.l.bf16 %v284
      %v329 = vunpack.c.l.bf16 %v285
      %v330 = vunpack.c.l.bf16 %v286
      %v331 = vunpack.c.l.bf16 %v287
      %v332 = vunpack.c.l.bf16 %v288
      %v333 = vld [vmem:[%s2] sm:$0x1]
      %v335 = vperm.slane %v333, 0
      %v337 = vmul.f32 %v289, %v335
      %v338 = vmul.f32 %v290, %v335
      %v339 = vmul.f32 %v291, %v335
      %v340 = vmul.f32 %v292, %v335
      %v341 = vmul.f32 %v293, %v335
      %v342 = vmul.f32 %v294, %v335
      %v343 = vmul.f32 %v295, %v335
      %v344 = vmul.f32 %v296, %v335
      %v345 = vmul.f32 %v297, %v335
      %v346 = vmul.f32 %v298, %v335
      %v347 = vmul.f32 %v299, %v335
      %v348 = vmul.f32 %v300, %v335
      %v349 = vmul.f32 %v301, %v335
      %v350 = vmul.f32 %v302, %v335
      %v351 = vmul.f32 %v303, %v335
      %v352 = vmul.f32 %v304, %v335
      %v353 = vmul.f32 %v305, %v335
      %v354 = vmul.f32 %v306, %v335
      %v355 = vmul.f32 %v307, %v335
      %v356 = vmul.f32 %v308, %v335
      %v357 = vmul.f32 %v309, %v335
      %v358 = vmul.f32 %v310, %v335
      %v359 = vmul.f32 %v311, %v335
      %v360 = vmul.f32 %v312, %v335
      %v361 = vmul.f32 %v313, %v335
      %v362 = vmul.f32 %v314, %v335
      %v363 = vmul.f32 %v315, %v335
      %v364 = vmul.f32 %v316, %v335
      %v365 = vmul.f32 %v317, %v335
      %v366 = vmul.f32 %v318, %v335
      %v367 = vmul.f32 %v319, %v335
      %v368 = vmul.f32 %v320, %v335
      %v369 = vmul.f32 %v321, %v335
      %v370 = vmul.f32 %v322, %v335
      %v371 = vmul.f32 %v323, %v335
      %v372 = vmul.f32 %v324, %v335
      %v373 = vmul.f32 %v325, %v335
      %v374 = vmul.f32 %v326, %v335
      %v375 = vmul.f32 %v327, %v335
      %v376 = vmul.f32 %v328, %v335
      %v377 = vmul.f32 %v329, %v335
      %v378 = vmul.f32 %v330, %v335
      %v379 = vmul.f32 %v331, %v335
      %v380 = vmul.f32 %v332, %v335
      %v381 = vld [vmem:[%s3] sm:$0x1]
      %v383 = vperm.slane %v381, 0
      %v385 = vadd.f32 %v337, %v383
      %v386 = vadd.f32 %v338, %v383
      %v387 = vadd.f32 %v339, %v383
      %v388 = vadd.f32 %v340, %v383
      %v389 = vadd.f32 %v341, %v383
      %v390 = vadd.f32 %v342, %v383
      %v391 = vadd.f32 %v343, %v383
      %v392 = vadd.f32 %v344, %v383
      %v393 = vadd.f32 %v345, %v383
      %v394 = vadd.f32 %v346, %v383
      %v395 = vadd.f32 %v347, %v383
      %v396 = vadd.f32 %v348, %v383
      %v397 = vadd.f32 %v349, %v383
      %v398 = vadd.f32 %v350, %v383
      %v399 = vadd.f32 %v351, %v383
      %v400 = vadd.f32 %v352, %v383
      %v401 = vadd.f32 %v353, %v383
      %v402 = vadd.f32 %v354, %v383
      %v403 = vadd.f32 %v355, %v383
      %v404 = vadd.f32 %v356, %v383
      %v405 = vadd.f32 %v357, %v383
      %v406 = vadd.f32 %v358, %v383
      %v407 = vadd.f32 %v359, %v383
      %v408 = vadd.f32 %v360, %v383
      %v409 = vadd.f32 %v361, %v383
      %v410 = vadd.f32 %v362, %v383
      %v411 = vadd.f32 %v363, %v383
      %v412 = vadd.f32 %v364, %v383
      %v413 = vadd.f32 %v365, %v383
      %v414 = vadd.f32 %v366, %v383
      %v415 = vadd.f32 %v367, %v383
      %v416 = vadd.f32 %v368, %v383
      %v417 = vadd.f32 %v369, %v383
      %v418 = vadd.f32 %v370, %v383
      %v419 = vadd.f32 %v371, %v383
      %v420 = vadd.f32 %v372, %v383
      %v421 = vadd.f32 %v373, %v383
      %v422 = vadd.f32 %v374, %v383
      %v423 = vadd.f32 %v375, %v383
      %v424 = vadd.f32 %v376, %v383
      %v425 = vadd.f32 %v377, %v383
      %v426 = vadd.f32 %v378, %v383
      %v427 = vadd.f32 %v379, %v383
      %v428 = vadd.f32 %v380, %v383
      %v429 = vld [vmem:[%s239] sm:$0xf]
      %v430 = vld [vmem:[%s239 + $0x4] sm:$0xf]
      %v431 = vld [vmem:[%s239 + $0x8] sm:$0xf]
      %v432 = vld [vmem:[%s239 + $0xc] sm:$0xf]
      %v433 = vld [vmem:[%s239 + $0x10] sm:$0xf]
      %v434 = vld [vmem:[%s239 + $0x14] sm:$0xf]
      %v435 = vld [vmem:[%s239 + $0x18] sm:$0xf]
      %v436 = vld [vmem:[%s239 + $0x1c] sm:$0xf]
      %v437 = vld [vmem:[%s239 + $0x20] sm:$0xf]
      %v438 = vld [vmem:[%s239 + $0x24] sm:$0xf]
      %v439 = vld [vmem:[%s239 + $0x28] sm:$0xf]
      %v440 = vld [vmem:[%s239 + $0x2c] sm:$0xf]
      %v441 = vld [vmem:[%s239 + $0x30] sm:$0xf]
      %v442 = vld [vmem:[%s239 + $0x34] sm:$0xf]
      %v443 = vld [vmem:[%s239 + $0x38] sm:$0xf]
      %v444 = vld [vmem:[%s239 + $0x3c] sm:$0xf]
      %v445 = vld [vmem:[%s239 + $0x40] sm:$0xf]
      %v446 = vld [vmem:[%s239 + $0x44] sm:$0xf]
      %v447 = vld [vmem:[%s239 + $0x48] sm:$0xf]
      %v448 = vld [vmem:[%s239 + $0x4c] sm:$0xf]
      %v449 = vld [vmem:[%s239 + $0x50] sm:$0xf]
      %v450 = vld [vmem:[%s239 + $0x54] sm:$0xf]
      %v451 = vld [vmem:[%s239 + $0x58] sm:$0xf]
      %v452 = vld [vmem:[%s239 + $0x5c] sm:$0xf]
      %v453 = vld [vmem:[%s239 + $0x60] sm:$0xf]
      %v454 = vld [vmem:[%s239 + $0x64] sm:$0xf]
      %v455 = vld [vmem:[%s239 + $0x68] sm:$0xf]
      %v456 = vld [vmem:[%s239 + $0x6c] sm:$0xf]
      %v457 = vld [vmem:[%s239 + $0x70] sm:$0xf]
      %v458 = vld [vmem:[%s239 + $0x74] sm:$0xf]
      %v459 = vld [vmem:[%s239 + $0x78] sm:$0xf]
      %v460 = vld [vmem:[%s239 + $0x7c] sm:$0xf]
      %v461 = vld [vmem:[%s239 + $0x80] sm:$0xf]
      %v462 = vld [vmem:[%s239 + $0x84] sm:$0xf]
      %v463 = vld [vmem:[%s239 + $0x88] sm:$0xf]
      %v464 = vld [vmem:[%s239 + $0x8c] sm:$0xf]
      %v465 = vld [vmem:[%s239 + $0x90] sm:$0xf]
      %v466 = vld [vmem:[%s239 + $0x94] sm:$0xf]
      %v467 = vld [vmem:[%s239 + $0x98] sm:$0xf]
      %v468 = vld [vmem:[%s239 + $0x9c] sm:$0xf]
      %v469 = vld [vmem:[%s239 + $0xa0] sm:$0xf]
      %v470 = vld [vmem:[%s239 + $0xa4] sm:$0xf]
      %v471 = vld [vmem:[%s239 + $0xa8] sm:$0xf]
      %v472 = vld [vmem:[%s239 + $0xac] sm:$0xf]
      %v473 = vunpack.c.l.bf16 %v429
      %v474 = vunpack.c.l.bf16 %v430
      %v475 = vunpack.c.l.bf16 %v431
      %v476 = vunpack.c.l.bf16 %v432
      %v477 = vunpack.c.l.bf16 %v433
      %v478 = vunpack.c.l.bf16 %v434
      %v479 = vunpack.c.l.bf16 %v435
      %v480 = vunpack.c.l.bf16 %v436
      %v481 = vunpack.c.l.bf16 %v437
      %v482 = vunpack.c.l.bf16 %v438
      %v483 = vunpack.c.l.bf16 %v439
      %v484 = vunpack.c.l.bf16 %v440
      %v485 = vunpack.c.l.bf16 %v441
      %v486 = vunpack.c.l.bf16 %v442
      %v487 = vunpack.c.l.bf16 %v443
      %v488 = vunpack.c.l.bf16 %v444
      %v489 = vunpack.c.l.bf16 %v445
      %v490 = vunpack.c.l.bf16 %v446
      %v491 = vunpack.c.l.bf16 %v447
      %v492 = vunpack.c.l.bf16 %v448
      %v493 = vunpack.c.l.bf16 %v449
      %v494 = vunpack.c.l.bf16 %v450
      %v495 = vunpack.c.l.bf16 %v451
      %v496 = vunpack.c.l.bf16 %v452
      %v497 = vunpack.c.l.bf16 %v453
      %v498 = vunpack.c.l.bf16 %v454
      %v499 = vunpack.c.l.bf16 %v455
      %v500 = vunpack.c.l.bf16 %v456
      %v501 = vunpack.c.l.bf16 %v457
      %v502 = vunpack.c.l.bf16 %v458
      %v503 = vunpack.c.l.bf16 %v459
      %v504 = vunpack.c.l.bf16 %v460
      %v505 = vunpack.c.l.bf16 %v461
      %v506 = vunpack.c.l.bf16 %v462
      %v507 = vunpack.c.l.bf16 %v463
      %v508 = vunpack.c.l.bf16 %v464
      %v509 = vunpack.c.l.bf16 %v465
      %v510 = vunpack.c.l.bf16 %v466
      %v511 = vunpack.c.l.bf16 %v467
      %v512 = vunpack.c.l.bf16 %v468
      %v513 = vunpack.c.l.bf16 %v469
      %v514 = vunpack.c.l.bf16 %v470
      %v515 = vunpack.c.l.bf16 %v471
      %v516 = vunpack.c.l.bf16 %v472
      %v517 = vadd.f32 %v385, %v473
      %v518 = vadd.f32 %v386, %v474
      %v519 = vadd.f32 %v387, %v475
      %v520 = vadd.f32 %v388, %v476
      %v521 = vadd.f32 %v389, %v477
      %v522 = vadd.f32 %v390, %v478
      %v523 = vadd.f32 %v391, %v479
      %v524 = vadd.f32 %v392, %v480
      %v525 = vadd.f32 %v393, %v481
      %v526 = vadd.f32 %v394, %v482
      %v527 = vadd.f32 %v395, %v483
      %v528 = vadd.f32 %v396, %v484
      %v529 = vadd.f32 %v397, %v485
      %v530 = vadd.f32 %v398, %v486
      %v531 = vadd.f32 %v399, %v487
      %v532 = vadd.f32 %v400, %v488
      %v533 = vadd.f32 %v401, %v489
      %v534 = vadd.f32 %v402, %v490
      %v535 = vadd.f32 %v403, %v491
      %v536 = vadd.f32 %v404, %v492
      %v537 = vadd.f32 %v405, %v493
      %v538 = vadd.f32 %v406, %v494
      %v539 = vadd.f32 %v407, %v495
      %v540 = vadd.f32 %v408, %v496
      %v541 = vadd.f32 %v409, %v497
      %v542 = vadd.f32 %v410, %v498
      %v543 = vadd.f32 %v411, %v499
      %v544 = vadd.f32 %v412, %v500
      %v545 = vadd.f32 %v413, %v501
      %v546 = vadd.f32 %v414, %v502
      %v547 = vadd.f32 %v415, %v503
      %v548 = vadd.f32 %v416, %v504
      %v549 = vadd.f32 %v417, %v505
      %v550 = vadd.f32 %v418, %v506
      %v551 = vadd.f32 %v419, %v507
      %v552 = vadd.f32 %v420, %v508
      %v553 = vadd.f32 %v421, %v509
      %v554 = vadd.f32 %v422, %v510
      %v555 = vadd.f32 %v423, %v511
      %v556 = vadd.f32 %v424, %v512
      %v557 = vadd.f32 %v425, %v513
      %v558 = vadd.f32 %v426, %v514
      %v559 = vadd.f32 %v427, %v515
      %v560 = vadd.f32 %v428, %v516
      %v561 = vld [vmem:[%s4] sm:$0xff]
      %v562 = vld [vmem:[%s4 + $0x8] sm:$0xff]
      %v563 = vld [vmem:[%s4 + $0x10] sm:$0xff]
      %v564 = vld [vmem:[%s4 + $0x18] sm:$0xff]
      %v565 = vld [vmem:[%s4 + $0x20] sm:$0xff]
      %v566 = vld [vmem:[%s4 + $0x28] sm:$0xff]
      %v567 = vld [vmem:[%s4 + $0x30] sm:$0xff]
      %v568 = vld [vmem:[%s4 + $0x38] sm:$0xff]
      %v569 = vld [vmem:[%s4 + $0x40] sm:$0xff]
      %v570 = vld [vmem:[%s4 + $0x48] sm:$0xff]
      %v571 = vld [vmem:[%s4 + $0x50] sm:$0xff]
      %v572 = vld [vmem:[%s4 + $0x58] sm:$0xff]
      %v573 = vld [vmem:[%s4 + $0x60] sm:$0xff]
      %v574 = vld [vmem:[%s4 + $0x68] sm:$0xff]
      %v575 = vld [vmem:[%s4 + $0x70] sm:$0xff]
      %v576 = vld [vmem:[%s4 + $0x78] sm:$0xff]
      %v577 = vld [vmem:[%s4 + $0x80] sm:$0xff]
      %v578 = vld [vmem:[%s4 + $0x88] sm:$0xff]
      %v579 = vld [vmem:[%s4 + $0x90] sm:$0xff]
      %v580 = vld [vmem:[%s4 + $0x98] sm:$0xff]
      %v581 = vld [vmem:[%s4 + $0xa0] sm:$0xff]
      %v582 = vld [vmem:[%s4 + $0xa8] sm:$0xff]
      %v583 = vld [vmem:[%s4 + $0xb0] sm:$0xff]
      %v584 = vld [vmem:[%s4 + $0xb8] sm:$0xff]
      %v585 = vld [vmem:[%s4 + $0xc0] sm:$0xff]
      %v586 = vld [vmem:[%s4 + $0xc8] sm:$0xff]
      %v587 = vld [vmem:[%s4 + $0xd0] sm:$0xff]
      %v588 = vld [vmem:[%s4 + $0xd8] sm:$0xff]
      %v589 = vld [vmem:[%s4 + $0xe0] sm:$0xff]
      %v590 = vld [vmem:[%s4 + $0xe8] sm:$0xff]
      %v591 = vld [vmem:[%s4 + $0xf0] sm:$0xff]
      %v592 = vld [vmem:[%s4 + $0xf8] sm:$0xff]
      %v593 = vld [vmem:[%s4 + $0x100] sm:$0xff]
      %v594 = vld [vmem:[%s4 + $0x108] sm:$0xff]
      %v595 = vld [vmem:[%s4 + $0x110] sm:$0xff]
      %v596 = vld [vmem:[%s4 + $0x118] sm:$0xff]
      %v597 = vld [vmem:[%s4 + $0x120] sm:$0xff]
      %v598 = vld [vmem:[%s4 + $0x128] sm:$0xff]
      %v599 = vld [vmem:[%s4 + $0x130] sm:$0xff]
      %v600 = vld [vmem:[%s4 + $0x138] sm:$0xff]
      %v601 = vld [vmem:[%s4 + $0x140] sm:$0xff]
      %v602 = vld [vmem:[%s4 + $0x148] sm:$0xff]
      %v603 = vld [vmem:[%s4 + $0x150] sm:$0xff]
      %v604 = vld [vmem:[%s4 + $0x158] sm:$0xff]
      %606 = vset.pattern.permute.xlu0 0
      %607 = vperm.xlu0 %606, %v561
      %v608 = vpop.permute.xlu0 %607
      %611 = vset.pattern.permute.xlu0 0
      %612 = vperm.xlu0 %611, %v562
      %v613 = vpop.permute.xlu0 %612
      %616 = vset.pattern.permute.xlu0 0
      %617 = vperm.xlu0 %616, %v563
      %v618 = vpop.permute.xlu0 %617
      %621 = vset.pattern.permute.xlu0 0
      %622 = vperm.xlu0 %621, %v564
      %v623 = vpop.permute.xlu0 %622
      %626 = vset.pattern.permute.xlu0 0
      %627 = vperm.xlu0 %626, %v565
      %v628 = vpop.permute.xlu0 %627
      %631 = vset.pattern.permute.xlu0 0
      %632 = vperm.xlu0 %631, %v566
      %v633 = vpop.permute.xlu0 %632
      %636 = vset.pattern.permute.xlu0 0
      %637 = vperm.xlu0 %636, %v567
      %v638 = vpop.permute.xlu0 %637
      %641 = vset.pattern.permute.xlu0 0
      %642 = vperm.xlu0 %641, %v568
      %v643 = vpop.permute.xlu0 %642
      %646 = vset.pattern.permute.xlu0 0
      %647 = vperm.xlu0 %646, %v569
      %v648 = vpop.permute.xlu0 %647
      %651 = vset.pattern.permute.xlu0 0
      %652 = vperm.xlu0 %651, %v570
      %v653 = vpop.permute.xlu0 %652
      %656 = vset.pattern.permute.xlu0 0
      %657 = vperm.xlu0 %656, %v571
      %v658 = vpop.permute.xlu0 %657
      %661 = vset.pattern.permute.xlu0 0
      %662 = vperm.xlu0 %661, %v572
      %v663 = vpop.permute.xlu0 %662
      %666 = vset.pattern.permute.xlu0 0
      %667 = vperm.xlu0 %666, %v573
      %v668 = vpop.permute.xlu0 %667
      %671 = vset.pattern.permute.xlu0 0
      %672 = vperm.xlu0 %671, %v574
      %v673 = vpop.permute.xlu0 %672
      %676 = vset.pattern.permute.xlu0 0
      %677 = vperm.xlu0 %676, %v575
      %v678 = vpop.permute.xlu0 %677
      %681 = vset.pattern.permute.xlu0 0
      %682 = vperm.xlu0 %681, %v576
      %v683 = vpop.permute.xlu0 %682
      %686 = vset.pattern.permute.xlu0 0
      %687 = vperm.xlu0 %686, %v577
      %v688 = vpop.permute.xlu0 %687
      %691 = vset.pattern.permute.xlu0 0
      %692 = vperm.xlu0 %691, %v578
      %v693 = vpop.permute.xlu0 %692
      %696 = vset.pattern.permute.xlu0 0
      %697 = vperm.xlu0 %696, %v579
      %v698 = vpop.permute.xlu0 %697
      %701 = vset.pattern.permute.xlu0 0
      %702 = vperm.xlu0 %701, %v580
      %v703 = vpop.permute.xlu0 %702
      %706 = vset.pattern.permute.xlu0 0
      %707 = vperm.xlu0 %706, %v581
      %v708 = vpop.permute.xlu0 %707
      %711 = vset.pattern.permute.xlu0 0
      %712 = vperm.xlu0 %711, %v582
      %v713 = vpop.permute.xlu0 %712
      %716 = vset.pattern.permute.xlu0 0
      %717 = vperm.xlu0 %716, %v583
      %v718 = vpop.permute.xlu0 %717
      %721 = vset.pattern.permute.xlu0 0
      %722 = vperm.xlu0 %721, %v584
      %v723 = vpop.permute.xlu0 %722
      %726 = vset.pattern.permute.xlu0 0
      %727 = vperm.xlu0 %726, %v585
      %v728 = vpop.permute.xlu0 %727
      %731 = vset.pattern.permute.xlu0 0
      %732 = vperm.xlu0 %731, %v586
      %v733 = vpop.permute.xlu0 %732
      %736 = vset.pattern.permute.xlu0 0
      %737 = vperm.xlu0 %736, %v587
      %v738 = vpop.permute.xlu0 %737
      %741 = vset.pattern.permute.xlu0 0
      %742 = vperm.xlu0 %741, %v588
      %v743 = vpop.permute.xlu0 %742
      %746 = vset.pattern.permute.xlu0 0
      %747 = vperm.xlu0 %746, %v589
      %v748 = vpop.permute.xlu0 %747
      %751 = vset.pattern.permute.xlu0 0
      %752 = vperm.xlu0 %751, %v590
      %v753 = vpop.permute.xlu0 %752
      %756 = vset.pattern.permute.xlu0 0
      %757 = vperm.xlu0 %756, %v591
      %v758 = vpop.permute.xlu0 %757
      %761 = vset.pattern.permute.xlu0 0
      %762 = vperm.xlu0 %761, %v592
      %v763 = vpop.permute.xlu0 %762
      %766 = vset.pattern.permute.xlu0 0
      %767 = vperm.xlu0 %766, %v593
      %v768 = vpop.permute.xlu0 %767
      %771 = vset.pattern.permute.xlu0 0
      %772 = vperm.xlu0 %771, %v594
      %v773 = vpop.permute.xlu0 %772
      %776 = vset.pattern.permute.xlu0 0
      %777 = vperm.xlu0 %776, %v595
      %v778 = vpop.permute.xlu0 %777
      %781 = vset.pattern.permute.xlu0 0
      %782 = vperm.xlu0 %781, %v596
      %v783 = vpop.permute.xlu0 %782
      %786 = vset.pattern.permute.xlu0 0
      %787 = vperm.xlu0 %786, %v597
      %v788 = vpop.permute.xlu0 %787
      %791 = vset.pattern.permute.xlu0 0
      %792 = vperm.xlu0 %791, %v598
      %v793 = vpop.permute.xlu0 %792
      %796 = vset.pattern.permute.xlu0 0
      %797 = vperm.xlu0 %796, %v599
      %v798 = vpop.permute.xlu0 %797
      %801 = vset.pattern.permute.xlu0 0
      %802 = vperm.xlu0 %801, %v600
      %v803 = vpop.permute.xlu0 %802
      %806 = vset.pattern.permute.xlu0 0
      %807 = vperm.xlu0 %806, %v601
      %v808 = vpop.permute.xlu0 %807
      %811 = vset.pattern.permute.xlu0 0
      %812 = vperm.xlu0 %811, %v602
      %v813 = vpop.permute.xlu0 %812
      %816 = vset.pattern.permute.xlu0 0
      %817 = vperm.xlu0 %816, %v603
      %v818 = vpop.permute.xlu0 %817
      %821 = vset.pattern.permute.xlu0 0
      %822 = vperm.xlu0 %821, %v604
      %v823 = vpop.permute.xlu0 %822
      %v825 = vmul.f32 %v517, %v608
      %v826 = vmul.f32 %v518, %v613
      %v827 = vmul.f32 %v519, %v618
      %v828 = vmul.f32 %v520, %v623
      %v829 = vmul.f32 %v521, %v628
      %v830 = vmul.f32 %v522, %v633
      %v831 = vmul.f32 %v523, %v638
      %v832 = vmul.f32 %v524, %v643
      %v833 = vmul.f32 %v525, %v648
      %v834 = vmul.f32 %v526, %v653
      %v835 = vmul.f32 %v527, %v658
      %v836 = vmul.f32 %v528, %v663
      %v837 = vmul.f32 %v529, %v668
      %v838 = vmul.f32 %v530, %v673
      %v839 = vmul.f32 %v531, %v678
      %v840 = vmul.f32 %v532, %v683
      %v841 = vmul.f32 %v533, %v688
      %v842 = vmul.f32 %v534, %v693
      %v843 = vmul.f32 %v535, %v698
      %v844 = vmul.f32 %v536, %v703
      %v845 = vmul.f32 %v537, %v708
      %v846 = vmul.f32 %v538, %v713
      %v847 = vmul.f32 %v539, %v718
      %v848 = vmul.f32 %v540, %v723
      %v849 = vmul.f32 %v541, %v728
      %v850 = vmul.f32 %v542, %v733
      %v851 = vmul.f32 %v543, %v738
      %v852 = vmul.f32 %v544, %v743
      %v853 = vmul.f32 %v545, %v748
      %v854 = vmul.f32 %v546, %v753
      %v855 = vmul.f32 %v547, %v758
      %v856 = vmul.f32 %v548, %v763
      %v857 = vmul.f32 %v549, %v768
      %v858 = vmul.f32 %v550, %v773
      %v859 = vmul.f32 %v551, %v778
      %v860 = vmul.f32 %v552, %v783
      %v861 = vmul.f32 %v553, %v788
      %v862 = vmul.f32 %v554, %v793
      %v863 = vmul.f32 %v555, %v798
      %v864 = vmul.f32 %v556, %v803
      %v865 = vmul.f32 %v557, %v808
      %v866 = vmul.f32 %v558, %v813
      %v867 = vmul.f32 %v559, %v818
      %v868 = vmul.f32 %v560, %v823
      %869 = vst [vmem:[%s244] sm:$0xff] %v825
      %870 = vst [vmem:[%s244 + $0x8] sm:$0xff] %v826
      %871 = vst [vmem:[%s244 + $0x10] sm:$0xff] %v827
      %872 = vst [vmem:[%s244 + $0x18] sm:$0xff] %v828
      %873 = vst [vmem:[%s244 + $0x20] sm:$0xff] %v829
      %874 = vst [vmem:[%s244 + $0x28] sm:$0xff] %v830
      %875 = vst [vmem:[%s244 + $0x30] sm:$0xff] %v831
      %876 = vst [vmem:[%s244 + $0x38] sm:$0xff] %v832
      %877 = vst [vmem:[%s244 + $0x40] sm:$0xff] %v833
      %878 = vst [vmem:[%s244 + $0x48] sm:$0xff] %v834
      %879 = vst [vmem:[%s244 + $0x50] sm:$0xff] %v835
      %880 = vst [vmem:[%s244 + $0x58] sm:$0xff] %v836
      %881 = vst [vmem:[%s244 + $0x60] sm:$0xff] %v837
      %882 = vst [vmem:[%s244 + $0x68] sm:$0xff] %v838
      %883 = vst [vmem:[%s244 + $0x70] sm:$0xff] %v839
      %884 = vst [vmem:[%s244 + $0x78] sm:$0xff] %v840
      %885 = vst [vmem:[%s244 + $0x80] sm:$0xff] %v841
      %886 = vst [vmem:[%s244 + $0x88] sm:$0xff] %v842
      %887 = vst [vmem:[%s244 + $0x90] sm:$0xff] %v843
      %888 = vst [vmem:[%s244 + $0x98] sm:$0xff] %v844
      %889 = vst [vmem:[%s244 + $0xa0] sm:$0xff] %v845
      %890 = vst [vmem:[%s244 + $0xa8] sm:$0xff] %v846
      %891 = vst [vmem:[%s244 + $0xb0] sm:$0xff] %v847
      %892 = vst [vmem:[%s244 + $0xb8] sm:$0xff] %v848
      %893 = vst [vmem:[%s244 + $0xc0] sm:$0xff] %v849
      %894 = vst [vmem:[%s244 + $0xc8] sm:$0xff] %v850
      %895 = vst [vmem:[%s244 + $0xd0] sm:$0xff] %v851
      %896 = vst [vmem:[%s244 + $0xd8] sm:$0xff] %v852
      %897 = vst [vmem:[%s244 + $0xe0] sm:$0xff] %v853
      %898 = vst [vmem:[%s244 + $0xe8] sm:$0xff] %v854
      %899 = vst [vmem:[%s244 + $0xf0] sm:$0xff] %v855
      %900 = vst [vmem:[%s244 + $0xf8] sm:$0xff] %v856
      %901 = vst [vmem:[%s244 + $0x100] sm:$0xff] %v857
      %902 = vst [vmem:[%s244 + $0x108] sm:$0xff] %v858
      %903 = vst [vmem:[%s244 + $0x110] sm:$0xff] %v859
      %904 = vst [vmem:[%s244 + $0x118] sm:$0xff] %v860
      %905 = vst [vmem:[%s244 + $0x120] sm:$0xff] %v861
      %906 = vst [vmem:[%s244 + $0x128] sm:$0xff] %v862
      %907 = vst [vmem:[%s244 + $0x130] sm:$0xff] %v863
      %908 = vst [vmem:[%s244 + $0x138] sm:$0xff] %v864
      %909 = vst [vmem:[%s244 + $0x140] sm:$0xff] %v865
      %910 = vst [vmem:[%s244 + $0x148] sm:$0xff] %v866
      %911 = vst [vmem:[%s244 + $0x150] sm:$0xff] %v867
      %912 = vst [vmem:[%s244 + $0x158] sm:$0xff] %v868
      %p913 = scmp.lt.s32.totalorder %s16, 1
      %s914 = scalar_select %p913, %s16, 1
      %s915 = smul.addr %s914, 44
      %s916 = smul.addr %s915, 8
      %s917 = scalar_lea.vmem %s5, %s916
      // Predicated region
      $region41: #{basic_block_forward.21} parent=39 // pred_check
        %p918 = pneg %p149
      $region42: #{basic_block_forward.21} parent=39 // pred_check_branch
        %920 = sbr.rel (%p918) target = $region44
      $region43: #{basic_block_forward.21} parent=39 // pred_region
        _
      $region44: #{basic_block_forward.21} parent=39 // pred_fallthru
        _
    $region40: #{basic_block_forward.21} parent=5 // pred_fallthru
      _
    %p921 = scmp.le.s32.totalorder 2, %s11
    // Predicated region
    $region45: #{basic_block_forward.21} parent=5 // pred_check
      %p922 = pneg %p921
    $region46: #{basic_block_forward.21} parent=5 // pred_check_branch
      %924 = sbr.rel (%p922) target = $region48
    $region47: #{basic_block_forward.21} parent=5 // pred_region
      %s925 = ssub.s32 %s11, 2
      // Predicated region
      $region49: #{basic_block_forward.21} parent=47 // pred_check
        %p926 = pneg %p155
      $region50: #{basic_block_forward.21} parent=47 // pred_check_branch
        %928 = sbr.rel (%p926) target = $region52
      $region51: #{basic_block_forward.21} parent=47 // pred_region
        %p929 = scmp.lt.s32.totalorder %s17, 1
        %s930 = scalar_select %p929, %s17, 1
        %s931 = smul.addr %s930, 44
        %s932 = smul.addr %s931, 8
        %s933 = scalar_lea.vmem %s5, %s932
      $region52: #{basic_block_forward.21} parent=47 // pred_fallthru
        _
    $region48: #{basic_block_forward.21} parent=5 // pred_fallthru
      _
  $region6: #{basic_block_forward.21} parent=0 // loop_footer
    %s15 = sadd.s32 1, %s11
  $region7: #{basic_block_forward.21} parent=0 // loop_footer_branch
    %10 = sbr.rel target = $region3
  $region8: #{basic_block_forward.21} parent=0 // loop_exit
    _

// kernel: basic_block_forward.12
$region0: #{basic_block_forward.12}
  #allocation0 [shape = 'u32[]', space=smem, size = 0x4, offset = 0x4, fixed_abs, tag = 'smem constant byte address 0x4 - core index']
  #allocation1 [shape = 'u32[72,128]{1,0:T(1,128)}', space=vmem, size = 0x9000, scoped, tag = 'internal scratch']
  %s0 = inlined_call_operand.vmem [shape: bf16[2,352,128], index: 0, kind: input, shape index: {}]
  %s1 = inlined_call_operand.vmem [shape: bf16[9,128,128], index: 1, kind: input, shape index: {}]
  %s2 = inlined_call_operand.vmem [shape: f32[352,1], index: 2, kind: input, shape index: {}]
  %s3 = inlined_call_operand.vmem [shape: bf16[2,352,128], index: 3, kind: output, shape index: {0}]
  %s4 = inlined_call_operand.vmem [shape: f32[2,1,128], index: 4, kind: output, shape index: {1}]
  %s5 = inlined_call_operand.vmem [shape: f32[2,1,128], index: 5, kind: output, shape index: {2}]
  %6 = xla_tuple %s3, %s4, %s5
  %s7 = sld [smem:[#allocation0]]
  $region61: #{basic_block_forward.12} parent=0
    _
  %s9 = ssub.s32 1, %s7
  %s10 = scalar_select 0, %s9, %s7
  loop: start=0, step=1, limit=4
  $region2: #{basic_block_forward.12} parent=0 // loop_pre_header
    _
  $region3: #{basic_block_forward.12} parent=0 // loop_header
    %s12 = sphi 0, %s16
    %p13 = scmp.ge.s32.totalorder %s12, 4
    %s22 = sphi 0, %s24
    %s25 = sphi 0, %s22
    %s26 = sphi 0, %s25
    %s42 = sphi 0, %s26
    %s46 = sphi 0, %s46
    %s48 = sphi 0, %s46
    %s49 = sphi 0, %s48
    %s63 = sphi 0, %s49
    %s67 = sphi 0, %s67
    %s69 = sphi 0, %s67
    %s70 = sphi 0, %s69
    %s84 = sphi 0, %s70
    %s90 = sphi 0, %s92
    %s93 = sphi 0, %s90
    %s94 = sphi 0, %s93
    %s110 = sphi 0, %s94
    %s116 = sphi 0, %s118
    %s119 = sphi 0, %s116
    %s120 = sphi 0, %s119
    %s136 = sphi 0, %s120
    %s142 = sphi 0, %s144
    %s145 = sphi 0, %s142
    %s146 = sphi 0, %s145
    %s162 = sphi 0, %s146
  $region4: #{basic_block_forward.12} parent=0 // loop_header_branch
    %15 = sbr.rel (%p13) target = $region8
  $region5: #{basic_block_forward.12} parent=0 // loop_body
    %s17 = ssub.s32 %s12, 1
    %s18 = ssub.s32 %s12, 2
    %s19 = sadd.s32 %s12, 1
    %s20 = ssub.s32 %s12, %s19
    %p21 = scmp.eq.s32.totalorder %s20, 0
    %s23 = sadd.s32 %s22, 1
    %s24 = scalar_select %p21, %s22, %s23
    %p27 = pneg %p21
    %p28 = scmp.eq.s32.totalorder %s12, 1
    %p29 = por %p27, %p28
    %p30 = scmp.ne.s32.totalorder %s22, %s25
    %p31 = scmp.eq.s32.totalorder %s12, 0
    %p32 = por %p30, %p31
    %p33 = scmp.ne.s32.totalorder %s22, %s25
    %p34 = scmp.eq.s32.totalorder %s17, 1
    %p35 = por %p33, %p34
    %p36 = scmp.ne.s32.totalorder %s25, %s26
    %p37 = scmp.eq.s32.totalorder %s17, 0
    %p38 = por %p36, %p37
    %p39 = scmp.ne.s32.totalorder %s25, %s26
    %p40 = scmp.eq.s32.totalorder %s18, 1
    %p41 = por %p39, %p40
    %p43 = scmp.ne.s32.totalorder %s26, %s42
    %p44 = scmp.eq.s32.totalorder %s18, 0
    %p45 = por %p43, %p44
    %s47 = sadd.s32 %s46, 1
    %p50 = scmp.eq.s32.totalorder %s12, 1
    %p51 = scmp.ne.s32.totalorder %s46, %s48
    %p52 = scmp.eq.s32.totalorder %s12, 0
    %p53 = por %p51, %p52
    %p54 = scmp.ne.s32.totalorder %s46, %s48
    %p55 = scmp.eq.s32.totalorder %s17, 1
    %p56 = por %p54, %p55
    %p57 = scmp.ne.s32.totalorder %s48, %s49
    %p58 = scmp.eq.s32.totalorder %s17, 0
    %p59 = por %p57, %p58
    %p60 = scmp.ne.s32.totalorder %s48, %s49
    %p61 = scmp.eq.s32.totalorder %s18, 1
    %p62 = por %p60, %p61
    %p64 = scmp.ne.s32.totalorder %s49, %s63
    %p65 = scmp.eq.s32.totalorder %s18, 0
    %p66 = por %p64, %p65
    %s68 = sadd.s32 %s67, 1
    %p71 = scmp.eq.s32.totalorder %s12, 1
    %p72 = scmp.ne.s32.totalorder %s67, %s69
    %p73 = scmp.eq.s32.totalorder %s12, 0
    %p74 = por %p72, %p73
    %p75 = scmp.ne.s32.totalorder %s67, %s69
    %p76 = scmp.eq.s32.totalorder %s17, 1
    %p77 = por %p75, %p76
    %p78 = scmp.ne.s32.totalorder %s69, %s70
    %p79 = scmp.eq.s32.totalorder %s17, 0
    %p80 = por %p78, %p79
    %p81 = scmp.ne.s32.totalorder %s69, %s70
    %p82 = scmp.eq.s32.totalorder %s18, 1
    %p83 = por %p81, %p82
    %p85 = scmp.ne.s32.totalorder %s70, %s84
    %p86 = scmp.eq.s32.totalorder %s18, 0
    %p87 = por %p85, %p86
    %s88 = ssub.s32 %s12, %s19
    %p89 = scmp.eq.s32.totalorder %s88, 0
    %s91 = sadd.s32 %s90, 1
    %s92 = scalar_select %p89, %s90, %s91
    %p95 = pneg %p89
    %p96 = scmp.eq.s32.totalorder %s12, 1
    %p97 = por %p95, %p96
    %p98 = scmp.ne.s32.totalorder %s90, %s93
    %p99 = scmp.eq.s32.totalorder %s12, 0
    %p100 = por %p98, %p99
    %p101 = scmp.ne.s32.totalorder %s90, %s93
    %p102 = scmp.eq.s32.totalorder %s17, 1
    %p103 = por %p101, %p102
    %p104 = scmp.ne.s32.totalorder %s93, %s94
    %p105 = scmp.eq.s32.totalorder %s17, 0
    %p106 = por %p104, %p105
    %p107 = scmp.ne.s32.totalorder %s93, %s94
    %p108 = scmp.eq.s32.totalorder %s18, 1
    %p109 = por %p107, %p108
    %p111 = scmp.ne.s32.totalorder %s94, %s110
    %p112 = scmp.eq.s32.totalorder %s18, 0
    %p113 = por %p111, %p112
    %s114 = ssub.s32 %s12, %s19
    %p115 = scmp.eq.s32.totalorder %s114, 0
    %s117 = sadd.s32 %s116, 1
    %s118 = scalar_select %p115, %s116, %s117
    %p121 = pneg %p115
    %p122 = scmp.eq.s32.totalorder %s12, 1
    %p123 = por %p121, %p122
    %p124 = scmp.ne.s32.totalorder %s116, %s119
    %p125 = scmp.eq.s32.totalorder %s12, 0
    %p126 = por %p124, %p125
    %p127 = scmp.ne.s32.totalorder %s116, %s119
    %p128 = scmp.eq.s32.totalorder %s17, 1
    %p129 = por %p127, %p128
    %p130 = scmp.ne.s32.totalorder %s119, %s120
    %p131 = scmp.eq.s32.totalorder %s17, 0
    %p132 = por %p130, %p131
    %p133 = scmp.ne.s32.totalorder %s119, %s120
    %p134 = scmp.eq.s32.totalorder %s18, 1
    %p135 = por %p133, %p134
    %p137 = scmp.ne.s32.totalorder %s120, %s136
    %p138 = scmp.eq.s32.totalorder %s18, 0
    %p139 = por %p137, %p138
    %s140 = ssub.s32 %s12, %s19
    %p141 = scmp.eq.s32.totalorder %s140, 0
    %s143 = sadd.s32 %s142, 1
    %s144 = scalar_select %p141, %s142, %s143
    %p147 = pneg %p141
    %p148 = scmp.eq.s32.totalorder %s12, 1
    %p149 = por %p147, %p148
    %p150 = scmp.ne.s32.totalorder %s142, %s145
    %p151 = scmp.eq.s32.totalorder %s12, 0
    %p152 = por %p150, %p151
    %p153 = scmp.ne.s32.totalorder %s142, %s145
    %p154 = scmp.eq.s32.totalorder %s17, 1
    %p155 = por %p153, %p154
    %p156 = scmp.ne.s32.totalorder %s145, %s146
    %p157 = scmp.eq.s32.totalorder %s17, 0
    %p158 = por %p156, %p157
    %p159 = scmp.ne.s32.totalorder %s145, %s146
    %p160 = scmp.eq.s32.totalorder %s18, 1
    %p161 = por %p159, %p160
    %p163 = scmp.ne.s32.totalorder %s146, %s162
    %p164 = scmp.eq.s32.totalorder %s18, 0
    %p165 = por %p163, %p164
    %p166 = scmp.le.s32.totalorder 1, %s12
    %p167 = scmp.lt.s32.totalorder %s12, 3
    %p168 = pnand %p166, %p167
    %p169 = pneg %p168
    // Predicated region
    $region9: #{basic_block_forward.12} parent=5 // pred_check
      _
    $region10: #{basic_block_forward.12} parent=5 // pred_check_branch
      %171 = sbr.rel (%p168) target = $region12
    $region11: #{basic_block_forward.12} parent=5 // pred_region
      %s172 = ssub.s32 %s12, 1
      // Predicated region
      $region13: #{basic_block_forward.12} parent=11 // pred_check
        %p173 = pneg %p59
      $region14: #{basic_block_forward.12} parent=11 // pred_check_branch
        %175 = sbr.rel (%p173) target = $region16
      $region15: #{basic_block_forward.12} parent=11 // pred_region
        _
      $region16: #{basic_block_forward.12} parent=11 // pred_fallthru
        _
      // Predicated region
      $region17: #{basic_block_forward.12} parent=11 // pred_check
        %p176 = pneg %p80
      $region18: #{basic_block_forward.12} parent=11 // pred_check_branch
        %178 = sbr.rel (%p176) target = $region20
      $region19: #{basic_block_forward.12} parent=11 // pred_region
        _
      $region20: #{basic_block_forward.12} parent=11 // pred_fallthru
        _
    $region12: #{basic_block_forward.12} parent=5 // pred_fallthru
      _
    %p179 = scmp.lt.s32.totalorder %s12, 2
    // Predicated region
    $region21: #{basic_block_forward.12} parent=5 // pred_check
      %p180 = pneg %p179
    $region22: #{basic_block_forward.12} parent=5 // pred_check_branch
      %182 = sbr.rel (%p180) target = $region24
    $region23: #{basic_block_forward.12} parent=5 // pred_region
      // Predicated region
      $region25: #{basic_block_forward.12} parent=23 // pred_check
        %p183 = pneg %p32
      $region26: #{basic_block_forward.12} parent=23 // pred_check_branch
        %185 = sbr.rel (%p183) target = $region28
      $region27: #{basic_block_forward.12} parent=23 // pred_region
        %p186 = scmp.lt.s32.totalorder %s12, 1
        %s187 = scalar_select %p186, %s12, 1
        %s188 = smul.addr %s187, 44
        %s189 = smul.addr %s188, 4
        %s190 = scalar_lea.vmem %s0, %s189
      $region28: #{basic_block_forward.12} parent=23 // pred_fallthru
        _
    $region24: #{basic_block_forward.12} parent=5 // pred_fallthru
      _
    %p191 = scmp.le.s32.totalorder 1, %s12
    %p192 = scmp.lt.s32.totalorder %s12, 3
    %p193 = pnand %p191, %p192
    %p194 = pneg %p193
    // Predicated region
    $region29: #{basic_block_forward.12} parent=5 // pred_check
      _
    $region30: #{basic_block_forward.12} parent=5 // pred_check_branch
      %196 = sbr.rel (%p193) target = $region32
    $region31: #{basic_block_forward.12} parent=5 // pred_region
      %s197 = ssub.s32 %s12, 1
      %p198 = scmp.lt.s32.totalorder %s17, 1
      %s199 = scalar_select %p198, %s17, 1
      %s200 = smul.addr %s199, 44
      %s201 = smul.addr %s200, 4
      %s202 = scalar_lea.vmem %s0, %s201
      %p203 = pneg %p38
      %p204 = pneg %p35
      %p205 = pneg %p59
      %p206 = pneg %p56
      %p207 = pneg %p80
      %p208 = pneg %p77
      %p209 = pneg %p106
      %p210 = pneg %p103
      %p211 = scmp.lt.s32.totalorder %s17, 1
      %s212 = scalar_select %p211, %s17, 1
      %s213 = smul.addr %s212, 44
      %s214 = smul.addr %s213, 4
      %s215 = scalar_lea.vmem %s3, %s214
      %p216 = pneg %p132
      %p217 = pneg %p129
      %p218 = scmp.lt.s32.totalorder %s17, 1
      %s219 = scalar_select %p218, %s17, 1
      %s220 = scalar_lea.vmem %s4, %s219
      %p221 = pneg %p158
      %p222 = pneg %p155
      %p223 = scmp.lt.s32.totalorder %s17, 1
      %s224 = scalar_select %p223, %s17, 1
      %s225 = scalar_lea.vmem %s5, %s224
      %p226 = scmp.lt.s32.totalorder %s17, 1
      %s227 = scalar_select %p226, %s17, 1
      %s228 = smul.addr %s227, 44
      %s229 = smul.addr %s228, 4
      %s230 = scalar_lea.vmem %s0, %s229
      %p231 = scmp.lt.s32.totalorder %s17, 1
      %s232 = scalar_select %p231, %s17, 1
      %s233 = smul.addr %s232, 44
      %s234 = smul.addr %s233, 4
      %s235 = scalar_lea.vmem %s3, %s234
      %p236 = scmp.lt.s32.totalorder %s17, 1
      %s237 = scalar_select %p236, %s17, 1
      %s238 = scalar_lea.vmem %s4, %s237
      %p239 = scmp.lt.s32.totalorder %s17, 1
      %s240 = scalar_select %p239, %s17, 1
      %s241 = scalar_lea.vmem %s5, %s240
      %v243 = vld [vmem:[%s230 + $0x4] sm:$0xf]
      %v244 = vld [vmem:[%s230 + $0x8] sm:$0xf]
      %v245 = vld [vmem:[%s230 + $0xc] sm:$0xf]
      %v246 = vld [vmem:[%s230 + $0x10] sm:$0xf]
      %v247 = vld [vmem:[%s230 + $0x14] sm:$0xf]
      %v248 = vld [vmem:[%s230 + $0x18] sm:$0xf]
      %v249 = vld [vmem:[%s230 + $0x1c] sm:$0xf]
      %v250 = vld [vmem:[%s230 + $0x20] sm:$0xf]
      %v251 = vld [vmem:[%s230 + $0x24] sm:$0xf]
      %v252 = vld [vmem:[%s230 + $0x28] sm:$0xf]
      %v253 = vld [vmem:[%s230 + $0x2c] sm:$0xf]
      %v254 = vld [vmem:[%s230 + $0x30] sm:$0xf]
      %v255 = vld [vmem:[%s230 + $0x34] sm:$0xf]
      %v256 = vld [vmem:[%s230 + $0x38] sm:$0xf]
      %v257 = vld [vmem:[%s230 + $0x3c] sm:$0xf]
      %v258 = vld [vmem:[%s230 + $0x40] sm:$0xf]
      %v259 = vld [vmem:[%s230 + $0x44] sm:$0xf]
      %v260 = vld [vmem:[%s230 + $0x48] sm:$0xf]
      %v261 = vld [vmem:[%s230 + $0x4c] sm:$0xf]
      %v262 = vld [vmem:[%s230 + $0x50] sm:$0xf]
      %v263 = vld [vmem:[%s230 + $0x54] sm:$0xf]
      %v264 = vld [vmem:[%s230 + $0x58] sm:$0xf]
      %v265 = vld [vmem:[%s230 + $0x5c] sm:$0xf]
      %v266 = vld [vmem:[%s230 + $0x60] sm:$0xf]
      %v267 = vld [vmem:[%s230 + $0x64] sm:$0xf]
      %v268 = vld [vmem:[%s230 + $0x68] sm:$0xf]
      %v269 = vld [vmem:[%s230 + $0x6c] sm:$0xf]
      %v270 = vld [vmem:[%s230 + $0x70] sm:$0xf]
      %v271 = vld [vmem:[%s230 + $0x74] sm:$0xf]
      %v272 = vld [vmem:[%s230 + $0x78] sm:$0xf]
      %v273 = vld [vmem:[%s230 + $0x7c] sm:$0xf]
      %v274 = vld [vmem:[%s230 + $0x80] sm:$0xf]
      %v275 = vld [vmem:[%s230 + $0x84] sm:$0xf]
      %v276 = vld [vmem:[%s230 + $0x88] sm:$0xf]
      %v277 = vld [vmem:[%s230 + $0x8c] sm:$0xf]
      %v278 = vld [vmem:[%s230 + $0x90] sm:$0xf]
      %v279 = vld [vmem:[%s230 + $0x94] sm:$0xf]
      %v280 = vld [vmem:[%s230 + $0x98] sm:$0xf]
      %v281 = vld [vmem:[%s230 + $0x9c] sm:$0xf]
      %v282 = vld [vmem:[%s230 + $0xa0] sm:$0xf]
      %v283 = vld [vmem:[%s230 + $0xa4] sm:$0xf]
      %v284 = vld [vmem:[%s230 + $0xa8] sm:$0xf]
      %v285 = vunpack.c.l.bf16 %v243
      %v286 = vunpack.c.l.bf16 %v244
      %v287 = vunpack.c.l.bf16 %v245
      %v288 = vunpack.c.l.bf16 %v246
      %v289 = vunpack.c.l.bf16 %v247
      %v290 = vunpack.c.l.bf16 %v248
      %v291 = vunpack.c.l.bf16 %v249
      %v292 = vunpack.c.l.bf16 %v250
      %v293 = vunpack.c.l.bf16 %v251
      %v294 = vunpack.c.l.bf16 %v252
      %v295 = vunpack.c.l.bf16 %v253
      %v296 = vunpack.c.l.bf16 %v254
      %v297 = vunpack.c.l.bf16 %v255
      %v298 = vunpack.c.l.bf16 %v256
      %v299 = vunpack.c.l.bf16 %v257
      %v300 = vunpack.c.l.bf16 %v258
      %v301 = vunpack.c.l.bf16 %v259
      %v302 = vunpack.c.l.bf16 %v260
      %v303 = vunpack.c.l.bf16 %v261
      %v304 = vunpack.c.l.bf16 %v262
      %v305 = vunpack.c.l.bf16 %v263
      %v306 = vunpack.c.l.bf16 %v264
      %v307 = vunpack.c.l.bf16 %v265
      %v308 = vunpack.c.l.bf16 %v266
      %v309 = vunpack.c.l.bf16 %v267
      %v310 = vunpack.c.l.bf16 %v268
      %v311 = vunpack.c.l.bf16 %v269
      %v312 = vunpack.c.l.bf16 %v270
      %v313 = vunpack.c.l.bf16 %v271
      %v314 = vunpack.c.l.bf16 %v272
      %v315 = vunpack.c.l.bf16 %v273
      %v316 = vunpack.c.l.bf16 %v274
      %v317 = vunpack.c.l.bf16 %v275
      %v318 = vunpack.c.l.bf16 %v276
      %v319 = vunpack.c.l.bf16 %v277
      %v320 = vunpack.c.l.bf16 %v278
      %v321 = vunpack.c.l.bf16 %v279
      %v322 = vunpack.c.l.bf16 %v280
      %v323 = vunpack.c.l.bf16 %v281
      %v324 = vunpack.c.l.bf16 %v282
      %v325 = vunpack.c.l.bf16 %v283
      %v326 = vunpack.c.l.bf16 %v284
      %v327 = vpack.c.bf16 %v286, %v285
      %v328 = vpack.c.bf16 %v288, %v287
      %v329 = vpack.c.bf16 %v290, %v289
      %v330 = vpack.c.bf16 %v292, %v291
      %v331 = vpack.c.bf16 %v294, %v293
      %v332 = vpack.c.bf16 %v296, %v295
      %v333 = vpack.c.bf16 %v298, %v297
      %v334 = vpack.c.bf16 %v300, %v299
      %v335 = vpack.c.bf16 %v302, %v301
      %v336 = vpack.c.bf16 %v304, %v303
      %v337 = vpack.c.bf16 %v306, %v305
      %v338 = vpack.c.bf16 %v308, %v307
      %v339 = vpack.c.bf16 %v310, %v309
      %v340 = vpack.c.bf16 %v312, %v311
      %v341 = vpack.c.bf16 %v314, %v313
      %v342 = vpack.c.bf16 %v316, %v315
      %v343 = vpack.c.bf16 %v318, %v317
      %v344 = vpack.c.bf16 %v320, %v319
      %v345 = vpack.c.bf16 %v321, %v321
      %v346 = vld [vmem:[%s1] sm:$0xf]
      %v347 = vld [vmem:[%s1 + $0x4] sm:$0xf]
      %v348 = vld [vmem:[%s1 + $0x8] sm:$0xf]
      %v349 = vld [vmem:[%s1 + $0xc] sm:$0xf]
      %v350 = vld [vmem:[%s1 + $0x10] sm:$0xf]
      %v351 = vld [vmem:[%s1 + $0x14] sm:$0xf]
      %v352 = vld [vmem:[%s1 + $0x18] sm:$0xf]
      %v353 = vld [vmem:[%s1 + $0x1c] sm:$0xf]
      %v354 = vld [vmem:[%s1 + $0x20] sm:$0xf]
      %v355 = vld [vmem:[%s1 + $0x24] sm:$0xf]
      %v356 = vld [vmem:[%s1 + $0x28] sm:$0xf]
      %v357 = vld [vmem:[%s1 + $0x2c] sm:$0xf]
      %v358 = vld [vmem:[%s1 + $0x30] sm:$0xf]
      %v359 = vld [vmem:[%s1 + $0x34] sm:$0xf]
      %v360 = vld [vmem:[%s1 + $0x38] sm:$0xf]
      %v361 = vld [vmem:[%s1 + $0x3c] sm:$0xf]
      %s362 = scalar_lea.vmem %s1, 64
      %v363 = vld [vmem:[%s362] sm:$0xf]
      %v364 = vld [vmem:[%s362 + $0x4] sm:$0xf]
      %v365 = vld [vmem:[%s362 + $0x8] sm:$0xf]
      %v366 = vld [vmem:[%s362 + $0xc] sm:$0xf]
      %v367 = vld [vmem:[%s362 + $0x10] sm:$0xf]
      %v368 = vld [vmem:[%s362 + $0x14] sm:$0xf]
      %v369 = vld [vmem:[%s362 + $0x18] sm:$0xf]
      %v370 = vld [vmem:[%s362 + $0x1c] sm:$0xf]
      %v371 = vld [vmem:[%s362 + $0x20] sm:$0xf]
      %v372 = vld [vmem:[%s362 + $0x24] sm:$0xf]
      %v373 = vld [vmem:[%s362 + $0x28] sm:$0xf]
      %v374 = vld [vmem:[%s362 + $0x2c] sm:$0xf]
      %v375 = vld [vmem:[%s362 + $0x30] sm:$0xf]
      %v376 = vld [vmem:[%s362 + $0x34] sm:$0xf]
      %v377 = vld [vmem:[%s362 + $0x38] sm:$0xf]
      %v378 = vld [vmem:[%s362 + $0x3c] sm:$0xf]
      %vm379 = vsmask.f32 5376
      %v381 = vshrl.u32 %v327, 16
      %v383 = vrot.slane %v381, 2
      %v384 = vshll.u32 %v327, 16
      %v386 = vrot.slane %v384, 3
      %v387 = vor.u32 %v383, %v386
      %v389 = vshrl.u32 %v328, 16
      %v391 = vrot.slane %v389, 2
      %v392 = vshll.u32 %v328, 16
      %v394 = vrot.slane %v392, 3
      %v395 = vor.u32 %v391, %v394
      %v396 = vsel %vm379, %v387, %v395
      %v398 = vshrl.u32 %v329, 16
      %v400 = vrot.slane %v398, 2
      %v401 = vshll.u32 %v329, 16
      %v403 = vrot.slane %v401, 3
      %v404 = vor.u32 %v400, %v403
      %v405 = vsel %vm379, %v395, %v404
      %v407 = vshrl.u32 %v330, 16
      %v409 = vrot.slane %v407, 2
      %v410 = vshll.u32 %v330, 16
      %v412 = vrot.slane %v410, 3
      %v413 = vor.u32 %v409, %v412
      %v414 = vsel %vm379, %v404, %v413
      %v416 = vshrl.u32 %v331, 16
      %v418 = vrot.slane %v416, 2
      %v419 = vshll.u32 %v331, 16
      %v421 = vrot.slane %v419, 3
      %v422 = vor.u32 %v418, %v421
      %v423 = vsel %vm379, %v413, %v422
      %v425 = vshrl.u32 %v332, 16
      %v427 = vrot.slane %v425, 2
      %v428 = vshll.u32 %v332, 16
      %v430 = vrot.slane %v428, 3
      %v431 = vor.u32 %v427, %v430
      %v432 = vsel %vm379, %v422, %v431
      %v434 = vshrl.u32 %v333, 16
      %v436 = vrot.slane %v434, 2
      %v437 = vshll.u32 %v333, 16
      %v439 = vrot.slane %v437, 3
      %v440 = vor.u32 %v436, %v439
      %v441 = vsel %vm379, %v431, %v440
      %v443 = vshrl.u32 %v334, 16
      %v445 = vrot.slane %v443, 2
      %v446 = vshll.u32 %v334, 16
      %v448 = vrot.slane %v446, 3
      %v449 = vor.u32 %v445, %v448
      %v450 = vsel %vm379, %v440, %v449
      %v452 = vshrl.u32 %v335, 16
      %v454 = vrot.slane %v452, 2
      %v455 = vshll.u32 %v335, 16
      %v457 = vrot.slane %v455, 3
      %v458 = vor.u32 %v454, %v457
      %v459 = vsel %vm379, %v449, %v458
      %v461 = vshrl.u32 %v336, 16
      %v463 = vrot.slane %v461, 2
      %v464 = vshll.u32 %v336, 16
      %v466 = vrot.slane %v464, 3
      %v467 = vor.u32 %v463, %v466
      %v468 = vsel %vm379, %v458, %v467
      %v470 = vshrl.u32 %v337, 16
      %v472 = vrot.slane %v470, 2
      %v473 = vshll.u32 %v337, 16
      %v475 = vrot.slane %v473, 3
      %v476 = vor.u32 %v472, %v475
      %v477 = vsel %vm379, %v467, %v476
      %v479 = vshrl.u32 %v338, 16
      %v481 = vrot.slane %v479, 2
      %v482 = vshll.u32 %v338, 16
      %v484 = vrot.slane %v482, 3
      %v485 = vor.u32 %v481, %v484
      %v486 = vsel %vm379, %v476, %v485
      %v488 = vshrl.u32 %v339, 16
      %v490 = vrot.slane %v488, 2
      %v491 = vshll.u32 %v339, 16
      %v493 = vrot.slane %v491, 3
      %v494 = vor.u32 %v490, %v493
      %v495 = vsel %vm379, %v485, %v494
      %v497 = vshrl.u32 %v340, 16
      %v499 = vrot.slane %v497, 2
      %v500 = vshll.u32 %v340, 16
      %v502 = vrot.slane %v500, 3
      %v503 = vor.u32 %v499, %v502
      %v504 = vsel %vm379, %v494, %v503
      %v506 = vshrl.u32 %v341, 16
      %v508 = vrot.slane %v506, 2
      %v509 = vshll.u32 %v341, 16
      %v511 = vrot.slane %v509, 3
      %v512 = vor.u32 %v508, %v511
      %v513 = vsel %vm379, %v503, %v512
      %v515 = vshrl.u32 %v342, 16
      %v517 = vrot.slane %v515, 2
      %v518 = vshll.u32 %v342, 16
      %v520 = vrot.slane %v518, 3
      %v521 = vor.u32 %v517, %v520
      %v522 = vsel %vm379, %v512, %v521
      %v524 = vshrl.u32 %v343, 16
      %v526 = vrot.slane %v524, 2
      %v527 = vshll.u32 %v343, 16
      %v529 = vrot.slane %v527, 3
      %v530 = vor.u32 %v526, %v529
      %v531 = vsel %vm379, %v521, %v530
      %v533 = vshrl.u32 %v344, 16
      %v535 = vrot.slane %v533, 2
      %v536 = vshll.u32 %v344, 16
      %v538 = vrot.slane %v536, 3
      %v539 = vor.u32 %v535, %v538
      %v540 = vsel %vm379, %v530, %v539
      %v542 = vshrl.u32 %v345, 16
      %v544 = vrot.slane %v542, 2
      %v545 = vshll.u32 %v345, 16
      %v547 = vrot.slane %v545, 3
      %v548 = vor.u32 %v544, %v547
      %v549 = vsel %vm379, %v539, %v548
      %v584 = vunpack.c.l.b16 %v363
      %v585 = vunpack.c.l.b16 %v364
      %v586 = vunpack.c.l.b16 %v365
      %v587 = vunpack.c.l.b16 %v366
      %v588 = vunpack.c.l.b16 %v367
      %v589 = vunpack.c.l.b16 %v368
      %v590 = vunpack.c.l.b16 %v369
      %v591 = vunpack.c.l.b16 %v370
      %v592 = vunpack.c.l.b16 %v371
      %v593 = vunpack.c.l.b16 %v372
      %v594 = vunpack.c.l.b16 %v373
      %v595 = vunpack.c.l.b16 %v374
      %v596 = vunpack.c.l.b16 %v375
      %v597 = vunpack.c.l.b16 %v376
      %v598 = vunpack.c.l.b16 %v377
      %v599 = vunpack.c.l.b16 %v378
      %v600 = vpack.c.b16 %v585, %v584
      %v601 = vpack.c.b16 %v587, %v586
      %v602 = vpack.c.b16 %v589, %v588
      %v603 = vpack.c.b16 %v591, %v590
      %v604 = vpack.c.b16 %v593, %v592
      %v605 = vpack.c.b16 %v595, %v594
      %v606 = vpack.c.b16 %v597, %v596
      %v607 = vpack.c.b16 %v599, %v598
      %616 = vmatpush.bf16.msra.mxu0 %v607
      %617 = vmatpush.bf16.msra.mxu0 %v606
      %618 = vmatpush.bf16.msra.mxu0 %v605
      %619 = vmatpush.bf16.msra.mxu0 %v604
      %620 = vmatpush.bf16.msra.mxu0 %v603
      %621 = vmatpush.bf16.msra.mxu0 %v602
      %622 = vmatpush.bf16.msra.mxu0 %v601
      %623 = vmatpush.bf16.msra.mxu0 %v600
      %624 = vmatmul.bf16.gmra.mxu0 %v396
      %v625 = vpop.f32.mrf.mxu0
      %v626 = vadd.f32 0.0, %v625
      %v627 = vpop.f32.mrf.mxu0
      %v628 = vadd.f32 0.0, %v627
      %629 = vmatmul.bf16.gmra.mxu0 %v405
      %v630 = vpop.f32.mrf.mxu0
      %v631 = vadd.f32 0.0, %v630
      %v632 = vpop.f32.mrf.mxu0
      %v633 = vadd.f32 0.0, %v632
      %634 = vmatmul.bf16.gmra.mxu0 %v414
      %v635 = vpop.f32.mrf.mxu0
      %v636 = vadd.f32 0.0, %v635
      %v637 = vpop.f32.mrf.mxu0
      %v638 = vadd.f32 0.0, %v637
      %639 = vmatmul.bf16.gmra.mxu0 %v423
      %v640 = vpop.f32.mrf.mxu0
      %v641 = vadd.f32 0.0, %v640
      %v642 = vpop.f32.mrf.mxu0
      %v643 = vadd.f32 0.0, %v642
      %644 = vmatmul.bf16.gmra.mxu0 %v432
      %v645 = vpop.f32.mrf.mxu0
      %v646 = vadd.f32 0.0, %v645
      %v647 = vpop.f32.mrf.mxu0
      %v648 = vadd.f32 0.0, %v647
      %649 = vmatmul.bf16.gmra.mxu0 %v441
      %v650 = vpop.f32.mrf.mxu0
      %v651 = vadd.f32 0.0, %v650
      %v652 = vpop.f32.mrf.mxu0
      %v653 = vadd.f32 0.0, %v652
      %654 = vmatmul.bf16.gmra.mxu0 %v450
      %v655 = vpop.f32.mrf.mxu0
      %v656 = vadd.f32 0.0, %v655
      %v657 = vpop.f32.mrf.mxu0
      %v658 = vadd.f32 0.0, %v657
      %659 = vmatmul.bf16.gmra.mxu0 %v459
      %v660 = vpop.f32.mrf.mxu0
      %v661 = vadd.f32 0.0, %v660
      %v662 = vpop.f32.mrf.mxu0
      %v663 = vadd.f32 0.0, %v662
      %664 = vmatmul.bf16.gmra.mxu0 %v468
      %v665 = vpop.f32.mrf.mxu0
      %v666 = vadd.f32 0.0, %v665
      %v667 = vpop.f32.mrf.mxu0
      %v668 = vadd.f32 0.0, %v667
      %669 = vmatmul.bf16.gmra.mxu0 %v477
      %v670 = vpop.f32.mrf.mxu0
      %v671 = vadd.f32 0.0, %v670
      %v672 = vpop.f32.mrf.mxu0
      %v673 = vadd.f32 0.0, %v672
      %674 = vmatmul.bf16.gmra.mxu0 %v486
      %v675 = vpop.f32.mrf.mxu0
      %v676 = vadd.f32 0.0, %v675
      %v677 = vpop.f32.mrf.mxu0
      %v678 = vadd.f32 0.0, %v677
      %679 = vmatmul.bf16.gmra.mxu0 %v495
      %v680 = vpop.f32.mrf.mxu0
      %v681 = vadd.f32 0.0, %v680
      %v682 = vpop.f32.mrf.mxu0
      %v683 = vadd.f32 0.0, %v682
      %684 = vmatmul.bf16.gmra.mxu0 %v504
      %v685 = vpop.f32.mrf.mxu0
      %v686 = vadd.f32 0.0, %v685
      %v687 = vpop.f32.mrf.mxu0
      %v688 = vadd.f32 0.0, %v687
      %689 = vmatmul.bf16.gmra.mxu0 %v513
      %v690 = vpop.f32.mrf.mxu0
      %v691 = vadd.f32 0.0, %v690
      %v692 = vpop.f32.mrf.mxu0
      %v693 = vadd.f32 0.0, %v692
      %694 = vmatmul.bf16.gmra.mxu0 %v522
      %v695 = vpop.f32.mrf.mxu0
      %v696 = vadd.f32 0.0, %v695
      %v697 = vpop.f32.mrf.mxu0
      %v698 = vadd.f32 0.0, %v697
      %699 = vmatmul.bf16.gmra.mxu0 %v531
      %v700 = vpop.f32.mrf.mxu0
      %v701 = vadd.f32 0.0, %v700
      %v702 = vpop.f32.mrf.mxu0
      %v703 = vadd.f32 0.0, %v702
      %704 = vmatmul.bf16.gmra.mxu0 %v540
      %v705 = vpop.f32.mrf.mxu0
      %v706 = vadd.f32 0.0, %v705
      %v707 = vpop.f32.mrf.mxu0
      %v708 = vadd.f32 0.0, %v707
      %709 = vmatmul.bf16.gmra.mxu0 %v549
      %v710 = vpop.f32.mrf.mxu0
      %v711 = vadd.f32 0.0, %v710
      %v712 = vpop.f32.mrf.mxu0
      %v713 = vadd.f32 0.0, %v712
      %714 = vdwg.mxu0
      %vm734 = vcmask 1045504
      %v735 = vrot.slane %v327, 2
      %v736 = vrot.slane %v328, 2
      %v737 = vsel %vm734, %v735, %v736
      %v738 = vrot.slane %v329, 2
      %v739 = vsel %vm734, %v736, %v738
      %v740 = vrot.slane %v330, 2
      %v741 = vsel %vm734, %v738, %v740
      %v742 = vrot.slane %v331, 2
      %v743 = vsel %vm734, %v740, %v742
      %v744 = vrot.slane %v332, 2
      %v745 = vsel %vm734, %v742, %v744
      %v746 = vrot.slane %v333, 2
      %v747 = vsel %vm734, %v744, %v746
      %v748 = vrot.slane %v334, 2
      %v749 = vsel %vm734, %v746, %v748
      %v750 = vrot.slane %v335, 2
      %v751 = vsel %vm734, %v748, %v750
      %v752 = vrot.slane %v336, 2
      %v753 = vsel %vm734, %v750, %v752
      %v754 = vrot.slane %v337, 2
      %v755 = vsel %vm734, %v752, %v754
      %v756 = vrot.slane %v338, 2
      %v757 = vsel %vm734, %v754, %v756
      %v758 = vrot.slane %v339, 2
      %v759 = vsel %vm734, %v756, %v758
      %v760 = vrot.slane %v340, 2
      %v761 = vsel %vm734, %v758, %v760
      %v762 = vrot.slane %v341, 2
      %v763 = vsel %vm734, %v760, %v762
      %v764 = vrot.slane %v342, 2
      %v765 = vsel %vm734, %v762, %v764
      %v766 = vrot.slane %v343, 2
      %v767 = vsel %vm734, %v764, %v766
      %v768 = vrot.slane %v344, 2
      %v769 = vsel %vm734, %v766, %v768
      %v770 = vrot.slane %v345, 2
      %v771 = vsel %vm734, %v768, %v770
      %v806 = vunpack.c.l.b16 %v346
      %v807 = vunpack.c.l.b16 %v347
      %v808 = vunpack.c.l.b16 %v348
      %v809 = vunpack.c.l.b16 %v349
      %v810 = vunpack.c.l.b16 %v350
      %v811 = vunpack.c.l.b16 %v351
      %v812 = vunpack.c.l.b16 %v352
      %v813 = vunpack.c.l.b16 %v353
      %v814 = vunpack.c.l.b16 %v354
      %v815 = vunpack.c.l.b16 %v355
      %v816 = vunpack.c.l.b16 %v356
      %v817 = vunpack.c.l.b16 %v357
      %v818 = vunpack.c.l.b16 %v358
      %v819 = vunpack.c.l.b16 %v359
      %v820 = vunpack.c.l.b16 %v360
      %v821 = vunpack.c.l.b16 %v361
      %v822 = vpack.c.b16 %v807, %v806
      %v823 = vpack.c.b16 %v809, %v808
      %v824 = vpack.c.b16 %v811, %v810
      %v825 = vpack.c.b16 %v813, %v812
      %v826 = vpack.c.b16 %v815, %v814
      %v827 = vpack.c.b16 %v817, %v816
      %v828 = vpack.c.b16 %v819, %v818
      %v829 = vpack.c.b16 %v821, %v820
      %838 = vmatpush.bf16.msra.mxu0 %v829
      %839 = vmatpush.bf16.msra.mxu0 %v828
      %840 = vmatpush.bf16.msra.mxu0 %v827
      %841 = vmatpush.bf16.msra.mxu0 %v826
      %842 = vmatpush.bf16.msra.mxu0 %v825
      %843 = vmatpush.bf16.msra.mxu0 %v824
      %844 = vmatpush.bf16.msra.mxu0 %v823
      %845 = vmatpush.bf16.msra.mxu0 %v822
      %846 = vmatmul.bf16.gmra.mxu0 %v737
      %v847 = vpop.f32.mrf.mxu0
      %v848 = vadd.f32 %v626, %v847
      %v849 = vpop.f32.mrf.mxu0
      %v850 = vadd.f32 %v628, %v849
      %851 = vmatmul.bf16.gmra.mxu0 %v739
      %v852 = vpop.f32.mrf.mxu0
      %v853 = vadd.f32 %v631, %v852
      %v854 = vpop.f32.mrf.mxu0
      %v855 = vadd.f32 %v633, %v854
      %856 = vmatmul.bf16.gmra.mxu0 %v741
      %v857 = vpop.f32.mrf.mxu0
      %v858 = vadd.f32 %v636, %v857
      %v859 = vpop.f32.mrf.mxu0
      %v860 = vadd.f32 %v638, %v859
      %861 = vmatmul.bf16.gmra.mxu0 %v743
      %v862 = vpop.f32.mrf.mxu0
      %v863 = vadd.f32 %v641, %v862
      %v864 = vpop.f32.mrf.mxu0
      %v865 = vadd.f32 %v643, %v864
      %866 = vmatmul.bf16.gmra.mxu0 %v745
      %v867 = vpop.f32.mrf.mxu0
      %v868 = vadd.f32 %v646, %v867
      %v869 = vpop.f32.mrf.mxu0
      %v870 = vadd.f32 %v648, %v869
      %871 = vmatmul.bf16.gmra.mxu0 %v747
      %v872 = vpop.f32.mrf.mxu0
      %v873 = vadd.f32 %v651, %v872
      %v874 = vpop.f32.mrf.mxu0
      %v875 = vadd.f32 %v653, %v874
      %876 = vmatmul.bf16.gmra.mxu0 %v749
      %v877 = vpop.f32.mrf.mxu0
      %v878 = vadd.f32 %v656, %v877
      %v879 = vpop.f32.mrf.mxu0
      %v880 = vadd.f32 %v658, %v879
      %881 = vmatmul.bf16.gmra.mxu0 %v751
      %v882 = vpop.f32.mrf.mxu0
      %v883 = vadd.f32 %v661, %v882
      %v884 = vpop.f32.mrf.mxu0
      %v885 = vadd.f32 %v663, %v884
      %886 = vmatmul.bf16.gmra.mxu0 %v753
      %v887 = vpop.f32.mrf.mxu0
      %v888 = vadd.f32 %v666, %v887
      %v889 = vpop.f32.mrf.mxu0
      %v890 = vadd.f32 %v668, %v889
      %891 = vmatmul.bf16.gmra.mxu0 %v755
      %v892 = vpop.f32.mrf.mxu0
      %v893 = vadd.f32 %v671, %v892
      %v894 = vpop.f32.mrf.mxu0
      %v895 = vadd.f32 %v673, %v894
      %896 = vmatmul.bf16.gmra.mxu0 %v757
      %v897 = vpop.f32.mrf.mxu0
      %v898 = vadd.f32 %v676, %v897
      %v899 = vpop.f32.mrf.mxu0
      %v900 = vadd.f32 %v678, %v899
      %901 = vmatmul.bf16.gmra.mxu0 %v759
      %v902 = vpop.f32.mrf.mxu0
      %v903 = vadd.f32 %v681, %v902
      %v904 = vpop.f32.mrf.mxu0
      %v905 = vadd.f32 %v683, %v904
      %906 = vmatmul.bf16.gmra.mxu0 %v761
      %v907 = vpop.f32.mrf.mxu0
      %v908 = vadd.f32 %v686, %v907
      %v909 = vpop.f32.mrf.mxu0
      %v910 = vadd.f32 %v688, %v909
      %911 = vmatmul.bf16.gmra.mxu0 %v763
      %v912 = vpop.f32.mrf.mxu0
      %v913 = vadd.f32 %v691, %v912
      %v914 = vpop.f32.mrf.mxu0
      %v915 = vadd.f32 %v693, %v914
      %916 = vmatmul.bf16.gmra.mxu0 %v765
      %v917 = vpop.f32.mrf.mxu0
      %v918 = vadd.f32 %v696, %v917
      %v919 = vpop.f32.mrf.mxu0
      %v920 = vadd.f32 %v698, %v919
      %921 = vmatmul.bf16.gmra.mxu0 %v767
      %v922 = vpop.f32.mrf.mxu0
      %v923 = vadd.f32 %v701, %v922
      %v924 = vpop.f32.mrf.mxu0
      %v925 = vadd.f32 %v703, %v924
      %926 = vmatmul.bf16.gmra.mxu0 %v769
      %v927 = vpop.f32.mrf.mxu0
      %v928 = vadd.f32 %v706, %v927
      %v929 = vpop.f32.mrf.mxu0
      %v930 = vadd.f32 %v708, %v929
      %931 = vmatmul.bf16.gmra.mxu0 %v771
      %v932 = vpop.f32.mrf.mxu0
      %v933 = vadd.f32 %v711, %v932
      %v934 = vpop.f32.mrf.mxu0
      %v935 = vadd.f32 %v713, %v934
      %936 = vdwg.mxu0
      %s937 = scalar_lea.vmem %s1, 128
      %v938 = vld [vmem:[%s937] sm:$0xf]
      %v939 = vld [vmem:[%s937 + $0x4] sm:$0xf]
      %v940 = vld [vmem:[%s937 + $0x8] sm:$0xf]
      %v941 = vld [vmem:[%s937 + $0xc] sm:$0xf]
      %v942 = vld [vmem:[%s937 + $0x10] sm:$0xf]
      %v943 = vld [vmem:[%s937 + $0x14] sm:$0xf]
      %v944 = vld [vmem:[%s937 + $0x18] sm:$0xf]
      %v945 = vld [vmem:[%s937 + $0x1c] sm:$0xf]
      %v946 = vld [vmem:[%s937 + $0x20] sm:$0xf]
      %v947 = vld [vmem:[%s937 + $0x24] sm:$0xf]
      %v948 = vld [vmem:[%s937 + $0x28] sm:$0xf]
      %v949 = vld [vmem:[%s937 + $0x2c] sm:$0xf]
      %v950 = vld [vmem:[%s937 + $0x30] sm:$0xf]
      %v951 = vld [vmem:[%s937 + $0x34] sm:$0xf]
      %v952 = vld [vmem:[%s937 + $0x38] sm:$0xf]
      %v953 = vld [vmem:[%s937 + $0x3c] sm:$0xf]
      %vm954 = vcmask 1044480
      %v955 = vrot.slane %v327, 3
      %v956 = vrot.slane %v328, 3
      %v957 = vsel %vm954, %v955, %v956
      %v958 = vrot.slane %v329, 3
      %v959 = vsel %vm954, %v956, %v958
      %v960 = vrot.slane %v330, 3
      %v961 = vsel %vm954, %v958, %v960
      %v962 = vrot.slane %v331, 3
      %v963 = vsel %vm954, %v960, %v962
      %v964 = vrot.slane %v332, 3
      %v965 = vsel %vm954, %v962, %v964
      %v966 = vrot.slane %v333, 3
      %v967 = vsel %vm954, %v964, %v966
      %v968 = vrot.slane %v334, 3
      %v969 = vsel %vm954, %v966, %v968
      %v970 = vrot.slane %v335, 3
      %v971 = vsel %vm954, %v968, %v970
      %v972 = vrot.slane %v336, 3
      %v973 = vsel %vm954, %v970, %v972
      %v974 = vrot.slane %v337, 3
      %v975 = vsel %vm954, %v972, %v974
      %v976 = vrot.slane %v338, 3
      %v977 = vsel %vm954, %v974, %v976
      %v978 = vrot.slane %v339, 3
      %v979 = vsel %vm954, %v976, %v978
      %v980 = vrot.slane %v340, 3
      %v981 = vsel %vm954, %v978, %v980
      %v982 = vrot.slane %v341, 3
      %v983 = vsel %vm954, %v980, %v982
      %v984 = vrot.slane %v342, 3
      %v985 = vsel %vm954, %v982, %v984
      %v986 = vrot.slane %v343, 3
      %v987 = vsel %vm954, %v984, %v986
      %v988 = vrot.slane %v344, 3
      %v989 = vsel %vm954, %v986, %v988
      %v990 = vrot.slane %v345, 3
      %v991 = vsel %vm954, %v988, %v990
      %v1026 = vunpack.c.l.b16 %v938
      %v1027 = vunpack.c.l.b16 %v939
      %v1028 = vunpack.c.l.b16 %v940
      %v1029 = vunpack.c.l.b16 %v941
      %v1030 = vunpack.c.l.b16 %v942
      %v1031 = vunpack.c.l.b16 %v943
      %v1032 = vunpack.c.l.b16 %v944
      %v1033 = vunpack.c.l.b16 %v945
      %v1034 = vunpack.c.l.b16 %v946
      %v1035 = vunpack.c.l.b16 %v947
      %v1036 = vunpack.c.l.b16 %v948
      %v1037 = vunpack.c.l.b16 %v949
      %v1038 = vunpack.c.l.b16 %v950
      %v1039 = vunpack.c.l.b16 %v951
      %v1040 = vunpack.c.l.b16 %v952
      %v1041 = vunpack.c.l.b16 %v953
      %v1042 = vpack.c.b16 %v1027, %v1026
      %v1043 = vpack.c.b16 %v1029, %v1028
      %v1044 = vpack.c.b16 %v1031, %v1030
      %v1045 = vpack.c.b16 %v1033, %v1032
      %v1046 = vpack.c.b16 %v1035, %v1034
      %v1047 = vpack.c.b16 %v1037, %v1036
      %v1048 = vpack.c.b16 %v1039, %v1038
      %v1049 = vpack.c.b16 %v1041, %v1040
      %1058 = vmatpush.bf16.msra.mxu0 %v1049
      %1059 = vmatpush.bf16.msra.mxu0 %v1048
      %1060 = vmatpush.bf16.msra.mxu0 %v1047
      %1061 = vmatpush.bf16.msra.mxu0 %v1046
      %1062 = vmatpush.bf16.msra.mxu0 %v1045
      %1063 = vmatpush.bf16.msra.mxu0 %v1044
      %1064 = vmatpush.bf16.msra.mxu0 %v1043
      %1065 = vmatpush.bf16.msra.mxu0 %v1042
      %1066 = vmatmul.bf16.gmra.mxu0 %v957
      %v1067 = vpop.f32.mrf.mxu0
      %v1068 = vadd.f32 0.0, %v1067
      %v1069 = vpop.f32.mrf.mxu0
      %v1070 = vadd.f32 0.0, %v1069
      %1071 = vmatmul.bf16.gmra.mxu0 %v959
      %v1072 = vpop.f32.mrf.mxu0
      %v1073 = vadd.f32 0.0, %v1072
      %v1074 = vpop.f32.mrf.mxu0
      %v1075 = vadd.f32 0.0, %v1074
      %1076 = vmatmul.bf16.gmra.mxu0 %v961
      %v1077 = vpop.f32.mrf.mxu0
      %v1078 = vadd.f32 0.0, %v1077
      %v1079 = vpop.f32.mrf.mxu0
      %v1080 = vadd.f32 0.0, %v1079
      %1081 = vmatmul.bf16.gmra.mxu0 %v963
      %v1082 = vpop.f32.mrf.mxu0
      %v1083 = vadd.f32 0.0, %v1082
      %v1084 = vpop.f32.mrf.mxu0
      %v1085 = vadd.f32 0.0, %v1084
      %1086 = vmatmul.bf16.gmra.mxu0 %v965
      %v1087 = vpop.f32.mrf.mxu0
      %v1088 = vadd.f32 0.0, %v1087
      %v1089 = vpop.f32.mrf.mxu0
      %v1090 = vadd.f32 0.0, %v1089
      %1091 = vmatmul.bf16.gmra.mxu0 %v967
      %v1092 = vpop.f32.mrf.mxu0
      %v1093 = vadd.f32 0.0, %v1092
      %v1094 = vpop.f32.mrf.mxu0
      %v1095 = vadd.f32 0.0, %v1094
      %1096 = vmatmul.bf16.gmra.mxu0 %v969
      %v1097 = vpop.f32.mrf.mxu0
      %v1098 = vadd.f32 0.0, %v1097
      %v1099 = vpop.f32.mrf.mxu0
      %v1100 = vadd.f32 0.0, %v1099
      %1101 = vmatmul.bf16.gmra.mxu0 %v971
      %v1102 = vpop.f32.mrf.mxu0
      %v1103 = vadd.f32 0.0, %v1102
      %v1104 = vpop.f32.mrf.mxu0
      %v1105 = vadd.f32 0.0, %v1104
      %1106 = vmatmul.bf16.gmra.mxu0 %v973
      %v1107 = vpop.f32.mrf.mxu0
      %v1108 = vadd.f32 0.0, %v1107
      %v1109 = vpop.f32.mrf.mxu0
      %v1110 = vadd.f32 0.0, %v1109
      %1111 = vmatmul.bf16.gmra.mxu0 %v975
      %v1112 = vpop.f32.mrf.mxu0
      %v1113 = vadd.f32 0.0, %v1112
      %v1114 = vpop.f32.mrf.mxu0
      %v1115 = vadd.f32 0.0, %v1114
      %1116 = vmatmul.bf16.gmra.mxu0 %v977
      %v1117 = vpop.f32.mrf.mxu0
      %v1118 = vadd.f32 0.0, %v1117
      %v1119 = vpop.f32.mrf.mxu0
      %v1120 = vadd.f32 0.0, %v1119
      %1121 = vmatmul.bf16.gmra.mxu0 %v979
      %v1122 = vpop.f32.mrf.mxu0
      %v1123 = vadd.f32 0.0, %v1122
      %v1124 = vpop.f32.mrf.mxu0
      %v1125 = vadd.f32 0.0, %v1124
      %1126 = vmatmul.bf16.gmra.mxu0 %v981
      %v1127 = vpop.f32.mrf.mxu0
      %v1128 = vadd.f32 0.0, %v1127
      %v1129 = vpop.f32.mrf.mxu0
      %v1130 = vadd.f32 0.0, %v1129
      %1131 = vmatmul.bf16.gmra.mxu0 %v983
      %v1132 = vpop.f32.mrf.mxu0
      %v1133 = vadd.f32 0.0, %v1132
      %v1134 = vpop.f32.mrf.mxu0
      %v1135 = vadd.f32 0.0, %v1134
      %1136 = vmatmul.bf16.gmra.mxu0 %v985
      %v1137 = vpop.f32.mrf.mxu0
      %v1138 = vadd.f32 0.0, %v1137
      %v1139 = vpop.f32.mrf.mxu0
      %v1140 = vadd.f32 0.0, %v1139
      %1141 = vmatmul.bf16.gmra.mxu0 %v987
      %v1142 = vpop.f32.mrf.mxu0
      %v1143 = vadd.f32 0.0, %v1142
      %v1144 = vpop.f32.mrf.mxu0
      %v1145 = vadd.f32 0.0, %v1144
      %1146 = vmatmul.bf16.gmra.mxu0 %v989
      %v1147 = vpop.f32.mrf.mxu0
      %v1148 = vadd.f32 0.0, %v1147
      %v1149 = vpop.f32.mrf.mxu0
      %v1150 = vadd.f32 0.0, %v1149
      %1151 = vmatmul.bf16.gmra.mxu0 %v991
      %v1152 = vpop.f32.mrf.mxu0
      %v1153 = vadd.f32 0.0, %v1152
      %v1154 = vpop.f32.mrf.mxu0
      %v1155 = vadd.f32 0.0, %v1154
      %1156 = vdwg.mxu0
      %v1157 = vadd.f32 %v848, %v1068
      %v1158 = vadd.f32 %v850, %v1070
      %v1159 = vadd.f32 %v853, %v1073
      %v1160 = vadd.f32 %v855, %v1075
      %v1161 = vadd.f32 %v858, %v1078
      %v1162 = vadd.f32 %v860, %v1080
      %v1163 = vadd.f32 %v863, %v1083
      %v1164 = vadd.f32 %v865, %v1085
      %v1165 = vadd.f32 %v868, %v1088
      %v1166 = vadd.f32 %v870, %v1090
      %v1167 = vadd.f32 %v873, %v1093
      %v1168 = vadd.f32 %v875, %v1095
      %v1169 = vadd.f32 %v878, %v1098
      %v1170 = vadd.f32 %v880, %v1100
      %v1171 = vadd.f32 %v883, %v1103
      %v1172 = vadd.f32 %v885, %v1105
      %v1173 = vadd.f32 %v888, %v1108
      %v1174 = vadd.f32 %v890, %v1110
      %v1175 = vadd.f32 %v893, %v1113
      %v1176 = vadd.f32 %v895, %v1115
      %v1177 = vadd.f32 %v898, %v1118
      %v1178 = vadd.f32 %v900, %v1120
      %v1179 = vadd.f32 %v903, %v1123
      %v1180 = vadd.f32 %v905, %v1125
      %v1181 = vadd.f32 %v908, %v1128
      %v1182 = vadd.f32 %v910, %v1130
      %v1183 = vadd.f32 %v913, %v1133
      %v1184 = vadd.f32 %v915, %v1135
      %v1185 = vadd.f32 %v918, %v1138
      %v1186 = vadd.f32 %v920, %v1140
      %v1187 = vadd.f32 %v923, %v1143
      %v1188 = vadd.f32 %v925, %v1145
      %v1189 = vadd.f32 %v928, %v1148
      %v1190 = vadd.f32 %v930, %v1150
      %v1191 = vadd.f32 %v933, %v1153
      %v1192 = vadd.f32 %v935, %v1155
      %v1193 = vpack.c.bf16 %v322, %v321
      %v1194 = vpack.c.bf16 %v323, %v323
      %s1195 = scalar_lea.vmem %s1, 192
      %v1196 = vld [vmem:[%s1195] sm:$0xf]
      %v1197 = vld [vmem:[%s1195 + $0x4] sm:$0xf]
      %v1198 = vld [vmem:[%s1195 + $0x8] sm:$0xf]
      %v1199 = vld [vmem:[%s1195 + $0xc] sm:$0xf]
      %v1200 = vld [vmem:[%s1195 + $0x10] sm:$0xf]
      %v1201 = vld [vmem:[%s1195 + $0x14] sm:$0xf]
      %v1202 = vld [vmem:[%s1195 + $0x18] sm:$0xf]
      %v1203 = vld [vmem:[%s1195 + $0x1c] sm:$0xf]
      %v1204 = vld [vmem:[%s1195 + $0x20] sm:$0xf]
      %v1205 = vld [vmem:[%s1195 + $0x24] sm:$0xf]
      %v1206 = vld [vmem:[%s1195 + $0x28] sm:$0xf]
      %v1207 = vld [vmem:[%s1195 + $0x2c] sm:$0xf]
      %v1208 = vld [vmem:[%s1195 + $0x30] sm:$0xf]
      %v1209 = vld [vmem:[%s1195 + $0x34] sm:$0xf]
      %v1210 = vld [vmem:[%s1195 + $0x38] sm:$0xf]
      %v1211 = vld [vmem:[%s1195 + $0x3c] sm:$0xf]
      %v1214 = vrot.slane %v1193, 3
      %v1215 = vsel %vm954, %v988, %v1214
      %v1216 = vrot.slane %v1194, 3
      %v1217 = vsel %vm954, %v1214, %v1216
      %v1236 = vunpack.c.l.b16 %v1196
      %v1237 = vunpack.c.l.b16 %v1197
      %v1238 = vunpack.c.l.b16 %v1198
      %v1239 = vunpack.c.l.b16 %v1199
      %v1240 = vunpack.c.l.b16 %v1200
      %v1241 = vunpack.c.l.b16 %v1201
      %v1242 = vunpack.c.l.b16 %v1202
      %v1243 = vunpack.c.l.b16 %v1203
      %v1244 = vunpack.c.l.b16 %v1204
      %v1245 = vunpack.c.l.b16 %v1205
      %v1246 = vunpack.c.l.b16 %v1206
      %v1247 = vunpack.c.l.b16 %v1207
      %v1248 = vunpack.c.l.b16 %v1208
      %v1249 = vunpack.c.l.b16 %v1209
      %v1250 = vunpack.c.l.b16 %v1210
      %v1251 = vunpack.c.l.b16 %v1211
      %v1252 = vpack.c.b16 %v1237, %v1236
      %v1253 = vpack.c.b16 %v1239, %v1238
      %v1254 = vpack.c.b16 %v1241, %v1240
      %v1255 = vpack.c.b16 %v1243, %v1242
      %v1256 = vpack.c.b16 %v1245, %v1244
      %v1257 = vpack.c.b16 %v1247, %v1246
      %v1258 = vpack.c.b16 %v1249, %v1248
      %v1259 = vpack.c.b16 %v1251, %v1250
      %1268 = vmatpush.bf16.msra.mxu0 %v1259
      %1269 = vmatpush.bf16.msra.mxu0 %v1258
      %1270 = vmatpush.bf16.msra.mxu0 %v1257
      %1271 = vmatpush.bf16.msra.mxu0 %v1256
      %1272 = vmatpush.bf16.msra.mxu0 %v1255
      %1273 = vmatpush.bf16.msra.mxu0 %v1254
      %1274 = vmatpush.bf16.msra.mxu0 %v1253
      %1275 = vmatpush.bf16.msra.mxu0 %v1252
      %1276 = vmatmul.bf16.gmra.mxu0 %v959
      %v1277 = vpop.f32.mrf.mxu0
      %v1278 = vadd.f32 0.0, %v1277
      %v1279 = vpop.f32.mrf.mxu0
      %v1280 = vadd.f32 0.0, %v1279
      %1281 = vmatmul.bf16.gmra.mxu0 %v961
      %v1282 = vpop.f32.mrf.mxu0
      %v1283 = vadd.f32 0.0, %v1282
      %v1284 = vpop.f32.mrf.mxu0
      %v1285 = vadd.f32 0.0, %v1284
      %1286 = vmatmul.bf16.gmra.mxu0 %v963
      %v1287 = vpop.f32.mrf.mxu0
      %v1288 = vadd.f32 0.0, %v1287
      %v1289 = vpop.f32.mrf.mxu0
      %v1290 = vadd.f32 0.0, %v1289
      %1291 = vmatmul.bf16.gmra.mxu0 %v965
      %v1292 = vpop.f32.mrf.mxu0
      %v1293 = vadd.f32 0.0, %v1292
      %v1294 = vpop.f32.mrf.mxu0
      %v1295 = vadd.f32 0.0, %v1294
      %1296 = vmatmul.bf16.gmra.mxu0 %v967
      %v1297 = vpop.f32.mrf.mxu0
      %v1298 = vadd.f32 0.0, %v1297
      %v1299 = vpop.f32.mrf.mxu0
      %v1300 = vadd.f32 0.0, %v1299
      %1301 = vmatmul.bf16.gmra.mxu0 %v969
      %v1302 = vpop.f32.mrf.mxu0
      %v1303 = vadd.f32 0.0, %v1302
      %v1304 = vpop.f32.mrf.mxu0
      %v1305 = vadd.f32 0.0, %v1304
      %1306 = vmatmul.bf16.gmra.mxu0 %v971
      %v1307 = vpop.f32.mrf.mxu0
      %v1308 = vadd.f32 0.0, %v1307
      %v1309 = vpop.f32.mrf.mxu0
      %v1310 = vadd.f32 0.0, %v1309
      %1311 = vmatmul.bf16.gmra.mxu0 %v973
      %v1312 = vpop.f32.mrf.mxu0
      %v1313 = vadd.f32 0.0, %v1312
      %v1314 = vpop.f32.mrf.mxu0
      %v1315 = vadd.f32 0.0, %v1314
      %1316 = vmatmul.bf16.gmra.mxu0 %v975
      %v1317 = vpop.f32.mrf.mxu0
      %v1318 = vadd.f32 0.0, %v1317
      %v1319 = vpop.f32.mrf.mxu0
      %v1320 = vadd.f32 0.0, %v1319
      %1321 = vmatmul.bf16.gmra.mxu0 %v977
      %v1322 = vpop.f32.mrf.mxu0
      %v1323 = vadd.f32 0.0, %v1322
      %v1324 = vpop.f32.mrf.mxu0
      %v1325 = vadd.f32 0.0, %v1324
      %1326 = vmatmul.bf16.gmra.mxu0 %v979
      %v1327 = vpop.f32.mrf.mxu0
      %v1328 = vadd.f32 0.0, %v1327
      %v1329 = vpop.f32.mrf.mxu0
      %v1330 = vadd.f32 0.0, %v1329
      %1331 = vmatmul.bf16.gmra.mxu0 %v981
      %v1332 = vpop.f32.mrf.mxu0
      %v1333 = vadd.f32 0.0, %v1332
      %v1334 = vpop.f32.mrf.mxu0
      %v1335 = vadd.f32 0.0, %v1334
      %1336 = vmatmul.bf16.gmra.mxu0 %v983
      %v1337 = vpop.f32.mrf.mxu0
      %v1338 = vadd.f32 0.0, %v1337
      %v1339 = vpop.f32.mrf.mxu0
      %v1340 = vadd.f32 0.0, %v1339
      %1341 = vmatmul.bf16.gmra.mxu0 %v985
      %v1342 = vpop.f32.mrf.mxu0
      %v1343 = vadd.f32 0.0, %v1342
      %v1344 = vpop.f32.mrf.mxu0
      %v1345 = vadd.f32 0.0, %v1344
      %1346 = vmatmul.bf16.gmra.mxu0 %v987
      %v1347 = vpop.f32.mrf.mxu0
      %v1348 = vadd.f32 0.0, %v1347
      %v1349 = vpop.f32.mrf.mxu0
      %v1350 = vadd.f32 0.0, %v1349
      %1351 = vmatmul.bf16.gmra.mxu0 %v989
      %v1352 = vpop.f32.mrf.mxu0
      %v1353 = vadd.f32 0.0, %v1352
      %v1354 = vpop.f32.mrf.mxu0
      %v1355 = vadd.f32 0.0, %v1354
      %1356 = vmatmul.bf16.gmra.mxu0 %v1215
      %v1357 = vpop.f32.mrf.mxu0
      %v1358 = vadd.f32 0.0, %v1357
      %v1359 = vpop.f32.mrf.mxu0
      %v1360 = vadd.f32 0.0, %v1359
      %1361 = vmatmul.bf16.gmra.mxu0 %v1217
      %v1362 = vpop.f32.mrf.mxu0
      %v1363 = vadd.f32 0.0, %v1362
      %v1364 = vpop.f32.mrf.mxu0
      %v1365 = vadd.f32 0.0, %v1364
      %1366 = vdwg.mxu0
      %v1367 = vadd.f32 %v1157, %v1278
      %v1368 = vadd.f32 %v1158, %v1280
      %v1369 = vadd.f32 %v1159, %v1283
      %v1370 = vadd.f32 %v1160, %v1285
      %v1371 = vadd.f32 %v1161, %v1288
      %v1372 = vadd.f32 %v1162, %v1290
      %v1373 = vadd.f32 %v1163, %v1293
      %v1374 = vadd.f32 %v1164, %v1295
      %v1375 = vadd.f32 %v1165, %v1298
      %v1376 = vadd.f32 %v1166, %v1300
      %v1377 = vadd.f32 %v1167, %v1303
      %v1378 = vadd.f32 %v1168, %v1305
      %v1379 = vadd.f32 %v1169, %v1308
      %v1380 = vadd.f32 %v1170, %v1310
      %v1381 = vadd.f32 %v1171, %v1313
      %v1382 = vadd.f32 %v1172, %v1315
      %v1383 = vadd.f32 %v1173, %v1318
      %v1384 = vadd.f32 %v1174, %v1320
      %v1385 = vadd.f32 %v1175, %v1323
      %v1386 = vadd.f32 %v1176, %v1325
      %v1387 = vadd.f32 %v1177, %v1328
      %v1388 = vadd.f32 %v1178, %v1330
      %v1389 = vadd.f32 %v1179, %v1333
      %v1390 = vadd.f32 %v1180, %v1335
      %v1391 = vadd.f32 %v1181, %v1338
      %v1392 = vadd.f32 %v1182, %v1340
      %v1393 = vadd.f32 %v1183, %v1343
      %v1394 = vadd.f32 %v1184, %v1345
      %v1395 = vadd.f32 %v1185, %v1348
      %v1396 = vadd.f32 %v1186, %v1350
      %v1397 = vadd.f32 %v1187, %v1353
      %v1398 = vadd.f32 %v1188, %v1355
      %v1399 = vadd.f32 %v1189, %v1358
      %v1400 = vadd.f32 %v1190, %v1360
      %v1401 = vadd.f32 %v1191, %v1363
      %v1402 = vadd.f32 %v1192, %v1365
      %s1403 = scalar_lea.vmem %s1, 256
      %v1404 = vld [vmem:[%s1403] sm:$0xf]
      %v1405 = vld [vmem:[%s1403 + $0x4] sm:$0xf]
      %v1406 = vld [vmem:[%s1403 + $0x8] sm:$0xf]
      %v1407 = vld [vmem:[%s1403 + $0xc] sm:$0xf]
      %v1408 = vld [vmem:[%s1403 + $0x10] sm:$0xf]
      %v1409 = vld [vmem:[%s1403 + $0x14] sm:$0xf]
      %v1410 = vld [vmem:[%s1403 + $0x18] sm:$0xf]
      %v1411 = vld [vmem:[%s1403 + $0x1c] sm:$0xf]
      %v1412 = vld [vmem:[%s1403 + $0x20] sm:$0xf]
      %v1413 = vld [vmem:[%s1403 + $0x24] sm:$0xf]
      %v1414 = vld [vmem:[%s1403 + $0x28] sm:$0xf]
      %v1415 = vld [vmem:[%s1403 + $0x2c] sm:$0xf]
      %v1416 = vld [vmem:[%s1403 + $0x30] sm:$0xf]
      %v1417 = vld [vmem:[%s1403 + $0x34] sm:$0xf]
      %v1418 = vld [vmem:[%s1403 + $0x38] sm:$0xf]
      %v1419 = vld [vmem:[%s1403 + $0x3c] sm:$0xf]
      %vm1420 = vsmask.f32 4352
      %v1421 = vrot.slane %v389, 3
      %v1422 = vrot.slane %v392, 4
      %v1423 = vor.u32 %v1421, %v1422
      %v1424 = vrot.slane %v398, 3
      %v1425 = vrot.slane %v401, 4
      %v1426 = vor.u32 %v1424, %v1425
      %v1427 = vsel %vm1420, %v1423, %v1426
      %v1428 = vrot.slane %v407, 3
      %v1429 = vrot.slane %v410, 4
      %v1430 = vor.u32 %v1428, %v1429
      %v1431 = vsel %vm1420, %v1426, %v1430
      %v1432 = vrot.slane %v416, 3
      %v1433 = vrot.slane %v419, 4
      %v1434 = vor.u32 %v1432, %v1433
      %v1435 = vsel %vm1420, %v1430, %v1434
      %v1436 = vrot.slane %v425, 3
      %v1437 = vrot.slane %v428, 4
      %v1438 = vor.u32 %v1436, %v1437
      %v1439 = vsel %vm1420, %v1434, %v1438
      %v1440 = vrot.slane %v434, 3
      %v1441 = vrot.slane %v437, 4
      %v1442 = vor.u32 %v1440, %v1441
      %v1443 = vsel %vm1420, %v1438, %v1442
      %v1444 = vrot.slane %v443, 3
      %v1445 = vrot.slane %v446, 4
      %v1446 = vor.u32 %v1444, %v1445
      %v1447 = vsel %vm1420, %v1442, %v1446
      %v1448 = vrot.slane %v452, 3
      %v1449 = vrot.slane %v455, 4
      %v1450 = vor.u32 %v1448, %v1449
      %v1451 = vsel %vm1420, %v1446, %v1450
      %v1452 = vrot.slane %v461, 3
      %v1453 = vrot.slane %v464, 4
      %v1454 = vor.u32 %v1452, %v1453
      %v1455 = vsel %vm1420, %v1450, %v1454
      %v1456 = vrot.slane %v470, 3
      %v1457 = vrot.slane %v473, 4
      %v1458 = vor.u32 %v1456, %v1457
      %v1459 = vsel %vm1420, %v1454, %v1458
      %v1460 = vrot.slane %v479, 3
      %v1461 = vrot.slane %v482, 4
      %v1462 = vor.u32 %v1460, %v1461
      %v1463 = vsel %vm1420, %v1458, %v1462
      %v1464 = vrot.slane %v488, 3
      %v1465 = vrot.slane %v491, 4
      %v1466 = vor.u32 %v1464, %v1465
      %v1467 = vsel %vm1420, %v1462, %v1466
      %v1468 = vrot.slane %v497, 3
      %v1469 = vrot.slane %v500, 4
      %v1470 = vor.u32 %v1468, %v1469
      %v1471 = vsel %vm1420, %v1466, %v1470
      %v1472 = vrot.slane %v506, 3
      %v1473 = vrot.slane %v509, 4
      %v1474 = vor.u32 %v1472, %v1473
      %v1475 = vsel %vm1420, %v1470, %v1474
      %v1476 = vrot.slane %v515, 3
      %v1477 = vrot.slane %v518, 4
      %v1478 = vor.u32 %v1476, %v1477
      %v1479 = vsel %vm1420, %v1474, %v1478
      %v1480 = vrot.slane %v524, 3
      %v1481 = vrot.slane %v527, 4
      %v1482 = vor.u32 %v1480, %v1481
      %v1483 = vsel %vm1420, %v1478, %v1482
      %v1484 = vrot.slane %v533, 3
      %v1485 = vrot.slane %v536, 4
      %v1486 = vor.u32 %v1484, %v1485
      %v1487 = vsel %vm1420, %v1482, %v1486
      %v1489 = vshrl.u32 %v1193, 16
      %v1491 = vrot.slane %v1489, 3
      %v1492 = vshll.u32 %v1193, 16
      %v1494 = vrot.slane %v1492, 4
      %v1495 = vor.u32 %v1491, %v1494
      %v1496 = vsel %vm1420, %v1486, %v1495
      %v1498 = vshrl.u32 %v1194, 16
      %v1500 = vrot.slane %v1498, 3
      %v1501 = vshll.u32 %v1194, 16
      %v1503 = vrot.slane %v1501, 4
      %v1504 = vor.u32 %v1500, %v1503
      %v1505 = vsel %vm1420, %v1495, %v1504
      %v1540 = vunpack.c.l.b16 %v1404
      %v1541 = vunpack.c.l.b16 %v1405
      %v1542 = vunpack.c.l.b16 %v1406
      %v1543 = vunpack.c.l.b16 %v1407
      %v1544 = vunpack.c.l.b16 %v1408
      %v1545 = vunpack.c.l.b16 %v1409
      %v1546 = vunpack.c.l.b16 %v1410
      %v1547 = vunpack.c.l.b16 %v1411
      %v1548 = vunpack.c.l.b16 %v1412
      %v1549 = vunpack.c.l.b16 %v1413
      %v1550 = vunpack.c.l.b16 %v1414
      %v1551 = vunpack.c.l.b16 %v1415
      %v1552 = vunpack.c.l.b16 %v1416
      %v1553 = vunpack.c.l.b16 %v1417
      %v1554 = vunpack.c.l.b16 %v1418
      %v1555 = vunpack.c.l.b16 %v1419
      %v1556 = vpack.c.b16 %v1541, %v1540
      %v1557 = vpack.c.b16 %v1543, %v1542
      %v1558 = vpack.c.b16 %v1545, %v1544
      %v1559 = vpack.c.b16 %v1547, %v1546
      %v1560 = vpack.c.b16 %v1549, %v1548
      %v1561 = vpack.c.b16 %v1551, %v1550
      %v1562 = vpack.c.b16 %v1553, %v1552
      %v1563 = vpack.c.b16 %v1555, %v1554
      %1572 = vmatpush.bf16.msra.mxu0 %v1563
      %1573 = vmatpush.bf16.msra.mxu0 %v1562
      %1574 = vmatpush.bf16.msra.mxu0 %v1561
      %1575 = vmatpush.bf16.msra.mxu0 %v1560
      %1576 = vmatpush.bf16.msra.mxu0 %v1559
      %1577 = vmatpush.bf16.msra.mxu0 %v1558
      %1578 = vmatpush.bf16.msra.mxu0 %v1557
      %1579 = vmatpush.bf16.msra.mxu0 %v1556
      %1580 = vmatmul.bf16.gmra.mxu0 %v1427
      %v1581 = vpop.f32.mrf.mxu0
      %v1582 = vadd.f32 0.0, %v1581
      %v1583 = vpop.f32.mrf.mxu0
      %v1584 = vadd.f32 0.0, %v1583
      %1585 = vmatmul.bf16.gmra.mxu0 %v1431
      %v1586 = vpop.f32.mrf.mxu0
      %v1587 = vadd.f32 0.0, %v1586
      %v1588 = vpop.f32.mrf.mxu0
      %v1589 = vadd.f32 0.0, %v1588
      %1590 = vmatmul.bf16.gmra.mxu0 %v1435
      %v1591 = vpop.f32.mrf.mxu0
      %v1592 = vadd.f32 0.0, %v1591
      %v1593 = vpop.f32.mrf.mxu0
      %v1594 = vadd.f32 0.0, %v1593
      %1595 = vmatmul.bf16.gmra.mxu0 %v1439
      %v1596 = vpop.f32.mrf.mxu0
      %v1597 = vadd.f32 0.0, %v1596
      %v1598 = vpop.f32.mrf.mxu0
      %v1599 = vadd.f32 0.0, %v1598
      %1600 = vmatmul.bf16.gmra.mxu0 %v1443
      %v1601 = vpop.f32.mrf.mxu0
      %v1602 = vadd.f32 0.0, %v1601
      %v1603 = vpop.f32.mrf.mxu0
      %v1604 = vadd.f32 0.0, %v1603
      %1605 = vmatmul.bf16.gmra.mxu0 %v1447
      %v1606 = vpop.f32.mrf.mxu0
      %v1607 = vadd.f32 0.0, %v1606
      %v1608 = vpop.f32.mrf.mxu0
      %v1609 = vadd.f32 0.0, %v1608
      %1610 = vmatmul.bf16.gmra.mxu0 %v1451
      %v1611 = vpop.f32.mrf.mxu0
      %v1612 = vadd.f32 0.0, %v1611
      %v1613 = vpop.f32.mrf.mxu0
      %v1614 = vadd.f32 0.0, %v1613
      %1615 = vmatmul.bf16.gmra.mxu0 %v1455
      %v1616 = vpop.f32.mrf.mxu0
      %v1617 = vadd.f32 0.0, %v1616
      %v1618 = vpop.f32.mrf.mxu0
      %v1619 = vadd.f32 0.0, %v1618
      %1620 = vmatmul.bf16.gmra.mxu0 %v1459
      %v1621 = vpop.f32.mrf.mxu0
      %v1622 = vadd.f32 0.0, %v1621
      %v1623 = vpop.f32.mrf.mxu0
      %v1624 = vadd.f32 0.0, %v1623
      %1625 = vmatmul.bf16.gmra.mxu0 %v1463
      %v1626 = vpop.f32.mrf.mxu0
      %v1627 = vadd.f32 0.0, %v1626
      %v1628 = vpop.f32.mrf.mxu0
      %v1629 = vadd.f32 0.0, %v1628
      %1630 = vmatmul.bf16.gmra.mxu0 %v1467
      %v1631 = vpop.f32.mrf.mxu0
      %v1632 = vadd.f32 0.0, %v1631
      %v1633 = vpop.f32.mrf.mxu0
      %v1634 = vadd.f32 0.0, %v1633
      %1635 = vmatmul.bf16.gmra.mxu0 %v1471
      %v1636 = vpop.f32.mrf.mxu0
      %v1637 = vadd.f32 0.0, %v1636
      %v1638 = vpop.f32.mrf.mxu0
      %v1639 = vadd.f32 0.0, %v1638
      %1640 = vmatmul.bf16.gmra.mxu0 %v1475
      %v1641 = vpop.f32.mrf.mxu0
      %v1642 = vadd.f32 0.0, %v1641
      %v1643 = vpop.f32.mrf.mxu0
      %v1644 = vadd.f32 0.0, %v1643
      %1645 = vmatmul.bf16.gmra.mxu0 %v1479
      %v1646 = vpop.f32.mrf.mxu0
      %v1647 = vadd.f32 0.0, %v1646
      %v1648 = vpop.f32.mrf.mxu0
      %v1649 = vadd.f32 0.0, %v1648
      %1650 = vmatmul.bf16.gmra.mxu0 %v1483
      %v1651 = vpop.f32.mrf.mxu0
      %v1652 = vadd.f32 0.0, %v1651
      %v1653 = vpop.f32.mrf.mxu0
      %v1654 = vadd.f32 0.0, %v1653
      %1655 = vmatmul.bf16.gmra.mxu0 %v1487
      %v1656 = vpop.f32.mrf.mxu0
      %v1657 = vadd.f32 0.0, %v1656
      %v1658 = vpop.f32.mrf.mxu0
      %v1659 = vadd.f32 0.0, %v1658
      %1660 = vmatmul.bf16.gmra.mxu0 %v1496
      %v1661 = vpop.f32.mrf.mxu0
      %v1662 = vadd.f32 0.0, %v1661
      %v1663 = vpop.f32.mrf.mxu0
      %v1664 = vadd.f32 0.0, %v1663
      %1665 = vmatmul.bf16.gmra.mxu0 %v1505
      %v1666 = vpop.f32.mrf.mxu0
      %v1667 = vadd.f32 0.0, %v1666
      %v1668 = vpop.f32.mrf.mxu0
      %v1669 = vadd.f32 0.0, %v1668
      %1670 = vdwg.mxu0
      %v1671 = vadd.f32 %v1367, %v1582
      %v1672 = vadd.f32 %v1368, %v1584
      %v1673 = vadd.f32 %v1369, %v1587
      %v1674 = vadd.f32 %v1370, %v1589
      %v1675 = vadd.f32 %v1371, %v1592
      %v1676 = vadd.f32 %v1372, %v1594
      %v1677 = vadd.f32 %v1373, %v1597
      %v1678 = vadd.f32 %v1374, %v1599
      %v1679 = vadd.f32 %v1375, %v1602
      %v1680 = vadd.f32 %v1376, %v1604
      %v1681 = vadd.f32 %v1377, %v1607
      %v1682 = vadd.f32 %v1378, %v1609
      %v1683 = vadd.f32 %v1379, %v1612
      %v1684 = vadd.f32 %v1380, %v1614
      %v1685 = vadd.f32 %v1381, %v1617
      %v1686 = vadd.f32 %v1382, %v1619
      %v1687 = vadd.f32 %v1383, %v1622
      %v1688 = vadd.f32 %v1384, %v1624
      %v1689 = vadd.f32 %v1385, %v1627
      %v1690 = vadd.f32 %v1386, %v1629
      %v1691 = vadd.f32 %v1387, %v1632
      %v1692 = vadd.f32 %v1388, %v1634
      %v1693 = vadd.f32 %v1389, %v1637
      %v1694 = vadd.f32 %v1390, %v1639
      %v1695 = vadd.f32 %v1391, %v1642
      %v1696 = vadd.f32 %v1392, %v1644
      %v1697 = vadd.f32 %v1393, %v1647
      %v1698 = vadd.f32 %v1394, %v1649
      %v1699 = vadd.f32 %v1395, %v1652
      %v1700 = vadd.f32 %v1396, %v1654
      %v1701 = vadd.f32 %v1397, %v1657
      %v1702 = vadd.f32 %v1398, %v1659
      %v1703 = vadd.f32 %v1399, %v1662
      %v1704 = vadd.f32 %v1400, %v1664
      %v1705 = vadd.f32 %v1401, %v1667
      %v1706 = vadd.f32 %v1402, %v1669
      %v1707 = vpack.c.bf16 %v289, %v288
      %v1708 = vpack.c.bf16 %v291, %v290
      %v1709 = vpack.c.bf16 %v293, %v292
      %v1710 = vpack.c.bf16 %v295, %v294
      %v1711 = vpack.c.bf16 %v297, %v296
      %v1712 = vpack.c.bf16 %v299, %v298
      %v1713 = vpack.c.bf16 %v301, %v300
      %v1714 = vpack.c.bf16 %v303, %v302
      %v1715 = vpack.c.bf16 %v305, %v304
      %v1716 = vpack.c.bf16 %v307, %v306
      %v1717 = vpack.c.bf16 %v309, %v308
      %v1718 = vpack.c.bf16 %v311, %v310
      %v1719 = vpack.c.bf16 %v313, %v312
      %v1720 = vpack.c.bf16 %v315, %v314
      %v1721 = vpack.c.bf16 %v317, %v316
      %v1722 = vpack.c.bf16 %v319, %v318
      %v1723 = vpack.c.bf16 %v321, %v320
      %v1724 = vpack.c.bf16 %v323, %v322
      %s1725 = scalar_lea.vmem %s1, 320
      %v1726 = vld [vmem:[%s1725] sm:$0xf]
      %v1727 = vld [vmem:[%s1725 + $0x4] sm:$0xf]
      %v1728 = vld [vmem:[%s1725 + $0x8] sm:$0xf]
      %v1729 = vld [vmem:[%s1725 + $0xc] sm:$0xf]
      %v1730 = vld [vmem:[%s1725 + $0x10] sm:$0xf]
      %v1731 = vld [vmem:[%s1725 + $0x14] sm:$0xf]
      %v1732 = vld [vmem:[%s1725 + $0x18] sm:$0xf]
      %v1733 = vld [vmem:[%s1725 + $0x1c] sm:$0xf]
      %v1734 = vld [vmem:[%s1725 + $0x20] sm:$0xf]
      %v1735 = vld [vmem:[%s1725 + $0x24] sm:$0xf]
      %v1736 = vld [vmem:[%s1725 + $0x28] sm:$0xf]
      %v1737 = vld [vmem:[%s1725 + $0x2c] sm:$0xf]
      %v1738 = vld [vmem:[%s1725 + $0x30] sm:$0xf]
      %v1739 = vld [vmem:[%s1725 + $0x34] sm:$0xf]
      %v1740 = vld [vmem:[%s1725 + $0x38] sm:$0xf]
      %v1741 = vld [vmem:[%s1725 + $0x3c] sm:$0xf]
      %v1758 = vunpack.c.l.b16 %v1726
      %v1759 = vunpack.c.l.b16 %v1727
      %v1760 = vunpack.c.l.b16 %v1728
      %v1761 = vunpack.c.l.b16 %v1729
      %v1762 = vunpack.c.l.b16 %v1730
      %v1763 = vunpack.c.l.b16 %v1731
      %v1764 = vunpack.c.l.b16 %v1732
      %v1765 = vunpack.c.l.b16 %v1733
      %v1766 = vunpack.c.l.b16 %v1734
      %v1767 = vunpack.c.l.b16 %v1735
      %v1768 = vunpack.c.l.b16 %v1736
      %v1769 = vunpack.c.l.b16 %v1737
      %v1770 = vunpack.c.l.b16 %v1738
      %v1771 = vunpack.c.l.b16 %v1739
      %v1772 = vunpack.c.l.b16 %v1740
      %v1773 = vunpack.c.l.b16 %v1741
      %v1774 = vpack.c.b16 %v1759, %v1758
      %v1775 = vpack.c.b16 %v1761, %v1760
      %v1776 = vpack.c.b16 %v1763, %v1762
      %v1777 = vpack.c.b16 %v1765, %v1764
      %v1778 = vpack.c.b16 %v1767, %v1766
      %v1779 = vpack.c.b16 %v1769, %v1768
      %v1780 = vpack.c.b16 %v1771, %v1770
      %v1781 = vpack.c.b16 %v1773, %v1772
      %1790 = vmatpush.bf16.msra.mxu0 %v1781
      %1791 = vmatpush.bf16.msra.mxu0 %v1780
      %1792 = vmatpush.bf16.msra.mxu0 %v1779
      %1793 = vmatpush.bf16.msra.mxu0 %v1778
      %1794 = vmatpush.bf16.msra.mxu0 %v1777
      %1795 = vmatpush.bf16.msra.mxu0 %v1776
      %1796 = vmatpush.bf16.msra.mxu0 %v1775
      %1797 = vmatpush.bf16.msra.mxu0 %v1774
      %1798 = vmatmul.bf16.gmra.mxu0 %v1707
      %v1799 = vpop.f32.mrf.mxu0
      %v1800 = vadd.f32 0.0, %v1799
      %v1801 = vpop.f32.mrf.mxu0
      %v1802 = vadd.f32 0.0, %v1801
      %1803 = vmatmul.bf16.gmra.mxu0 %v1708
      %v1804 = vpop.f32.mrf.mxu0
      %v1805 = vadd.f32 0.0, %v1804
      %v1806 = vpop.f32.mrf.mxu0
      %v1807 = vadd.f32 0.0, %v1806
      %1808 = vmatmul.bf16.gmra.mxu0 %v1709
      %v1809 = vpop.f32.mrf.mxu0
      %v1810 = vadd.f32 0.0, %v1809
      %v1811 = vpop.f32.mrf.mxu0
      %v1812 = vadd.f32 0.0, %v1811
      %1813 = vmatmul.bf16.gmra.mxu0 %v1710
      %v1814 = vpop.f32.mrf.mxu0
      %v1815 = vadd.f32 0.0, %v1814
      %v1816 = vpop.f32.mrf.mxu0
      %v1817 = vadd.f32 0.0, %v1816
      %1818 = vmatmul.bf16.gmra.mxu0 %v1711
      %v1819 = vpop.f32.mrf.mxu0
      %v1820 = vadd.f32 0.0, %v1819
      %v1821 = vpop.f32.mrf.mxu0
      %v1822 = vadd.f32 0.0, %v1821
      %1823 = vmatmul.bf16.gmra.mxu0 %v1712
      %v1824 = vpop.f32.mrf.mxu0
      %v1825 = vadd.f32 0.0, %v1824
      %v1826 = vpop.f32.mrf.mxu0
      %v1827 = vadd.f32 0.0, %v1826
      %1828 = vmatmul.bf16.gmra.mxu0 %v1713
      %v1829 = vpop.f32.mrf.mxu0
      %v1830 = vadd.f32 0.0, %v1829
      %v1831 = vpop.f32.mrf.mxu0
      %v1832 = vadd.f32 0.0, %v1831
      %1833 = vmatmul.bf16.gmra.mxu0 %v1714
      %v1834 = vpop.f32.mrf.mxu0
      %v1835 = vadd.f32 0.0, %v1834
      %v1836 = vpop.f32.mrf.mxu0
      %v1837 = vadd.f32 0.0, %v1836
      %1838 = vmatmul.bf16.gmra.mxu0 %v1715
      %v1839 = vpop.f32.mrf.mxu0
      %v1840 = vadd.f32 0.0, %v1839
      %v1841 = vpop.f32.mrf.mxu0
      %v1842 = vadd.f32 0.0, %v1841
      %1843 = vmatmul.bf16.gmra.mxu0 %v1716
      %v1844 = vpop.f32.mrf.mxu0
      %v1845 = vadd.f32 0.0, %v1844
      %v1846 = vpop.f32.mrf.mxu0
      %v1847 = vadd.f32 0.0, %v1846
      %1848 = vmatmul.bf16.gmra.mxu0 %v1717
      %v1849 = vpop.f32.mrf.mxu0
      %v1850 = vadd.f32 0.0, %v1849
      %v1851 = vpop.f32.mrf.mxu0
      %v1852 = vadd.f32 0.0, %v1851
      %1853 = vmatmul.bf16.gmra.mxu0 %v1718
      %v1854 = vpop.f32.mrf.mxu0
      %v1855 = vadd.f32 0.0, %v1854
      %v1856 = vpop.f32.mrf.mxu0
      %v1857 = vadd.f32 0.0, %v1856
      %1858 = vmatmul.bf16.gmra.mxu0 %v1719
      %v1859 = vpop.f32.mrf.mxu0
      %v1860 = vadd.f32 0.0, %v1859
      %v1861 = vpop.f32.mrf.mxu0
      %v1862 = vadd.f32 0.0, %v1861
      %1863 = vmatmul.bf16.gmra.mxu0 %v1720
      %v1864 = vpop.f32.mrf.mxu0
      %v1865 = vadd.f32 0.0, %v1864
      %v1866 = vpop.f32.mrf.mxu0
      %v1867 = vadd.f32 0.0, %v1866
      %1868 = vmatmul.bf16.gmra.mxu0 %v1721
      %v1869 = vpop.f32.mrf.mxu0
      %v1870 = vadd.f32 0.0, %v1869
      %v1871 = vpop.f32.mrf.mxu0
      %v1872 = vadd.f32 0.0, %v1871
      %1873 = vmatmul.bf16.gmra.mxu0 %v1722
      %v1874 = vpop.f32.mrf.mxu0
      %v1875 = vadd.f32 0.0, %v1874
      %v1876 = vpop.f32.mrf.mxu0
      %v1877 = vadd.f32 0.0, %v1876
      %1878 = vmatmul.bf16.gmra.mxu0 %v1723
      %v1879 = vpop.f32.mrf.mxu0
      %v1880 = vadd.f32 0.0, %v1879
      %v1881 = vpop.f32.mrf.mxu0
      %v1882 = vadd.f32 0.0, %v1881
      %1883 = vmatmul.bf16.gmra.mxu0 %v1724
      %v1884 = vpop.f32.mrf.mxu0
      %v1885 = vadd.f32 0.0, %v1884
      %v1886 = vpop.f32.mrf.mxu0
      %v1887 = vadd.f32 0.0, %v1886
      %1888 = vdwg.mxu0
      %v1889 = vadd.f32 %v1671, %v1800
      %v1890 = vadd.f32 %v1672, %v1802
      %v1891 = vadd.f32 %v1673, %v1805
      %v1892 = vadd.f32 %v1674, %v1807
      %v1893 = vadd.f32 %v1675, %v1810
      %v1894 = vadd.f32 %v1676, %v1812
      %v1895 = vadd.f32 %v1677, %v1815
      %v1896 = vadd.f32 %v1678, %v1817
      %v1897 = vadd.f32 %v1679, %v1820
      %v1898 = vadd.f32 %v1680, %v1822
      %v1899 = vadd.f32 %v1681, %v1825
      %v1900 = vadd.f32 %v1682, %v1827
      %v1901 = vadd.f32 %v1683, %v1830
      %v1902 = vadd.f32 %v1684, %v1832
      %v1903 = vadd.f32 %v1685, %v1835
      %v1904 = vadd.f32 %v1686, %v1837
      %v1905 = vadd.f32 %v1687, %v1840
      %v1906 = vadd.f32 %v1688, %v1842
      %v1907 = vadd.f32 %v1689, %v1845
      %v1908 = vadd.f32 %v1690, %v1847
      %v1909 = vadd.f32 %v1691, %v1850
      %v1910 = vadd.f32 %v1692, %v1852
      %v1911 = vadd.f32 %v1693, %v1855
      %v1912 = vadd.f32 %v1694, %v1857
      %v1913 = vadd.f32 %v1695, %v1860
      %v1914 = vadd.f32 %v1696, %v1862
      %v1915 = vadd.f32 %v1697, %v1865
      %v1916 = vadd.f32 %v1698, %v1867
      %v1917 = vadd.f32 %v1699, %v1870
      %v1918 = vadd.f32 %v1700, %v1872
      %v1919 = vadd.f32 %v1701, %v1875
      %v1920 = vadd.f32 %v1702, %v1877
      %v1921 = vadd.f32 %v1703, %v1880
      %v1922 = vadd.f32 %v1704, %v1882
      %v1923 = vadd.f32 %v1705, %v1885
      %v1924 = vadd.f32 %v1706, %v1887
      %v1925 = vpack.c.bf16 %v325, %v324
      %s1926 = scalar_lea.vmem %s1, 384
      %v1927 = vld [vmem:[%s1926] sm:$0xf]
      %v1928 = vld [vmem:[%s1926 + $0x4] sm:$0xf]
      %v1929 = vld [vmem:[%s1926 + $0x8] sm:$0xf]
      %v1930 = vld [vmem:[%s1926 + $0xc] sm:$0xf]
      %v1931 = vld [vmem:[%s1926 + $0x10] sm:$0xf]
      %v1932 = vld [vmem:[%s1926 + $0x14] sm:$0xf]
      %v1933 = vld [vmem:[%s1926 + $0x18] sm:$0xf]
      %v1934 = vld [vmem:[%s1926 + $0x1c] sm:$0xf]
      %v1935 = vld [vmem:[%s1926 + $0x20] sm:$0xf]
      %v1936 = vld [vmem:[%s1926 + $0x24] sm:$0xf]
      %v1937 = vld [vmem:[%s1926 + $0x28] sm:$0xf]
      %v1938 = vld [vmem:[%s1926 + $0x2c] sm:$0xf]
      %v1939 = vld [vmem:[%s1926 + $0x30] sm:$0xf]
      %v1940 = vld [vmem:[%s1926 + $0x34] sm:$0xf]
      %v1941 = vld [vmem:[%s1926 + $0x38] sm:$0xf]
      %v1942 = vld [vmem:[%s1926 + $0x3c] sm:$0xf]
      %v1959 = vunpack.c.l.b16 %v1927
      %v1960 = vunpack.c.l.b16 %v1928
      %v1961 = vunpack.c.l.b16 %v1929
      %v1962 = vunpack.c.l.b16 %v1930
      %v1963 = vunpack.c.l.b16 %v1931
      %v1964 = vunpack.c.l.b16 %v1932
      %v1965 = vunpack.c.l.b16 %v1933
      %v1966 = vunpack.c.l.b16 %v1934
      %v1967 = vunpack.c.l.b16 %v1935
      %v1968 = vunpack.c.l.b16 %v1936
      %v1969 = vunpack.c.l.b16 %v1937
      %v1970 = vunpack.c.l.b16 %v1938
      %v1971 = vunpack.c.l.b16 %v1939
      %v1972 = vunpack.c.l.b16 %v1940
      %v1973 = vunpack.c.l.b16 %v1941
      %v1974 = vunpack.c.l.b16 %v1942
      %v1975 = vpack.c.b16 %v1960, %v1959
      %v1976 = vpack.c.b16 %v1962, %v1961
      %v1977 = vpack.c.b16 %v1964, %v1963
      %v1978 = vpack.c.b16 %v1966, %v1965
      %v1979 = vpack.c.b16 %v1968, %v1967
      %v1980 = vpack.c.b16 %v1970, %v1969
      %v1981 = vpack.c.b16 %v1972, %v1971
      %v1982 = vpack.c.b16 %v1974, %v1973
      %1991 = vmatpush.bf16.msra.mxu0 %v1982
      %1992 = vmatpush.bf16.msra.mxu0 %v1981
      %1993 = vmatpush.bf16.msra.mxu0 %v1980
      %1994 = vmatpush.bf16.msra.mxu0 %v1979
      %1995 = vmatpush.bf16.msra.mxu0 %v1978
      %1996 = vmatpush.bf16.msra.mxu0 %v1977
      %1997 = vmatpush.bf16.msra.mxu0 %v1976
      %1998 = vmatpush.bf16.msra.mxu0 %v1975
      %1999 = vmatmul.bf16.gmra.mxu0 %v1708
      %v2000 = vpop.f32.mrf.mxu0
      %v2001 = vadd.f32 0.0, %v2000
      %v2002 = vpop.f32.mrf.mxu0
      %v2003 = vadd.f32 0.0, %v2002
      %2004 = vmatmul.bf16.gmra.mxu0 %v1709
      %v2005 = vpop.f32.mrf.mxu0
      %v2006 = vadd.f32 0.0, %v2005
      %v2007 = vpop.f32.mrf.mxu0
      %v2008 = vadd.f32 0.0, %v2007
      %2009 = vmatmul.bf16.gmra.mxu0 %v1710
      %v2010 = vpop.f32.mrf.mxu0
      %v2011 = vadd.f32 0.0, %v2010
      %v2012 = vpop.f32.mrf.mxu0
      %v2013 = vadd.f32 0.0, %v2012
      %2014 = vmatmul.bf16.gmra.mxu0 %v1711
      %v2015 = vpop.f32.mrf.mxu0
      %v2016 = vadd.f32 0.0, %v2015
      %v2017 = vpop.f32.mrf.mxu0
      %v2018 = vadd.f32 0.0, %v2017
      %2019 = vmatmul.bf16.gmra.mxu0 %v1712
      %v2020 = vpop.f32.mrf.mxu0
      %v2021 = vadd.f32 0.0, %v2020
      %v2022 = vpop.f32.mrf.mxu0
      %v2023 = vadd.f32 0.0, %v2022
      %2024 = vmatmul.bf16.gmra.mxu0 %v1713
      %v2025 = vpop.f32.mrf.mxu0
      %v2026 = vadd.f32 0.0, %v2025
      %v2027 = vpop.f32.mrf.mxu0
      %v2028 = vadd.f32 0.0, %v2027
      %2029 = vmatmul.bf16.gmra.mxu0 %v1714
      %v2030 = vpop.f32.mrf.mxu0
      %v2031 = vadd.f32 0.0, %v2030
      %v2032 = vpop.f32.mrf.mxu0
      %v2033 = vadd.f32 0.0, %v2032
      %2034 = vmatmul.bf16.gmra.mxu0 %v1715
      %v2035 = vpop.f32.mrf.mxu0
      %v2036 = vadd.f32 0.0, %v2035
      %v2037 = vpop.f32.mrf.mxu0
      %v2038 = vadd.f32 0.0, %v2037
      %2039 = vmatmul.bf16.gmra.mxu0 %v1716
      %v2040 = vpop.f32.mrf.mxu0
      %v2041 = vadd.f32 0.0, %v2040
      %v2042 = vpop.f32.mrf.mxu0
      %v2043 = vadd.f32 0.0, %v2042
      %2044 = vmatmul.bf16.gmra.mxu0 %v1717
      %v2045 = vpop.f32.mrf.mxu0
      %v2046 = vadd.f32 0.0, %v2045
      %v2047 = vpop.f32.mrf.mxu0
      %v2048 = vadd.f32 0.0, %v2047
      %2049 = vmatmul.bf16.gmra.mxu0 %v1718
      %v2050 = vpop.f32.mrf.mxu0
      %v2051 = vadd.f32 0.0, %v2050
      %v2052 = vpop.f32.mrf.mxu0
      %v2053 = vadd.f32 0.0, %v2052
      %2054 = vmatmul.bf16.gmra.mxu0 %v1719
      %v2055 = vpop.f32.mrf.mxu0
      %v2056 = vadd.f32 0.0, %v2055
      %v2057 = vpop.f32.mrf.mxu0
      %v2058 = vadd.f32 0.0, %v2057
      %2059 = vmatmul.bf16.gmra.mxu0 %v1720
      %v2060 = vpop.f32.mrf.mxu0
      %v2061 = vadd.f32 0.0, %v2060
      %v2062 = vpop.f32.mrf.mxu0
      %v2063 = vadd.f32 0.0, %v2062
      %2064 = vmatmul.bf16.gmra.mxu0 %v1721
      %v2065 = vpop.f32.mrf.mxu0
      %v2066 = vadd.f32 0.0, %v2065
      %v2067 = vpop.f32.mrf.mxu0
      %v2068 = vadd.f32 0.0, %v2067
      %2069 = vmatmul.bf16.gmra.mxu0 %v1722
      %v2070 = vpop.f32.mrf.mxu0
      %v2071 = vadd.f32 0.0, %v2070
      %v2072 = vpop.f32.mrf.mxu0
      %v2073 = vadd.f32 0.0, %v2072
      %2074 = vmatmul.bf16.gmra.mxu0 %v1723
      %v2075 = vpop.f32.mrf.mxu0
      %v2076 = vadd.f32 0.0, %v2075
      %v2077 = vpop.f32.mrf.mxu0
      %v2078 = vadd.f32 0.0, %v2077
      %2079 = vmatmul.bf16.gmra.mxu0 %v1724
      %v2080 = vpop.f32.mrf.mxu0
      %v2081 = vadd.f32 0.0, %v2080
      %v2082 = vpop.f32.mrf.mxu0
      %v2083 = vadd.f32 0.0, %v2082
      %2084 = vmatmul.bf16.gmra.mxu0 %v1925
      %v2085 = vpop.f32.mrf.mxu0
      %v2086 = vadd.f32 0.0, %v2085
      %v2087 = vpop.f32.mrf.mxu0
      %v2088 = vadd.f32 0.0, %v2087
      %2089 = vdwg.mxu0
      %v2090 = vadd.f32 %v1889, %v2001
      %v2091 = vadd.f32 %v1890, %v2003
      %v2092 = vadd.f32 %v1891, %v2006
      %v2093 = vadd.f32 %v1892, %v2008
      %v2094 = vadd.f32 %v1893, %v2011
      %v2095 = vadd.f32 %v1894, %v2013
      %v2096 = vadd.f32 %v1895, %v2016
      %v2097 = vadd.f32 %v1896, %v2018
      %v2098 = vadd.f32 %v1897, %v2021
      %v2099 = vadd.f32 %v1898, %v2023
      %v2100 = vadd.f32 %v1899, %v2026
      %v2101 = vadd.f32 %v1900, %v2028
      %v2102 = vadd.f32 %v1901, %v2031
      %v2103 = vadd.f32 %v1902, %v2033
      %v2104 = vadd.f32 %v1903, %v2036
      %v2105 = vadd.f32 %v1904, %v2038
      %v2106 = vadd.f32 %v1905, %v2041
      %v2107 = vadd.f32 %v1906, %v2043
      %v2108 = vadd.f32 %v1907, %v2046
      %v2109 = vadd.f32 %v1908, %v2048
      %v2110 = vadd.f32 %v1909, %v2051
      %v2111 = vadd.f32 %v1910, %v2053
      %v2112 = vadd.f32 %v1911, %v2056
      %v2113 = vadd.f32 %v1912, %v2058
      %v2114 = vadd.f32 %v1913, %v2061
      %v2115 = vadd.f32 %v1914, %v2063
      %v2116 = vadd.f32 %v1915, %v2066
      %v2117 = vadd.f32 %v1916, %v2068
      %v2118 = vadd.f32 %v1917, %v2071
      %v2119 = vadd.f32 %v1918, %v2073
      %v2120 = vadd.f32 %v1919, %v2076
      %v2121 = vadd.f32 %v1920, %v2078
      %v2122 = vadd.f32 %v1921, %v2081
      %v2123 = vadd.f32 %v1922, %v2083
      %v2124 = vadd.f32 %v1923, %v2086
      %v2125 = vadd.f32 %v1924, %v2088
      %v2126 = vpack.c.bf16 %v326, %v326
      %s2127 = scalar_lea.vmem %s1, 448
      %v2128 = vld [vmem:[%s2127] sm:$0xf]
      %v2129 = vld [vmem:[%s2127 + $0x4] sm:$0xf]
      %v2130 = vld [vmem:[%s2127 + $0x8] sm:$0xf]
      %v2131 = vld [vmem:[%s2127 + $0xc] sm:$0xf]
      %v2132 = vld [vmem:[%s2127 + $0x10] sm:$0xf]
      %v2133 = vld [vmem:[%s2127 + $0x14] sm:$0xf]
      %v2134 = vld [vmem:[%s2127 + $0x18] sm:$0xf]
      %v2135 = vld [vmem:[%s2127 + $0x1c] sm:$0xf]
      %v2136 = vld [vmem:[%s2127 + $0x20] sm:$0xf]
      %v2137 = vld [vmem:[%s2127 + $0x24] sm:$0xf]
      %v2138 = vld [vmem:[%s2127 + $0x28] sm:$0xf]
      %v2139 = vld [vmem:[%s2127 + $0x2c] sm:$0xf]
      %v2140 = vld [vmem:[%s2127 + $0x30] sm:$0xf]
      %v2141 = vld [vmem:[%s2127 + $0x34] sm:$0xf]
      %v2142 = vld [vmem:[%s2127 + $0x38] sm:$0xf]
      %v2143 = vld [vmem:[%s2127 + $0x3c] sm:$0xf]
      %vm2144 = vsmask.f32 7424
      %v2146 = vshrl.u32 %v1708, 16
      %v2148 = vshll.u32 %v1708, 16
      %v2150 = vrot.slane %v2148, 1
      %v2151 = vor.u32 %v2146, %v2150
      %v2153 = vshll.u32 %v1709, 16
      %v2155 = vrot.slane %v2153, 1
      %v2156 = vsel %vm2144, %v2151, %v2155
      %v2157 = vshrl.u32 %v1709, 16
      %v2159 = vor.u32 %v2157, %v2155
      %v2161 = vshll.u32 %v1710, 16
      %v2163 = vrot.slane %v2161, 1
      %v2164 = vsel %vm2144, %v2159, %v2163
      %v2165 = vshrl.u32 %v1710, 16
      %v2167 = vor.u32 %v2165, %v2163
      %v2169 = vshll.u32 %v1711, 16
      %v2171 = vrot.slane %v2169, 1
      %v2172 = vsel %vm2144, %v2167, %v2171
      %v2173 = vshrl.u32 %v1711, 16
      %v2175 = vor.u32 %v2173, %v2171
      %v2177 = vshll.u32 %v1712, 16
      %v2179 = vrot.slane %v2177, 1
      %v2180 = vsel %vm2144, %v2175, %v2179
      %v2181 = vshrl.u32 %v1712, 16
      %v2183 = vor.u32 %v2181, %v2179
      %v2185 = vshll.u32 %v1713, 16
      %v2187 = vrot.slane %v2185, 1
      %v2188 = vsel %vm2144, %v2183, %v2187
      %v2189 = vshrl.u32 %v1713, 16
      %v2191 = vor.u32 %v2189, %v2187
      %v2193 = vshll.u32 %v1714, 16
      %v2195 = vrot.slane %v2193, 1
      %v2196 = vsel %vm2144, %v2191, %v2195
      %v2197 = vshrl.u32 %v1714, 16
      %v2199 = vor.u32 %v2197, %v2195
      %v2201 = vshll.u32 %v1715, 16
      %v2203 = vrot.slane %v2201, 1
      %v2204 = vsel %vm2144, %v2199, %v2203
      %v2205 = vshrl.u32 %v1715, 16
      %v2207 = vor.u32 %v2205, %v2203
      %v2209 = vshll.u32 %v1716, 16
      %v2211 = vrot.slane %v2209, 1
      %v2212 = vsel %vm2144, %v2207, %v2211
      %v2213 = vshrl.u32 %v1716, 16
      %v2215 = vor.u32 %v2213, %v2211
      %v2217 = vshll.u32 %v1717, 16
      %v2219 = vrot.slane %v2217, 1
      %v2220 = vsel %vm2144, %v2215, %v2219
      %v2221 = vshrl.u32 %v1717, 16
      %v2223 = vor.u32 %v2221, %v2219
      %v2225 = vshll.u32 %v1718, 16
      %v2227 = vrot.slane %v2225, 1
      %v2228 = vsel %vm2144, %v2223, %v2227
      %v2229 = vshrl.u32 %v1718, 16
      %v2231 = vor.u32 %v2229, %v2227
      %v2233 = vshll.u32 %v1719, 16
      %v2235 = vrot.slane %v2233, 1
      %v2236 = vsel %vm2144, %v2231, %v2235
      %v2237 = vshrl.u32 %v1719, 16
      %v2239 = vor.u32 %v2237, %v2235
      %v2241 = vshll.u32 %v1720, 16
      %v2243 = vrot.slane %v2241, 1
      %v2244 = vsel %vm2144, %v2239, %v2243
      %v2245 = vshrl.u32 %v1720, 16
      %v2247 = vor.u32 %v2245, %v2243
      %v2249 = vshll.u32 %v1721, 16
      %v2251 = vrot.slane %v2249, 1
      %v2252 = vsel %vm2144, %v2247, %v2251
      %v2253 = vshrl.u32 %v1721, 16
      %v2255 = vor.u32 %v2253, %v2251
      %v2257 = vshll.u32 %v1722, 16
      %v2259 = vrot.slane %v2257, 1
      %v2260 = vsel %vm2144, %v2255, %v2259
      %v2261 = vshrl.u32 %v1722, 16
      %v2263 = vor.u32 %v2261, %v2259
      %v2265 = vshll.u32 %v1723, 16
      %v2267 = vrot.slane %v2265, 1
      %v2268 = vsel %vm2144, %v2263, %v2267
      %v2269 = vshrl.u32 %v1723, 16
      %v2271 = vor.u32 %v2269, %v2267
      %v2273 = vshll.u32 %v1724, 16
      %v2275 = vrot.slane %v2273, 1
      %v2276 = vsel %vm2144, %v2271, %v2275
      %v2277 = vshrl.u32 %v1724, 16
      %v2279 = vor.u32 %v2277, %v2275
      %v2281 = vshll.u32 %v1925, 16
      %v2283 = vrot.slane %v2281, 1
      %v2284 = vsel %vm2144, %v2279, %v2283
      %v2285 = vshrl.u32 %v1925, 16
      %v2287 = vor.u32 %v2285, %v2283
      %v2289 = vshll.u32 %v2126, 16
      %v2291 = vrot.slane %v2289, 1
      %v2292 = vsel %vm2144, %v2287, %v2291
      %v2327 = vunpack.c.l.b16 %v2128
      %v2328 = vunpack.c.l.b16 %v2129
      %v2329 = vunpack.c.l.b16 %v2130
      %v2330 = vunpack.c.l.b16 %v2131
      %v2331 = vunpack.c.l.b16 %v2132
      %v2332 = vunpack.c.l.b16 %v2133
      %v2333 = vunpack.c.l.b16 %v2134
      %v2334 = vunpack.c.l.b16 %v2135
      %v2335 = vunpack.c.l.b16 %v2136
      %v2336 = vunpack.c.l.b16 %v2137
      %v2337 = vunpack.c.l.b16 %v2138
      %v2338 = vunpack.c.l.b16 %v2139
      %v2339 = vunpack.c.l.b16 %v2140
      %v2340 = vunpack.c.l.b16 %v2141
      %v2341 = vunpack.c.l.b16 %v2142
      %v2342 = vunpack.c.l.b16 %v2143
      %v2343 = vpack.c.b16 %v2328, %v2327
      %v2344 = vpack.c.b16 %v2330, %v2329
      %v2345 = vpack.c.b16 %v2332, %v2331
      %v2346 = vpack.c.b16 %v2334, %v2333
      %v2347 = vpack.c.b16 %v2336, %v2335
      %v2348 = vpack.c.b16 %v2338, %v2337
      %v2349 = vpack.c.b16 %v2340, %v2339
      %v2350 = vpack.c.b16 %v2342, %v2341
      %2359 = vmatpush.bf16.msra.mxu0 %v2350
      %2360 = vmatpush.bf16.msra.mxu0 %v2349
      %2361 = vmatpush.bf16.msra.mxu0 %v2348
      %2362 = vmatpush.bf16.msra.mxu0 %v2347
      %2363 = vmatpush.bf16.msra.mxu0 %v2346
      %2364 = vmatpush.bf16.msra.mxu0 %v2345
      %2365 = vmatpush.bf16.msra.mxu0 %v2344
      %2366 = vmatpush.bf16.msra.mxu0 %v2343
      %2367 = vmatmul.bf16.gmra.mxu0 %v2156
      %v2368 = vpop.f32.mrf.mxu0
      %v2369 = vadd.f32 0.0, %v2368
      %v2370 = vpop.f32.mrf.mxu0
      %v2371 = vadd.f32 0.0, %v2370
      %2372 = vmatmul.bf16.gmra.mxu0 %v2164
      %v2373 = vpop.f32.mrf.mxu0
      %v2374 = vadd.f32 0.0, %v2373
      %v2375 = vpop.f32.mrf.mxu0
      %v2376 = vadd.f32 0.0, %v2375
      %2377 = vmatmul.bf16.gmra.mxu0 %v2172
      %v2378 = vpop.f32.mrf.mxu0
      %v2379 = vadd.f32 0.0, %v2378
      %v2380 = vpop.f32.mrf.mxu0
      %v2381 = vadd.f32 0.0, %v2380
      %2382 = vmatmul.bf16.gmra.mxu0 %v2180
      %v2383 = vpop.f32.mrf.mxu0
      %v2384 = vadd.f32 0.0, %v2383
      %v2385 = vpop.f32.mrf.mxu0
      %v2386 = vadd.f32 0.0, %v2385
      %2387 = vmatmul.bf16.gmra.mxu0 %v2188
      %v2388 = vpop.f32.mrf.mxu0
      %v2389 = vadd.f32 0.0, %v2388
      %v2390 = vpop.f32.mrf.mxu0
      %v2391 = vadd.f32 0.0, %v2390
      %2392 = vmatmul.bf16.gmra.mxu0 %v2196
      %v2393 = vpop.f32.mrf.mxu0
      %v2394 = vadd.f32 0.0, %v2393
      %v2395 = vpop.f32.mrf.mxu0
      %v2396 = vadd.f32 0.0, %v2395
      %2397 = vmatmul.bf16.gmra.mxu0 %v2204
      %v2398 = vpop.f32.mrf.mxu0
      %v2399 = vadd.f32 0.0, %v2398
      %v2400 = vpop.f32.mrf.mxu0
      %v2401 = vadd.f32 0.0, %v2400
      %2402 = vmatmul.bf16.gmra.mxu0 %v2212
      %v2403 = vpop.f32.mrf.mxu0
      %v2404 = vadd.f32 0.0, %v2403
      %v2405 = vpop.f32.mrf.mxu0
      %v2406 = vadd.f32 0.0, %v2405
      %2407 = vmatmul.bf16.gmra.mxu0 %v2220
      %v2408 = vpop.f32.mrf.mxu0
      %v2409 = vadd.f32 0.0, %v2408
      %v2410 = vpop.f32.mrf.mxu0
      %v2411 = vadd.f32 0.0, %v2410
      %2412 = vmatmul.bf16.gmra.mxu0 %v2228
      %v2413 = vpop.f32.mrf.mxu0
      %v2414 = vadd.f32 0.0, %v2413
      %v2415 = vpop.f32.mrf.mxu0
      %v2416 = vadd.f32 0.0, %v2415
      %2417 = vmatmul.bf16.gmra.mxu0 %v2236
      %v2418 = vpop.f32.mrf.mxu0
      %v2419 = vadd.f32 0.0, %v2418
      %v2420 = vpop.f32.mrf.mxu0
      %v2421 = vadd.f32 0.0, %v2420
      %2422 = vmatmul.bf16.gmra.mxu0 %v2244
      %v2423 = vpop.f32.mrf.mxu0
      %v2424 = vadd.f32 0.0, %v2423
      %v2425 = vpop.f32.mrf.mxu0
      %v2426 = vadd.f32 0.0, %v2425
      %2427 = vmatmul.bf16.gmra.mxu0 %v2252
      %v2428 = vpop.f32.mrf.mxu0
      %v2429 = vadd.f32 0.0, %v2428
      %v2430 = vpop.f32.mrf.mxu0
      %v2431 = vadd.f32 0.0, %v2430
      %2432 = vmatmul.bf16.gmra.mxu0 %v2260
      %v2433 = vpop.f32.mrf.mxu0
      %v2434 = vadd.f32 0.0, %v2433
      %v2435 = vpop.f32.mrf.mxu0
      %v2436 = vadd.f32 0.0, %v2435
      %2437 = vmatmul.bf16.gmra.mxu0 %v2268
      %v2438 = vpop.f32.mrf.mxu0
      %v2439 = vadd.f32 0.0, %v2438
      %v2440 = vpop.f32.mrf.mxu0
      %v2441 = vadd.f32 0.0, %v2440
      %2442 = vmatmul.bf16.gmra.mxu0 %v2276
      %v2443 = vpop.f32.mrf.mxu0
      %v2444 = vadd.f32 0.0, %v2443
      %v2445 = vpop.f32.mrf.mxu0
      %v2446 = vadd.f32 0.0, %v2445
      %2447 = vmatmul.bf16.gmra.mxu0 %v2284
      %v2448 = vpop.f32.mrf.mxu0
      %v2449 = vadd.f32 0.0, %v2448
      %v2450 = vpop.f32.mrf.mxu0
      %v2451 = vadd.f32 0.0, %v2450
      %2452 = vmatmul.bf16.gmra.mxu0 %v2292
      %v2453 = vpop.f32.mrf.mxu0
      %v2454 = vadd.f32 0.0, %v2453
      %v2455 = vpop.f32.mrf.mxu0
      %v2456 = vadd.f32 0.0, %v2455
      %2457 = vdwg.mxu0
      %v2458 = vadd.f32 %v2090, %v2369
      %v2459 = vadd.f32 %v2091, %v2371
      %v2460 = vadd.f32 %v2092, %v2374
      %v2461 = vadd.f32 %v2093, %v2376
      %v2462 = vadd.f32 %v2094, %v2379
      %v2463 = vadd.f32 %v2095, %v2381
      %v2464 = vadd.f32 %v2096, %v2384
      %v2465 = vadd.f32 %v2097, %v2386
      %v2466 = vadd.f32 %v2098, %v2389
      %v2467 = vadd.f32 %v2099, %v2391
      %v2468 = vadd.f32 %v2100, %v2394
      %v2469 = vadd.f32 %v2101, %v2396
      %v2470 = vadd.f32 %v2102, %v2399
      %v2471 = vadd.f32 %v2103, %v2401
      %v2472 = vadd.f32 %v2104, %v2404
      %v2473 = vadd.f32 %v2105, %v2406
      %v2474 = vadd.f32 %v2106, %v2409
      %v2475 = vadd.f32 %v2107, %v2411
      %v2476 = vadd.f32 %v2108, %v2414
      %v2477 = vadd.f32 %v2109, %v2416
      %v2478 = vadd.f32 %v2110, %v2419
      %v2479 = vadd.f32 %v2111, %v2421
      %v2480 = vadd.f32 %v2112, %v2424
      %v2481 = vadd.f32 %v2113, %v2426
      %v2482 = vadd.f32 %v2114, %v2429
      %v2483 = vadd.f32 %v2115, %v2431
      %v2484 = vadd.f32 %v2116, %v2434
      %v2485 = vadd.f32 %v2117, %v2436
      %v2486 = vadd.f32 %v2118, %v2439
      %v2487 = vadd.f32 %v2119, %v2441
      %v2488 = vadd.f32 %v2120, %v2444
      %v2489 = vadd.f32 %v2121, %v2446
      %v2490 = vadd.f32 %v2122, %v2449
      %v2491 = vadd.f32 %v2123, %v2451
      %v2492 = vadd.f32 %v2124, %v2454
      %v2493 = vadd.f32 %v2125, %v2456
      %s2494 = scalar_lea.vmem %s1, 512
      %v2495 = vld [vmem:[%s2494] sm:$0xf]
      %v2496 = vld [vmem:[%s2494 + $0x4] sm:$0xf]
      %v2497 = vld [vmem:[%s2494 + $0x8] sm:$0xf]
      %v2498 = vld [vmem:[%s2494 + $0xc] sm:$0xf]
      %v2499 = vld [vmem:[%s2494 + $0x10] sm:$0xf]
      %v2500 = vld [vmem:[%s2494 + $0x14] sm:$0xf]
      %v2501 = vld [vmem:[%s2494 + $0x18] sm:$0xf]
      %v2502 = vld [vmem:[%s2494 + $0x1c] sm:$0xf]
      %v2503 = vld [vmem:[%s2494 + $0x20] sm:$0xf]
      %v2504 = vld [vmem:[%s2494 + $0x24] sm:$0xf]
      %v2505 = vld [vmem:[%s2494 + $0x28] sm:$0xf]
      %v2506 = vld [vmem:[%s2494 + $0x2c] sm:$0xf]
      %v2507 = vld [vmem:[%s2494 + $0x30] sm:$0xf]
      %v2508 = vld [vmem:[%s2494 + $0x34] sm:$0xf]
      %v2509 = vld [vmem:[%s2494 + $0x38] sm:$0xf]
      %v2510 = vld [vmem:[%s2494 + $0x3c] sm:$0xf]
      %vm2530 = vcmask 1046528
      %v2531 = vrot.slane %v1708, 1
      %v2532 = vrot.slane %v1709, 1
      %v2533 = vsel %vm2530, %v2531, %v2532
      %v2534 = vrot.slane %v1710, 1
      %v2535 = vsel %vm2530, %v2532, %v2534
      %v2536 = vrot.slane %v1711, 1
      %v2537 = vsel %vm2530, %v2534, %v2536
      %v2538 = vrot.slane %v1712, 1
      %v2539 = vsel %vm2530, %v2536, %v2538
      %v2540 = vrot.slane %v1713, 1
      %v2541 = vsel %vm2530, %v2538, %v2540
      %v2542 = vrot.slane %v1714, 1
      %v2543 = vsel %vm2530, %v2540, %v2542
      %v2544 = vrot.slane %v1715, 1
      %v2545 = vsel %vm2530, %v2542, %v2544
      %v2546 = vrot.slane %v1716, 1
      %v2547 = vsel %vm2530, %v2544, %v2546
      %v2548 = vrot.slane %v1717, 1
      %v2549 = vsel %vm2530, %v2546, %v2548
      %v2550 = vrot.slane %v1718, 1
      %v2551 = vsel %vm2530, %v2548, %v2550
      %v2552 = vrot.slane %v1719, 1
      %v2553 = vsel %vm2530, %v2550, %v2552
      %v2554 = vrot.slane %v1720, 1
      %v2555 = vsel %vm2530, %v2552, %v2554
      %v2556 = vrot.slane %v1721, 1
      %v2557 = vsel %vm2530, %v2554, %v2556
      %v2558 = vrot.slane %v1722, 1
      %v2559 = vsel %vm2530, %v2556, %v2558
      %v2560 = vrot.slane %v1723, 1
      %v2561 = vsel %vm2530, %v2558, %v2560
      %v2562 = vrot.slane %v1724, 1
      %v2563 = vsel %vm2530, %v2560, %v2562
      %v2564 = vrot.slane %v1925, 1
      %v2565 = vsel %vm2530, %v2562, %v2564
      %v2566 = vrot.slane %v2126, 1
      %v2567 = vsel %vm2530, %v2564, %v2566
      %v2602 = vunpack.c.l.b16 %v2495
      %v2603 = vunpack.c.l.b16 %v2496
      %v2604 = vunpack.c.l.b16 %v2497
      %v2605 = vunpack.c.l.b16 %v2498
      %v2606 = vunpack.c.l.b16 %v2499
      %v2607 = vunpack.c.l.b16 %v2500
      %v2608 = vunpack.c.l.b16 %v2501
      %v2609 = vunpack.c.l.b16 %v2502
      %v2610 = vunpack.c.l.b16 %v2503
      %v2611 = vunpack.c.l.b16 %v2504
      %v2612 = vunpack.c.l.b16 %v2505
      %v2613 = vunpack.c.l.b16 %v2506
      %v2614 = vunpack.c.l.b16 %v2507
      %v2615 = vunpack.c.l.b16 %v2508
      %v2616 = vunpack.c.l.b16 %v2509
      %v2617 = vunpack.c.l.b16 %v2510
      %v2618 = vpack.c.b16 %v2603, %v2602
      %v2619 = vpack.c.b16 %v2605, %v2604
      %v2620 = vpack.c.b16 %v2607, %v2606
      %v2621 = vpack.c.b16 %v2609, %v2608
      %v2622 = vpack.c.b16 %v2611, %v2610
      %v2623 = vpack.c.b16 %v2613, %v2612
      %v2624 = vpack.c.b16 %v2615, %v2614
      %v2625 = vpack.c.b16 %v2617, %v2616
      %2634 = vmatpush.bf16.msra.mxu0 %v2625
      %2635 = vmatpush.bf16.msra.mxu0 %v2624
      %2636 = vmatpush.bf16.msra.mxu0 %v2623
      %2637 = vmatpush.bf16.msra.mxu0 %v2622
      %2638 = vmatpush.bf16.msra.mxu0 %v2621
      %2639 = vmatpush.bf16.msra.mxu0 %v2620
      %2640 = vmatpush.bf16.msra.mxu0 %v2619
      %2641 = vmatpush.bf16.msra.mxu0 %v2618
      %2642 = vmatmul.bf16.gmra.mxu0 %v2533
      %v2643 = vpop.f32.mrf.mxu0
      %v2644 = vadd.f32 0.0, %v2643
      %v2645 = vpop.f32.mrf.mxu0
      %v2646 = vadd.f32 0.0, %v2645
      %2647 = vmatmul.bf16.gmra.mxu0 %v2535
      %v2648 = vpop.f32.mrf.mxu0
      %v2649 = vadd.f32 0.0, %v2648
      %v2650 = vpop.f32.mrf.mxu0
      %v2651 = vadd.f32 0.0, %v2650
      %2652 = vmatmul.bf16.gmra.mxu0 %v2537
      %v2653 = vpop.f32.mrf.mxu0
      %v2654 = vadd.f32 0.0, %v2653
      %v2655 = vpop.f32.mrf.mxu0
      %v2656 = vadd.f32 0.0, %v2655
      %2657 = vmatmul.bf16.gmra.mxu0 %v2539
      %v2658 = vpop.f32.mrf.mxu0
      %v2659 = vadd.f32 0.0, %v2658
      %v2660 = vpop.f32.mrf.mxu0
      %v2661 = vadd.f32 0.0, %v2660
      %2662 = vmatmul.bf16.gmra.mxu0 %v2541
      %v2663 = vpop.f32.mrf.mxu0
      %v2664 = vadd.f32 0.0, %v2663
      %v2665 = vpop.f32.mrf.mxu0
      %v2666 = vadd.f32 0.0, %v2665
      %2667 = vmatmul.bf16.gmra.mxu0 %v2543
      %v2668 = vpop.f32.mrf.mxu0
      %v2669 = vadd.f32 0.0, %v2668
      %v2670 = vpop.f32.mrf.mxu0
      %v2671 = vadd.f32 0.0, %v2670
      %2672 = vmatmul.bf16.gmra.mxu0 %v2545
      %v2673 = vpop.f32.mrf.mxu0
      %v2674 = vadd.f32 0.0, %v2673
      %v2675 = vpop.f32.mrf.mxu0
      %v2676 = vadd.f32 0.0, %v2675
      %2677 = vmatmul.bf16.gmra.mxu0 %v2547
      %v2678 = vpop.f32.mrf.mxu0
      %v2679 = vadd.f32 0.0, %v2678
      %v2680 = vpop.f32.mrf.mxu0
      %v2681 = vadd.f32 0.0, %v2680
      %2682 = vmatmul.bf16.gmra.mxu0 %v2549
      %v2683 = vpop.f32.mrf.mxu0
      %v2684 = vadd.f32 0.0, %v2683
      %v2685 = vpop.f32.mrf.mxu0
      %v2686 = vadd.f32 0.0, %v2685
      %2687 = vmatmul.bf16.gmra.mxu0 %v2551
      %v2688 = vpop.f32.mrf.mxu0
      %v2689 = vadd.f32 0.0, %v2688
      %v2690 = vpop.f32.mrf.mxu0
      %v2691 = vadd.f32 0.0, %v2690
      %2692 = vmatmul.bf16.gmra.mxu0 %v2553
      %v2693 = vpop.f32.mrf.mxu0
      %v2694 = vadd.f32 0.0, %v2693
      %v2695 = vpop.f32.mrf.mxu0
      %v2696 = vadd.f32 0.0, %v2695
      %2697 = vmatmul.bf16.gmra.mxu0 %v2555
      %v2698 = vpop.f32.mrf.mxu0
      %v2699 = vadd.f32 0.0, %v2698
      %v2700 = vpop.f32.mrf.mxu0
      %v2701 = vadd.f32 0.0, %v2700
      %2702 = vmatmul.bf16.gmra.mxu0 %v2557
      %v2703 = vpop.f32.mrf.mxu0
      %v2704 = vadd.f32 0.0, %v2703
      %v2705 = vpop.f32.mrf.mxu0
      %v2706 = vadd.f32 0.0, %v2705
      %2707 = vmatmul.bf16.gmra.mxu0 %v2559
      %v2708 = vpop.f32.mrf.mxu0
      %v2709 = vadd.f32 0.0, %v2708
      %v2710 = vpop.f32.mrf.mxu0
      %v2711 = vadd.f32 0.0, %v2710
      %2712 = vmatmul.bf16.gmra.mxu0 %v2561
      %v2713 = vpop.f32.mrf.mxu0
      %v2714 = vadd.f32 0.0, %v2713
      %v2715 = vpop.f32.mrf.mxu0
      %v2716 = vadd.f32 0.0, %v2715
      %2717 = vmatmul.bf16.gmra.mxu0 %v2563
      %v2718 = vpop.f32.mrf.mxu0
      %v2719 = vadd.f32 0.0, %v2718
      %v2720 = vpop.f32.mrf.mxu0
      %v2721 = vadd.f32 0.0, %v2720
      %2722 = vmatmul.bf16.gmra.mxu0 %v2565
      %v2723 = vpop.f32.mrf.mxu0
      %v2724 = vadd.f32 0.0, %v2723
      %v2725 = vpop.f32.mrf.mxu0
      %v2726 = vadd.f32 0.0, %v2725
      %2727 = vmatmul.bf16.gmra.mxu0 %v2567
      %v2728 = vpop.f32.mrf.mxu0
      %v2729 = vadd.f32 0.0, %v2728
      %v2730 = vpop.f32.mrf.mxu0
      %v2731 = vadd.f32 0.0, %v2730
      %2732 = vdwg.mxu0
      %v2733 = vadd.f32 %v2458, %v2644
      %v2734 = vadd.f32 %v2459, %v2646
      %v2735 = vadd.f32 %v2460, %v2649
      %v2736 = vadd.f32 %v2461, %v2651
      %v2737 = vadd.f32 %v2462, %v2654
      %v2738 = vadd.f32 %v2463, %v2656
      %v2739 = vadd.f32 %v2464, %v2659
      %v2740 = vadd.f32 %v2465, %v2661
      %v2741 = vadd.f32 %v2466, %v2664
      %v2742 = vadd.f32 %v2467, %v2666
      %v2743 = vadd.f32 %v2468, %v2669
      %v2744 = vadd.f32 %v2469, %v2671
      %v2745 = vadd.f32 %v2470, %v2674
      %v2746 = vadd.f32 %v2471, %v2676
      %v2747 = vadd.f32 %v2472, %v2679
      %v2748 = vadd.f32 %v2473, %v2681
      %v2749 = vadd.f32 %v2474, %v2684
      %v2750 = vadd.f32 %v2475, %v2686
      %v2751 = vadd.f32 %v2476, %v2689
      %v2752 = vadd.f32 %v2477, %v2691
      %v2753 = vadd.f32 %v2478, %v2694
      %v2754 = vadd.f32 %v2479, %v2696
      %v2755 = vadd.f32 %v2480, %v2699
      %v2756 = vadd.f32 %v2481, %v2701
      %v2757 = vadd.f32 %v2482, %v2704
      %v2758 = vadd.f32 %v2483, %v2706
      %v2759 = vadd.f32 %v2484, %v2709
      %v2760 = vadd.f32 %v2485, %v2711
      %v2761 = vadd.f32 %v2486, %v2714
      %v2762 = vadd.f32 %v2487, %v2716
      %v2763 = vadd.f32 %v2488, %v2719
      %v2764 = vadd.f32 %v2489, %v2721
      %v2765 = vadd.f32 %v2490, %v2724
      %v2766 = vadd.f32 %v2491, %v2726
      %v2767 = vadd.f32 %v2492, %v2729
      %v2768 = vadd.f32 %v2493, %v2731
      %v2769 = vld [vmem:[%s2 + $0x20] sm:$0xff]
      %v2770 = vld [vmem:[%s2 + $0x28] sm:$0xff]
      %v2771 = vld [vmem:[%s2 + $0x30] sm:$0xff]
      %v2772 = vld [vmem:[%s2 + $0x38] sm:$0xff]
      %v2773 = vld [vmem:[%s2 + $0x40] sm:$0xff]
      %v2774 = vld [vmem:[%s2 + $0x48] sm:$0xff]
      %v2775 = vld [vmem:[%s2 + $0x50] sm:$0xff]
      %v2776 = vld [vmem:[%s2 + $0x58] sm:$0xff]
      %v2777 = vld [vmem:[%s2 + $0x60] sm:$0xff]
      %v2778 = vld [vmem:[%s2 + $0x68] sm:$0xff]
      %v2779 = vld [vmem:[%s2 + $0x70] sm:$0xff]
      %v2780 = vld [vmem:[%s2 + $0x78] sm:$0xff]
      %v2781 = vld [vmem:[%s2 + $0x80] sm:$0xff]
      %v2782 = vld [vmem:[%s2 + $0x88] sm:$0xff]
      %v2783 = vld [vmem:[%s2 + $0x90] sm:$0xff]
      %v2784 = vld [vmem:[%s2 + $0x98] sm:$0xff]
      %v2785 = vld [vmem:[%s2 + $0xa0] sm:$0xff]
      %v2786 = vld [vmem:[%s2 + $0xa8] sm:$0xff]
      %v2787 = vld [vmem:[%s2 + $0xb0] sm:$0xff]
      %v2788 = vld [vmem:[%s2 + $0xb8] sm:$0xff]
      %v2789 = vld [vmem:[%s2 + $0xc0] sm:$0xff]
      %v2790 = vld [vmem:[%s2 + $0xc8] sm:$0xff]
      %v2791 = vld [vmem:[%s2 + $0xd0] sm:$0xff]
      %v2792 = vld [vmem:[%s2 + $0xd8] sm:$0xff]
      %v2793 = vld [vmem:[%s2 + $0xe0] sm:$0xff]
      %v2794 = vld [vmem:[%s2 + $0xe8] sm:$0xff]
      %v2795 = vld [vmem:[%s2 + $0xf0] sm:$0xff]
      %v2796 = vld [vmem:[%s2 + $0xf8] sm:$0xff]
      %v2797 = vld [vmem:[%s2 + $0x100] sm:$0xff]
      %v2798 = vld [vmem:[%s2 + $0x108] sm:$0xff]
      %v2799 = vld [vmem:[%s2 + $0x110] sm:$0xff]
      %v2800 = vld [vmem:[%s2 + $0x118] sm:$0xff]
      %v2801 = vld [vmem:[%s2 + $0x120] sm:$0xff]
      %v2802 = vld [vmem:[%s2 + $0x128] sm:$0xff]
      %v2803 = vld [vmem:[%s2 + $0x130] sm:$0xff]
      %v2804 = vld [vmem:[%s2 + $0x138] sm:$0xff]
      %2806 = vset.pattern.permute.xlu0 0
      %2807 = vperm.xlu0 %2806, %v2769
      %v2808 = vpop.permute.xlu0 %2807
      %2811 = vset.pattern.permute.xlu0 0
      %2812 = vperm.xlu0 %2811, %v2770
      %v2813 = vpop.permute.xlu0 %2812
      %2816 = vset.pattern.permute.xlu0 0
      %2817 = vperm.xlu0 %2816, %v2771
      %v2818 = vpop.permute.xlu0 %2817
      %2821 = vset.pattern.permute.xlu0 0
      %2822 = vperm.xlu0 %2821, %v2772
      %v2823 = vpop.permute.xlu0 %2822
      %2826 = vset.pattern.permute.xlu0 0
      %2827 = vperm.xlu0 %2826, %v2773
      %v2828 = vpop.permute.xlu0 %2827
      %2831 = vset.pattern.permute.xlu0 0
      %2832 = vperm.xlu0 %2831, %v2774
      %v2833 = vpop.permute.xlu0 %2832
      %2836 = vset.pattern.permute.xlu0 0
      %2837 = vperm.xlu0 %2836, %v2775
      %v2838 = vpop.permute.xlu0 %2837
      %2841 = vset.pattern.permute.xlu0 0
      %2842 = vperm.xlu0 %2841, %v2776
      %v2843 = vpop.permute.xlu0 %2842
      %2846 = vset.pattern.permute.xlu0 0
      %2847 = vperm.xlu0 %2846, %v2777
      %v2848 = vpop.permute.xlu0 %2847
      %2851 = vset.pattern.permute.xlu0 0
      %2852 = vperm.xlu0 %2851, %v2778
      %v2853 = vpop.permute.xlu0 %2852
      %2856 = vset.pattern.permute.xlu0 0
      %2857 = vperm.xlu0 %2856, %v2779
      %v2858 = vpop.permute.xlu0 %2857
      %2861 = vset.pattern.permute.xlu0 0
      %2862 = vperm.xlu0 %2861, %v2780
      %v2863 = vpop.permute.xlu0 %2862
      %2866 = vset.pattern.permute.xlu0 0
      %2867 = vperm.xlu0 %2866, %v2781
      %v2868 = vpop.permute.xlu0 %2867
      %2871 = vset.pattern.permute.xlu0 0
      %2872 = vperm.xlu0 %2871, %v2782
      %v2873 = vpop.permute.xlu0 %2872
      %2876 = vset.pattern.permute.xlu0 0
      %2877 = vperm.xlu0 %2876, %v2783
      %v2878 = vpop.permute.xlu0 %2877
      %2881 = vset.pattern.permute.xlu0 0
      %2882 = vperm.xlu0 %2881, %v2784
      %v2883 = vpop.permute.xlu0 %2882
      %2886 = vset.pattern.permute.xlu0 0
      %2887 = vperm.xlu0 %2886, %v2785
      %v2888 = vpop.permute.xlu0 %2887
      %2891 = vset.pattern.permute.xlu0 0
      %2892 = vperm.xlu0 %2891, %v2786
      %v2893 = vpop.permute.xlu0 %2892
      %2896 = vset.pattern.permute.xlu0 0
      %2897 = vperm.xlu0 %2896, %v2787
      %v2898 = vpop.permute.xlu0 %2897
      %2901 = vset.pattern.permute.xlu0 0
      %2902 = vperm.xlu0 %2901, %v2788
      %v2903 = vpop.permute.xlu0 %2902
      %2906 = vset.pattern.permute.xlu0 0
      %2907 = vperm.xlu0 %2906, %v2789
      %v2908 = vpop.permute.xlu0 %2907
      %2911 = vset.pattern.permute.xlu0 0
      %2912 = vperm.xlu0 %2911, %v2790
      %v2913 = vpop.permute.xlu0 %2912
      %2916 = vset.pattern.permute.xlu0 0
      %2917 = vperm.xlu0 %2916, %v2791
      %v2918 = vpop.permute.xlu0 %2917
      %2921 = vset.pattern.permute.xlu0 0
      %2922 = vperm.xlu0 %2921, %v2792
      %v2923 = vpop.permute.xlu0 %2922
      %2926 = vset.pattern.permute.xlu0 0
      %2927 = vperm.xlu0 %2926, %v2793
      %v2928 = vpop.permute.xlu0 %2927
      %2931 = vset.pattern.permute.xlu0 0
      %2932 = vperm.xlu0 %2931, %v2794
      %v2933 = vpop.permute.xlu0 %2932
      %2936 = vset.pattern.permute.xlu0 0
      %2937 = vperm.xlu0 %2936, %v2795
      %v2938 = vpop.permute.xlu0 %2937
      %2941 = vset.pattern.permute.xlu0 0
      %2942 = vperm.xlu0 %2941, %v2796
      %v2943 = vpop.permute.xlu0 %2942
      %2946 = vset.pattern.permute.xlu0 0
      %2947 = vperm.xlu0 %2946, %v2797
      %v2948 = vpop.permute.xlu0 %2947
      %2951 = vset.pattern.permute.xlu0 0
      %2952 = vperm.xlu0 %2951, %v2798
      %v2953 = vpop.permute.xlu0 %2952
      %2956 = vset.pattern.permute.xlu0 0
      %2957 = vperm.xlu0 %2956, %v2799
      %v2958 = vpop.permute.xlu0 %2957
      %2961 = vset.pattern.permute.xlu0 0
      %2962 = vperm.xlu0 %2961, %v2800
      %v2963 = vpop.permute.xlu0 %2962
      %2966 = vset.pattern.permute.xlu0 0
      %2967 = vperm.xlu0 %2966, %v2801
      %v2968 = vpop.permute.xlu0 %2967
      %2971 = vset.pattern.permute.xlu0 0
      %2972 = vperm.xlu0 %2971, %v2802
      %v2973 = vpop.permute.xlu0 %2972
      %2976 = vset.pattern.permute.xlu0 0
      %2977 = vperm.xlu0 %2976, %v2803
      %v2978 = vpop.permute.xlu0 %2977
      %2981 = vset.pattern.permute.xlu0 0
      %2982 = vperm.xlu0 %2981, %v2804
      %v2983 = vpop.permute.xlu0 %2982
      %v2985 = vmul.f32 %v2733, %v2808
      %v2986 = vmul.f32 %v2734, %v2813
      %v2987 = vmul.f32 %v2735, %v2818
      %v2988 = vmul.f32 %v2736, %v2823
      %v2989 = vmul.f32 %v2737, %v2828
      %v2990 = vmul.f32 %v2738, %v2833
      %v2991 = vmul.f32 %v2739, %v2838
      %v2992 = vmul.f32 %v2740, %v2843
      %v2993 = vmul.f32 %v2741, %v2848
      %v2994 = vmul.f32 %v2742, %v2853
      %v2995 = vmul.f32 %v2743, %v2858
      %v2996 = vmul.f32 %v2744, %v2863
      %v2997 = vmul.f32 %v2745, %v2868
      %v2998 = vmul.f32 %v2746, %v2873
      %v2999 = vmul.f32 %v2747, %v2878
      %v3000 = vmul.f32 %v2748, %v2883
      %v3001 = vmul.f32 %v2749, %v2888
      %v3002 = vmul.f32 %v2750, %v2893
      %v3003 = vmul.f32 %v2751, %v2898
      %v3004 = vmul.f32 %v2752, %v2903
      %v3005 = vmul.f32 %v2753, %v2908
      %v3006 = vmul.f32 %v2754, %v2913
      %v3007 = vmul.f32 %v2755, %v2918
      %v3008 = vmul.f32 %v2756, %v2923
      %v3009 = vmul.f32 %v2757, %v2928
      %v3010 = vmul.f32 %v2758, %v2933
      %v3011 = vmul.f32 %v2759, %v2938
      %v3012 = vmul.f32 %v2760, %v2943
      %v3013 = vmul.f32 %v2761, %v2948
      %v3014 = vmul.f32 %v2762, %v2953
      %v3015 = vmul.f32 %v2763, %v2958
      %v3016 = vmul.f32 %v2764, %v2963
      %v3017 = vmul.f32 %v2765, %v2968
      %v3018 = vmul.f32 %v2766, %v2973
      %v3019 = vmul.f32 %v2767, %v2978
      %v3020 = vmul.f32 %v2768, %v2983
      %v3021 = vadd.f32 %v2985, %v2986
      %v3022 = vadd.f32 %v3021, %v2987
      %v3023 = vadd.f32 %v3022, %v2988
      %v3024 = vadd.f32 %v3023, %v2989
      %v3025 = vadd.f32 %v3024, %v2990
      %v3026 = vadd.f32 %v3025, %v2991
      %v3027 = vadd.f32 %v3026, %v2992
      %v3028 = vadd.f32 %v3027, %v2993
      %v3029 = vadd.f32 %v3028, %v2994
      %v3030 = vadd.f32 %v3029, %v2995
      %v3031 = vadd.f32 %v3030, %v2996
      %v3032 = vadd.f32 %v3031, %v2997
      %v3033 = vadd.f32 %v3032, %v2998
      %v3034 = vadd.f32 %v3033, %v2999
      %v3035 = vadd.f32 %v3034, %v3000
      %v3036 = vadd.f32 %v3035, %v3001
      %v3037 = vadd.f32 %v3036, %v3002
      %v3038 = vadd.f32 %v3037, %v3003
      %v3039 = vadd.f32 %v3038, %v3004
      %v3040 = vadd.f32 %v3039, %v3005
      %v3041 = vadd.f32 %v3040, %v3006
      %v3042 = vadd.f32 %v3041, %v3007
      %v3043 = vadd.f32 %v3042, %v3008
      %v3044 = vadd.f32 %v3043, %v3009
      %v3045 = vadd.f32 %v3044, %v3010
      %v3046 = vadd.f32 %v3045, %v3011
      %v3047 = vadd.f32 %v3046, %v3012
      %v3048 = vadd.f32 %v3047, %v3013
      %v3049 = vadd.f32 %v3048, %v3014
      %v3050 = vadd.f32 %v3049, %v3015
      %v3051 = vadd.f32 %v3050, %v3016
      %v3052 = vadd.f32 %v3051, %v3017
      %v3053 = vadd.f32 %v3052, %v3018
      %v3054 = vadd.f32 %v3053, %v3019
      %v3055 = vadd.f32 %v3054, %v3020
      %v3056 = vrot.slane %v3055, 4
      %v3057 = vadd.f32 %v3055, %v3056
      %v3058 = vrot.slane %v3057, 2
      %v3059 = vadd.f32 %v3057, %v3058
      %v3060 = vrot.slane %v3059, 1
      %v3061 = vadd.f32 %v3059, %v3060
      %3062 = vst [vmem:[%s238] sm:$0x1] %v3061
      %v3063 = vmul.f32 %v2985, %v2733
      %v3064 = vmul.f32 %v2986, %v2734
      %v3065 = vmul.f32 %v2987, %v2735
      %v3066 = vmul.f32 %v2988, %v2736
      %v3067 = vmul.f32 %v2989, %v2737
      %v3068 = vmul.f32 %v2990, %v2738
      %v3069 = vmul.f32 %v2991, %v2739
      %v3070 = vmul.f32 %v2992, %v2740
      %v3071 = vmul.f32 %v2993, %v2741
      %v3072 = vmul.f32 %v2994, %v2742
      %v3073 = vmul.f32 %v2995, %v2743
      %v3074 = vmul.f32 %v2996, %v2744
      %v3075 = vmul.f32 %v2997, %v2745
      %v3076 = vmul.f32 %v2998, %v2746
      %v3077 = vmul.f32 %v2999, %v2747
      %v3078 = vmul.f32 %v3000, %v2748
      %v3079 = vmul.f32 %v3001, %v2749
      %v3080 = vmul.f32 %v3002, %v2750
      %v3081 = vmul.f32 %v3003, %v2751
      %v3082 = vmul.f32 %v3004, %v2752
      %v3083 = vmul.f32 %v3005, %v2753
      %v3084 = vmul.f32 %v3006, %v2754
      %v3085 = vmul.f32 %v3007, %v2755
      %v3086 = vmul.f32 %v3008, %v2756
      %v3087 = vmul.f32 %v3009, %v2757
      %v3088 = vmul.f32 %v3010, %v2758
      %v3089 = vmul.f32 %v3011, %v2759
      %v3090 = vmul.f32 %v3012, %v2760
      %v3091 = vmul.f32 %v3013, %v2761
      %v3092 = vmul.f32 %v3014, %v2762
      %v3093 = vmul.f32 %v3015, %v2763
      %v3094 = vmul.f32 %v3016, %v2764
      %v3095 = vmul.f32 %v3017, %v2765
      %v3096 = vmul.f32 %v3018, %v2766
      %v3097 = vmul.f32 %v3019, %v2767
      %v3098 = vmul.f32 %v3020, %v2768
      %v3099 = vadd.f32 %v3063, %v3064
      %v3100 = vadd.f32 %v3099, %v3065
      %v3101 = vadd.f32 %v3100, %v3066
      %v3102 = vadd.f32 %v3101, %v3067
      %v3103 = vadd.f32 %v3102, %v3068
      %v3104 = vadd.f32 %v3103, %v3069
      %v3105 = vadd.f32 %v3104, %v3070
      %v3106 = vadd.f32 %v3105, %v3071
      %v3107 = vadd.f32 %v3106, %v3072
      %v3108 = vadd.f32 %v3107, %v3073
      %v3109 = vadd.f32 %v3108, %v3074
      %v3110 = vadd.f32 %v3109, %v3075
      %v3111 = vadd.f32 %v3110, %v3076
      %v3112 = vadd.f32 %v3111, %v3077
      %v3113 = vadd.f32 %v3112, %v3078
      %v3114 = vadd.f32 %v3113, %v3079
      %v3115 = vadd.f32 %v3114, %v3080
      %v3116 = vadd.f32 %v3115, %v3081
      %v3117 = vadd.f32 %v3116, %v3082
      %v3118 = vadd.f32 %v3117, %v3083
      %v3119 = vadd.f32 %v3118, %v3084
      %v3120 = vadd.f32 %v3119, %v3085
      %v3121 = vadd.f32 %v3120, %v3086
      %v3122 = vadd.f32 %v3121, %v3087
      %v3123 = vadd.f32 %v3122, %v3088
      %v3124 = vadd.f32 %v3123, %v3089
      %v3125 = vadd.f32 %v3124, %v3090
      %v3126 = vadd.f32 %v3125, %v3091
      %v3127 = vadd.f32 %v3126, %v3092
      %v3128 = vadd.f32 %v3127, %v3093
      %v3129 = vadd.f32 %v3128, %v3094
      %v3130 = vadd.f32 %v3129, %v3095
      %v3131 = vadd.f32 %v3130, %v3096
      %v3132 = vadd.f32 %v3131, %v3097
      %v3133 = vadd.f32 %v3132, %v3098
      %v3134 = vrot.slane %v3133, 4
      %v3135 = vadd.f32 %v3133, %v3134
      %v3136 = vrot.slane %v3135, 2
      %v3137 = vadd.f32 %v3135, %v3136
      %v3138 = vrot.slane %v3137, 1
      %v3139 = vadd.f32 %v3137, %v3138
      %3140 = vst [vmem:[%s241] sm:$0x1] %v3139
      %3141 = vst [vmem:[%s235] sm:$0xf] 0
      %3142 = vst [vmem:[%s235 + $0x4] sm:$0xf] 0
      %3143 = vst [vmem:[%s235 + $0x8] sm:$0xf] 0
      %3144 = vst [vmem:[%s235 + $0xc] sm:$0xf] 0
      %3145 = vst [vmem:[%s235 + $0x10] sm:$0xf] 0
      %3146 = vst [vmem:[%s235 + $0x14] sm:$0xf] 0
      %3147 = vst [vmem:[%s235 + $0x18] sm:$0xf] 0
      %3148 = vst [vmem:[%s235 + $0x1c] sm:$0xf] 0
      %3149 = vst [vmem:[%s235 + $0x20] sm:$0xf] 0
      %3150 = vst [vmem:[%s235 + $0x24] sm:$0xf] 0
      %3151 = vst [vmem:[%s235 + $0x28] sm:$0xf] 0
      %3152 = vst [vmem:[%s235 + $0x2c] sm:$0xf] 0
      %3153 = vst [vmem:[%s235 + $0x30] sm:$0xf] 0
      %3154 = vst [vmem:[%s235 + $0x34] sm:$0xf] 0
      %3155 = vst [vmem:[%s235 + $0x38] sm:$0xf] 0
      %3156 = vst [vmem:[%s235 + $0x3c] sm:$0xf] 0
      %3157 = vst [vmem:[%s235 + $0x40] sm:$0xf] 0
      %3158 = vst [vmem:[%s235 + $0x44] sm:$0xf] 0
      %3159 = vst [vmem:[%s235 + $0x48] sm:$0xf] 0
      %3160 = vst [vmem:[%s235 + $0x4c] sm:$0xf] 0
      %3161 = vst [vmem:[%s235 + $0x50] sm:$0xf] 0
      %3162 = vst [vmem:[%s235 + $0x54] sm:$0xf] 0
      %3163 = vst [vmem:[%s235 + $0x58] sm:$0xf] 0
      %3164 = vst [vmem:[%s235 + $0x5c] sm:$0xf] 0
      %3165 = vst [vmem:[%s235 + $0x60] sm:$0xf] 0
      %3166 = vst [vmem:[%s235 + $0x64] sm:$0xf] 0
      %3167 = vst [vmem:[%s235 + $0x68] sm:$0xf] 0
      %3168 = vst [vmem:[%s235 + $0x6c] sm:$0xf] 0
      %3169 = vst [vmem:[%s235 + $0x70] sm:$0xf] 0
      %3170 = vst [vmem:[%s235 + $0x74] sm:$0xf] 0
      %3171 = vst [vmem:[%s235 + $0x78] sm:$0xf] 0
      %3172 = vst [vmem:[%s235 + $0x7c] sm:$0xf] 0
      %3173 = vst [vmem:[%s235 + $0x80] sm:$0xf] 0
      %3174 = vst [vmem:[%s235 + $0x84] sm:$0xf] 0
      %3175 = vst [vmem:[%s235 + $0x88] sm:$0xf] 0
      %3176 = vst [vmem:[%s235 + $0x8c] sm:$0xf] 0
      %3177 = vst [vmem:[%s235 + $0x90] sm:$0xf] 0
      %3178 = vst [vmem:[%s235 + $0x94] sm:$0xf] 0
      %3179 = vst [vmem:[%s235 + $0x98] sm:$0xf] 0
      %3180 = vst [vmem:[%s235 + $0x9c] sm:$0xf] 0
      %3181 = vst [vmem:[%s235 + $0xa0] sm:$0xf] 0
      %3182 = vst [vmem:[%s235 + $0xa4] sm:$0xf] 0
      %3183 = vst [vmem:[%s235 + $0xa8] sm:$0xf] 0
      %3184 = vst [vmem:[%s235 + $0xac] sm:$0xf] 0
      %v3185 = vpack.c.bf16 %v2985, %v2985
      %v3186 = vpack.c.bf16 %v2986, %v2986
      %v3187 = vpack.c.bf16 %v2987, %v2987
      %v3188 = vpack.c.bf16 %v2988, %v2988
      %v3189 = vpack.c.bf16 %v2989, %v2989
      %v3190 = vpack.c.bf16 %v2990, %v2990
      %v3191 = vpack.c.bf16 %v2991, %v2991
      %v3192 = vpack.c.bf16 %v2992, %v2992
      %v3193 = vpack.c.bf16 %v2993, %v2993
      %v3194 = vpack.c.bf16 %v2994, %v2994
      %v3195 = vpack.c.bf16 %v2995, %v2995
      %v3196 = vpack.c.bf16 %v2996, %v2996
      %v3197 = vpack.c.bf16 %v2997, %v2997
      %v3198 = vpack.c.bf16 %v2998, %v2998
      %v3199 = vpack.c.bf16 %v2999, %v2999
      %v3200 = vpack.c.bf16 %v3000, %v3000
      %v3201 = vpack.c.bf16 %v3001, %v3001
      %v3202 = vpack.c.bf16 %v3002, %v3002
      %v3203 = vpack.c.bf16 %v3003, %v3003
      %v3204 = vpack.c.bf16 %v3004, %v3004
      %v3205 = vpack.c.bf16 %v3005, %v3005
      %v3206 = vpack.c.bf16 %v3006, %v3006
      %v3207 = vpack.c.bf16 %v3007, %v3007
      %v3208 = vpack.c.bf16 %v3008, %v3008
      %v3209 = vpack.c.bf16 %v3009, %v3009
      %v3210 = vpack.c.bf16 %v3010, %v3010
      %v3211 = vpack.c.bf16 %v3011, %v3011
      %v3212 = vpack.c.bf16 %v3012, %v3012
      %v3213 = vpack.c.bf16 %v3013, %v3013
      %v3214 = vpack.c.bf16 %v3014, %v3014
      %v3215 = vpack.c.bf16 %v3015, %v3015
      %v3216 = vpack.c.bf16 %v3016, %v3016
      %v3217 = vpack.c.bf16 %v3017, %v3017
      %v3218 = vpack.c.bf16 %v3018, %v3018
      %v3219 = vpack.c.bf16 %v3019, %v3019
      %v3220 = vpack.c.bf16 %v3020, %v3020
      %3221 = vst [vmem:[%s235 + $0x10] sm:$0xf] %v3185
      %3222 = vst [vmem:[%s235 + $0x14] sm:$0xf] %v3186
      %3223 = vst [vmem:[%s235 + $0x18] sm:$0xf] %v3187
      %3224 = vst [vmem:[%s235 + $0x1c] sm:$0xf] %v3188
      %3225 = vst [vmem:[%s235 + $0x20] sm:$0xf] %v3189
      %3226 = vst [vmem:[%s235 + $0x24] sm:$0xf] %v3190
      %3227 = vst [vmem:[%s235 + $0x28] sm:$0xf] %v3191
      %3228 = vst [vmem:[%s235 + $0x2c] sm:$0xf] %v3192
      %3229 = vst [vmem:[%s235 + $0x30] sm:$0xf] %v3193
      %3230 = vst [vmem:[%s235 + $0x34] sm:$0xf] %v3194
      %3231 = vst [vmem:[%s235 + $0x38] sm:$0xf] %v3195
      %3232 = vst [vmem:[%s235 + $0x3c] sm:$0xf] %v3196
      %3233 = vst [vmem:[%s235 + $0x40] sm:$0xf] %v3197
      %3234 = vst [vmem:[%s235 + $0x44] sm:$0xf] %v3198
      %3235 = vst [vmem:[%s235 + $0x48] sm:$0xf] %v3199
      %3236 = vst [vmem:[%s235 + $0x4c] sm:$0xf] %v3200
      %3237 = vst [vmem:[%s235 + $0x50] sm:$0xf] %v3201
      %3238 = vst [vmem:[%s235 + $0x54] sm:$0xf] %v3202
      %3239 = vst [vmem:[%s235 + $0x58] sm:$0xf] %v3203
      %3240 = vst [vmem:[%s235 + $0x5c] sm:$0xf] %v3204
      %3241 = vst [vmem:[%s235 + $0x60] sm:$0xf] %v3205
      %3242 = vst [vmem:[%s235 + $0x64] sm:$0xf] %v3206
      %3243 = vst [vmem:[%s235 + $0x68] sm:$0xf] %v3207
      %3244 = vst [vmem:[%s235 + $0x6c] sm:$0xf] %v3208
      %3245 = vst [vmem:[%s235 + $0x70] sm:$0xf] %v3209
      %3246 = vst [vmem:[%s235 + $0x74] sm:$0xf] %v3210
      %3247 = vst [vmem:[%s235 + $0x78] sm:$0xf] %v3211
      %3248 = vst [vmem:[%s235 + $0x7c] sm:$0xf] %v3212
      %3249 = vst [vmem:[%s235 + $0x80] sm:$0xf] %v3213
      %3250 = vst [vmem:[%s235 + $0x84] sm:$0xf] %v3214
      %3251 = vst [vmem:[%s235 + $0x88] sm:$0xf] %v3215
      %3252 = vst [vmem:[%s235 + $0x8c] sm:$0xf] %v3216
      %3253 = vst [vmem:[%s235 + $0x90] sm:$0xf] %v3217
      %3254 = vst [vmem:[%s235 + $0x94] sm:$0xf] %v3218
      %3255 = vst [vmem:[%s235 + $0x98] sm:$0xf] %v3219
      %3256 = vst [vmem:[%s235 + $0x9c] sm:$0xf] %v3220
      %p3257 = scmp.lt.s32.totalorder %s17, 1
      %s3258 = scalar_select %p3257, %s17, 1
      %s3259 = smul.addr %s3258, 44
      %s3260 = smul.addr %s3259, 4
      %s3261 = scalar_lea.vmem %s3, %s3260
      %p3262 = scmp.lt.s32.totalorder %s17, 1
      %s3263 = scalar_select %p3262, %s17, 1
      %s3264 = scalar_lea.vmem %s4, %s3263
      %p3265 = scmp.lt.s32.totalorder %s17, 1
      %s3266 = scalar_select %p3265, %s17, 1
      %s3267 = scalar_lea.vmem %s5, %s3266
      // Predicated region
      $region33: #{basic_block_forward.12} parent=31 // pred_check
        %p3268 = pneg %p103
      $region34: #{basic_block_forward.12} parent=31 // pred_check_branch
        %3270 = sbr.rel (%p3268) target = $region36
      $region35: #{basic_block_forward.12} parent=31 // pred_region
        _
      $region36: #{basic_block_forward.12} parent=31 // pred_fallthru
        _
      // Predicated region
      $region37: #{basic_block_forward.12} parent=31 // pred_check
        %p3271 = pneg %p129
      $region38: #{basic_block_forward.12} parent=31 // pred_check_branch
        %3273 = sbr.rel (%p3271) target = $region40
      $region39: #{basic_block_forward.12} parent=31 // pred_region
        _
      $region40: #{basic_block_forward.12} parent=31 // pred_fallthru
        _
      // Predicated region
      $region41: #{basic_block_forward.12} parent=31 // pred_check
        %p3274 = pneg %p155
      $region42: #{basic_block_forward.12} parent=31 // pred_check_branch
        %3276 = sbr.rel (%p3274) target = $region44
      $region43: #{basic_block_forward.12} parent=31 // pred_region
        _
      $region44: #{basic_block_forward.12} parent=31 // pred_fallthru
        _
    $region32: #{basic_block_forward.12} parent=5 // pred_fallthru
      _
    %p3277 = scmp.le.s32.totalorder 2, %s12
    // Predicated region
    $region45: #{basic_block_forward.12} parent=5 // pred_check
      %p3278 = pneg %p3277
    $region46: #{basic_block_forward.12} parent=5 // pred_check_branch
      %3280 = sbr.rel (%p3278) target = $region48
    $region47: #{basic_block_forward.12} parent=5 // pred_region
      %s3281 = ssub.s32 %s12, 2
      // Predicated region
      $region49: #{basic_block_forward.12} parent=47 // pred_check
        %p3282 = pneg %p109
      $region50: #{basic_block_forward.12} parent=47 // pred_check_branch
        %3284 = sbr.rel (%p3282) target = $region52
      $region51: #{basic_block_forward.12} parent=47 // pred_region
        %p3285 = scmp.lt.s32.totalorder %s18, 1
        %s3286 = scalar_select %p3285, %s18, 1
        %s3287 = smul.addr %s3286, 44
        %s3288 = smul.addr %s3287, 4
        %s3289 = scalar_lea.vmem %s3, %s3288
      $region52: #{basic_block_forward.12} parent=47 // pred_fallthru
        _
      // Predicated region
      $region53: #{basic_block_forward.12} parent=47 // pred_check
        %p3290 = pneg %p135
      $region54: #{basic_block_forward.12} parent=47 // pred_check_branch
        %3292 = sbr.rel (%p3290) target = $region56
      $region55: #{basic_block_forward.12} parent=47 // pred_region
        %p3293 = scmp.lt.s32.totalorder %s18, 1
        %s3294 = scalar_select %p3293, %s18, 1
        %s3295 = scalar_lea.vmem %s4, %s3294
      $region56: #{basic_block_forward.12} parent=47 // pred_fallthru
        _
      // Predicated region
      $region57: #{basic_block_forward.12} parent=47 // pred_check
        %p3296 = pneg %p161
      $region58: #{basic_block_forward.12} parent=47 // pred_check_branch
        %3298 = sbr.rel (%p3296) target = $region60
      $region59: #{basic_block_forward.12} parent=47 // pred_region
        %p3299 = scmp.lt.s32.totalorder %s18, 1
        %s3300 = scalar_select %p3299, %s18, 1
        %s3301 = scalar_lea.vmem %s5, %s3300
      $region60: #{basic_block_forward.12} parent=47 // pred_fallthru
        _
    $region48: #{basic_block_forward.12} parent=5 // pred_fallthru
      _
  $region6: #{basic_block_forward.12} parent=0 // loop_footer
    %s16 = sadd.s32 1, %s12
  $region7: #{basic_block_forward.12} parent=0 // loop_footer_branch
    %11 = sbr.rel target = $region3
  $region8: #{basic_block_forward.12} parent=0 // loop_exit
    _

</llo_original>
